<compile_context>
chip_gen: v6e
topology: v6e:2x2x1
jax: 0.10.0
libtpu: 0.0.40
codegen_flags: <defaults>
</compile_context>

<pallas_src>
import functools
import math

import jax
import jax.numpy as jnp
from jax.experimental import pallas as pl
from jax.experimental.pallas import tpu as pltpu

DTYPE = jnp.bfloat16           # activations / weights
EPS = 1e-5                     # PyTorch nn.LayerNorm default
NEG_INF = -1e9                 # finite mask fill (avoids inf-inf NaNs)
VMEM_LIMIT = 64 * 1024 * 1024  # raised per review (128 MiB physical on v5e/v6e)
TM = 256                       # M-tile for the matmul kernels


def _round_up(x, m):
    return (x + m - 1) // m * m


def _tile_m(m):
    # Big tiles always: 256 when M is large enough, otherwise round M up to a
    # sublane multiple (we pad the rows instead of shrinking the tile).
    return TM if m >= TM else max(8, _round_up(m, 8))


def _pad_rows(x2d, m_pad):
    m = x2d.shape[0]
    return x2d if m_pad == m else jnp.pad(x2d, ((0, m_pad - m), (0, 0)))


# ===================== TextPromptLearner splice kernel =====================

def _splice_kernel(pidx_ref, origin_ref, ctx_ref, pos_ref,
                   prompts_ref, x0_ref, *, n_ctx, cb):
    # origin block (cb, L, D); ctx (n_ctx, D); pos (L, D); prefix idx in SMEM.
    c0 = pl.program_id(0) * cb
    L = origin_ref.shape[1]
    ctx_all = ctx_ref[...]                                       # (n_ctx, D)
    pos = pos_ref[...]                                           # (L, D)
    for c in range(cb):                                          # static unroll
        pi = pidx_ref[c0 + c]
        rel = jax.lax.broadcasted_iota(jnp.int32, (L, 1), 0) - pi
        out_c = origin_ref[c]                                    # (L, D)
        for j in range(n_ctx):
            row = ctx_all[j:j + 1, :]                            # (1, D)
            out_c = jnp.where(rel == j, row, out_c)
        prompts_ref[c] = out_c                                   # module output
        x0_ref[c] = out_c + pos                                  # fused pos add


def prompt_learner_forward(ctx, origin_emb, prefix_index, pos_emb):
    """Returns (prompts, prompts + pos_emb).

    prompts[i] = origin_emb[i] with rows [pi, pi+n_ctx) replaced by ctx
    (identical to concat(origin[:pi], ctx, origin[pi+n_ctx:])).
    Assumes prefix_index[i] + n_ctx <= L (same contract as the PyTorch module).
    """
    n_cls, L, D = origin_emb.shape
    n_ctx = ctx.shape[0]
    cb = max(c for c in (8, 4, 2, 1) if n_cls % c == 0)   # classes per step
    grid_spec = pltpu.PrefetchScalarGridSpec(
        num_scalar_prefetch=1,
        grid=(n_cls // cb,),
        in_specs=[
            pl.BlockSpec((cb, L, D), lambda i, pidx: (i, 0, 0)),
            pl.BlockSpec((n_ctx, D), lambda i, pidx: (0, 0)),
            pl.BlockSpec((L, D), lambda i, pidx: (0, 0)),
        ],
        out_specs=(
            pl.BlockSpec((cb, L, D), lambda i, pidx: (i, 0, 0)),
            pl.BlockSpec((cb, L, D), lambda i, pidx: (i, 0, 0)),
        ),
    )
    return pl.pallas_call(
        functools.partial(_splice_kernel, n_ctx=n_ctx, cb=cb),
        grid_spec=grid_spec,
        out_shape=(jax.ShapeDtypeStruct((n_cls, L, D), origin_emb.dtype),
                   jax.ShapeDtypeStruct((n_cls, L, D), origin_emb.dtype)),
        compiler_params=pltpu.CompilerParams(
            dimension_semantics=("parallel",),          # classes independent
            vmem_limit_bytes=VMEM_LIMIT),
    )(prefix_index, origin_emb, ctx, pos_emb)


# ===================== Text-encoder kernels (fused) =====================

def _layernorm_f32(x, g_ref, b_ref):
    mean = jnp.mean(x, axis=-1, keepdims=True)
    xc = x - mean
    var = jnp.mean(xc * xc, axis=-1, keepdims=True)
    h = xc * jax.lax.rsqrt(var + EPS)
    return h * g_ref[...].astype(jnp.float32) + b_ref[...].astype(jnp.float32)


def _ln_linear_kernel(x_ref, g_ref, b_ref, w_ref, wb_ref, o_ref):
    # Fused LayerNorm -> Linear (ln_1 + QKV projection). LN in f32, MXU bf16.
    x = x_ref[...].astype(jnp.float32)
    h = _layernorm_f32(x, g_ref, b_ref)
    y = jnp.dot(h.astype(w_ref.dtype), w_ref[...],
                preferred_element_type=jnp.float32)
    y = y + wb_ref[...].astype(jnp.float32)
    o_ref[...] = y.astype(o_ref.dtype)


def ln_linear(x2d, gamma, beta, w, wb):
    M, D = x2d.shape
    Dout = w.shape[1]
    tm = _tile_m(M)
    m_pad = _round_up(M, tm)
    xp = _pad_rows(x2d, m_pad)
    out = pl.pallas_call(
        _ln_linear_kernel,
        grid=(m_pad // tm,),
        in_specs=[pl.BlockSpec((tm, D), lambda i: (i, 0)),
                  pl.BlockSpec((1, D), lambda i: (0, 0)),
                  pl.BlockSpec((1, D), lambda i: (0, 0)),
                  pl.BlockSpec((D, Dout), lambda i: (0, 0)),
                  pl.BlockSpec((1, Dout), lambda i: (0, 0))],
        out_specs=pl.BlockSpec((tm, Dout), lambda i: (i, 0)),
        out_shape=jax.ShapeDtypeStruct((m_pad, Dout), x2d.dtype),
        compiler_params=pltpu.CompilerParams(
            dimension_semantics=("parallel",), vmem_limit_bytes=VMEM_LIMIT),
    )(xp, gamma.reshape(1, -1), beta.reshape(1, -1), w, wb.reshape(1, -1))
    return out[:M] if m_pad != M else out


def _mlp_kernel(x_ref, g_ref, b_ref, fcw_ref, fcb_ref, pw_ref, pb_ref, o_ref):
    # Fused ln_2 + c_fc + QuickGELU + c_proj + residual; the (tm, 4D) hidden
    # lives only in VMEM/vregs, residual added in f32.
    x = x_ref[...].astype(jnp.float32)
    h = _layernorm_f32(x, g_ref, b_ref)
    h1 = jnp.dot(h.astype(fcw_ref.dtype), fcw_ref[...],
                 preferred_element_type=jnp.float32)
    h1 = h1 + fcb_ref[...].astype(jnp.float32)
    h1 = h1 * jax.nn.sigmoid(1.702 * h1)                 # QuickGELU (EUP)
    y = jnp.dot(h1.astype(pw_ref.dtype), pw_ref[...],
                preferred_element_type=jnp.float32)
    y = y + pb_ref[...].astype(jnp.float32) + x          # residual in f32
    o_ref[...] = y.astype(o_ref.dtype)


def mlp_block(x2d, gamma, beta, fcw, fcb, pw, pb):
    M, D = x2d.shape
    H4 = fcw.shape[1]
    tm = _tile_m(M)
    m_pad = _round_up(M, tm)
    xp = _pad_rows(x2d, m_pad)
    out = pl.pallas_call(
        _mlp_kernel,
        grid=(m_pad // tm,),
        in_specs=[pl.BlockSpec((tm, D), lambda i: (i, 0)),
                  pl.BlockSpec((1, D), lambda i: (0, 0)),
                  pl.BlockSpec((1, D), lambda i: (0, 0)),
                  pl.BlockSpec((D, H4), lambda i: (0, 0)),
                  pl.BlockSpec((1, H4), lambda i: (0, 0)),
                  pl.BlockSpec((H4, D), lambda i: (0, 0)),
                  pl.BlockSpec((1, D), lambda i: (0, 0))],
        out_specs=pl.BlockSpec((tm, D), lambda i: (i, 0)),
        out_shape=jax.ShapeDtypeStruct((m_pad, D), x2d.dtype),
        compiler_params=pltpu.CompilerParams(
            dimension_semantics=("parallel",), vmem_limit_bytes=VMEM_LIMIT),
    )(xp, gamma.reshape(1, -1), beta.reshape(1, -1),
      fcw, fcb.reshape(1, -1), pw, pb.reshape(1, -1))
    return out[:M] if m_pad != M else out


def _attn_block_kernel(qkv_ref, res_ref, mask_ref, wo_ref, bo_ref, o_ref, *,
                       heads):
    # Fused attention + out_proj + residual for a block of `bt` batch rows.
    # qkv (bt, L, 3D) packed [q | k | v]; q already scaled at init.
    bt, L, threeD = qkv_ref.shape
    D = threeD // 3
    dh = D // heads
    qkv = qkv_ref[...]
    mask = mask_ref[...].astype(jnp.float32)              # (L, L) additive
    wo = wo_ref[...]                                       # (D, D) resident
    acc = jnp.zeros((bt * L, D), jnp.float32)
    for h in range(heads):                                 # static unroll
        q = qkv[:, :, h * dh:(h + 1) * dh]
        k = qkv[:, :, D + h * dh:D + (h + 1) * dh]
        v = qkv[:, :, 2 * D + h * dh:2 * D + (h + 1) * dh]
        s = jnp.einsum('bqd,bkd->bqk', q, k,
                       preferred_element_type=jnp.float32)  # no k transpose
        s = s + mask[None]
        s = s - jnp.max(s, axis=-1, keepdims=True)
        p = jnp.exp(s)
        p = p * pl.reciprocal(jnp.sum(p, axis=-1, keepdims=True), approx=True)
        ph = jnp.einsum('bqk,bkd->bqd', p.astype(v.dtype), v,
                        preferred_element_type=jnp.float32)  # (bt, L, dh)
        # push this head straight through its rows of the output projection:
        # no per-head concatenate, no separate out_proj kernel.
        acc = acc + jnp.dot(ph.reshape(bt * L, dh).astype(wo.dtype),
                            wo[h * dh:(h + 1) * dh, :],
                            preferred_element_type=jnp.float32)
    out = (acc.reshape(bt, L, D)
           + bo_ref[...].astype(jnp.float32)[None]
           + res_ref[...].astype(jnp.float32))             # residual in f32
    o_ref[...] = out.astype(o_ref.dtype)


def attention_block(qkv3d, resid, mask, heads, wo, bo):
    B, L, threeD = qkv3d.shape
    D = threeD // 3
    bt = max(c for c in (8, 4, 2, 1) if B % c == 0)        # batch rows per step
    return pl.pallas_call(
        functools.partial(_attn_block_kernel, heads=heads),
        grid=(B // bt,),
        in_specs=[pl.BlockSpec((bt, L, threeD), lambda b: (b, 0, 0)),
                  pl.BlockSpec((bt, L, D), lambda b: (b, 0, 0)),
                  pl.BlockSpec((L, L), lambda b: (0, 0)),
                  pl.BlockSpec((D, D), lambda b: (0, 0)),
                  pl.BlockSpec((1, D), lambda b: (0, 0))],
        out_specs=pl.BlockSpec((bt, L, D), lambda b: (b, 0, 0)),
        out_shape=jax.ShapeDtypeStruct((B, L, D), qkv3d.dtype),
        compiler_params=pltpu.CompilerParams(
            dimension_semantics=("parallel",), vmem_limit_bytes=VMEM_LIMIT),
    )(qkv3d, resid, mask, wo, bo.reshape(1, -1))


def _ln_proj_kernel(x_ref, g_ref, b_ref, w_ref, o_ref):
    # Fused ln_final + text_projection on the already-gathered EOT rows.
    x = x_ref[...].astype(jnp.float32)
    h = _layernorm_f32(x, g_ref, b_ref)
    o_ref[...] = jnp.dot(h.astype(w_ref.dtype), w_ref[...],
                         preferred_element_type=jnp.float32).astype(o_ref.dtype)


def ln_project(pooled, gamma, beta, proj):
    B, D = pooled.shape
    E = proj.shape[1]
    return pl.pallas_call(
        _ln_proj_kernel,
        out_shape=jax.ShapeDtypeStruct((B, E), pooled.dtype),
        compiler_params=pltpu.CompilerParams(vmem_limit_bytes=VMEM_LIMIT),
    )(pooled, gamma.reshape(1, -1), beta.reshape(1, -1), proj)


# ----------------------------- Encoder forward -----------------------------

def residual_attention_block(x, p, mask, heads):
    B, L, D = x.shape
    x2 = x.reshape(B * L, D)

    # attention branch: x = x + out_proj(attn(ln_1(x)))   (3 -> 2 kernels fused)
    qkv = ln_linear(x2, p["ln1_g"], p["ln1_b"], p["attn_in_w"], p["attn_in_b"])
    x = attention_block(qkv.reshape(B, L, 3 * D), x, mask, heads,
                        p["attn_out_w"], p["attn_out_b"])

    # MLP branch: x = x + c_proj(quickgelu(c_fc(ln_2(x))))   (single fused kernel)
    x2 = mlp_block(x.reshape(B * L, D), p["ln2_g"], p["ln2_b"],
                   p["fc_w"], p["fc_b"], p["proj_w"], p["proj_b"])
    return x2.reshape(B, L, D)


def text_encoder_forward(x0, tokenized_prompts, params, heads):
    B, L, D = x0.shape
    x = x0                                      # prompts + pos (fused in splice)
    for blk in params["blocks"]:
        x = residual_attention_block(x, blk, params["attn_mask"], heads)
    # EOT-token gather BEFORE ln_final: only B rows get normalized/projected.
    eot = jnp.argmax(tokenized_prompts, axis=-1)
    pooled = x[jnp.arange(B), eot]                               # (B, D)
    return ln_project(pooled, params["lnf_g"], params["lnf_b"],
                      params["text_projection"])                 # (B, embed)


def full_forward(ctx, origin_emb, prefix_index, tokenized_prompts, params, *,
                 heads):
    prompts, x0 = prompt_learner_forward(ctx, origin_emb, prefix_index,
                                         params["pos_emb"])
    feats = text_encoder_forward(x0, tokenized_prompts, params, heads)
    return prompts, feats


# ----------------------------- Parameter init -----------------------------

def init_params(key, *, L, D, n_layers, embed_dim, heads):
    ks = iter(jax.random.split(key, 4 + 6 * n_layers))

    def nrm(shape, scale=0.02):
        return scale * jax.random.normal(next(ks), shape)

    rows = jnp.arange(L)
    attn_mask = jnp.where(rows[None, :] > rows[:, None],
                          NEG_INF, 0.0).astype(jnp.float32)

    params = {
        "pos_emb": nrm((L, D), 0.01).astype(DTYPE),
        "lnf_g": jnp.ones((D,), DTYPE),
        "lnf_b": jnp.zeros((D,), DTYPE),
        "text_projection": nrm((D, embed_dim), D ** -0.5).astype(DTYPE),
        "attn_mask": attn_mask,
        "blocks": [],
    }
    qscale = (D // heads) ** -0.5
    for _ in range(n_layers):
        # weights stored pre-transposed as (Din, Dout);
        # fold 1/sqrt(dh) into the q columns in f32 at init (free, more precise
        # than a per-step bf16 multiply). q-bias (zero here) would be scaled too.
        w_in = nrm((D, 3 * D))
        w_in = w_in.at[:, :D].multiply(qscale)
        params["blocks"].append({
            "ln1_g": jnp.ones((D,), DTYPE), "ln1_b": jnp.zeros((D,), DTYPE),
            "attn_in_w": w_in.astype(DTYPE),
            "attn_in_b": jnp.zeros((3 * D,), DTYPE),
            "attn_out_w": nrm((D, D)).astype(DTYPE),
            "attn_out_b": jnp.zeros((D,), DTYPE),
            "ln2_g": jnp.ones((D,), DTYPE), "ln2_b": jnp.zeros((D,), DTYPE),
            "fc_w": nrm((D, 4 * D)).astype(DTYPE),
            "fc_b": jnp.zeros((4 * D,), DTYPE),
            "proj_w": nrm((4 * D, D)).astype(DTYPE),
            "proj_b": jnp.zeros((D,), DTYPE),
        })
    return params


# ----------------------------- Reference (pure JAX) -----------------------------

def reference_splice(ctx, origin_emb, prefix_index):
    n_cls, L, D = origin_emb.shape
    n_ctx = ctx.shape[0]
    outs = []
    for i in range(n_cls):
        pi = int(prefix_index[i])
        outs.append(jnp.concatenate(
            [origin_emb[i, :pi], ctx, origin_emb[i, pi + n_ctx:]],
            axis=0)[None])
    return jnp.concatenate(outs, axis=0)


# ----------------------------- Main -----------------------------

if __name__ == "__main__":
    # small shapes; D=128 keeps every HBM store lane-dense per review
    N_CLS, L, D, H, LAYERS, EMBED, N_CTX = 4, 16, 128, 4, 2, 128, 4

    key = jax.random.PRNGKey(0)
    k_params, k_emb, k_ctx, k_tok = jax.random.split(key, 4)

    params = init_params(k_params, L=L, D=D, n_layers=LAYERS,
                         embed_dim=EMBED, heads=H)

    origin_emb = (0.1 * jax.random.normal(k_emb, (N_CLS, L, D))).astype(DTYPE)
    ctx = (0.02 * jax.random.normal(k_ctx, (N_CTX, D))).astype(DTYPE)
    prefix_index = jnp.array([3, 5, 7, 9], dtype=jnp.int32)   # per-class insert pos
    assert int(jnp.max(prefix_index)) + N_CTX <= L, "prefix_index + n_ctx must be <= L"

    # tokenized prompts: EOT token (max id) a couple of positions after the ctx
    tokenized = jax.random.randint(k_tok, (N_CLS, L), 1, 100, dtype=jnp.int32)
    eot_pos = jnp.minimum(prefix_index + N_CTX + 2, L - 1)
    tokenized = tokenized.at[jnp.arange(N_CLS), eot_pos].set(49407)

    fwd = jax.jit(functools.partial(full_forward, heads=H))
    prompts, feats = fwd(ctx, origin_emb, prefix_index, tokenized, params)
    prompts, feats = jax.block_until_ready((prompts, feats))

    # Module-semantics check: Pallas splice == PyTorch-style concat splice.
    ref_prompts = reference_splice(ctx, origin_emb, prefix_index)
    assert prompts.shape == (N_CLS, L, D), prompts.shape
    assert bool(jnp.array_equal(prompts, ref_prompts)), "prompt splice mismatch"

    assert feats.shape == (N_CLS, EMBED), feats.shape
    assert bool(jnp.all(jnp.isfinite(feats.astype(jnp.float32))))
    print("KERNEL_OK")
</pallas_src>

<mosaic_0001>
module attributes {stable_mosaic.version = 11 : i64} {
  func.func @_ln_linear_kernel(%arg0: i32, %arg1: memref<64x128xbf16, #tpu.memory_space<vmem>>, %arg2: memref<1x128xbf16, #tpu.memory_space<vmem>>, %arg3: memref<1x128xbf16, #tpu.memory_space<vmem>>, %arg4: memref<128x384xbf16, #tpu.memory_space<vmem>>, %arg5: memref<1x384xbf16, #tpu.memory_space<vmem>>, %arg6: memref<64x384xbf16, #tpu.memory_space<vmem>>) attributes {dimension_semantics = [#tpu.dimension_semantics<parallel>], iteration_bounds = array<i64: 1>, scalar_prefetch = 0 : i64, scratch_operands = 0 : i64, tpu.core_type = #tpu.core_type<tc>, window_params = [{transform_indices = @transform_0, window_bounds = array<i64: 64, 128>}, {pipeline_mode = #tpu.pipeline_mode<synchronous>, transform_indices = @transform_1, window_bounds = array<i64: 1, 128>}, {pipeline_mode = #tpu.pipeline_mode<synchronous>, transform_indices = @transform_2, window_bounds = array<i64: 1, 128>}, {pipeline_mode = #tpu.pipeline_mode<synchronous>, transform_indices = @transform_3, window_bounds = array<i64: 128, 384>}, {pipeline_mode = #tpu.pipeline_mode<synchronous>, transform_indices = @transform_4, window_bounds = array<i64: 1, 384>}, {transform_indices = @transform_5, window_bounds = array<i64: 64, 384>}]} {
    %c0 = arith.constant 0 : index
    %c0_0 = arith.constant 0 : index
    %0 = vector.load %arg1[%c0, %c0_0] : memref<64x128xbf16, #tpu.memory_space<vmem>>, vector<64x128xbf16>
    %1 = arith.extf %0 : vector<64x128xbf16> to vector<64x128xf32>
    %cst = arith.constant dense<0.000000e+00> : vector<64xf32>
    %2 = vector.multi_reduction <add>, %1, %cst [1] : vector<64x128xf32> to vector<64xf32>
    %3 = vector.shape_cast %2 : vector<64xf32> to vector<64x1xf32>
    %cst_1 = arith.constant 1.280000e+02 : f32
    %4 = vector.broadcast %cst_1 : f32 to vector<64x1xf32>
    %5 = arith.divf %3, %4 : vector<64x1xf32>
    %6 = vector.broadcast %5 : vector<64x1xf32> to vector<64x128xf32>
    %7 = arith.subf %1, %6 : vector<64x128xf32>
    %8 = arith.mulf %7, %7 : vector<64x128xf32>
    %cst_2 = arith.constant dense<0.000000e+00> : vector<64xf32>
    %9 = vector.multi_reduction <add>, %8, %cst_2 [1] : vector<64x128xf32> to vector<64xf32>
    %10 = vector.shape_cast %9 : vector<64xf32> to vector<64x1xf32>
    %cst_3 = arith.constant 1.280000e+02 : f32
    %11 = vector.broadcast %cst_3 : f32 to vector<64x1xf32>
    %12 = arith.divf %10, %11 : vector<64x1xf32>
    %cst_4 = arith.constant 9.99999974E-6 : f32
    %13 = vector.broadcast %cst_4 : f32 to vector<64x1xf32>
    %14 = arith.addf %12, %13 : vector<64x1xf32>
    %15 = math.rsqrt %14 : vector<64x1xf32>
    %16 = vector.broadcast %15 : vector<64x1xf32> to vector<64x128xf32>
    %17 = arith.mulf %7, %16 : vector<64x128xf32>
    %c0_5 = arith.constant 0 : index
    %c0_6 = arith.constant 0 : index
    %18 = vector.load %arg2[%c0_5, %c0_6] : memref<1x128xbf16, #tpu.memory_space<vmem>>, vector<1x128xbf16>
    %19 = arith.extf %18 : vector<1x128xbf16> to vector<1x128xf32>
    %20 = vector.broadcast %19 : vector<1x128xf32> to vector<64x128xf32>
    %21 = arith.mulf %17, %20 : vector<64x128xf32>
    %c0_7 = arith.constant 0 : index
    %c0_8 = arith.constant 0 : index
    %22 = vector.load %arg3[%c0_7, %c0_8] : memref<1x128xbf16, #tpu.memory_space<vmem>>, vector<1x128xbf16>
    %23 = arith.extf %22 : vector<1x128xbf16> to vector<1x128xf32>
    %24 = vector.broadcast %23 : vector<1x128xf32> to vector<64x128xf32>
    %25 = arith.addf %21, %24 : vector<64x128xf32>
    %26 = arith.truncf %25 : vector<64x128xf32> to vector<64x128xbf16>
    %c0_9 = arith.constant 0 : index
    %c0_10 = arith.constant 0 : index
    %27 = vector.load %arg4[%c0_9, %c0_10] : memref<128x384xbf16, #tpu.memory_space<vmem>>, vector<128x384xbf16>
    %cst_11 = arith.constant dense<0.000000e+00> : vector<64x384xf32>
    %28 = tpu.matmul %26, %27, %cst_11 {dimension_numbers = #tpu.dot_dimension_numbers<[1], [0], [0], [1], [0, 0, 1, 1], [], []>} : vector<64x128xbf16>, vector<128x384xbf16>, vector<64x384xf32> -> vector<64x384xf32>
    %c0_12 = arith.constant 0 : index
    %c0_13 = arith.constant 0 : index
    %29 = vector.load %arg5[%c0_12, %c0_13] : memref<1x384xbf16, #tpu.memory_space<vmem>>, vector<1x384xbf16>
    %30 = arith.extf %29 : vector<1x384xbf16> to vector<1x384xf32>
    %31 = vector.broadcast %30 : vector<1x384xf32> to vector<64x384xf32>
    %32 = arith.addf %28, %31 : vector<64x384xf32>
    %33 = arith.truncf %32 : vector<64x384xf32> to vector<64x384xbf16>
    %c0_14 = arith.constant 0 : index
    %c0_15 = arith.constant 0 : index
    %34 = vector.load %arg6[%c0_14, %c0_15] : memref<64x384xbf16, #tpu.memory_space<vmem>>, vector<64x384xbf16>
    tpu.vector_store %arg6[%c0_14, %c0_15], %33 {strides = array<i32>} : memref<64x384xbf16, #tpu.memory_space<vmem>>, vector<64x384xbf16>,
    return
  }
  func.func @transform_0(%arg0: i32) -> (i32, i32) {
    %c0_i32 = arith.constant 0 : i32
    %c0_i32_0 = arith.constant 0 : i32
    return %arg0, %c0_i32 : i32, i32
  }
  func.func @transform_1(%arg0: i32) -> (i32, i32) {
    %c0_i32 = arith.constant 0 : i32
    %c0_i32_0 = arith.constant 0 : i32
    %c0_i32_1 = arith.constant 0 : i32
    return %c0_i32, %c0_i32_0 : i32, i32
  }
  func.func @transform_2(%arg0: i32) -> (i32, i32) {
    %c0_i32 = arith.constant 0 : i32
    %c0_i32_0 = arith.constant 0 : i32
    %c0_i32_1 = arith.constant 0 : i32
    return %c0_i32, %c0_i32_0 : i32, i32
  }
  func.func @transform_3(%arg0: i32) -> (i32, i32) {
    %c0_i32 = arith.constant 0 : i32
    %c0_i32_0 = arith.constant 0 : i32
    %c0_i32_1 = arith.constant 0 : i32
    return %c0_i32, %c0_i32_0 : i32, i32
  }
  func.func @transform_4(%arg0: i32) -> (i32, i32) {
    %c0_i32 = arith.constant 0 : i32
    %c0_i32_0 = arith.constant 0 : i32
    %c0_i32_1 = arith.constant 0 : i32
    return %c0_i32, %c0_i32_0 : i32, i32
  }
  func.func @transform_5(%arg0: i32) -> (i32, i32) {
    %c0_i32 = arith.constant 0 : i32
    %c0_i32_0 = arith.constant 0 : i32
    return %arg0, %c0_i32 : i32, i32
  }
}

module attributes {stable_mosaic.version = 11 : i64} {
  func.func @_attn_block_kernel(%arg0: i32, %arg1: memref<4x16x384xbf16, #tpu.memory_space<vmem>>, %arg2: memref<4x16x128xbf16, #tpu.memory_space<vmem>>, %arg3: memref<16x16xf32, #tpu.memory_space<vmem>>, %arg4: memref<128x128xbf16, #tpu.memory_space<vmem>>, %arg5: memref<1x128xbf16, #tpu.memory_space<vmem>>, %arg6: memref<4x16x128xbf16, #tpu.memory_space<vmem>>) attributes {dimension_semantics = [#tpu.dimension_semantics<parallel>], iteration_bounds = array<i64: 1>, scalar_prefetch = 0 : i64, scratch_operands = 0 : i64, tpu.core_type = #tpu.core_type<tc>, window_params = [{transform_indices = @transform_0, window_bounds = array<i64: 4, 16, 384>}, {transform_indices = @transform_1, window_bounds = array<i64: 4, 16, 128>}, {pipeline_mode = #tpu.pipeline_mode<synchronous>, transform_indices = @transform_2, window_bounds = array<i64: 16, 16>}, {pipeline_mode = #tpu.pipeline_mode<synchronous>, transform_indices = @transform_3, window_bounds = array<i64: 128, 128>}, {pipeline_mode = #tpu.pipeline_mode<synchronous>, transform_indices = @transform_4, window_bounds = array<i64: 1, 128>}, {transform_indices = @transform_5, window_bounds = array<i64: 4, 16, 128>}]} {
    %c0 = arith.constant 0 : index
    %c0_0 = arith.constant 0 : index
    %c0_1 = arith.constant 0 : index
    %0 = vector.load %arg1[%c0, %c0_0, %c0_1] : memref<4x16x384xbf16, #tpu.memory_space<vmem>>, vector<4x16x384xbf16>
    %c0_2 = arith.constant 0 : index
    %c0_3 = arith.constant 0 : index
    %1 = vector.load %arg3[%c0_2, %c0_3] : memref<16x16xf32, #tpu.memory_space<vmem>>, vector<16x16xf32>
    %c0_4 = arith.constant 0 : index
    %c0_5 = arith.constant 0 : index
    %2 = vector.load %arg4[%c0_4, %c0_5] : memref<128x128xbf16, #tpu.memory_space<vmem>>, vector<128x128xbf16>
    %cst = arith.constant 0.000000e+00 : f32
    %3 = vector.broadcast %cst : f32 to vector<64x128xf32>
    %4 = vector.extract_strided_slice %0 {offsets = [0, 0, 0], sizes = [4, 16, 32], strides = [1, 1, 1]} : vector<4x16x384xbf16> to vector<4x16x32xbf16>
    %5 = vector.extract_strided_slice %0 {offsets = [0, 0, 128], sizes = [4, 16, 32], strides = [1, 1, 1]} : vector<4x16x384xbf16> to vector<4x16x32xbf16>
    %6 = vector.extract_strided_slice %0 {offsets = [0, 0, 256], sizes = [4, 16, 32], strides = [1, 1, 1]} : vector<4x16x384xbf16> to vector<4x16x32xbf16>
    "tpu.trace_start"() <{level = 10 : i32, message = "bqd,bkd->bqk"}> : () -> ()
    %cst_6 = arith.constant dense<0.000000e+00> : vector<4x16x16xf32>
    %7 = tpu.matmul %4, %5, %cst_6 {dimension_numbers = #tpu.dot_dimension_numbers<[2], [2], [1], [1], [0, 0, 0, 1, 1, 1], [0], [0]>} : vector<4x16x32xbf16>, vector<4x16x32xbf16>, vector<4x16x16xf32> -> vector<4x16x16xf32>
    "tpu.trace_stop"() : () -> ()
    %8 = vector.shape_cast %1 : vector<16x16xf32> to vector<1x16x16xf32>
    %9 = vector.broadcast %8 : vector<1x16x16xf32> to vector<4x16x16xf32>
    %10 = arith.addf %7, %9 : vector<4x16x16xf32>
    %cst_7 = arith.constant dense<0xFF800000> : vector<4x16xf32>
    %11 = vector.multi_reduction <maximumf>, %10, %cst_7 [2] : vector<4x16x16xf32> to vector<4x16xf32>
    %12 = vector.shape_cast %11 : vector<4x16xf32> to vector<4x16x1xf32>
    %13 = vector.broadcast %12 : vector<4x16x1xf32> to vector<4x16x16xf32>
    %14 = arith.subf %10, %13 : vector<4x16x16xf32>
    %15 = math.exp %14 : vector<4x16x16xf32>
    %cst_8 = arith.constant dense<0.000000e+00> : vector<4x16xf32>
    %16 = vector.multi_reduction <add>, %15, %cst_8 [2] : vector<4x16x16xf32> to vector<4x16xf32>
    %17 = vector.shape_cast %16 : vector<4x16xf32> to vector<4x16x1xf32>
    %18 = tpu.reciprocal %17 {approx = true} : vector<4x16x1xf32> -> vector<4x16x1xf32>
    %19 = vector.broadcast %18 : vector<4x16x1xf32> to vector<4x16x16xf32>
    %20 = arith.mulf %15, %19 : vector<4x16x16xf32>
    %21 = arith.truncf %20 : vector<4x16x16xf32> to vector<4x16x16xbf16>
    "tpu.trace_start"() <{level = 10 : i32, message = "bqk,bkd->bqd"}> : () -> ()
    %cst_9 = arith.constant dense<0.000000e+00> : vector<4x16x32xf32>
    %22 = tpu.matmul %21, %6, %cst_9 {dimension_numbers = #tpu.dot_dimension_numbers<[2], [1], [1], [2], [0, 0, 0, 1, 1, 2], [0], [0]>} : vector<4x16x16xbf16>, vector<4x16x32xbf16>, vector<4x16x32xf32> -> vector<4x16x32xf32>
    "tpu.trace_stop"() : () -> ()
    %23 = vector.shape_cast %22 : vector<4x16x32xf32> to vector<64x32xf32>
    %24 = arith.truncf %23 : vector<64x32xf32> to vector<64x32xbf16>
    %25 = vector.extract_strided_slice %2 {offsets = [0, 0], sizes = [32, 128], strides = [1, 1]} : vector<128x128xbf16> to vector<32x128xbf16>
    %cst_10 = arith.constant dense<0.000000e+00> : vector<64x128xf32>
    %26 = tpu.matmul %24, %25, %cst_10 {dimension_numbers = #tpu.dot_dimension_numbers<[1], [0], [0], [1], [0, 0, 1, 1], [], []>} : vector<64x32xbf16>, vector<32x128xbf16>, vector<64x128xf32> -> vector<64x128xf32>
    %27 = arith.addf %3, %26 : vector<64x128xf32>
    %28 = vector.extract_strided_slice %0 {offsets = [0, 0, 32], sizes = [4, 16, 32], strides = [1, 1, 1]} : vector<4x16x384xbf16> to vector<4x16x32xbf16>
    %29 = vector.extract_strided_slice %0 {offsets = [0, 0, 160], sizes = [4, 16, 32], strides = [1, 1, 1]} : vector<4x16x384xbf16> to vector<4x16x32xbf16>
    %30 = vector.extract_strided_slice %0 {offsets = [0, 0, 288], sizes = [4, 16, 32], strides = [1, 1, 1]} : vector<4x16x384xbf16> to vector<4x16x32xbf16>
    "tpu.trace_start"() <{level = 10 : i32, message = "bqd,bkd->bqk"}> : () -> ()
    %cst_11 = arith.constant dense<0.000000e+00> : vector<4x16x16xf32>
    %31 = tpu.matmul %28, %29, %cst_11 {dimension_numbers = #tpu.dot_dimension_numbers<[2], [2], [1], [1], [0, 0, 0, 1, 1, 1], [0], [0]>} : vector<4x16x32xbf16>, vector<4x16x32xbf16>, vector<4x16x16xf32> -> vector<4x16x16xf32>
    "tpu.trace_stop"() : () -> ()
    %32 = vector.shape_cast %1 : vector<16x16xf32> to vector<1x16x16xf32>
    %33 = vector.broadcast %32 : vector<1x16x16xf32> to vector<4x16x16xf32>
    %34 = arith.addf %31, %33 : vector<4x16x16xf32>
    %cst_12 = arith.constant dense<0xFF800000> : vector<4x16xf32>
    %35 = vector.multi_reduction <maximumf>, %34, %cst_12 [2] : vector<4x16x16xf32> to vector<4x16xf32>
    %36 = vector.shape_cast %35 : vector<4x16xf32> to vector<4x16x1xf32>
    %37 = vector.broadcast %36 : vector<4x16x1xf32> to vector<4x16x16xf32>
    %38 = arith.subf %34, %37 : vector<4x16x16xf32>
    %39 = math.exp %38 : vector<4x16x16xf32>
    %cst_13 = arith.constant dense<0.000000e+00> : vector<4x16xf32>
    %40 = vector.multi_reduction <add>, %39, %cst_13 [2] : vector<4x16x16xf32> to vector<4x16xf32>
    %41 = vector.shape_cast %40 : vector<4x16xf32> to vector<4x16x1xf32>
    %42 = tpu.reciprocal %41 {approx = true} : vector<4x16x1xf32> -> vector<4x16x1xf32>
    %43 = vector.broadcast %42 : vector<4x16x1xf32> to vector<4x16x16xf32>
    %44 = arith.mulf %39, %43 : vector<4x16x16xf32>
    %45 = arith.truncf %44 : vector<4x16x16xf32> to vector<4x16x16xbf16>
    "tpu.trace_start"() <{level = 10 : i32, message = "bqk,bkd->bqd"}> : () -> ()
    %cst_14 = arith.constant dense<0.000000e+00> : vector<4x16x32xf32>
    %46 = tpu.matmul %45, %30, %cst_14 {dimension_numbers = #tpu.dot_dimension_numbers<[2], [1], [1], [2], [0, 0, 0, 1, 1, 2], [0], [0]>} : vector<4x16x16xbf16>, vector<4x16x32xbf16>, vector<4x16x32xf32> -> vector<4x16x32xf32>
    "tpu.trace_stop"() : () -> ()
    %47 = vector.shape_cast %46 : vector<4x16x32xf32> to vector<64x32xf32>
    %48 = arith.truncf %47 : vector<64x32xf32> to vector<64x32xbf16>
    %49 = vector.extract_strided_slice %2 {offsets = [32, 0], sizes = [32, 128], strides = [1, 1]} : vector<128x128xbf16> to vector<32x128xbf16>
    %cst_15 = arith.constant dense<0.000000e+00> : vector<64x128xf32>
    %50 = tpu.matmul %48, %49, %cst_15 {dimension_numbers = #tpu.dot_dimension_numbers<[1], [0], [0], [1], [0, 0, 1, 1], [], []>} : vector<64x32xbf16>, vector<32x128xbf16>, vector<64x128xf32> -> vector<64x128xf32>
    %51 = arith.addf %27, %50 : vector<64x128xf32>
    %52 = vector.extract_strided_slice %0 {offsets = [0, 0, 64], sizes = [4, 16, 32], strides = [1, 1, 1]} : vector<4x16x384xbf16> to vector<4x16x32xbf16>
    %53 = vector.extract_strided_slice %0 {offsets = [0, 0, 192], sizes = [4, 16, 32], strides = [1, 1, 1]} : vector<4x16x384xbf16> to vector<4x16x32xbf16>
    %54 = vector.extract_strided_slice %0 {offsets = [0, 0, 320], sizes = [4, 16, 32], strides = [1, 1, 1]} : vector<4x16x384xbf16> to vector<4x16x32xbf16>
    "tpu.trace_start"() <{level = 10 : i32, message = "bqd,bkd->bqk"}> : () -> ()
    %cst_16 = arith.constant dense<0.000000e+00> : vector<4x16x16xf32>
    %55 = tpu.matmul %52, %53, %cst_16 {dimension_numbers = #tpu.dot_dimension_numbers<[2], [2], [1], [1], [0, 0, 0, 1, 1, 1], [0], [0]>} : vector<4x16x32xbf16>, vector<4x16x32xbf16>, vector<4x16x16xf32> -> vector<4x16x16xf32>
    "tpu.trace_stop"() : () -> ()
    %56 = vector.shape_cast %1 : vector<16x16xf32> to vector<1x16x16xf32>
    %57 = vector.broadcast %56 : vector<1x16x16xf32> to vector<4x16x16xf32>
    %58 = arith.addf %55, %57 : vector<4x16x16xf32>
    %cst_17 = arith.constant dense<0xFF800000> : vector<4x16xf32>
    %59 = vector.multi_reduction <maximumf>, %58, %cst_17 [2] : vector<4x16x16xf32> to vector<4x16xf32>
    %60 = vector.shape_cast %59 : vector<4x16xf32> to vector<4x16x1xf32>
    %61 = vector.broadcast %60 : vector<4x16x1xf32> to vector<4x16x16xf32>
    %62 = arith.subf %58, %61 : vector<4x16x16xf32>
    %63 = math.exp %62 : vector<4x16x16xf32>
    %cst_18 = arith.constant dense<0.000000e+00> : vector<4x16xf32>
    %64 = vector.multi_reduction <add>, %63, %cst_18 [2] : vector<4x16x16xf32> to vector<4x16xf32>
    %65 = vector.shape_cast %64 : vector<4x16xf32> to vector<4x16x1xf32>
    %66 = tpu.reciprocal %65 {approx = true} : vector<4x16x1xf32> -> vector<4x16x1xf32>
    %67 = vector.broadcast %66 : vector<4x16x1xf32> to vector<4x16x16xf32>
    %68 = arith.mulf %63, %67 : vector<4x16x16xf32>
    %69 = arith.truncf %68 : vector<4x16x16xf32> to vector<4x16x16xbf16>
    "tpu.trace_start"() <{level = 10 : i32, message = "bqk,bkd->bqd"}> : () -> ()
    %cst_19 = arith.constant dense<0.000000e+00> : vector<4x16x32xf32>
    %70 = tpu.matmul %69, %54, %cst_19 {dimension_numbers = #tpu.dot_dimension_numbers<[2], [1], [1], [2], [0, 0, 0, 1, 1, 2], [0], [0]>} : vector<4x16x16xbf16>, vector<4x16x32xbf16>, vector<4x16x32xf32> -> vector<4x16x32xf32>
    "tpu.trace_stop"() : () -> ()
    %71 = vector.shape_cast %70 : vector<4x16x32xf32> to vector<64x32xf32>
    %72 = arith.truncf %71 : vector<64x32xf32> to vector<64x32xbf16>
    %73 = vector.extract_strided_slice %2 {offsets = [64, 0], sizes = [32, 128], strides = [1, 1]} : vector<128x128xbf16> to vector<32x128xbf16>
    %cst_20 = arith.constant dense<0.000000e+00> : vector<64x128xf32>
    %74 = tpu.matmul %72, %73, %cst_20 {dimension_numbers = #tpu.dot_dimension_numbers<[1], [0], [0], [1], [0, 0, 1, 1], [], []>} : vector<64x32xbf16>, vector<32x128xbf16>, vector<64x128xf32> -> vector<64x128xf32>
    %75 = arith.addf %51, %74 : vector<64x128xf32>
    %76 = vector.extract_strided_slice %0 {offsets = [0, 0, 96], sizes = [4, 16, 32], strides = [1, 1, 1]} : vector<4x16x384xbf16> to vector<4x16x32xbf16>
    %77 = vector.extract_strided_slice %0 {offsets = [0, 0, 224], sizes = [4, 16, 32], strides = [1, 1, 1]} : vector<4x16x384xbf16> to vector<4x16x32xbf16>
    %78 = vector.extract_strided_slice %0 {offsets = [0, 0, 352], sizes = [4, 16, 32], strides = [1, 1, 1]} : vector<4x16x384xbf16> to vector<4x16x32xbf16>
    "tpu.trace_start"() <{level = 10 : i32, message = "bqd,bkd->bqk"}> : () -> ()
    %cst_21 = arith.constant dense<0.000000e+00> : vector<4x16x16xf32>
    %79 = tpu.matmul %76, %77, %cst_21 {dimension_numbers = #tpu.dot_dimension_numbers<[2], [2], [1], [1], [0, 0, 0, 1, 1, 1], [0], [0]>} : vector<4x16x32xbf16>, vector<4x16x32xbf16>, vector<4x16x16xf32> -> vector<4x16x16xf32>
    "tpu.trace_stop"() : () -> ()
    %80 = vector.shape_cast %1 : vector<16x16xf32> to vector<1x16x16xf32>
    %81 = vector.broadcast %80 : vector<1x16x16xf32> to vector<4x16x16xf32>
    %82 = arith.addf %79, %81 : vector<4x16x16xf32>
    %cst_22 = arith.constant dense<0xFF800000> : vector<4x16xf32>
    %83 = vector.multi_reduction <maximumf>, %82, %cst_22 [2] : vector<4x16x16xf32> to vector<4x16xf32>
    %84 = vector.shape_cast %83 : vector<4x16xf32> to vector<4x16x1xf32>
    %85 = vector.broadcast %84 : vector<4x16x1xf32> to vector<4x16x16xf32>
    %86 = arith.subf %82, %85 : vector<4x16x16xf32>
    %87 = math.exp %86 : vector<4x16x16xf32>
    %cst_23 = arith.constant dense<0.000000e+00> : vector<4x16xf32>
    %88 = vector.multi_reduction <add>, %87, %cst_23 [2] : vector<4x16x16xf32> to vector<4x16xf32>
    %89 = vector.shape_cast %88 : vector<4x16xf32> to vector<4x16x1xf32>
    %90 = tpu.reciprocal %89 {approx = true} : vector<4x16x1xf32> -> vector<4x16x1xf32>
    %91 = vector.broadcast %90 : vector<4x16x1xf32> to vector<4x16x16xf32>
    %92 = arith.mulf %87, %91 : vector<4x16x16xf32>
    %93 = arith.truncf %92 : vector<4x16x16xf32> to vector<4x16x16xbf16>
    "tpu.trace_start"() <{level = 10 : i32, message = "bqk,bkd->bqd"}> : () -> ()
    %cst_24 = arith.constant dense<0.000000e+00> : vector<4x16x32xf32>
    %94 = tpu.matmul %93, %78, %cst_24 {dimension_numbers = #tpu.dot_dimension_numbers<[2], [1], [1], [2], [0, 0, 0, 1, 1, 2], [0], [0]>} : vector<4x16x16xbf16>, vector<4x16x32xbf16>, vector<4x16x32xf32> -> vector<4x16x32xf32>
    "tpu.trace_stop"() : () -> ()
    %95 = vector.shape_cast %94 : vector<4x16x32xf32> to vector<64x32xf32>
    %96 = arith.truncf %95 : vector<64x32xf32> to vector<64x32xbf16>
    %97 = vector.extract_strided_slice %2 {offsets = [96, 0], sizes = [32, 128], strides = [1, 1]} : vector<128x128xbf16> to vector<32x128xbf16>
    %cst_25 = arith.constant dense<0.000000e+00> : vector<64x128xf32>
    %98 = tpu.matmul %96, %97, %cst_25 {dimension_numbers = #tpu.dot_dimension_numbers<[1], [0], [0], [1], [0, 0, 1, 1], [], []>} : vector<64x32xbf16>, vector<32x128xbf16>, vector<64x128xf32> -> vector<64x128xf32>
    %99 = arith.addf %75, %98 : vector<64x128xf32>
    %100 = vector.shape_cast %99 : vector<64x128xf32> to vector<4x16x128xf32>
    %c0_26 = arith.constant 0 : index
    %c0_27 = arith.constant 0 : index
    %101 = vector.load %arg5[%c0_26, %c0_27] : memref<1x128xbf16, #tpu.memory_space<vmem>>, vector<1x128xbf16>
    %102 = arith.extf %101 : vector<1x128xbf16> to vector<1x128xf32>
    %103 = vector.shape_cast %102 : vector<1x128xf32> to vector<1x1x128xf32>
    %104 = vector.broadcast %103 : vector<1x1x128xf32> to vector<4x16x128xf32>
    %105 = arith.addf %100, %104 : vector<4x16x128xf32>
    %c0_28 = arith.constant 0 : index
    %c0_29 = arith.constant 0 : index
    %c0_30 = arith.constant 0 : index
    %106 = vector.load %arg2[%c0_28, %c0_29, %c0_30] : memref<4x16x128xbf16, #tpu.memory_space<vmem>>, vector<4x16x128xbf16>
    %107 = arith.extf %106 : vector<4x16x128xbf16> to vector<4x16x128xf32>
    %108 = arith.addf %105, %107 : vector<4x16x128xf32>
    %109 = arith.truncf %108 : vector<4x16x128xf32> to vector<4x16x128xbf16>
    %c0_31 = arith.constant 0 : index
    %c0_32 = arith.constant 0 : index
    %c0_33 = arith.constant 0 : index
    %110 = vector.load %arg6[%c0_31, %c0_32, %c0_33] : memref<4x16x128xbf16, #tpu.memory_space<vmem>>, vector<4x16x128xbf16>
    tpu.vector_store %arg6[%c0_31, %c0_32, %c0_33], %109 {strides = array<i32>} : memref<4x16x128xbf16, #tpu.memory_space<vmem>>, vector<4x16x128xbf16>,
    return
  }
  func.func @transform_0(%arg0: i32) -> (i32, i32, i32) {
    %c0_i32 = arith.constant 0 : i32
    %c0_i32_0 = arith.constant 0 : i32
    %c0_i32_1 = arith.constant 0 : i32
    return %arg0, %c0_i32, %c0_i32_0 : i32, i32, i32
  }
  func.func @transform_1(%arg0: i32) -> (i32, i32, i32) {
    %c0_i32 = arith.constant 0 : i32
    %c0_i32_0 = arith.constant 0 : i32
    %c0_i32_1 = arith.constant 0 : i32
    return %arg0, %c0_i32, %c0_i32_0 : i32, i32, i32
  }
  func.func @transform_2(%arg0: i32) -> (i32, i32) {
    %c0_i32 = arith.constant 0 : i32
    %c0_i32_0 = arith.constant 0 : i32
    %c0_i32_1 = arith.constant 0 : i32
    return %c0_i32, %c0_i32_0 : i32, i32
  }
  func.func @transform_3(%arg0: i32) -> (i32, i32) {
    %c0_i32 = arith.constant 0 : i32
    %c0_i32_0 = arith.constant 0 : i32
    %c0_i32_1 = arith.constant 0 : i32
    return %c0_i32, %c0_i32_0 : i32, i32
  }
  func.func @transform_4(%arg0: i32) -> (i32, i32) {
    %c0_i32 = arith.constant 0 : i32
    %c0_i32_0 = arith.constant 0 : i32
    %c0_i32_1 = arith.constant 0 : i32
    return %c0_i32, %c0_i32_0 : i32, i32
  }
  func.func @transform_5(%arg0: i32) -> (i32, i32, i32) {
    %c0_i32 = arith.constant 0 : i32
    %c0_i32_0 = arith.constant 0 : i32
    %c0_i32_1 = arith.constant 0 : i32
    return %arg0, %c0_i32, %c0_i32_0 : i32, i32, i32
  }
}

module attributes {stable_mosaic.version = 11 : i64} {
  func.func @_splice_kernel(%arg0: i32, %arg1: memref<4xi32, #tpu.memory_space<smem>>, %arg2: memref<4x16x128xbf16, #tpu.memory_space<vmem>>, %arg3: memref<4x128xbf16, #tpu.memory_space<vmem>>, %arg4: memref<16x128xbf16, #tpu.memory_space<vmem>>, %arg5: memref<4x16x128xbf16, #tpu.memory_space<vmem>>, %arg6: memref<4x16x128xbf16, #tpu.memory_space<vmem>>) attributes {dimension_semantics = [#tpu.dimension_semantics<parallel>], iteration_bounds = array<i64: 1>, scalar_prefetch = 1 : i64, scratch_operands = 0 : i64, tpu.core_type = #tpu.core_type<tc>, window_params = [{transform_indices = @transform_0, window_bounds = array<i64: 4, 16, 128>}, {pipeline_mode = #tpu.pipeline_mode<synchronous>, transform_indices = @transform_1, window_bounds = array<i64: 4, 128>}, {pipeline_mode = #tpu.pipeline_mode<synchronous>, transform_indices = @transform_2, window_bounds = array<i64: 16, 128>}, {transform_indices = @transform_3, window_bounds = array<i64: 4, 16, 128>}, {transform_indices = @transform_4, window_bounds = array<i64: 4, 16, 128>}]} {
    %c4_i32 = arith.constant 4 : i32
    %0 = arith.muli %arg0, %c4_i32 : i32
    %c0 = arith.constant 0 : index
    %c0_0 = arith.constant 0 : index
    %1 = vector.load %arg3[%c0, %c0_0] : memref<4x128xbf16, #tpu.memory_space<vmem>>, vector<4x128xbf16>
    %c0_1 = arith.constant 0 : index
    %c0_2 = arith.constant 0 : index
    %2 = vector.load %arg4[%c0_1, %c0_2] : memref<16x128xbf16, #tpu.memory_space<vmem>>, vector<16x128xbf16>
    %c0_i32 = arith.constant 0 : i32
    %3 = arith.addi %0, %c0_i32 : i32
    %4 = arith.index_cast %3 : i32 to index
    %5 = memref.load %arg1[%4] : memref<4xi32, #tpu.memory_space<smem>>
    %6 = tpu.iota {dimensions = array<i32: 0>} : vector<16x1xi32>
    %7 = vector.broadcast %5 : i32 to vector<16x1xi32>
    %8 = arith.subi %6, %7 : vector<16x1xi32>
    %c0_3 = arith.constant 0 : index
    %c0_4 = arith.constant 0 : index
    %c0_5 = arith.constant 0 : index
    %9 = vector.load %arg2[%c0_3, %c0_4, %c0_5] : memref<4x16x128xbf16, #tpu.memory_space<vmem>>, vector<1x16x128xbf16>
    %10 = vector.shape_cast %9 : vector<1x16x128xbf16> to vector<16x128xbf16>
    %11 = vector.extract_strided_slice %1 {offsets = [0, 0], sizes = [1, 128], strides = [1, 1]} : vector<4x128xbf16> to vector<1x128xbf16>
    %c0_i32_6 = arith.constant 0 : i32
    %12 = vector.broadcast %c0_i32_6 : i32 to vector<16x1xi32>
    %13 = arith.cmpi eq, %8, %12 : vector<16x1xi32>
    %14 = vector.shape_cast %13 : vector<16x1xi1> to vector<16x1xi1>
    %15 = vector.broadcast %14 : vector<16x1xi1> to vector<16x128xi1>
    %16 = vector.shape_cast %11 : vector<1x128xbf16> to vector<1x128xbf16>
    %17 = vector.broadcast %16 : vector<1x128xbf16> to vector<16x128xbf16>
    %18 = arith.select %15, %17, %10 : vector<16x128xi1>, vector<16x128xbf16>
    %19 = vector.extract_strided_slice %1 {offsets = [1, 0], sizes = [1, 128], strides = [1, 1]} : vector<4x128xbf16> to vector<1x128xbf16>
    %c1_i32 = arith.constant 1 : i32
    %20 = vector.broadcast %c1_i32 : i32 to vector<16x1xi32>
    %21 = arith.cmpi eq, %8, %20 : vector<16x1xi32>
    %22 = vector.shape_cast %21 : vector<16x1xi1> to vector<16x1xi1>
    %23 = vector.broadcast %22 : vector<16x1xi1> to vector<16x128xi1>
    %24 = vector.shape_cast %19 : vector<1x128xbf16> to vector<1x128xbf16>
    %25 = vector.broadcast %24 : vector<1x128xbf16> to vector<16x128xbf16>
    %26 = arith.select %23, %25, %18 : vector<16x128xi1>, vector<16x128xbf16>
    %27 = vector.extract_strided_slice %1 {offsets = [2, 0], sizes = [1, 128], strides = [1, 1]} : vector<4x128xbf16> to vector<1x128xbf16>
    %c2_i32 = arith.constant 2 : i32
    %28 = vector.broadcast %c2_i32 : i32 to vector<16x1xi32>
    %29 = arith.cmpi eq, %8, %28 : vector<16x1xi32>
    %30 = vector.shape_cast %29 : vector<16x1xi1> to vector<16x1xi1>
    %31 = vector.broadcast %30 : vector<16x1xi1> to vector<16x128xi1>
    %32 = vector.shape_cast %27 : vector<1x128xbf16> to vector<1x128xbf16>
    %33 = vector.broadcast %32 : vector<1x128xbf16> to vector<16x128xbf16>
    %34 = arith.select %31, %33, %26 : vector<16x128xi1>, vector<16x128xbf16>
    %35 = vector.extract_strided_slice %1 {offsets = [3, 0], sizes = [1, 128], strides = [1, 1]} : vector<4x128xbf16> to vector<1x128xbf16>
    %c3_i32 = arith.constant 3 : i32
    %36 = vector.broadcast %c3_i32 : i32 to vector<16x1xi32>
    %37 = arith.cmpi eq, %8, %36 : vector<16x1xi32>
    %38 = vector.shape_cast %37 : vector<16x1xi1> to vector<16x1xi1>
    %39 = vector.broadcast %38 : vector<16x1xi1> to vector<16x128xi1>
    %40 = vector.shape_cast %35 : vector<1x128xbf16> to vector<1x128xbf16>
    %41 = vector.broadcast %40 : vector<1x128xbf16> to vector<16x128xbf16>
    %42 = arith.select %39, %41, %34 : vector<16x128xi1>, vector<16x128xbf16>
    %c0_7 = arith.constant 0 : index
    %c0_8 = arith.constant 0 : index
    %c0_9 = arith.constant 0 : index
    %43 = vector.load %arg5[%c0_7, %c0_8, %c0_9] : memref<4x16x128xbf16, #tpu.memory_space<vmem>>, vector<1x16x128xbf16>
    %44 = vector.shape_cast %43 : vector<1x16x128xbf16> to vector<16x128xbf16>
    %45 = vector.shape_cast %42 : vector<16x128xbf16> to vector<1x16x128xbf16>
    tpu.vector_store %arg5[%c0_7, %c0_8, %c0_9], %45 {strides = array<i32>} : memref<4x16x128xbf16, #tpu.memory_space<vmem>>, vector<1x16x128xbf16>,
    %46 = arith.addf %42, %2 : vector<16x128xbf16>
    %c0_10 = arith.constant 0 : index
    %c0_11 = arith.constant 0 : index
    %c0_12 = arith.constant 0 : index
    %47 = vector.load %arg6[%c0_10, %c0_11, %c0_12] : memref<4x16x128xbf16, #tpu.memory_space<vmem>>, vector<1x16x128xbf16>
    %48 = vector.shape_cast %47 : vector<1x16x128xbf16> to vector<16x128xbf16>
    %49 = vector.shape_cast %46 : vector<16x128xbf16> to vector<1x16x128xbf16>
    tpu.vector_store %arg6[%c0_10, %c0_11, %c0_12], %49 {strides = array<i32>} : memref<4x16x128xbf16, #tpu.memory_space<vmem>>, vector<1x16x128xbf16>,
    %c1_i32_13 = arith.constant 1 : i32
    %50 = arith.addi %0, %c1_i32_13 : i32
    %51 = arith.index_cast %50 : i32 to index
    %52 = memref.load %arg1[%51] : memref<4xi32, #tpu.memory_space<smem>>
    %53 = tpu.iota {dimensions = array<i32: 0>} : vector<16x1xi32>
    %54 = vector.broadcast %52 : i32 to vector<16x1xi32>
    %55 = arith.subi %53, %54 : vector<16x1xi32>
    %c1 = arith.constant 1 : index
    %c0_14 = arith.constant 0 : index
    %c0_15 = arith.constant 0 : index
    %56 = vector.load %arg2[%c1, %c0_14, %c0_15] : memref<4x16x128xbf16, #tpu.memory_space<vmem>>, vector<1x16x128xbf16>
    %57 = vector.shape_cast %56 : vector<1x16x128xbf16> to vector<16x128xbf16>
    %58 = vector.extract_strided_slice %1 {offsets = [0, 0], sizes = [1, 128], strides = [1, 1]} : vector<4x128xbf16> to vector<1x128xbf16>
    %c0_i32_16 = arith.constant 0 : i32
    %59 = vector.broadcast %c0_i32_16 : i32 to vector<16x1xi32>
    %60 = arith.cmpi eq, %55, %59 : vector<16x1xi32>
    %61 = vector.shape_cast %60 : vector<16x1xi1> to vector<16x1xi1>
    %62 = vector.broadcast %61 : vector<16x1xi1> to vector<16x128xi1>
    %63 = vector.shape_cast %58 : vector<1x128xbf16> to vector<1x128xbf16>
    %64 = vector.broadcast %63 : vector<1x128xbf16> to vector<16x128xbf16>
    %65 = arith.select %62, %64, %57 : vector<16x128xi1>, vector<16x128xbf16>
    %66 = vector.extract_strided_slice %1 {offsets = [1, 0], sizes = [1, 128], strides = [1, 1]} : vector<4x128xbf16> to vector<1x128xbf16>
    %c1_i32_17 = arith.constant 1 : i32
    %67 = vector.broadcast %c1_i32_17 : i32 to vector<16x1xi32>
    %68 = arith.cmpi eq, %55, %67 : vector<16x1xi32>
    %69 = vector.shape_cast %68 : vector<16x1xi1> to vector<16x1xi1>
    %70 = vector.broadcast %69 : vector<16x1xi1> to vector<16x128xi1>
    %71 = vector.shape_cast %66 : vector<1x128xbf16> to vector<1x128xbf16>
    %72 = vector.broadcast %71 : vector<1x128xbf16> to vector<16x128xbf16>
    %73 = arith.select %70, %72, %65 : vector<16x128xi1>, vector<16x128xbf16>
    %74 = vector.extract_strided_slice %1 {offsets = [2, 0], sizes = [1, 128], strides = [1, 1]} : vector<4x128xbf16> to vector<1x128xbf16>
    %c2_i32_18 = arith.constant 2 : i32
    %75 = vector.broadcast %c2_i32_18 : i32 to vector<16x1xi32>
    %76 = arith.cmpi eq, %55, %75 : vector<16x1xi32>
    %77 = vector.shape_cast %76 : vector<16x1xi1> to vector<16x1xi1>
    %78 = vector.broadcast %77 : vector<16x1xi1> to vector<16x128xi1>
    %79 = vector.shape_cast %74 : vector<1x128xbf16> to vector<1x128xbf16>
    %80 = vector.broadcast %79 : vector<1x128xbf16> to vector<16x128xbf16>
    %81 = arith.select %78, %80, %73 : vector<16x128xi1>, vector<16x128xbf16>
    %82 = vector.extract_strided_slice %1 {offsets = [3, 0], sizes = [1, 128], strides = [1, 1]} : vector<4x128xbf16> to vector<1x128xbf16>
    %c3_i32_19 = arith.constant 3 : i32
    %83 = vector.broadcast %c3_i32_19 : i32 to vector<16x1xi32>
    %84 = arith.cmpi eq, %55, %83 : vector<16x1xi32>
    %85 = vector.shape_cast %84 : vector<16x1xi1> to vector<16x1xi1>
    %86 = vector.broadcast %85 : vector<16x1xi1> to vector<16x128xi1>
    %87 = vector.shape_cast %82 : vector<1x128xbf16> to vector<1x128xbf16>
    %88 = vector.broadcast %87 : vector<1x128xbf16> to vector<16x128xbf16>
    %89 = arith.select %86, %88, %81 : vector<16x128xi1>, vector<16x128xbf16>
    %c1_20 = arith.constant 1 : index
    %c0_21 = arith.constant 0 : index
    %c0_22 = arith.constant 0 : index
    %90 = vector.load %arg5[%c1_20, %c0_21, %c0_22] : memref<4x16x128xbf16, #tpu.memory_space<vmem>>, vector<1x16x128xbf16>
    %91 = vector.shape_cast %90 : vector<1x16x128xbf16> to vector<16x128xbf16>
    %92 = vector.shape_cast %89 : vector<16x128xbf16> to vector<1x16x128xbf16>
    tpu.vector_store %arg5[%c1_20, %c0_21, %c0_22], %92 {strides = array<i32>} : memref<4x16x128xbf16, #tpu.memory_space<vmem>>, vector<1x16x128xbf16>,
    %93 = arith.addf %89, %2 : vector<16x128xbf16>
    %c1_23 = arith.constant 1 : index
    %c0_24 = arith.constant 0 : index
    %c0_25 = arith.constant 0 : index
    %94 = vector.load %arg6[%c1_23, %c0_24, %c0_25] : memref<4x16x128xbf16, #tpu.memory_space<vmem>>, vector<1x16x128xbf16>
    %95 = vector.shape_cast %94 : vector<1x16x128xbf16> to vector<16x128xbf16>
    %96 = vector.shape_cast %93 : vector<16x128xbf16> to vector<1x16x128xbf16>
    tpu.vector_store %arg6[%c1_23, %c0_24, %c0_25], %96 {strides = array<i32>} : memref<4x16x128xbf16, #tpu.memory_space<vmem>>, vector<1x16x128xbf16>,
    %c2_i32_26 = arith.constant 2 : i32
    %97 = arith.addi %0, %c2_i32_26 : i32
    %98 = arith.index_cast %97 : i32 to index
    %99 = memref.load %arg1[%98] : memref<4xi32, #tpu.memory_space<smem>>
    %100 = tpu.iota {dimensions = array<i32: 0>} : vector<16x1xi32>
    %101 = vector.broadcast %99 : i32 to vector<16x1xi32>
    %102 = arith.subi %100, %101 : vector<16x1xi32>
    %c2 = arith.constant 2 : index
    %c0_27 = arith.constant 0 : index
    %c0_28 = arith.constant 0 : index
    %103 = vector.load %arg2[%c2, %c0_27, %c0_28] : memref<4x16x128xbf16, #tpu.memory_space<vmem>>, vector<1x16x128xbf16>
    %104 = vector.shape_cast %103 : vector<1x16x128xbf16> to vector<16x128xbf16>
    %105 = vector.extract_strided_slice %1 {offsets = [0, 0], sizes = [1, 128], strides = [1, 1]} : vector<4x128xbf16> to vector<1x128xbf16>
    %c0_i32_29 = arith.constant 0 : i32
    %106 = vector.broadcast %c0_i32_29 : i32 to vector<16x1xi32>
    %107 = arith.cmpi eq, %102, %106 : vector<16x1xi32>
    %108 = vector.shape_cast %107 : vector<16x1xi1> to vector<16x1xi1>
    %109 = vector.broadcast %108 : vector<16x1xi1> to vector<16x128xi1>
    %110 = vector.shape_cast %105 : vector<1x128xbf16> to vector<1x128xbf16>
    %111 = vector.broadcast %110 : vector<1x128xbf16> to vector<16x128xbf16>
    %112 = arith.select %109, %111, %104 : vector<16x128xi1>, vector<16x128xbf16>
    %113 = vector.extract_strided_slice %1 {offsets = [1, 0], sizes = [1, 128], strides = [1, 1]} : vector<4x128xbf16> to vector<1x128xbf16>
    %c1_i32_30 = arith.constant 1 : i32
    %114 = vector.broadcast %c1_i32_30 : i32 to vector<16x1xi32>
    %115 = arith.cmpi eq, %102, %114 : vector<16x1xi32>
    %116 = vector.shape_cast %115 : vector<16x1xi1> to vector<16x1xi1>
    %117 = vector.broadcast %116 : vector<16x1xi1> to vector<16x128xi1>
    %118 = vector.shape_cast %113 : vector<1x128xbf16> to vector<1x128xbf16>
    %119 = vector.broadcast %118 : vector<1x128xbf16> to vector<16x128xbf16>
    %120 = arith.select %117, %119, %112 : vector<16x128xi1>, vector<16x128xbf16>
    %121 = vector.extract_strided_slice %1 {offsets = [2, 0], sizes = [1, 128], strides = [1, 1]} : vector<4x128xbf16> to vector<1x128xbf16>
    %c2_i32_31 = arith.constant 2 : i32
    %122 = vector.broadcast %c2_i32_31 : i32 to vector<16x1xi32>
    %123 = arith.cmpi eq, %102, %122 : vector<16x1xi32>
    %124 = vector.shape_cast %123 : vector<16x1xi1> to vector<16x1xi1>
    %125 = vector.broadcast %124 : vector<16x1xi1> to vector<16x128xi1>
    %126 = vector.shape_cast %121 : vector<1x128xbf16> to vector<1x128xbf16>
    %127 = vector.broadcast %126 : vector<1x128xbf16> to vector<16x128xbf16>
    %128 = arith.select %125, %127, %120 : vector<16x128xi1>, vector<16x128xbf16>
    %129 = vector.extract_strided_slice %1 {offsets = [3, 0], sizes = [1, 128], strides = [1, 1]} : vector<4x128xbf16> to vector<1x128xbf16>
    %c3_i32_32 = arith.constant 3 : i32
    %130 = vector.broadcast %c3_i32_32 : i32 to vector<16x1xi32>
    %131 = arith.cmpi eq, %102, %130 : vector<16x1xi32>
    %132 = vector.shape_cast %131 : vector<16x1xi1> to vector<16x1xi1>
    %133 = vector.broadcast %132 : vector<16x1xi1> to vector<16x128xi1>
    %134 = vector.shape_cast %129 : vector<1x128xbf16> to vector<1x128xbf16>
    %135 = vector.broadcast %134 : vector<1x128xbf16> to vector<16x128xbf16>
    %136 = arith.select %133, %135, %128 : vector<16x128xi1>, vector<16x128xbf16>
    %c2_33 = arith.constant 2 : index
    %c0_34 = arith.constant 0 : index
    %c0_35 = arith.constant 0 : index
    %137 = vector.load %arg5[%c2_33, %c0_34, %c0_35] : memref<4x16x128xbf16, #tpu.memory_space<vmem>>, vector<1x16x128xbf16>
    %138 = vector.shape_cast %137 : vector<1x16x128xbf16> to vector<16x128xbf16>
    %139 = vector.shape_cast %136 : vector<16x128xbf16> to vector<1x16x128xbf16>
    tpu.vector_store %arg5[%c2_33, %c0_34, %c0_35], %139 {strides = array<i32>} : memref<4x16x128xbf16, #tpu.memory_space<vmem>>, vector<1x16x128xbf16>,
    %140 = arith.addf %136, %2 : vector<16x128xbf16>
    %c2_36 = arith.constant 2 : index
    %c0_37 = arith.constant 0 : index
    %c0_38 = arith.constant 0 : index
    %141 = vector.load %arg6[%c2_36, %c0_37, %c0_38] : memref<4x16x128xbf16, #tpu.memory_space<vmem>>, vector<1x16x128xbf16>
    %142 = vector.shape_cast %141 : vector<1x16x128xbf16> to vector<16x128xbf16>
    %143 = vector.shape_cast %140 : vector<16x128xbf16> to vector<1x16x128xbf16>
    tpu.vector_store %arg6[%c2_36, %c0_37, %c0_38], %143 {strides = array<i32>} : memref<4x16x128xbf16, #tpu.memory_space<vmem>>, vector<1x16x128xbf16>,
    %c3_i32_39 = arith.constant 3 : i32
    %144 = arith.addi %0, %c3_i32_39 : i32
    %145 = arith.index_cast %144 : i32 to index
    %146 = memref.load %arg1[%145] : memref<4xi32, #tpu.memory_space<smem>>
    %147 = tpu.iota {dimensions = array<i32: 0>} : vector<16x1xi32>
    %148 = vector.broadcast %146 : i32 to vector<16x1xi32>
    %149 = arith.subi %147, %148 : vector<16x1xi32>
    %c3 = arith.constant 3 : index
    %c0_40 = arith.constant 0 : index
    %c0_41 = arith.constant 0 : index
    %150 = vector.load %arg2[%c3, %c0_40, %c0_41] : memref<4x16x128xbf16, #tpu.memory_space<vmem>>, vector<1x16x128xbf16>
    %151 = vector.shape_cast %150 : vector<1x16x128xbf16> to vector<16x128xbf16>
    %152 = vector.extract_strided_slice %1 {offsets = [0, 0], sizes = [1, 128], strides = [1, 1]} : vector<4x128xbf16> to vector<1x128xbf16>
    %c0_i32_42 = arith.constant 0 : i32
    %153 = vector.broadcast %c0_i32_42 : i32 to vector<16x1xi32>
    %154 = arith.cmpi eq, %149, %153 : vector<16x1xi32>
    %155 = vector.shape_cast %154 : vector<16x1xi1> to vector<16x1xi1>
    %156 = vector.broadcast %155 : vector<16x1xi1> to vector<16x128xi1>
    %157 = vector.shape_cast %152 : vector<1x128xbf16> to vector<1x128xbf16>
    %158 = vector.broadcast %157 : vector<1x128xbf16> to vector<16x128xbf16>
    %159 = arith.select %156, %158, %151 : vector<16x128xi1>, vector<16x128xbf16>
    %160 = vector.extract_strided_slice %1 {offsets = [1, 0], sizes = [1, 128], strides = [1, 1]} : vector<4x128xbf16> to vector<1x128xbf16>
    %c1_i32_43 = arith.constant 1 : i32
    %161 = vector.broadcast %c1_i32_43 : i32 to vector<16x1xi32>
    %162 = arith.cmpi eq, %149, %161 : vector<16x1xi32>
    %163 = vector.shape_cast %162 : vector<16x1xi1> to vector<16x1xi1>
    %164 = vector.broadcast %163 : vector<16x1xi1> to vector<16x128xi1>
    %165 = vector.shape_cast %160 : vector<1x128xbf16> to vector<1x128xbf16>
    %166 = vector.broadcast %165 : vector<1x128xbf16> to vector<16x128xbf16>
    %167 = arith.select %164, %166, %159 : vector<16x128xi1>, vector<16x128xbf16>
    %168 = vector.extract_strided_slice %1 {offsets = [2, 0], sizes = [1, 128], strides = [1, 1]} : vector<4x128xbf16> to vector<1x128xbf16>
    %c2_i32_44 = arith.constant 2 : i32
    %169 = vector.broadcast %c2_i32_44 : i32 to vector<16x1xi32>
    %170 = arith.cmpi eq, %149, %169 : vector<16x1xi32>
    %171 = vector.shape_cast %170 : vector<16x1xi1> to vector<16x1xi1>
    %172 = vector.broadcast %171 : vector<16x1xi1> to vector<16x128xi1>
    %173 = vector.shape_cast %168 : vector<1x128xbf16> to vector<1x128xbf16>
    %174 = vector.broadcast %173 : vector<1x128xbf16> to vector<16x128xbf16>
    %175 = arith.select %172, %174, %167 : vector<16x128xi1>, vector<16x128xbf16>
    %176 = vector.extract_strided_slice %1 {offsets = [3, 0], sizes = [1, 128], strides = [1, 1]} : vector<4x128xbf16> to vector<1x128xbf16>
    %c3_i32_45 = arith.constant 3 : i32
    %177 = vector.broadcast %c3_i32_45 : i32 to vector<16x1xi32>
    %178 = arith.cmpi eq, %149, %177 : vector<16x1xi32>
    %179 = vector.shape_cast %178 : vector<16x1xi1> to vector<16x1xi1>
    %180 = vector.broadcast %179 : vector<16x1xi1> to vector<16x128xi1>
    %181 = vector.shape_cast %176 : vector<1x128xbf16> to vector<1x128xbf16>
    %182 = vector.broadcast %181 : vector<1x128xbf16> to vector<16x128xbf16>
    %183 = arith.select %180, %182, %175 : vector<16x128xi1>, vector<16x128xbf16>
    %c3_46 = arith.constant 3 : index
    %c0_47 = arith.constant 0 : index
    %c0_48 = arith.constant 0 : index
    %184 = vector.load %arg5[%c3_46, %c0_47, %c0_48] : memref<4x16x128xbf16, #tpu.memory_space<vmem>>, vector<1x16x128xbf16>
    %185 = vector.shape_cast %184 : vector<1x16x128xbf16> to vector<16x128xbf16>
    %186 = vector.shape_cast %183 : vector<16x128xbf16> to vector<1x16x128xbf16>
    tpu.vector_store %arg5[%c3_46, %c0_47, %c0_48], %186 {strides = array<i32>} : memref<4x16x128xbf16, #tpu.memory_space<vmem>>, vector<1x16x128xbf16>,
    %187 = arith.addf %183, %2 : vector<16x128xbf16>
    %c3_49 = arith.constant 3 : index
    %c0_50 = arith.constant 0 : index
    %c0_51 = arith.constant 0 : index
    %188 = vector.load %arg6[%c3_49, %c0_50, %c0_51] : memref<4x16x128xbf16, #tpu.memory_space<vmem>>, vector<1x16x128xbf16>
    %189 = vector.shape_cast %188 : vector<1x16x128xbf16> to vector<16x128xbf16>
    %190 = vector.shape_cast %187 : vector<16x128xbf16> to vector<1x16x128xbf16>
    tpu.vector_store %arg6[%c3_49, %c0_50, %c0_51], %190 {strides = array<i32>} : memref<4x16x128xbf16, #tpu.memory_space<vmem>>, vector<1x16x128xbf16>,
    return
  }
  func.func @transform_0(%arg0: i32, %arg1: memref<4xi32, #tpu.memory_space<smem>>) -> (i32, i32, i32) {
    %c0_i32 = arith.constant 0 : i32
    %c0_i32_0 = arith.constant 0 : i32
    %c0_i32_1 = arith.constant 0 : i32
    return %arg0, %c0_i32, %c0_i32_0 : i32, i32, i32
  }
  func.func @transform_1(%arg0: i32, %arg1: memref<4xi32, #tpu.memory_space<smem>>) -> (i32, i32) {
    %c0_i32 = arith.constant 0 : i32
    %c0_i32_0 = arith.constant 0 : i32
    %c0_i32_1 = arith.constant 0 : i32
    return %c0_i32, %c0_i32_0 : i32, i32
  }
  func.func @transform_2(%arg0: i32, %arg1: memref<4xi32, #tpu.memory_space<smem>>) -> (i32, i32) {
    %c0_i32 = arith.constant 0 : i32
    %c0_i32_0 = arith.constant 0 : i32
    %c0_i32_1 = arith.constant 0 : i32
    return %c0_i32, %c0_i32_0 : i32, i32
  }
  func.func @transform_3(%arg0: i32, %arg1: memref<4xi32, #tpu.memory_space<smem>>) -> (i32, i32, i32) {
    %c0_i32 = arith.constant 0 : i32
    %c0_i32_0 = arith.constant 0 : i32
    %c0_i32_1 = arith.constant 0 : i32
    return %arg0, %c0_i32, %c0_i32_0 : i32, i32, i32
  }
  func.func @transform_4(%arg0: i32, %arg1: memref<4xi32, #tpu.memory_space<smem>>) -> (i32, i32, i32) {
    %c0_i32 = arith.constant 0 : i32
    %c0_i32_0 = arith.constant 0 : i32
    %c0_i32_1 = arith.constant 0 : i32
    return %arg0, %c0_i32, %c0_i32_0 : i32, i32, i32
  }
}

module attributes {stable_mosaic.version = 11 : i64} {
  func.func @_mlp_kernel(%arg0: i32, %arg1: memref<64x128xbf16, #tpu.memory_space<vmem>>, %arg2: memref<1x128xbf16, #tpu.memory_space<vmem>>, %arg3: memref<1x128xbf16, #tpu.memory_space<vmem>>, %arg4: memref<128x512xbf16, #tpu.memory_space<vmem>>, %arg5: memref<1x512xbf16, #tpu.memory_space<vmem>>, %arg6: memref<512x128xbf16, #tpu.memory_space<vmem>>, %arg7: memref<1x128xbf16, #tpu.memory_space<vmem>>, %arg8: memref<64x128xbf16, #tpu.memory_space<vmem>>) attributes {dimension_semantics = [#tpu.dimension_semantics<parallel>], iteration_bounds = array<i64: 1>, scalar_prefetch = 0 : i64, scratch_operands = 0 : i64, tpu.core_type = #tpu.core_type<tc>, window_params = [{transform_indices = @transform_0, window_bounds = array<i64: 64, 128>}, {pipeline_mode = #tpu.pipeline_mode<synchronous>, transform_indices = @transform_1, window_bounds = array<i64: 1, 128>}, {pipeline_mode = #tpu.pipeline_mode<synchronous>, transform_indices = @transform_2, window_bounds = array<i64: 1, 128>}, {pipeline_mode = #tpu.pipeline_mode<synchronous>, transform_indices = @transform_3, window_bounds = array<i64: 128, 512>}, {pipeline_mode = #tpu.pipeline_mode<synchronous>, transform_indices = @transform_4, window_bounds = array<i64: 1, 512>}, {pipeline_mode = #tpu.pipeline_mode<synchronous>, transform_indices = @transform_5, window_bounds = array<i64: 512, 128>}, {pipeline_mode = #tpu.pipeline_mode<synchronous>, transform_indices = @transform_6, window_bounds = array<i64: 1, 128>}, {transform_indices = @transform_7, window_bounds = array<i64: 64, 128>}]} {
    %c0 = arith.constant 0 : index
    %c0_0 = arith.constant 0 : index
    %0 = vector.load %arg1[%c0, %c0_0] : memref<64x128xbf16, #tpu.memory_space<vmem>>, vector<64x128xbf16>
    %1 = arith.extf %0 : vector<64x128xbf16> to vector<64x128xf32>
    %cst = arith.constant dense<0.000000e+00> : vector<64xf32>
    %2 = vector.multi_reduction <add>, %1, %cst [1] : vector<64x128xf32> to vector<64xf32>
    %3 = vector.shape_cast %2 : vector<64xf32> to vector<64x1xf32>
    %cst_1 = arith.constant 1.280000e+02 : f32
    %4 = vector.broadcast %cst_1 : f32 to vector<64x1xf32>
    %5 = arith.divf %3, %4 : vector<64x1xf32>
    %6 = vector.broadcast %5 : vector<64x1xf32> to vector<64x128xf32>
    %7 = arith.subf %1, %6 : vector<64x128xf32>
    %8 = arith.mulf %7, %7 : vector<64x128xf32>
    %cst_2 = arith.constant dense<0.000000e+00> : vector<64xf32>
    %9 = vector.multi_reduction <add>, %8, %cst_2 [1] : vector<64x128xf32> to vector<64xf32>
    %10 = vector.shape_cast %9 : vector<64xf32> to vector<64x1xf32>
    %cst_3 = arith.constant 1.280000e+02 : f32
    %11 = vector.broadcast %cst_3 : f32 to vector<64x1xf32>
    %12 = arith.divf %10, %11 : vector<64x1xf32>
    %cst_4 = arith.constant 9.99999974E-6 : f32
    %13 = vector.broadcast %cst_4 : f32 to vector<64x1xf32>
    %14 = arith.addf %12, %13 : vector<64x1xf32>
    %15 = math.rsqrt %14 : vector<64x1xf32>
    %16 = vector.broadcast %15 : vector<64x1xf32> to vector<64x128xf32>
    %17 = arith.mulf %7, %16 : vector<64x128xf32>
    %c0_5 = arith.constant 0 : index
    %c0_6 = arith.constant 0 : index
    %18 = vector.load %arg2[%c0_5, %c0_6] : memref<1x128xbf16, #tpu.memory_space<vmem>>, vector<1x128xbf16>
    %19 = arith.extf %18 : vector<1x128xbf16> to vector<1x128xf32>
    %20 = vector.broadcast %19 : vector<1x128xf32> to vector<64x128xf32>
    %21 = arith.mulf %17, %20 : vector<64x128xf32>
    %c0_7 = arith.constant 0 : index
    %c0_8 = arith.constant 0 : index
    %22 = vector.load %arg3[%c0_7, %c0_8] : memref<1x128xbf16, #tpu.memory_space<vmem>>, vector<1x128xbf16>
    %23 = arith.extf %22 : vector<1x128xbf16> to vector<1x128xf32>
    %24 = vector.broadcast %23 : vector<1x128xf32> to vector<64x128xf32>
    %25 = arith.addf %21, %24 : vector<64x128xf32>
    %26 = arith.truncf %25 : vector<64x128xf32> to vector<64x128xbf16>
    %c0_9 = arith.constant 0 : index
    %c0_10 = arith.constant 0 : index
    %27 = vector.load %arg4[%c0_9, %c0_10] : memref<128x512xbf16, #tpu.memory_space<vmem>>, vector<128x512xbf16>
    %cst_11 = arith.constant dense<0.000000e+00> : vector<64x512xf32>
    %28 = tpu.matmul %26, %27, %cst_11 {dimension_numbers = #tpu.dot_dimension_numbers<[1], [0], [0], [1], [0, 0, 1, 1], [], []>} : vector<64x128xbf16>, vector<128x512xbf16>, vector<64x512xf32> -> vector<64x512xf32>
    %c0_12 = arith.constant 0 : index
    %c0_13 = arith.constant 0 : index
    %29 = vector.load %arg5[%c0_12, %c0_13] : memref<1x512xbf16, #tpu.memory_space<vmem>>, vector<1x512xbf16>
    %30 = arith.extf %29 : vector<1x512xbf16> to vector<1x512xf32>
    %31 = vector.broadcast %30 : vector<1x512xf32> to vector<64x512xf32>
    %32 = arith.addf %28, %31 : vector<64x512xf32>
    %cst_14 = arith.constant 1.702000e+00 : f32
    %33 = vector.broadcast %cst_14 : f32 to vector<64x512xf32>
    %34 = arith.mulf %33, %32 : vector<64x512xf32>
    %35 = arith.negf %34 : vector<64x512xf32>
    %36 = math.exp %35 : vector<64x512xf32>
    %cst_15 = arith.constant 1.000000e+00 : f32
    %37 = vector.broadcast %cst_15 : f32 to vector<64x512xf32>
    %38 = arith.addf %37, %36 : vector<64x512xf32>
    %39 = arith.divf %37, %38 : vector<64x512xf32>
    %40 = arith.mulf %32, %39 : vector<64x512xf32>
    %41 = arith.truncf %40 : vector<64x512xf32> to vector<64x512xbf16>
    %c0_16 = arith.constant 0 : index
    %c0_17 = arith.constant 0 : index
    %42 = vector.load %arg6[%c0_16, %c0_17] : memref<512x128xbf16, #tpu.memory_space<vmem>>, vector<512x128xbf16>
    %cst_18 = arith.constant dense<0.000000e+00> : vector<64x128xf32>
    %43 = tpu.matmul %41, %42, %cst_18 {dimension_numbers = #tpu.dot_dimension_numbers<[1], [0], [0], [1], [0, 0, 1, 1], [], []>} : vector<64x512xbf16>, vector<512x128xbf16>, vector<64x128xf32> -> vector<64x128xf32>
    %c0_19 = arith.constant 0 : index
    %c0_20 = arith.constant 0 : index
    %44 = vector.load %arg7[%c0_19, %c0_20] : memref<1x128xbf16, #tpu.memory_space<vmem>>, vector<1x128xbf16>
    %45 = arith.extf %44 : vector<1x128xbf16> to vector<1x128xf32>
    %46 = vector.broadcast %45 : vector<1x128xf32> to vector<64x128xf32>
    %47 = arith.addf %43, %46 : vector<64x128xf32>
    %48 = arith.addf %47, %1 : vector<64x128xf32>
    %49 = arith.truncf %48 : vector<64x128xf32> to vector<64x128xbf16>
    %c0_21 = arith.constant 0 : index
    %c0_22 = arith.constant 0 : index
    %50 = vector.load %arg8[%c0_21, %c0_22] : memref<64x128xbf16, #tpu.memory_space<vmem>>, vector<64x128xbf16>
    tpu.vector_store %arg8[%c0_21, %c0_22], %49 {strides = array<i32>} : memref<64x128xbf16, #tpu.memory_space<vmem>>, vector<64x128xbf16>,
    return
  }
  func.func @transform_0(%arg0: i32) -> (i32, i32) {
    %c0_i32 = arith.constant 0 : i32
    %c0_i32_0 = arith.constant 0 : i32
    return %arg0, %c0_i32 : i32, i32
  }
  func.func @transform_1(%arg0: i32) -> (i32, i32) {
    %c0_i32 = arith.constant 0 : i32
    %c0_i32_0 = arith.constant 0 : i32
    %c0_i32_1 = arith.constant 0 : i32
    return %c0_i32, %c0_i32_0 : i32, i32
  }
  func.func @transform_2(%arg0: i32) -> (i32, i32) {
    %c0_i32 = arith.constant 0 : i32
    %c0_i32_0 = arith.constant 0 : i32
    %c0_i32_1 = arith.constant 0 : i32
    return %c0_i32, %c0_i32_0 : i32, i32
  }
  func.func @transform_3(%arg0: i32) -> (i32, i32) {
    %c0_i32 = arith.constant 0 : i32
    %c0_i32_0 = arith.constant 0 : i32
    %c0_i32_1 = arith.constant 0 : i32
    return %c0_i32, %c0_i32_0 : i32, i32
  }
  func.func @transform_4(%arg0: i32) -> (i32, i32) {
    %c0_i32 = arith.constant 0 : i32
    %c0_i32_0 = arith.constant 0 : i32
    %c0_i32_1 = arith.constant 0 : i32
    return %c0_i32, %c0_i32_0 : i32, i32
  }
  func.func @transform_5(%arg0: i32) -> (i32, i32) {
    %c0_i32 = arith.constant 0 : i32
    %c0_i32_0 = arith.constant 0 : i32
    %c0_i32_1 = arith.constant 0 : i32
    return %c0_i32, %c0_i32_0 : i32, i32
  }
  func.func @transform_6(%arg0: i32) -> (i32, i32) {
    %c0_i32 = arith.constant 0 : i32
    %c0_i32_0 = arith.constant 0 : i32
    %c0_i32_1 = arith.constant 0 : i32
    return %c0_i32, %c0_i32_0 : i32, i32
  }
  func.func @transform_7(%arg0: i32) -> (i32, i32) {
    %c0_i32 = arith.constant 0 : i32
    %c0_i32_0 = arith.constant 0 : i32
    return %arg0, %c0_i32 : i32, i32
  }
}

module attributes {stable_mosaic.version = 11 : i64} {
  func.func @_ln_linear_kernel(%arg0: i32, %arg1: memref<64x128xbf16, #tpu.memory_space<vmem>>, %arg2: memref<1x128xbf16, #tpu.memory_space<vmem>>, %arg3: memref<1x128xbf16, #tpu.memory_space<vmem>>, %arg4: memref<128x384xbf16, #tpu.memory_space<vmem>>, %arg5: memref<1x384xbf16, #tpu.memory_space<vmem>>, %arg6: memref<64x384xbf16, #tpu.memory_space<vmem>>) attributes {dimension_semantics = [#tpu.dimension_semantics<parallel>], iteration_bounds = array<i64: 1>, scalar_prefetch = 0 : i64, scratch_operands = 0 : i64, tpu.core_type = #tpu.core_type<tc>, window_params = [{transform_indices = @transform_0, window_bounds = array<i64: 64, 128>}, {pipeline_mode = #tpu.pipeline_mode<synchronous>, transform_indices = @transform_1, window_bounds = array<i64: 1, 128>}, {pipeline_mode = #tpu.pipeline_mode<synchronous>, transform_indices = @transform_2, window_bounds = array<i64: 1, 128>}, {pipeline_mode = #tpu.pipeline_mode<synchronous>, transform_indices = @transform_3, window_bounds = array<i64: 128, 384>}, {pipeline_mode = #tpu.pipeline_mode<synchronous>, transform_indices = @transform_4, window_bounds = array<i64: 1, 384>}, {transform_indices = @transform_5, window_bounds = array<i64: 64, 384>}]} {
    %c0 = arith.constant 0 : index
    %c0_0 = arith.constant 0 : index
    %0 = vector.load %arg1[%c0, %c0_0] : memref<64x128xbf16, #tpu.memory_space<vmem>>, vector<64x128xbf16>
    %1 = arith.extf %0 : vector<64x128xbf16> to vector<64x128xf32>
    %cst = arith.constant dense<0.000000e+00> : vector<64xf32>
    %2 = vector.multi_reduction <add>, %1, %cst [1] : vector<64x128xf32> to vector<64xf32>
    %3 = vector.shape_cast %2 : vector<64xf32> to vector<64x1xf32>
    %cst_1 = arith.constant 1.280000e+02 : f32
    %4 = vector.broadcast %cst_1 : f32 to vector<64x1xf32>
    %5 = arith.divf %3, %4 : vector<64x1xf32>
    %6 = vector.broadcast %5 : vector<64x1xf32> to vector<64x128xf32>
    %7 = arith.subf %1, %6 : vector<64x128xf32>
    %8 = arith.mulf %7, %7 : vector<64x128xf32>
    %cst_2 = arith.constant dense<0.000000e+00> : vector<64xf32>
    %9 = vector.multi_reduction <add>, %8, %cst_2 [1] : vector<64x128xf32> to vector<64xf32>
    %10 = vector.shape_cast %9 : vector<64xf32> to vector<64x1xf32>
    %cst_3 = arith.constant 1.280000e+02 : f32
    %11 = vector.broadcast %cst_3 : f32 to vector<64x1xf32>
    %12 = arith.divf %10, %11 : vector<64x1xf32>
    %cst_4 = arith.constant 9.99999974E-6 : f32
    %13 = vector.broadcast %cst_4 : f32 to vector<64x1xf32>
    %14 = arith.addf %12, %13 : vector<64x1xf32>
    %15 = math.rsqrt %14 : vector<64x1xf32>
    %16 = vector.broadcast %15 : vector<64x1xf32> to vector<64x128xf32>
    %17 = arith.mulf %7, %16 : vector<64x128xf32>
    %c0_5 = arith.constant 0 : index
    %c0_6 = arith.constant 0 : index
    %18 = vector.load %arg2[%c0_5, %c0_6] : memref<1x128xbf16, #tpu.memory_space<vmem>>, vector<1x128xbf16>
    %19 = arith.extf %18 : vector<1x128xbf16> to vector<1x128xf32>
    %20 = vector.broadcast %19 : vector<1x128xf32> to vector<64x128xf32>
    %21 = arith.mulf %17, %20 : vector<64x128xf32>
    %c0_7 = arith.constant 0 : index
    %c0_8 = arith.constant 0 : index
    %22 = vector.load %arg3[%c0_7, %c0_8] : memref<1x128xbf16, #tpu.memory_space<vmem>>, vector<1x128xbf16>
    %23 = arith.extf %22 : vector<1x128xbf16> to vector<1x128xf32>
    %24 = vector.broadcast %23 : vector<1x128xf32> to vector<64x128xf32>
    %25 = arith.addf %21, %24 : vector<64x128xf32>
    %26 = arith.truncf %25 : vector<64x128xf32> to vector<64x128xbf16>
    %c0_9 = arith.constant 0 : index
    %c0_10 = arith.constant 0 : index
    %27 = vector.load %arg4[%c0_9, %c0_10] : memref<128x384xbf16, #tpu.memory_space<vmem>>, vector<128x384xbf16>
    %cst_11 = arith.constant dense<0.000000e+00> : vector<64x384xf32>
    %28 = tpu.matmul %26, %27, %cst_11 {dimension_numbers = #tpu.dot_dimension_numbers<[1], [0], [0], [1], [0, 0, 1, 1], [], []>} : vector<64x128xbf16>, vector<128x384xbf16>, vector<64x384xf32> -> vector<64x384xf32>
    %c0_12 = arith.constant 0 : index
    %c0_13 = arith.constant 0 : index
    %29 = vector.load %arg5[%c0_12, %c0_13] : memref<1x384xbf16, #tpu.memory_space<vmem>>, vector<1x384xbf16>
    %30 = arith.extf %29 : vector<1x384xbf16> to vector<1x384xf32>
    %31 = vector.broadcast %30 : vector<1x384xf32> to vector<64x384xf32>
    %32 = arith.addf %28, %31 : vector<64x384xf32>
    %33 = arith.truncf %32 : vector<64x384xf32> to vector<64x384xbf16>
    %c0_14 = arith.constant 0 : index
    %c0_15 = arith.constant 0 : index
    %34 = vector.load %arg6[%c0_14, %c0_15] : memref<64x384xbf16, #tpu.memory_space<vmem>>, vector<64x384xbf16>
    tpu.vector_store %arg6[%c0_14, %c0_15], %33 {strides = array<i32>} : memref<64x384xbf16, #tpu.memory_space<vmem>>, vector<64x384xbf16>,
    return
  }
  func.func @transform_0(%arg0: i32) -> (i32, i32) {
    %c0_i32 = arith.constant 0 : i32
    %c0_i32_0 = arith.constant 0 : i32
    return %arg0, %c0_i32 : i32, i32
  }
  func.func @transform_1(%arg0: i32) -> (i32, i32) {
    %c0_i32 = arith.constant 0 : i32
    %c0_i32_0 = arith.constant 0 : i32
    %c0_i32_1 = arith.constant 0 : i32
    return %c0_i32, %c0_i32_0 : i32, i32
  }
  func.func @transform_2(%arg0: i32) -> (i32, i32) {
    %c0_i32 = arith.constant 0 : i32
    %c0_i32_0 = arith.constant 0 : i32
    %c0_i32_1 = arith.constant 0 : i32
    return %c0_i32, %c0_i32_0 : i32, i32
  }
  func.func @transform_3(%arg0: i32) -> (i32, i32) {
    %c0_i32 = arith.constant 0 : i32
    %c0_i32_0 = arith.constant 0 : i32
    %c0_i32_1 = arith.constant 0 : i32
    return %c0_i32, %c0_i32_0 : i32, i32
  }
  func.func @transform_4(%arg0: i32) -> (i32, i32) {
    %c0_i32 = arith.constant 0 : i32
    %c0_i32_0 = arith.constant 0 : i32
    %c0_i32_1 = arith.constant 0 : i32
    return %c0_i32, %c0_i32_0 : i32, i32
  }
  func.func @transform_5(%arg0: i32) -> (i32, i32) {
    %c0_i32 = arith.constant 0 : i32
    %c0_i32_0 = arith.constant 0 : i32
    return %arg0, %c0_i32 : i32, i32
  }
}

module attributes {stable_mosaic.version = 11 : i64} {
  func.func @_ln_proj_kernel(%arg0: memref<4x128xbf16, #tpu.memory_space<vmem>>, %arg1: memref<1x128xbf16, #tpu.memory_space<vmem>>, %arg2: memref<1x128xbf16, #tpu.memory_space<vmem>>, %arg3: memref<128x128xbf16, #tpu.memory_space<vmem>>, %arg4: memref<4x128xbf16, #tpu.memory_space<vmem>>) attributes {dimension_semantics = [], scalar_prefetch = 0 : i64, scratch_operands = 0 : i64, tpu.core_type = #tpu.core_type<tc>} {
    %c0 = arith.constant 0 : index
    %c0_0 = arith.constant 0 : index
    %0 = vector.load %arg0[%c0, %c0_0] : memref<4x128xbf16, #tpu.memory_space<vmem>>, vector<4x128xbf16>
    %1 = arith.extf %0 : vector<4x128xbf16> to vector<4x128xf32>
    %cst = arith.constant dense<0.000000e+00> : vector<4xf32>
    %2 = vector.multi_reduction <add>, %1, %cst [1] : vector<4x128xf32> to vector<4xf32>
    %3 = vector.shape_cast %2 : vector<4xf32> to vector<4x1xf32>
    %cst_1 = arith.constant 1.280000e+02 : f32
    %4 = vector.broadcast %cst_1 : f32 to vector<4x1xf32>
    %5 = arith.divf %3, %4 : vector<4x1xf32>
    %6 = vector.broadcast %5 : vector<4x1xf32> to vector<4x128xf32>
    %7 = arith.subf %1, %6 : vector<4x128xf32>
    %8 = arith.mulf %7, %7 : vector<4x128xf32>
    %cst_2 = arith.constant dense<0.000000e+00> : vector<4xf32>
    %9 = vector.multi_reduction <add>, %8, %cst_2 [1] : vector<4x128xf32> to vector<4xf32>
    %10 = vector.shape_cast %9 : vector<4xf32> to vector<4x1xf32>
    %cst_3 = arith.constant 1.280000e+02 : f32
    %11 = vector.broadcast %cst_3 : f32 to vector<4x1xf32>
    %12 = arith.divf %10, %11 : vector<4x1xf32>
    %cst_4 = arith.constant 9.99999974E-6 : f32
    %13 = vector.broadcast %cst_4 : f32 to vector<4x1xf32>
    %14 = arith.addf %12, %13 : vector<4x1xf32>
    %15 = math.rsqrt %14 : vector<4x1xf32>
    %16 = vector.broadcast %15 : vector<4x1xf32> to vector<4x128xf32>
    %17 = arith.mulf %7, %16 : vector<4x128xf32>
    %c0_5 = arith.constant 0 : index
    %c0_6 = arith.constant 0 : index
    %18 = vector.load %arg1[%c0_5, %c0_6] : memref<1x128xbf16, #tpu.memory_space<vmem>>, vector<1x128xbf16>
    %19 = arith.extf %18 : vector<1x128xbf16> to vector<1x128xf32>
    %20 = vector.broadcast %19 : vector<1x128xf32> to vector<4x128xf32>
    %21 = arith.mulf %17, %20 : vector<4x128xf32>
    %c0_7 = arith.constant 0 : index
    %c0_8 = arith.constant 0 : index
    %22 = vector.load %arg2[%c0_7, %c0_8] : memref<1x128xbf16, #tpu.memory_space<vmem>>, vector<1x128xbf16>
    %23 = arith.extf %22 : vector<1x128xbf16> to vector<1x128xf32>
    %24 = vector.broadcast %23 : vector<1x128xf32> to vector<4x128xf32>
    %25 = arith.addf %21, %24 : vector<4x128xf32>
    %26 = arith.truncf %25 : vector<4x128xf32> to vector<4x128xbf16>
    %c0_9 = arith.constant 0 : index
    %c0_10 = arith.constant 0 : index
    %27 = vector.load %arg3[%c0_9, %c0_10] : memref<128x128xbf16, #tpu.memory_space<vmem>>, vector<128x128xbf16>
    %cst_11 = arith.constant dense<0.000000e+00> : vector<4x128xf32>
    %28 = tpu.matmul %26, %27, %cst_11 {dimension_numbers = #tpu.dot_dimension_numbers<[1], [0], [0], [1], [0, 0, 1, 1], [], []>} : vector<4x128xbf16>, vector<128x128xbf16>, vector<4x128xf32> -> vector<4x128xf32>
    %29 = arith.truncf %28 : vector<4x128xf32> to vector<4x128xbf16>
    %c0_12 = arith.constant 0 : index
    %c0_13 = arith.constant 0 : index
    %30 = vector.load %arg4[%c0_12, %c0_13] : memref<4x128xbf16, #tpu.memory_space<vmem>>, vector<4x128xbf16>
    tpu.vector_store %arg4[%c0_12, %c0_13], %29 {strides = array<i32>} : memref<4x128xbf16, #tpu.memory_space<vmem>>, vector<4x128xbf16>,
    return
  }
}

</mosaic_0001>

<llo_original>
// kernel: full_forward.8
$region0: #{full_forward.8}
  #allocation0 [shape = 'u32[]', space=smem, size = 0x4, offset = 0x4, fixed_abs, tag = 'smem constant byte address 0x4 - core index']
  #allocation1 [shape = 'u32[144,128]{1,0:T(1,128)}', space=vmem, size = 0x12000, scoped, tag = 'internal scratch']
  #allocation2 [shape = 's32[1]{0}', space=sflag, size = 0x4, scoped, tag = 'scoped memory for full_forward.8']
  #allocation3 [shape = 'u8[512]{0}', space=smem, size = 0x200, scoped, tag = 'prefetched SMEM operand 0']
  %s0 = inlined_call_operand.vmem [shape: s32[4], index: 0, kind: input, shape index: {}]
  %s1 = inlined_call_operand.vmem [shape: bf16[4,16,128], index: 1, kind: input, shape index: {}]
  %s2 = inlined_call_operand.vmem [shape: bf16[4,128], index: 2, kind: input, shape index: {}]
  %s3 = inlined_call_operand.vmem [shape: bf16[16,128], index: 3, kind: input, shape index: {}]
  %s4 = inlined_call_operand.hbm [shape: bf16[4,16,128], index: 4, kind: output, shape index: {0}]
  %s5 = inlined_call_operand.vmem [shape: bf16[4,16,128], index: 5, kind: output, shape index: {1}]
  %6 = xla_tuple %s4, %s5
  %s7 = sld [smem:[#allocation0]]
  $region30: #{full_forward.8} parent=0
    _
  %s9 = ssub.s32 1, %s7
  %s10 = scalar_select 0, %s9, %s7
  %s11 = sshll.u32 %s0, 4
  %s12 = int_to_ptr.vmem [resolvable:$true] %s11
  %14 = dma.vmem_to_smem %s12, 16, [#allocation3], [#allocation2]
  %15 = dma.done [#allocation2], 16
  %16 = sfence
  $region1: #{full_forward.8} parent=0
    #allocation4 [shape = 'u8[16384]{0}', space=vmem, size = 0x4000, scoped, tag = 'output window, operand 0, single buffered']
    #allocation5 [shape = 's32[1]{0}', space=sflag, size = 0x4, scoped, tag = 'scoped memory for full_forward.8']
    %17 = vsyncpa [#allocation5], 0
    // Predicated region
    $region2: #{full_forward.8} parent=1 // pred_check
      _
    $region3: #{full_forward.8} parent=1 // pred_check_branch
      %19 = sbr.rel (0) target = $region5
    $region4: #{full_forward.8} parent=1 // pred_region
      _
    $region5: #{full_forward.8} parent=1 // pred_fallthru
      _
    // Predicated region
    $region6: #{full_forward.8} parent=1 // pred_check
      _
    $region7: #{full_forward.8} parent=1 // pred_check_branch
      %21 = sbr.rel (0) target = $region9
    $region8: #{full_forward.8} parent=1 // pred_region
      _
    $region9: #{full_forward.8} parent=1 // pred_fallthru
      _
    // Predicated region
    $region10: #{full_forward.8} parent=1 // pred_check
      _
    $region11: #{full_forward.8} parent=1 // pred_check_branch
      %23 = sbr.rel (0) target = $region13
    $region12: #{full_forward.8} parent=1 // pred_region
      _
    $region13: #{full_forward.8} parent=1 // pred_fallthru
      _
    %s26 = smul.u32 0, 4
    %v27 = vld [vmem:[%s2] sm:$0x3]
    %v28 = vld [vmem:[%s3] sm:$0xf]
    %v29 = vld [vmem:[%s3 + $0x4] sm:$0xf]
    %s30 = sld [smem:[#allocation3 + %s26]]
    %v31 = vlaneseq
    %v32 = vshrl.u32 %v31, 7
    %v33 = vadd.s32 %v32, 8
    %v34 = vstv %s30
    %v35 = vsub.s32 %v32, %v34
    %v36 = vsub.s32 %v33, %v34
    %v37 = vld [vmem:[%s1] sm:$0xf]
    %v38 = vld [vmem:[%s1 + $0x4] sm:$0xf]
    %vm39 = vcmp.eq.s32.totalorder %v35, 0
    %vm40 = vcmp.eq.s32.totalorder %v36, 0
    %v41 = vsel %vm39, 1, 0
    %v42 = vsel %vm40, 1, 0
    %vm43 = vcmp.eq.s32.totalorder %v41, 1
    %vm44 = vcmp.eq.s32.totalorder %v42, 1
    %v46 = vpack.i.b16 %v27, %v27
    %v48 = vlaneseq
    %v49 = vshrl.u32 %v48, 7
    %v50 = vsub.s32 0, %v49
    %v51 = vrot.slane %v46, %v50
    %vm52 = vmpackc.low %vm43, %vm43
    %vm53 = vmpackc.low %vm44, %vm44
    %v54 = vsel %vm52, 65537, 0
    %v55 = vsel %vm53, 65537, 0
    %v56 = vunpack.c.l.b16 %v54
    %v57 = vunpack.c.l.b16 %v55
    %v58 = vpack.c.b16 %v57, %v56
    %vm59 = vcmp.ne.s16.totalorder %v58, 0
    %v62 = vunpack.c.l.b16 %v37
    %v63 = vunpack.c.l.b16 %v38
    %v64 = vpack.c.b16 %v63, %v62
    %v66 = vsel %vm59, %v51, %v64
    %vm67 = vcmp.eq.s32.totalorder %v35, 1
    %vm68 = vcmp.eq.s32.totalorder %v36, 1
    %v69 = vsel %vm67, 1, 0
    %v70 = vsel %vm68, 1, 0
    %vm71 = vcmp.eq.s32.totalorder %v69, 1
    %vm72 = vcmp.eq.s32.totalorder %v70, 1
    %v73 = vshrl.u32 %v27, 16
    %v74 = vpack.i.b16 %v73, %v73
    %v76 = vlaneseq
    %v77 = vshrl.u32 %v76, 7
    %v78 = vsub.s32 0, %v77
    %v79 = vrot.slane %v74, %v78
    %vm80 = vmpackc.low %vm71, %vm71
    %vm81 = vmpackc.low %vm72, %vm72
    %v82 = vsel %vm80, 65537, 0
    %v83 = vsel %vm81, 65537, 0
    %v84 = vunpack.c.l.b16 %v82
    %v85 = vunpack.c.l.b16 %v83
    %v86 = vpack.c.b16 %v85, %v84
    %vm87 = vcmp.ne.s16.totalorder %v86, 0
    %v88 = vsel %vm87, %v79, %v66
    %vm89 = vcmp.eq.s32.totalorder %v35, 2
    %vm90 = vcmp.eq.s32.totalorder %v36, 2
    %v91 = vsel %vm89, 1, 0
    %v92 = vsel %vm90, 1, 0
    %vm93 = vcmp.eq.s32.totalorder %v91, 1
    %vm94 = vcmp.eq.s32.totalorder %v92, 1
    %v95 = vlaneseq
    %v96 = vshrl.u32 %v95, 7
    %v97 = vsub.s32 1, %v96
    %v98 = vrot.slane %v46, %v97
    %vm99 = vmpackc.low %vm93, %vm93
    %vm100 = vmpackc.low %vm94, %vm94
    %v101 = vsel %vm99, 65537, 0
    %v102 = vsel %vm100, 65537, 0
    %v103 = vunpack.c.l.b16 %v101
    %v104 = vunpack.c.l.b16 %v102
    %v105 = vpack.c.b16 %v104, %v103
    %vm106 = vcmp.ne.s16.totalorder %v105, 0
    %v107 = vsel %vm106, %v98, %v88
    %vm108 = vcmp.eq.s32.totalorder %v35, 3
    %vm109 = vcmp.eq.s32.totalorder %v36, 3
    %v110 = vsel %vm108, 1, 0
    %v111 = vsel %vm109, 1, 0
    %vm112 = vcmp.eq.s32.totalorder %v110, 1
    %vm113 = vcmp.eq.s32.totalorder %v111, 1
    %v114 = vlaneseq
    %v115 = vshrl.u32 %v114, 7
    %v116 = vsub.s32 1, %v115
    %v117 = vrot.slane %v74, %v116
    %vm118 = vmpackc.low %vm112, %vm112
    %vm119 = vmpackc.low %vm113, %vm113
    %v120 = vsel %vm118, 65537, 0
    %v121 = vsel %vm119, 65537, 0
    %v122 = vunpack.c.l.b16 %v120
    %v123 = vunpack.c.l.b16 %v121
    %v124 = vpack.c.b16 %v123, %v122
    %vm125 = vcmp.ne.s16.totalorder %v124, 0
    %v126 = vsel %vm125, %v117, %v107
    %v128 = vunpack.c.l.b16 %v126
    %v129 = vunpack.c.h.b16 %v126
    %v130 = vpack.c.b16 %v128, %v128
    %v131 = vpack.c.b16 %v129, %v129
    %134 = vst [vmem:[#allocation4] sm:$0xf] %v130
    %135 = vst [vmem:[#allocation4 + $0x4] sm:$0xf] %v131
    %v138 = vunpack.c.l.b16 %v28
    %v139 = vunpack.c.l.b16 %v29
    %v140 = vpack.c.b16 %v139, %v138
    %v142 = vadd.bf16 %v126, %v140
    %v144 = vunpack.c.l.b16 %v142
    %v145 = vunpack.c.h.b16 %v142
    %v146 = vpack.c.b16 %v144, %v144
    %v147 = vpack.c.b16 %v145, %v145
    %150 = vst [vmem:[%s5] sm:$0xf] %v146
    %151 = vst [vmem:[%s5 + $0x4] sm:$0xf] %v147
    %s152 = sadd.s32 %s26, 1
    %s153 = sld [smem:[#allocation3 + %s152]]
    %v154 = vstv %s153
    %v155 = vsub.s32 %v32, %v154
    %v156 = vsub.s32 %v33, %v154
    %s157 = scalar_lea.vmem %s1, 8
    %v158 = vld [vmem:[%s157] sm:$0xf]
    %v159 = vld [vmem:[%s157 + $0x4] sm:$0xf]
    %vm160 = vcmp.eq.s32.totalorder %v155, 0
    %vm161 = vcmp.eq.s32.totalorder %v156, 0
    %v162 = vsel %vm160, 1, 0
    %v163 = vsel %vm161, 1, 0
    %vm164 = vcmp.eq.s32.totalorder %v162, 1
    %vm165 = vcmp.eq.s32.totalorder %v163, 1
    %vm166 = vmpackc.low %vm164, %vm164
    %vm167 = vmpackc.low %vm165, %vm165
    %v168 = vsel %vm166, 65537, 0
    %v169 = vsel %vm167, 65537, 0
    %v170 = vunpack.c.l.b16 %v168
    %v171 = vunpack.c.l.b16 %v169
    %v172 = vpack.c.b16 %v171, %v170
    %vm173 = vcmp.ne.s16.totalorder %v172, 0
    %v176 = vunpack.c.l.b16 %v158
    %v177 = vunpack.c.l.b16 %v159
    %v178 = vpack.c.b16 %v177, %v176
    %v180 = vsel %vm173, %v51, %v178
    %vm181 = vcmp.eq.s32.totalorder %v155, 1
    %vm182 = vcmp.eq.s32.totalorder %v156, 1
    %v183 = vsel %vm181, 1, 0
    %v184 = vsel %vm182, 1, 0
    %vm185 = vcmp.eq.s32.totalorder %v183, 1
    %vm186 = vcmp.eq.s32.totalorder %v184, 1
    %vm187 = vmpackc.low %vm185, %vm185
    %vm188 = vmpackc.low %vm186, %vm186
    %v189 = vsel %vm187, 65537, 0
    %v190 = vsel %vm188, 65537, 0
    %v191 = vunpack.c.l.b16 %v189
    %v192 = vunpack.c.l.b16 %v190
    %v193 = vpack.c.b16 %v192, %v191
    %vm194 = vcmp.ne.s16.totalorder %v193, 0
    %v195 = vsel %vm194, %v79, %v180
    %vm196 = vcmp.eq.s32.totalorder %v155, 2
    %vm197 = vcmp.eq.s32.totalorder %v156, 2
    %v198 = vsel %vm196, 1, 0
    %v199 = vsel %vm197, 1, 0
    %vm200 = vcmp.eq.s32.totalorder %v198, 1
    %vm201 = vcmp.eq.s32.totalorder %v199, 1
    %vm202 = vmpackc.low %vm200, %vm200
    %vm203 = vmpackc.low %vm201, %vm201
    %v204 = vsel %vm202, 65537, 0
    %v205 = vsel %vm203, 65537, 0
    %v206 = vunpack.c.l.b16 %v204
    %v207 = vunpack.c.l.b16 %v205
    %v208 = vpack.c.b16 %v207, %v206
    %vm209 = vcmp.ne.s16.totalorder %v208, 0
    %v210 = vsel %vm209, %v98, %v195
    %vm211 = vcmp.eq.s32.totalorder %v155, 3
    %vm212 = vcmp.eq.s32.totalorder %v156, 3
    %v213 = vsel %vm211, 1, 0
    %v214 = vsel %vm212, 1, 0
    %vm215 = vcmp.eq.s32.totalorder %v213, 1
    %vm216 = vcmp.eq.s32.totalorder %v214, 1
    %vm217 = vmpackc.low %vm215, %vm215
    %vm218 = vmpackc.low %vm216, %vm216
    %v219 = vsel %vm217, 65537, 0
    %v220 = vsel %vm218, 65537, 0
    %v221 = vunpack.c.l.b16 %v219
    %v222 = vunpack.c.l.b16 %v220
    %v223 = vpack.c.b16 %v222, %v221
    %vm224 = vcmp.ne.s16.totalorder %v223, 0
    %v225 = vsel %vm224, %v117, %v210
    %v227 = vunpack.c.l.b16 %v225
    %v228 = vunpack.c.h.b16 %v225
    %v229 = vpack.c.b16 %v227, %v227
    %v230 = vpack.c.b16 %v228, %v228
    %s233 = scalar_lea.vmem [#allocation4], 8
    %234 = vst [vmem:[%s233] sm:$0xf] %v229
    %235 = vst [vmem:[%s233 + $0x4] sm:$0xf] %v230
    %v236 = vadd.bf16 %v225, %v140
    %v238 = vunpack.c.l.b16 %v236
    %v239 = vunpack.c.h.b16 %v236
    %v240 = vpack.c.b16 %v238, %v238
    %v241 = vpack.c.b16 %v239, %v239
    %s244 = scalar_lea.vmem %s5, 8
    %245 = vst [vmem:[%s244] sm:$0xf] %v240
    %246 = vst [vmem:[%s244 + $0x4] sm:$0xf] %v241
    %s247 = sadd.s32 %s26, 2
    %s248 = sld [smem:[#allocation3 + %s247]]
    %v249 = vstv %s248
    %v250 = vsub.s32 %v32, %v249
    %v251 = vsub.s32 %v33, %v249
    %s252 = scalar_lea.vmem %s1, 16
    %v253 = vld [vmem:[%s252] sm:$0xf]
    %v254 = vld [vmem:[%s252 + $0x4] sm:$0xf]
    %vm255 = vcmp.eq.s32.totalorder %v250, 0
    %vm256 = vcmp.eq.s32.totalorder %v251, 0
    %v257 = vsel %vm255, 1, 0
    %v258 = vsel %vm256, 1, 0
    %vm259 = vcmp.eq.s32.totalorder %v257, 1
    %vm260 = vcmp.eq.s32.totalorder %v258, 1
    %vm261 = vmpackc.low %vm259, %vm259
    %vm262 = vmpackc.low %vm260, %vm260
    %v263 = vsel %vm261, 65537, 0
    %v264 = vsel %vm262, 65537, 0
    %v265 = vunpack.c.l.b16 %v263
    %v266 = vunpack.c.l.b16 %v264
    %v267 = vpack.c.b16 %v266, %v265
    %vm268 = vcmp.ne.s16.totalorder %v267, 0
    %v271 = vunpack.c.l.b16 %v253
    %v272 = vunpack.c.l.b16 %v254
    %v273 = vpack.c.b16 %v272, %v271
    %v275 = vsel %vm268, %v51, %v273
    %vm276 = vcmp.eq.s32.totalorder %v250, 1
    %vm277 = vcmp.eq.s32.totalorder %v251, 1
    %v278 = vsel %vm276, 1, 0
    %v279 = vsel %vm277, 1, 0
    %vm280 = vcmp.eq.s32.totalorder %v278, 1
    %vm281 = vcmp.eq.s32.totalorder %v279, 1
    %vm282 = vmpackc.low %vm280, %vm280
    %vm283 = vmpackc.low %vm281, %vm281
    %v284 = vsel %vm282, 65537, 0
    %v285 = vsel %vm283, 65537, 0
    %v286 = vunpack.c.l.b16 %v284
    %v287 = vunpack.c.l.b16 %v285
    %v288 = vpack.c.b16 %v287, %v286
    %vm289 = vcmp.ne.s16.totalorder %v288, 0
    %v290 = vsel %vm289, %v79, %v275
    %vm291 = vcmp.eq.s32.totalorder %v250, 2
    %vm292 = vcmp.eq.s32.totalorder %v251, 2
    %v293 = vsel %vm291, 1, 0
    %v294 = vsel %vm292, 1, 0
    %vm295 = vcmp.eq.s32.totalorder %v293, 1
    %vm296 = vcmp.eq.s32.totalorder %v294, 1
    %vm297 = vmpackc.low %vm295, %vm295
    %vm298 = vmpackc.low %vm296, %vm296
    %v299 = vsel %vm297, 65537, 0
    %v300 = vsel %vm298, 65537, 0
    %v301 = vunpack.c.l.b16 %v299
    %v302 = vunpack.c.l.b16 %v300
    %v303 = vpack.c.b16 %v302, %v301
    %vm304 = vcmp.ne.s16.totalorder %v303, 0
    %v305 = vsel %vm304, %v98, %v290
    %vm306 = vcmp.eq.s32.totalorder %v250, 3
    %vm307 = vcmp.eq.s32.totalorder %v251, 3
    %v308 = vsel %vm306, 1, 0
    %v309 = vsel %vm307, 1, 0
    %vm310 = vcmp.eq.s32.totalorder %v308, 1
    %vm311 = vcmp.eq.s32.totalorder %v309, 1
    %vm312 = vmpackc.low %vm310, %vm310
    %vm313 = vmpackc.low %vm311, %vm311
    %v314 = vsel %vm312, 65537, 0
    %v315 = vsel %vm313, 65537, 0
    %v316 = vunpack.c.l.b16 %v314
    %v317 = vunpack.c.l.b16 %v315
    %v318 = vpack.c.b16 %v317, %v316
    %vm319 = vcmp.ne.s16.totalorder %v318, 0
    %v320 = vsel %vm319, %v117, %v305
    %v322 = vunpack.c.l.b16 %v320
    %v323 = vunpack.c.h.b16 %v320
    %v324 = vpack.c.b16 %v322, %v322
    %v325 = vpack.c.b16 %v323, %v323
    %s328 = scalar_lea.vmem [#allocation4], 16
    %329 = vst [vmem:[%s328] sm:$0xf] %v324
    %330 = vst [vmem:[%s328 + $0x4] sm:$0xf] %v325
    %v331 = vadd.bf16 %v320, %v140
    %v333 = vunpack.c.l.b16 %v331
    %v334 = vunpack.c.h.b16 %v331
    %v335 = vpack.c.b16 %v333, %v333
    %v336 = vpack.c.b16 %v334, %v334
    %s339 = scalar_lea.vmem %s5, 16
    %340 = vst [vmem:[%s339] sm:$0xf] %v335
    %341 = vst [vmem:[%s339 + $0x4] sm:$0xf] %v336
    %s342 = sadd.s32 %s26, 3
    %s343 = sld [smem:[#allocation3 + %s342]]
    %v344 = vstv %s343
    %v345 = vsub.s32 %v32, %v344
    %v346 = vsub.s32 %v33, %v344
    %s347 = scalar_lea.vmem %s1, 24
    %v348 = vld [vmem:[%s347] sm:$0xf]
    %v349 = vld [vmem:[%s347 + $0x4] sm:$0xf]
    %vm350 = vcmp.eq.s32.totalorder %v345, 0
    %vm351 = vcmp.eq.s32.totalorder %v346, 0
    %v352 = vsel %vm350, 1, 0
    %v353 = vsel %vm351, 1, 0
    %vm354 = vcmp.eq.s32.totalorder %v352, 1
    %vm355 = vcmp.eq.s32.totalorder %v353, 1
    %vm356 = vmpackc.low %vm354, %vm354
    %vm357 = vmpackc.low %vm355, %vm355
    %v358 = vsel %vm356, 65537, 0
    %v359 = vsel %vm357, 65537, 0
    %v360 = vunpack.c.l.b16 %v358
    %v361 = vunpack.c.l.b16 %v359
    %v362 = vpack.c.b16 %v361, %v360
    %vm363 = vcmp.ne.s16.totalorder %v362, 0
    %v366 = vunpack.c.l.b16 %v348
    %v367 = vunpack.c.l.b16 %v349
    %v368 = vpack.c.b16 %v367, %v366
    %v370 = vsel %vm363, %v51, %v368
    %vm371 = vcmp.eq.s32.totalorder %v345, 1
    %vm372 = vcmp.eq.s32.totalorder %v346, 1
    %v373 = vsel %vm371, 1, 0
    %v374 = vsel %vm372, 1, 0
    %vm375 = vcmp.eq.s32.totalorder %v373, 1
    %vm376 = vcmp.eq.s32.totalorder %v374, 1
    %vm377 = vmpackc.low %vm375, %vm375
    %vm378 = vmpackc.low %vm376, %vm376
    %v379 = vsel %vm377, 65537, 0
    %v380 = vsel %vm378, 65537, 0
    %v381 = vunpack.c.l.b16 %v379
    %v382 = vunpack.c.l.b16 %v380
    %v383 = vpack.c.b16 %v382, %v381
    %vm384 = vcmp.ne.s16.totalorder %v383, 0
    %v385 = vsel %vm384, %v79, %v370
    %vm386 = vcmp.eq.s32.totalorder %v345, 2
    %vm387 = vcmp.eq.s32.totalorder %v346, 2
    %v388 = vsel %vm386, 1, 0
    %v389 = vsel %vm387, 1, 0
    %vm390 = vcmp.eq.s32.totalorder %v388, 1
    %vm391 = vcmp.eq.s32.totalorder %v389, 1
    %vm392 = vmpackc.low %vm390, %vm390
    %vm393 = vmpackc.low %vm391, %vm391
    %v394 = vsel %vm392, 65537, 0
    %v395 = vsel %vm393, 65537, 0
    %v396 = vunpack.c.l.b16 %v394
    %v397 = vunpack.c.l.b16 %v395
    %v398 = vpack.c.b16 %v397, %v396
    %vm399 = vcmp.ne.s16.totalorder %v398, 0
    %v400 = vsel %vm399, %v98, %v385
    %vm401 = vcmp.eq.s32.totalorder %v345, 3
    %vm402 = vcmp.eq.s32.totalorder %v346, 3
    %v403 = vsel %vm401, 1, 0
    %v404 = vsel %vm402, 1, 0
    %vm405 = vcmp.eq.s32.totalorder %v403, 1
    %vm406 = vcmp.eq.s32.totalorder %v404, 1
    %vm407 = vmpackc.low %vm405, %vm405
    %vm408 = vmpackc.low %vm406, %vm406
    %v409 = vsel %vm407, 65537, 0
    %v410 = vsel %vm408, 65537, 0
    %v411 = vunpack.c.l.b16 %v409
    %v412 = vunpack.c.l.b16 %v410
    %v413 = vpack.c.b16 %v412, %v411
    %vm414 = vcmp.ne.s16.totalorder %v413, 0
    %v415 = vsel %vm414, %v117, %v400
    %v417 = vunpack.c.l.b16 %v415
    %v418 = vunpack.c.h.b16 %v415
    %v419 = vpack.c.b16 %v417, %v417
    %v420 = vpack.c.b16 %v418, %v418
    %s423 = scalar_lea.vmem [#allocation4], 24
    %424 = vst [vmem:[%s423] sm:$0xf] %v419
    %425 = vst [vmem:[%s423 + $0x4] sm:$0xf] %v420
    %v426 = vadd.bf16 %v415, %v140
    %v428 = vunpack.c.l.b16 %v426
    %v429 = vunpack.c.h.b16 %v426
    %v430 = vpack.c.b16 %v428, %v428
    %v431 = vpack.c.b16 %v429, %v429
    %s434 = scalar_lea.vmem %s5, 24
    %435 = vst [vmem:[%s434] sm:$0xf] %v430
    %436 = vst [vmem:[%s434 + $0x4] sm:$0xf] %v431
    // Predicated region
    $region14: #{full_forward.8} parent=1 // pred_check
      _
    $region15: #{full_forward.8} parent=1 // pred_check_branch
      %438 = sbr.rel (0) target = $region17
    $region16: #{full_forward.8} parent=1 // pred_region
      %s440 = ssub.s32 512, 512
      %441 = vsyncadd [#allocation5], %s440
      %s442 = sshll.u32 [#allocation4], 4
      %s443 = int_to_ptr.vmem [resolvable:$true] %s442
      %448 = dma.vmem_to_hbm [thread:$0]  %s443, 512, %s4, [#allocation5], 64, 64, 4
    $region17: #{full_forward.8} parent=1 // pred_fallthru
      _
    // Predicated region
    $region18: #{full_forward.8} parent=1 // pred_check
      _
    $region19: #{full_forward.8} parent=1 // pred_check_branch
      %450 = sbr.rel (0) target = $region21
    $region20: #{full_forward.8} parent=1 // pred_region
      _
    $region21: #{full_forward.8} parent=1 // pred_fallthru
      _
    // Predicated region
    $region22: #{full_forward.8} parent=1 // pred_check
      _
    $region23: #{full_forward.8} parent=1 // pred_check_branch
      %452 = sbr.rel (0) target = $region25
    $region24: #{full_forward.8} parent=1 // pred_region
      %453 = dma.done [#allocation5], 512
    $region25: #{full_forward.8} parent=1 // pred_fallthru
      _
    // Predicated region
    $region26: #{full_forward.8} parent=1 // pred_check
      _
    $region27: #{full_forward.8} parent=1 // pred_check_branch
      %455 = sbr.rel (0) target = $region29
    $region28: #{full_forward.8} parent=1 // pred_region
      _
    $region29: #{full_forward.8} parent=1 // pred_fallthru
      _
    %456 = vsyncpa [#allocation5], 1

// kernel: full_forward.9
$region0: #{full_forward.9}
  #allocation0 [shape = 'u32[]', space=smem, size = 0x4, offset = 0x4, fixed_abs, tag = 'smem constant byte address 0x4 - core index']
  #allocation1 [shape = 'u32[144,128]{1,0:T(1,128)}', space=vmem, size = 0x12000, scoped, tag = 'internal scratch']
  %s0 = inlined_call_operand.vmem [shape: bf16[64,128], index: 0, kind: input, shape index: {}]
  %s1 = inlined_call_operand.vmem [shape: bf16[1,128], index: 1, kind: input, shape index: {}]
  %s2 = inlined_call_operand.vmem [shape: bf16[1,128], index: 2, kind: input, shape index: {}]
  %s3 = inlined_call_operand.hbm [shape: bf16[128,384], index: 3, kind: input, shape index: {}]
  %s4 = inlined_call_operand.vmem [shape: bf16[1,384], index: 4, kind: input, shape index: {}]
  %s5 = inlined_call_operand.vmem [shape: bf16[64,384], index: 5, kind: output, shape index: {}]
  %s6 = sld [smem:[#allocation0]]
  $region34: #{full_forward.9} parent=0
    _
  %s8 = ssub.s32 1, %s6
  %s9 = scalar_select 0, %s8, %s6
  $region1: #{full_forward.9} parent=0
    #allocation2 [shape = 'u8[98304]{0}', space=vmem, size = 0x18000, scoped, tag = 'input window, operand 3, single buffered']
    #allocation3 [shape = 's32[1]{0}', space=sflag, size = 0x4, scoped, tag = 'scoped memory for full_forward.9']
    %10 = vsyncpa [#allocation3], 0
    // Predicated region
    $region2: #{full_forward.9} parent=1 // pred_check
      _
    $region3: #{full_forward.9} parent=1 // pred_check_branch
      %12 = sbr.rel (0) target = $region5
    $region4: #{full_forward.9} parent=1 // pred_region
      _
    $region5: #{full_forward.9} parent=1 // pred_fallthru
      _
    // Predicated region
    $region6: #{full_forward.9} parent=1 // pred_check
      _
    $region7: #{full_forward.9} parent=1 // pred_check_branch
      %14 = sbr.rel (0) target = $region9
    $region8: #{full_forward.9} parent=1 // pred_region
      _
    $region9: #{full_forward.9} parent=1 // pred_fallthru
      _
    // Predicated region
    $region10: #{full_forward.9} parent=1 // pred_check
      _
    $region11: #{full_forward.9} parent=1 // pred_check_branch
      %16 = sbr.rel (0) target = $region13
    $region12: #{full_forward.9} parent=1 // pred_region
      _
    $region13: #{full_forward.9} parent=1 // pred_fallthru
      _
    // Predicated region
    $region14: #{full_forward.9} parent=1 // pred_check
      _
    $region15: #{full_forward.9} parent=1 // pred_check_branch
      %18 = sbr.rel (0) target = $region17
    $region16: #{full_forward.9} parent=1 // pred_region
      %s20 = ssub.s32 3072, 3072
      %21 = vsyncadd [#allocation3], %s20
      %s22 = sshll.u32 [#allocation2], 4
      %s23 = int_to_ptr.vmem [resolvable:$true] %s22
      %28 = dma.hbm_to_vmem [thread:$0]  %s3, 3072, %s23, [#allocation3], 192, 192, 12
    $region17: #{full_forward.9} parent=1 // pred_fallthru
      _
    // Predicated region
    $region18: #{full_forward.9} parent=1 // pred_check
      _
    $region19: #{full_forward.9} parent=1 // pred_check_branch
      %30 = sbr.rel (0) target = $region21
    $region20: #{full_forward.9} parent=1 // pred_region
      _
    $region21: #{full_forward.9} parent=1 // pred_fallthru
      _
    // Predicated region
    $region22: #{full_forward.9} parent=1 // pred_check
      _
    $region23: #{full_forward.9} parent=1 // pred_check_branch
      %32 = sbr.rel (0) target = $region25
    $region24: #{full_forward.9} parent=1 // pred_region
      %33 = dma.done [#allocation3], 3072
    $region25: #{full_forward.9} parent=1 // pred_fallthru
      _
    %v35 = vld [vmem:[%s0] sm:$0xf]
    %v36 = vld [vmem:[%s0 + $0x4] sm:$0xf]
    %v37 = vld [vmem:[%s0 + $0x8] sm:$0xf]
    %v38 = vld [vmem:[%s0 + $0xc] sm:$0xf]
    %v39 = vld [vmem:[%s0 + $0x10] sm:$0xf]
    %v40 = vld [vmem:[%s0 + $0x14] sm:$0xf]
    %v41 = vld [vmem:[%s0 + $0x18] sm:$0xf]
    %v42 = vld [vmem:[%s0 + $0x1c] sm:$0xf]
    %v43 = vunpack.c.l.bf16 %v35
    %v44 = vunpack.c.l.bf16 %v36
    %v45 = vunpack.c.l.bf16 %v37
    %v46 = vunpack.c.l.bf16 %v38
    %v47 = vunpack.c.l.bf16 %v39
    %v48 = vunpack.c.l.bf16 %v40
    %v49 = vunpack.c.l.bf16 %v41
    %v50 = vunpack.c.l.bf16 %v42
    %51 = vadd.xlane.f32.xlu0 %v43
    %v52 = vpop.xlane.xlu0 %51
    %53 = vadd.xlane.f32.xlu0 %v44
    %v54 = vpop.xlane.xlu0 %53
    %55 = vadd.xlane.f32.xlu0 %v45
    %v56 = vpop.xlane.xlu0 %55
    %57 = vadd.xlane.f32.xlu0 %v46
    %v58 = vpop.xlane.xlu0 %57
    %59 = vadd.xlane.f32.xlu0 %v47
    %v60 = vpop.xlane.xlu0 %59
    %61 = vadd.xlane.f32.xlu0 %v48
    %v62 = vpop.xlane.xlu0 %61
    %63 = vadd.xlane.f32.xlu0 %v49
    %v64 = vpop.xlane.xlu0 %63
    %65 = vadd.xlane.f32.xlu0 %v50
    %v66 = vpop.xlane.xlu0 %65
    %v67 = vrcp.pop 128.0
    %v68 = vmul.f32 %v52, %v67
    %v69 = vmul.f32 %v54, %v67
    %v70 = vmul.f32 %v56, %v67
    %v71 = vmul.f32 %v58, %v67
    %v72 = vmul.f32 %v60, %v67
    %v73 = vmul.f32 %v62, %v67
    %v74 = vmul.f32 %v64, %v67
    %v75 = vmul.f32 %v66, %v67
    %v76 = vsub.f32 %v43, %v68
    %v77 = vsub.f32 %v44, %v69
    %v78 = vsub.f32 %v45, %v70
    %v79 = vsub.f32 %v46, %v71
    %v80 = vsub.f32 %v47, %v72
    %v81 = vsub.f32 %v48, %v73
    %v82 = vsub.f32 %v49, %v74
    %v83 = vsub.f32 %v50, %v75
    %v84 = vmul.f32 %v76, %v76
    %v85 = vmul.f32 %v77, %v77
    %v86 = vmul.f32 %v78, %v78
    %v87 = vmul.f32 %v79, %v79
    %v88 = vmul.f32 %v80, %v80
    %v89 = vmul.f32 %v81, %v81
    %v90 = vmul.f32 %v82, %v82
    %v91 = vmul.f32 %v83, %v83
    %92 = vadd.xlane.f32.xlu0 %v84
    %v93 = vpop.xlane.xlu0 %92
    %94 = vadd.xlane.f32.xlu0 %v85
    %v95 = vpop.xlane.xlu0 %94
    %96 = vadd.xlane.f32.xlu0 %v86
    %v97 = vpop.xlane.xlu0 %96
    %98 = vadd.xlane.f32.xlu0 %v87
    %v99 = vpop.xlane.xlu0 %98
    %100 = vadd.xlane.f32.xlu0 %v88
    %v101 = vpop.xlane.xlu0 %100
    %102 = vadd.xlane.f32.xlu0 %v89
    %v103 = vpop.xlane.xlu0 %102
    %104 = vadd.xlane.f32.xlu0 %v90
    %v105 = vpop.xlane.xlu0 %104
    %106 = vadd.xlane.f32.xlu0 %v91
    %v107 = vpop.xlane.xlu0 %106
    %v108 = vmul.f32 %v93, %v67
    %v109 = vmul.f32 %v95, %v67
    %v110 = vmul.f32 %v97, %v67
    %v111 = vmul.f32 %v99, %v67
    %v112 = vmul.f32 %v101, %v67
    %v113 = vmul.f32 %v103, %v67
    %v114 = vmul.f32 %v105, %v67
    %v115 = vmul.f32 %v107, %v67
    %v116 = vadd.f32 %v108, 1e-05
    %v117 = vadd.f32 %v109, 1e-05
    %v118 = vadd.f32 %v110, 1e-05
    %v119 = vadd.f32 %v111, 1e-05
    %v120 = vadd.f32 %v112, 1e-05
    %v121 = vadd.f32 %v113, 1e-05
    %v122 = vadd.f32 %v114, 1e-05
    %v123 = vadd.f32 %v115, 1e-05
    %v124 = vrsqrt.pop %v116
    %v125 = vrsqrt.pop %v117
    %v126 = vrsqrt.pop %v118
    %v127 = vrsqrt.pop %v119
    %v128 = vrsqrt.pop %v120
    %v129 = vrsqrt.pop %v121
    %v130 = vrsqrt.pop %v122
    %v131 = vrsqrt.pop %v123
    %v132 = vmul.f32 %v76, %v124
    %v133 = vmul.f32 %v77, %v125
    %v134 = vmul.f32 %v78, %v126
    %v135 = vmul.f32 %v79, %v127
    %v136 = vmul.f32 %v80, %v128
    %v137 = vmul.f32 %v81, %v129
    %v138 = vmul.f32 %v82, %v130
    %v139 = vmul.f32 %v83, %v131
    %v140 = vld [vmem:[%s1] sm:$0x1]
    %v141 = vunpack.c.l.bf16 %v140
    %v142 = vlaneseq
    %v143 = vshrl.u32 %v142, 7
    %v144 = vsub.s32 0, %v143
    %v145 = vrot.slane %v141, %v144
    %v146 = vmul.f32 %v132, %v145
    %v147 = vmul.f32 %v133, %v145
    %v148 = vmul.f32 %v134, %v145
    %v149 = vmul.f32 %v135, %v145
    %v150 = vmul.f32 %v136, %v145
    %v151 = vmul.f32 %v137, %v145
    %v152 = vmul.f32 %v138, %v145
    %v153 = vmul.f32 %v139, %v145
    %v154 = vld [vmem:[%s2] sm:$0x1]
    %v155 = vunpack.c.l.bf16 %v154
    %v156 = vlaneseq
    %v157 = vshrl.u32 %v156, 7
    %v158 = vsub.s32 0, %v157
    %v159 = vrot.slane %v155, %v158
    %v160 = vadd.f32 %v146, %v159
    %v161 = vadd.f32 %v147, %v159
    %v162 = vadd.f32 %v148, %v159
    %v163 = vadd.f32 %v149, %v159
    %v164 = vadd.f32 %v150, %v159
    %v165 = vadd.f32 %v151, %v159
    %v166 = vadd.f32 %v152, %v159
    %v167 = vadd.f32 %v153, %v159
    %v168 = vpack.c.bf16 %v161, %v160
    %v169 = vpack.c.bf16 %v163, %v162
    %v170 = vpack.c.bf16 %v165, %v164
    %v171 = vpack.c.bf16 %v167, %v166
    %v172 = vld [vmem:[#allocation2] sm:$0xff]
    %v173 = vld [vmem:[#allocation2 + $0x8] sm:$0xf]
    %v174 = vld [vmem:[#allocation2 + $0xc] sm:$0xff]
    %v175 = vld [vmem:[#allocation2 + $0x14] sm:$0xf]
    %v176 = vld [vmem:[#allocation2 + $0x18] sm:$0xff]
    %v177 = vld [vmem:[#allocation2 + $0x20] sm:$0xf]
    %v178 = vld [vmem:[#allocation2 + $0x24] sm:$0xff]
    %v179 = vld [vmem:[#allocation2 + $0x2c] sm:$0xf]
    %v180 = vld [vmem:[#allocation2 + $0x30] sm:$0xff]
    %v181 = vld [vmem:[#allocation2 + $0x38] sm:$0xf]
    %v182 = vld [vmem:[#allocation2 + $0x3c] sm:$0xff]
    %v183 = vld [vmem:[#allocation2 + $0x44] sm:$0xf]
    %v184 = vld [vmem:[#allocation2 + $0x48] sm:$0xff]
    %v185 = vld [vmem:[#allocation2 + $0x50] sm:$0xf]
    %v186 = vld [vmem:[#allocation2 + $0x54] sm:$0xff]
    %v187 = vld [vmem:[#allocation2 + $0x5c] sm:$0xf]
    %v188 = vld [vmem:[#allocation2 + $0x60] sm:$0xff]
    %v189 = vld [vmem:[#allocation2 + $0x68] sm:$0xf]
    %v190 = vld [vmem:[#allocation2 + $0x6c] sm:$0xff]
    %v191 = vld [vmem:[#allocation2 + $0x74] sm:$0xf]
    %v192 = vld [vmem:[#allocation2 + $0x78] sm:$0xff]
    %v193 = vld [vmem:[#allocation2 + $0x80] sm:$0xf]
    %v194 = vld [vmem:[#allocation2 + $0x84] sm:$0xff]
    %v195 = vld [vmem:[#allocation2 + $0x8c] sm:$0xf]
    %v196 = vld [vmem:[#allocation2 + $0x90] sm:$0xff]
    %v197 = vld [vmem:[#allocation2 + $0x98] sm:$0xf]
    %v198 = vld [vmem:[#allocation2 + $0x9c] sm:$0xff]
    %v199 = vld [vmem:[#allocation2 + $0xa4] sm:$0xf]
    %v200 = vld [vmem:[#allocation2 + $0xa8] sm:$0xff]
    %v201 = vld [vmem:[#allocation2 + $0xb0] sm:$0xf]
    %v202 = vld [vmem:[#allocation2 + $0xb4] sm:$0xff]
    %v203 = vld [vmem:[#allocation2 + $0xbc] sm:$0xf]
    %v204 = vld [vmem:[%s4] sm:$0x7]
    %v205 = vunpack.c.l.bf16 %v204
    %v207 = vlaneseq
    %v208 = vshrl.u32 %v207, 7
    %v209 = vsub.s32 0, %v208
    %v210 = vrot.slane %v205, %v209
    %v211 = vlaneseq
    %v212 = vshrl.u32 %v211, 7
    %v213 = vsub.s32 2, %v212
    %v214 = vrot.slane %v205, %v213
    %v215 = vlaneseq
    %v216 = vshrl.u32 %v215, 7
    %v217 = vsub.s32 4, %v216
    %v218 = vrot.slane %v205, %v217
    %v222 = vlaneseq
    %v223 = vshrl.u32 %v222, 7
    %v224 = vsub.s32 0, %v223
    %v225 = vrot.slane %v210, %v224
    %v226 = vlaneseq
    %v227 = vshrl.u32 %v226, 7
    %v228 = vsub.s32 0, %v227
    %v229 = vrot.slane %v214, %v228
    %v230 = vlaneseq
    %v231 = vshrl.u32 %v230, 7
    %v232 = vsub.s32 0, %v231
    %v233 = vrot.slane %v218, %v232
    %v266 = vunpack.c.l.b16 %v172
    %v267 = vunpack.c.h.b16 %v172
    %v268 = vunpack.c.l.b16 %v173
    %v269 = vunpack.c.l.b16 %v174
    %v270 = vunpack.c.h.b16 %v174
    %v271 = vunpack.c.l.b16 %v175
    %v272 = vunpack.c.l.b16 %v176
    %v273 = vunpack.c.h.b16 %v176
    %v274 = vunpack.c.l.b16 %v177
    %v275 = vunpack.c.l.b16 %v178
    %v276 = vunpack.c.h.b16 %v178
    %v277 = vunpack.c.l.b16 %v179
    %v278 = vunpack.c.l.b16 %v180
    %v279 = vunpack.c.h.b16 %v180
    %v280 = vunpack.c.l.b16 %v181
    %v281 = vunpack.c.l.b16 %v182
    %v282 = vunpack.c.h.b16 %v182
    %v283 = vunpack.c.l.b16 %v183
    %v284 = vunpack.c.l.b16 %v184
    %v285 = vunpack.c.h.b16 %v184
    %v286 = vunpack.c.l.b16 %v185
    %v287 = vunpack.c.l.b16 %v186
    %v288 = vunpack.c.h.b16 %v186
    %v289 = vunpack.c.l.b16 %v187
    %v290 = vunpack.c.l.b16 %v188
    %v291 = vunpack.c.h.b16 %v188
    %v292 = vunpack.c.l.b16 %v189
    %v293 = vunpack.c.l.b16 %v190
    %v294 = vunpack.c.h.b16 %v190
    %v295 = vunpack.c.l.b16 %v191
    %v296 = vunpack.c.l.b16 %v192
    %v297 = vunpack.c.h.b16 %v192
    %v298 = vunpack.c.l.b16 %v193
    %v299 = vunpack.c.l.b16 %v194
    %v300 = vunpack.c.h.b16 %v194
    %v301 = vunpack.c.l.b16 %v195
    %v302 = vunpack.c.l.b16 %v196
    %v303 = vunpack.c.h.b16 %v196
    %v304 = vunpack.c.l.b16 %v197
    %v305 = vunpack.c.l.b16 %v198
    %v306 = vunpack.c.h.b16 %v198
    %v307 = vunpack.c.l.b16 %v199
    %v308 = vunpack.c.l.b16 %v200
    %v309 = vunpack.c.h.b16 %v200
    %v310 = vunpack.c.l.b16 %v201
    %v311 = vunpack.c.l.b16 %v202
    %v312 = vunpack.c.h.b16 %v202
    %v313 = vunpack.c.l.b16 %v203
    %v314 = vpack.c.b16 %v269, %v266
    %v315 = vpack.c.b16 %v270, %v267
    %v316 = vpack.c.b16 %v271, %v268
    %v317 = vpack.c.b16 %v275, %v272
    %v318 = vpack.c.b16 %v276, %v273
    %v319 = vpack.c.b16 %v277, %v274
    %v320 = vpack.c.b16 %v281, %v278
    %v321 = vpack.c.b16 %v282, %v279
    %v322 = vpack.c.b16 %v283, %v280
    %v323 = vpack.c.b16 %v287, %v284
    %v324 = vpack.c.b16 %v288, %v285
    %v325 = vpack.c.b16 %v289, %v286
    %v326 = vpack.c.b16 %v293, %v290
    %v327 = vpack.c.b16 %v294, %v291
    %v328 = vpack.c.b16 %v295, %v292
    %v329 = vpack.c.b16 %v299, %v296
    %v330 = vpack.c.b16 %v300, %v297
    %v331 = vpack.c.b16 %v301, %v298
    %v332 = vpack.c.b16 %v305, %v302
    %v333 = vpack.c.b16 %v306, %v303
    %v334 = vpack.c.b16 %v307, %v304
    %v335 = vpack.c.b16 %v311, %v308
    %v336 = vpack.c.b16 %v312, %v309
    %v337 = vpack.c.b16 %v313, %v310
    %362 = vmatprep.subr.bf16.mxu0 %v336
    %363 = vmatpush1.bf16.msra.mxu0 %v335
    %364 = vmatprep.subr.bf16.mxu0 %v333
    %365 = vmatpush1.bf16.msra.mxu0 %v332
    %366 = vmatprep.subr.bf16.mxu0 %v330
    %367 = vmatpush1.bf16.msra.mxu0 %v329
    %368 = vmatprep.subr.bf16.mxu0 %v327
    %369 = vmatpush1.bf16.msra.mxu0 %v326
    %370 = vmatprep.subr.bf16.mxu0 %v324
    %371 = vmatpush1.bf16.msra.mxu0 %v323
    %372 = vmatprep.subr.bf16.mxu0 %v321
    %373 = vmatpush1.bf16.msra.mxu0 %v320
    %374 = vmatprep.subr.bf16.mxu0 %v318
    %375 = vmatpush1.bf16.msra.mxu0 %v317
    %376 = vmatprep.subr.bf16.mxu0 %v315
    %377 = vmatpush1.bf16.msra.mxu0 %v314
    %378 = vmatprep.subr.bf16.mxu0 0
    %379 = vmatpush2.bf16.msra.mxu0 0
    %380 = vmatprep.subr.bf16.mxu0 0
    %381 = vmatpush2.bf16.msra.mxu0 0
    %382 = vmatprep.subr.bf16.mxu0 0
    %383 = vmatpush2.bf16.msra.mxu0 0
    %384 = vmatprep.subr.bf16.mxu0 0
    %385 = vmatpush2.bf16.msra.mxu0 0
    %386 = vmatprep.subr.bf16.mxu0 0
    %387 = vmatpush2.bf16.msra.mxu0 0
    %388 = vmatprep.subr.bf16.mxu0 0
    %389 = vmatpush2.bf16.msra.mxu0 0
    %390 = vmatprep.subr.bf16.mxu0 0
    %391 = vmatpush2.bf16.msra.mxu0 0
    %392 = vmatprep.subr.bf16.mxu0 0
    %393 = vmatpush2.bf16.msra.mxu0 0
    %394 = vmatprep.mubr.bf16.mxu0 0
    %395 = vmatmul.mubr.bf16.gmra.mxu0 %v168
    %v396 = vpop.f32.mrf.mxu0
    %v397 = vadd.f32 %v225, %v396
    %v398 = vpop.f32.mrf.mxu0
    %v399 = vadd.f32 %v229, %v398
    %v400 = vpop.f32.mrf.mxu0
    %v401 = vadd.f32 %v225, %v400
    %v402 = vpop.f32.mrf.mxu0
    %v403 = vadd.f32 %v229, %v402
    %404 = vmatprep.mubr.bf16.mxu0 0
    %405 = vmatmul.mubr.bf16.gmra.mxu0 %v169
    %v406 = vpop.f32.mrf.mxu0
    %v407 = vadd.f32 %v225, %v406
    %v408 = vpop.f32.mrf.mxu0
    %v409 = vadd.f32 %v229, %v408
    %v410 = vpop.f32.mrf.mxu0
    %v411 = vadd.f32 %v225, %v410
    %v412 = vpop.f32.mrf.mxu0
    %v413 = vadd.f32 %v229, %v412
    %414 = vmatprep.mubr.bf16.mxu0 0
    %415 = vmatmul.mubr.bf16.gmra.mxu0 %v170
    %v416 = vpop.f32.mrf.mxu0
    %v417 = vadd.f32 %v225, %v416
    %v418 = vpop.f32.mrf.mxu0
    %v419 = vadd.f32 %v229, %v418
    %v420 = vpop.f32.mrf.mxu0
    %v421 = vadd.f32 %v225, %v420
    %v422 = vpop.f32.mrf.mxu0
    %v423 = vadd.f32 %v229, %v422
    %424 = vmatprep.mubr.bf16.mxu0 0
    %425 = vmatmul.mubr.bf16.gmra.mxu0 %v171
    %v426 = vpop.f32.mrf.mxu0
    %v427 = vadd.f32 %v225, %v426
    %v428 = vpop.f32.mrf.mxu0
    %v429 = vadd.f32 %v229, %v428
    %v430 = vpop.f32.mrf.mxu0
    %v431 = vadd.f32 %v225, %v430
    %v432 = vpop.f32.mrf.mxu0
    %v433 = vadd.f32 %v229, %v432
    %434 = vdwg.mxu0
    %435 = vmatprep.subr.bf16.mxu0 0
    %436 = vmatpush1.bf16.msra.mxu0 %v337
    %437 = vmatprep.subr.bf16.mxu0 0
    %438 = vmatpush1.bf16.msra.mxu0 %v334
    %439 = vmatprep.subr.bf16.mxu0 0
    %440 = vmatpush1.bf16.msra.mxu0 %v331
    %441 = vmatprep.subr.bf16.mxu0 0
    %442 = vmatpush1.bf16.msra.mxu0 %v328
    %443 = vmatprep.subr.bf16.mxu0 0
    %444 = vmatpush1.bf16.msra.mxu0 %v325
    %445 = vmatprep.subr.bf16.mxu0 0
    %446 = vmatpush1.bf16.msra.mxu0 %v322
    %447 = vmatprep.subr.bf16.mxu0 0
    %448 = vmatpush1.bf16.msra.mxu0 %v319
    %449 = vmatprep.subr.bf16.mxu0 0
    %450 = vmatpush1.bf16.msra.mxu0 %v316
    %451 = vmatprep.subr.bf16.mxu0 0
    %452 = vmatpush2.bf16.msra.mxu0 0
    %453 = vmatprep.subr.bf16.mxu0 0
    %454 = vmatpush2.bf16.msra.mxu0 0
    %455 = vmatprep.subr.bf16.mxu0 0
    %456 = vmatpush2.bf16.msra.mxu0 0
    %457 = vmatprep.subr.bf16.mxu0 0
    %458 = vmatpush2.bf16.msra.mxu0 0
    %459 = vmatprep.subr.bf16.mxu0 0
    %460 = vmatpush2.bf16.msra.mxu0 0
    %461 = vmatprep.subr.bf16.mxu0 0
    %462 = vmatpush2.bf16.msra.mxu0 0
    %463 = vmatprep.subr.bf16.mxu0 0
    %464 = vmatpush2.bf16.msra.mxu0 0
    %465 = vmatprep.subr.bf16.mxu0 0
    %466 = vmatpush2.bf16.msra.mxu0 0
    %467 = vmatprep.mubr.bf16.mxu0 0
    %468 = vmatmul.mubr.bf16.gmra.mxu0 %v168
    %v469 = vpop.f32.mrf.mxu0
    %v470 = vadd.f32 %v233, %v469
    %v471 = vpop.f32.mrf.mxu0
    %v472 = vpop.f32.mrf.mxu0
    %v473 = vadd.f32 %v233, %v472
    %v474 = vpop.f32.mrf.mxu0
    %475 = vmatprep.mubr.bf16.mxu0 0
    %476 = vmatmul.mubr.bf16.gmra.mxu0 %v169
    %v477 = vpop.f32.mrf.mxu0
    %v478 = vadd.f32 %v233, %v477
    %v479 = vpop.f32.mrf.mxu0
    %v480 = vpop.f32.mrf.mxu0
    %v481 = vadd.f32 %v233, %v480
    %v482 = vpop.f32.mrf.mxu0
    %483 = vmatprep.mubr.bf16.mxu0 0
    %484 = vmatmul.mubr.bf16.gmra.mxu0 %v170
    %v485 = vpop.f32.mrf.mxu0
    %v486 = vadd.f32 %v233, %v485
    %v487 = vpop.f32.mrf.mxu0
    %v488 = vpop.f32.mrf.mxu0
    %v489 = vadd.f32 %v233, %v488
    %v490 = vpop.f32.mrf.mxu0
    %491 = vmatprep.mubr.bf16.mxu0 0
    %492 = vmatmul.mubr.bf16.gmra.mxu0 %v171
    %v493 = vpop.f32.mrf.mxu0
    %v494 = vadd.f32 %v233, %v493
    %v495 = vpop.f32.mrf.mxu0
    %v496 = vpop.f32.mrf.mxu0
    %v497 = vadd.f32 %v233, %v496
    %v498 = vpop.f32.mrf.mxu0
    %499 = vdwg.mxu0
    %v500 = vpack.c.bf16 %v401, %v397
    %v501 = vpack.c.bf16 %v403, %v399
    %v502 = vpack.c.bf16 %v473, %v470
    %v503 = vpack.c.bf16 %v411, %v407
    %v504 = vpack.c.bf16 %v413, %v409
    %v505 = vpack.c.bf16 %v481, %v478
    %v506 = vpack.c.bf16 %v421, %v417
    %v507 = vpack.c.bf16 %v423, %v419
    %v508 = vpack.c.bf16 %v489, %v486
    %v509 = vpack.c.bf16 %v431, %v427
    %v510 = vpack.c.bf16 %v433, %v429
    %v511 = vpack.c.bf16 %v497, %v494
    %v524 = vunpack.c.l.b16 %v500
    %v525 = vunpack.c.l.b16 %v501
    %v526 = vunpack.c.l.b16 %v502
    %v527 = vunpack.c.h.b16 %v500
    %v528 = vunpack.c.h.b16 %v501
    %v529 = vunpack.c.h.b16 %v502
    %v530 = vunpack.c.l.b16 %v503
    %v531 = vunpack.c.l.b16 %v504
    %v532 = vunpack.c.l.b16 %v505
    %v533 = vunpack.c.h.b16 %v503
    %v534 = vunpack.c.h.b16 %v504
    %v535 = vunpack.c.h.b16 %v505
    %v536 = vunpack.c.l.b16 %v506
    %v537 = vunpack.c.l.b16 %v507
    %v538 = vunpack.c.l.b16 %v508
    %v539 = vunpack.c.h.b16 %v506
    %v540 = vunpack.c.h.b16 %v507
    %v541 = vunpack.c.h.b16 %v508
    %v542 = vunpack.c.l.b16 %v509
    %v543 = vunpack.c.l.b16 %v510
    %v544 = vunpack.c.l.b16 %v511
    %v545 = vunpack.c.h.b16 %v509
    %v546 = vunpack.c.h.b16 %v510
    %v547 = vunpack.c.h.b16 %v511
    %v548 = vpack.c.b16 %v525, %v524
    %v549 = vpack.c.b16 %v526, %v526
    %v550 = vpack.c.b16 %v528, %v527
    %v551 = vpack.c.b16 %v529, %v529
    %v552 = vpack.c.b16 %v531, %v530
    %v553 = vpack.c.b16 %v532, %v532
    %v554 = vpack.c.b16 %v534, %v533
    %v555 = vpack.c.b16 %v535, %v535
    %v556 = vpack.c.b16 %v537, %v536
    %v557 = vpack.c.b16 %v538, %v538
    %v558 = vpack.c.b16 %v540, %v539
    %v559 = vpack.c.b16 %v541, %v541
    %v560 = vpack.c.b16 %v543, %v542
    %v561 = vpack.c.b16 %v544, %v544
    %v562 = vpack.c.b16 %v546, %v545
    %v563 = vpack.c.b16 %v547, %v547
    %580 = vst [vmem:[%s5] sm:$0xff] %v548
    %581 = vst [vmem:[%s5 + $0x8] sm:$0xf] %v549
    %582 = vst [vmem:[%s5 + $0xc] sm:$0xff] %v550
    %583 = vst [vmem:[%s5 + $0x14] sm:$0xf] %v551
    %584 = vst [vmem:[%s5 + $0x18] sm:$0xff] %v552
    %585 = vst [vmem:[%s5 + $0x20] sm:$0xf] %v553
    %586 = vst [vmem:[%s5 + $0x24] sm:$0xff] %v554
    %587 = vst [vmem:[%s5 + $0x2c] sm:$0xf] %v555
    %588 = vst [vmem:[%s5 + $0x30] sm:$0xff] %v556
    %589 = vst [vmem:[%s5 + $0x38] sm:$0xf] %v557
    %590 = vst [vmem:[%s5 + $0x3c] sm:$0xff] %v558
    %591 = vst [vmem:[%s5 + $0x44] sm:$0xf] %v559
    %592 = vst [vmem:[%s5 + $0x48] sm:$0xff] %v560
    %593 = vst [vmem:[%s5 + $0x50] sm:$0xf] %v561
    %594 = vst [vmem:[%s5 + $0x54] sm:$0xff] %v562
    %595 = vst [vmem:[%s5 + $0x5c] sm:$0xf] %v563
    // Predicated region
    $region26: #{full_forward.9} parent=1 // pred_check
      _
    $region27: #{full_forward.9} parent=1 // pred_check_branch
      %597 = sbr.rel (0) target = $region29
    $region28: #{full_forward.9} parent=1 // pred_region
      _
    $region29: #{full_forward.9} parent=1 // pred_fallthru
      _
    // Predicated region
    $region30: #{full_forward.9} parent=1 // pred_check
      _
    $region31: #{full_forward.9} parent=1 // pred_check_branch
      %599 = sbr.rel (0) target = $region33
    $region32: #{full_forward.9} parent=1 // pred_region
      _
    $region33: #{full_forward.9} parent=1 // pred_fallthru
      _
    %600 = vsyncpa [#allocation3], 1

// kernel: full_forward.11
$region0: #{full_forward.11}
  #allocation0 [shape = 'u32[]', space=smem, size = 0x4, offset = 0x4, fixed_abs, tag = 'smem constant byte address 0x4 - core index']
  #allocation1 [shape = 'u32[144,128]{1,0:T(1,128)}', space=vmem, size = 0x12000, scoped, tag = 'internal scratch']
  %s0 = inlined_call_operand.vmem [shape: bf16[64,128], index: 0, kind: input, shape index: {}]
  %s1 = inlined_call_operand.vmem [shape: bf16[1,128], index: 1, kind: input, shape index: {}]
  %s2 = inlined_call_operand.vmem [shape: bf16[1,128], index: 2, kind: input, shape index: {}]
  %s3 = inlined_call_operand.vmem [shape: bf16[128,512], index: 3, kind: input, shape index: {}]
  %s4 = inlined_call_operand.vmem [shape: bf16[1,512], index: 4, kind: input, shape index: {}]
  %s5 = inlined_call_operand.vmem [shape: bf16[512,128], index: 5, kind: input, shape index: {}]
  %s6 = inlined_call_operand.vmem [shape: bf16[1,128], index: 6, kind: input, shape index: {}]
  %s7 = inlined_call_operand.vmem [shape: bf16[64,128], index: 7, kind: output, shape index: {}]
  %s8 = sld [smem:[#allocation0]]
  $region38: #{full_forward.11} parent=0
    _
  %s10 = ssub.s32 1, %s8
  %s11 = scalar_select 0, %s10, %s8
  // Predicated region
  $region2: #{full_forward.11} parent=0 // pred_check
    _
  $region3: #{full_forward.11} parent=0 // pred_check_branch
    %13 = sbr.rel (0) target = $region5
  $region4: #{full_forward.11} parent=0 // pred_region
    _
  $region5: #{full_forward.11} parent=0 // pred_fallthru
    _
  // Predicated region
  $region6: #{full_forward.11} parent=0 // pred_check
    _
  $region7: #{full_forward.11} parent=0 // pred_check_branch
    %15 = sbr.rel (0) target = $region9
  $region8: #{full_forward.11} parent=0 // pred_region
    _
  $region9: #{full_forward.11} parent=0 // pred_fallthru
    _
  // Predicated region
  $region10: #{full_forward.11} parent=0 // pred_check
    _
  $region11: #{full_forward.11} parent=0 // pred_check_branch
    %17 = sbr.rel (0) target = $region13
  $region12: #{full_forward.11} parent=0 // pred_region
    _
  $region13: #{full_forward.11} parent=0 // pred_fallthru
    _
  // Predicated region
  $region14: #{full_forward.11} parent=0 // pred_check
    _
  $region15: #{full_forward.11} parent=0 // pred_check_branch
    %19 = sbr.rel (0) target = $region17
  $region16: #{full_forward.11} parent=0 // pred_region
    _
  $region17: #{full_forward.11} parent=0 // pred_fallthru
    _
  // Predicated region
  $region18: #{full_forward.11} parent=0 // pred_check
    _
  $region19: #{full_forward.11} parent=0 // pred_check_branch
    %21 = sbr.rel (0) target = $region21
  $region20: #{full_forward.11} parent=0 // pred_region
    _
  $region21: #{full_forward.11} parent=0 // pred_fallthru
    _
  // Predicated region
  $region22: #{full_forward.11} parent=0 // pred_check
    _
  $region23: #{full_forward.11} parent=0 // pred_check_branch
    %23 = sbr.rel (0) target = $region25
  $region24: #{full_forward.11} parent=0 // pred_region
    _
  $region25: #{full_forward.11} parent=0 // pred_fallthru
    _
  // Predicated region
  $region26: #{full_forward.11} parent=0 // pred_check
    _
  $region27: #{full_forward.11} parent=0 // pred_check_branch
    %25 = sbr.rel (0) target = $region29
  $region28: #{full_forward.11} parent=0 // pred_region
    _
  $region29: #{full_forward.11} parent=0 // pred_fallthru
    _
  %v27 = vld [vmem:[%s0] sm:$0xf]
  %v28 = vld [vmem:[%s0 + $0x4] sm:$0xf]
  %v29 = vld [vmem:[%s0 + $0x8] sm:$0xf]
  %v30 = vld [vmem:[%s0 + $0xc] sm:$0xf]
  %v31 = vld [vmem:[%s0 + $0x10] sm:$0xf]
  %v32 = vld [vmem:[%s0 + $0x14] sm:$0xf]
  %v33 = vld [vmem:[%s0 + $0x18] sm:$0xf]
  %v34 = vld [vmem:[%s0 + $0x1c] sm:$0xf]
  %v35 = vunpack.c.l.bf16 %v27
  %v36 = vunpack.c.l.bf16 %v28
  %v37 = vunpack.c.l.bf16 %v29
  %v38 = vunpack.c.l.bf16 %v30
  %v39 = vunpack.c.l.bf16 %v31
  %v40 = vunpack.c.l.bf16 %v32
  %v41 = vunpack.c.l.bf16 %v33
  %v42 = vunpack.c.l.bf16 %v34
  %43 = vadd.xlane.f32.xlu0 %v35
  %v44 = vpop.xlane.xlu0 %43
  %45 = vadd.xlane.f32.xlu0 %v36
  %v46 = vpop.xlane.xlu0 %45
  %47 = vadd.xlane.f32.xlu0 %v37
  %v48 = vpop.xlane.xlu0 %47
  %49 = vadd.xlane.f32.xlu0 %v38
  %v50 = vpop.xlane.xlu0 %49
  %51 = vadd.xlane.f32.xlu0 %v39
  %v52 = vpop.xlane.xlu0 %51
  %53 = vadd.xlane.f32.xlu0 %v40
  %v54 = vpop.xlane.xlu0 %53
  %55 = vadd.xlane.f32.xlu0 %v41
  %v56 = vpop.xlane.xlu0 %55
  %57 = vadd.xlane.f32.xlu0 %v42
  %v58 = vpop.xlane.xlu0 %57
  %v59 = vrcp.pop 128.0
  %v60 = vmul.f32 %v44, %v59
  %v61 = vmul.f32 %v46, %v59
  %v62 = vmul.f32 %v48, %v59
  %v63 = vmul.f32 %v50, %v59
  %v64 = vmul.f32 %v52, %v59
  %v65 = vmul.f32 %v54, %v59
  %v66 = vmul.f32 %v56, %v59
  %v67 = vmul.f32 %v58, %v59
  %v68 = vsub.f32 %v35, %v60
  %v69 = vsub.f32 %v36, %v61
  %v70 = vsub.f32 %v37, %v62
  %v71 = vsub.f32 %v38, %v63
  %v72 = vsub.f32 %v39, %v64
  %v73 = vsub.f32 %v40, %v65
  %v74 = vsub.f32 %v41, %v66
  %v75 = vsub.f32 %v42, %v67
  %v76 = vmul.f32 %v68, %v68
  %v77 = vmul.f32 %v69, %v69
  %v78 = vmul.f32 %v70, %v70
  %v79 = vmul.f32 %v71, %v71
  %v80 = vmul.f32 %v72, %v72
  %v81 = vmul.f32 %v73, %v73
  %v82 = vmul.f32 %v74, %v74
  %v83 = vmul.f32 %v75, %v75
  %84 = vadd.xlane.f32.xlu0 %v76
  %v85 = vpop.xlane.xlu0 %84
  %86 = vadd.xlane.f32.xlu0 %v77
  %v87 = vpop.xlane.xlu0 %86
  %88 = vadd.xlane.f32.xlu0 %v78
  %v89 = vpop.xlane.xlu0 %88
  %90 = vadd.xlane.f32.xlu0 %v79
  %v91 = vpop.xlane.xlu0 %90
  %92 = vadd.xlane.f32.xlu0 %v80
  %v93 = vpop.xlane.xlu0 %92
  %94 = vadd.xlane.f32.xlu0 %v81
  %v95 = vpop.xlane.xlu0 %94
  %96 = vadd.xlane.f32.xlu0 %v82
  %v97 = vpop.xlane.xlu0 %96
  %98 = vadd.xlane.f32.xlu0 %v83
  %v99 = vpop.xlane.xlu0 %98
  %v100 = vmul.f32 %v85, %v59
  %v101 = vmul.f32 %v87, %v59
  %v102 = vmul.f32 %v89, %v59
  %v103 = vmul.f32 %v91, %v59
  %v104 = vmul.f32 %v93, %v59
  %v105 = vmul.f32 %v95, %v59
  %v106 = vmul.f32 %v97, %v59
  %v107 = vmul.f32 %v99, %v59
  %v108 = vadd.f32 %v100, 1e-05
  %v109 = vadd.f32 %v101, 1e-05
  %v110 = vadd.f32 %v102, 1e-05
  %v111 = vadd.f32 %v103, 1e-05
  %v112 = vadd.f32 %v104, 1e-05
  %v113 = vadd.f32 %v105, 1e-05
  %v114 = vadd.f32 %v106, 1e-05
  %v115 = vadd.f32 %v107, 1e-05
  %v116 = vrsqrt.pop %v108
  %v117 = vrsqrt.pop %v109
  %v118 = vrsqrt.pop %v110
  %v119 = vrsqrt.pop %v111
  %v120 = vrsqrt.pop %v112
  %v121 = vrsqrt.pop %v113
  %v122 = vrsqrt.pop %v114
  %v123 = vrsqrt.pop %v115
  %v124 = vmul.f32 %v68, %v116
  %v125 = vmul.f32 %v69, %v117
  %v126 = vmul.f32 %v70, %v118
  %v127 = vmul.f32 %v71, %v119
  %v128 = vmul.f32 %v72, %v120
  %v129 = vmul.f32 %v73, %v121
  %v130 = vmul.f32 %v74, %v122
  %v131 = vmul.f32 %v75, %v123
  %v132 = vld [vmem:[%s1] sm:$0x1]
  %v133 = vunpack.c.l.bf16 %v132
  %v134 = vlaneseq
  %v135 = vshrl.u32 %v134, 7
  %v136 = vsub.s32 0, %v135
  %v137 = vrot.slane %v133, %v136
  %v138 = vmul.f32 %v124, %v137
  %v139 = vmul.f32 %v125, %v137
  %v140 = vmul.f32 %v126, %v137
  %v141 = vmul.f32 %v127, %v137
  %v142 = vmul.f32 %v128, %v137
  %v143 = vmul.f32 %v129, %v137
  %v144 = vmul.f32 %v130, %v137
  %v145 = vmul.f32 %v131, %v137
  %v146 = vld [vmem:[%s2] sm:$0x1]
  %v147 = vunpack.c.l.bf16 %v146
  %v148 = vlaneseq
  %v149 = vshrl.u32 %v148, 7
  %v150 = vsub.s32 0, %v149
  %v151 = vrot.slane %v147, %v150
  %v152 = vadd.f32 %v138, %v151
  %v153 = vadd.f32 %v139, %v151
  %v154 = vadd.f32 %v140, %v151
  %v155 = vadd.f32 %v141, %v151
  %v156 = vadd.f32 %v142, %v151
  %v157 = vadd.f32 %v143, %v151
  %v158 = vadd.f32 %v144, %v151
  %v159 = vadd.f32 %v145, %v151
  %v160 = vpack.c.bf16 %v153, %v152
  %v161 = vpack.c.bf16 %v155, %v154
  %v162 = vpack.c.bf16 %v157, %v156
  %v163 = vpack.c.bf16 %v159, %v158
  %v164 = vld [vmem:[%s3] sm:$0xff]
  %v165 = vld [vmem:[%s3 + $0x8] sm:$0xff]
  %v166 = vld [vmem:[%s3 + $0x10] sm:$0xff]
  %v167 = vld [vmem:[%s3 + $0x18] sm:$0xff]
  %v168 = vld [vmem:[%s3 + $0x20] sm:$0xff]
  %v169 = vld [vmem:[%s3 + $0x28] sm:$0xff]
  %v170 = vld [vmem:[%s3 + $0x30] sm:$0xff]
  %v171 = vld [vmem:[%s3 + $0x38] sm:$0xff]
  %v172 = vld [vmem:[%s3 + $0x40] sm:$0xff]
  %v173 = vld [vmem:[%s3 + $0x48] sm:$0xff]
  %v174 = vld [vmem:[%s3 + $0x50] sm:$0xff]
  %v175 = vld [vmem:[%s3 + $0x58] sm:$0xff]
  %v176 = vld [vmem:[%s3 + $0x60] sm:$0xff]
  %v177 = vld [vmem:[%s3 + $0x68] sm:$0xff]
  %v178 = vld [vmem:[%s3 + $0x70] sm:$0xff]
  %v179 = vld [vmem:[%s3 + $0x78] sm:$0xff]
  %v180 = vld [vmem:[%s3 + $0x80] sm:$0xff]
  %v181 = vld [vmem:[%s3 + $0x88] sm:$0xff]
  %v182 = vld [vmem:[%s3 + $0x90] sm:$0xff]
  %v183 = vld [vmem:[%s3 + $0x98] sm:$0xff]
  %v184 = vld [vmem:[%s3 + $0xa0] sm:$0xff]
  %v185 = vld [vmem:[%s3 + $0xa8] sm:$0xff]
  %v186 = vld [vmem:[%s3 + $0xb0] sm:$0xff]
  %v187 = vld [vmem:[%s3 + $0xb8] sm:$0xff]
  %v188 = vld [vmem:[%s3 + $0xc0] sm:$0xff]
  %v189 = vld [vmem:[%s3 + $0xc8] sm:$0xff]
  %v190 = vld [vmem:[%s3 + $0xd0] sm:$0xff]
  %v191 = vld [vmem:[%s3 + $0xd8] sm:$0xff]
  %v192 = vld [vmem:[%s3 + $0xe0] sm:$0xff]
  %v193 = vld [vmem:[%s3 + $0xe8] sm:$0xff]
  %v194 = vld [vmem:[%s3 + $0xf0] sm:$0xff]
  %v195 = vld [vmem:[%s3 + $0xf8] sm:$0xff]
  %v196 = vld [vmem:[%s4] sm:$0xf]
  %v197 = vunpack.c.l.bf16 %v196
  %v199 = vlaneseq
  %v200 = vshrl.u32 %v199, 7
  %v201 = vsub.s32 0, %v200
  %v202 = vrot.slane %v197, %v201
  %v203 = vlaneseq
  %v204 = vshrl.u32 %v203, 7
  %v205 = vsub.s32 2, %v204
  %v206 = vrot.slane %v197, %v205
  %v207 = vlaneseq
  %v208 = vshrl.u32 %v207, 7
  %v209 = vsub.s32 4, %v208
  %v210 = vrot.slane %v197, %v209
  %v211 = vlaneseq
  %v212 = vshrl.u32 %v211, 7
  %v213 = vsub.s32 6, %v212
  %v214 = vrot.slane %v197, %v213
  %v219 = vlaneseq
  %v220 = vshrl.u32 %v219, 7
  %v221 = vsub.s32 0, %v220
  %v222 = vrot.slane %v202, %v221
  %v223 = vlaneseq
  %v224 = vshrl.u32 %v223, 7
  %v225 = vsub.s32 0, %v224
  %v226 = vrot.slane %v206, %v225
  %v227 = vlaneseq
  %v228 = vshrl.u32 %v227, 7
  %v229 = vsub.s32 0, %v228
  %v230 = vrot.slane %v210, %v229
  %v231 = vlaneseq
  %v232 = vshrl.u32 %v231, 7
  %v233 = vsub.s32 0, %v232
  %v234 = vrot.slane %v214, %v233
  %v267 = vunpack.c.l.b16 %v164
  %v268 = vunpack.c.h.b16 %v164
  %v269 = vunpack.c.l.b16 %v165
  %v270 = vunpack.c.h.b16 %v165
  %v271 = vunpack.c.l.b16 %v166
  %v272 = vunpack.c.h.b16 %v166
  %v273 = vunpack.c.l.b16 %v167
  %v274 = vunpack.c.h.b16 %v167
  %v275 = vunpack.c.l.b16 %v168
  %v276 = vunpack.c.h.b16 %v168
  %v277 = vunpack.c.l.b16 %v169
  %v278 = vunpack.c.h.b16 %v169
  %v279 = vunpack.c.l.b16 %v170
  %v280 = vunpack.c.h.b16 %v170
  %v281 = vunpack.c.l.b16 %v171
  %v282 = vunpack.c.h.b16 %v171
  %v283 = vunpack.c.l.b16 %v172
  %v284 = vunpack.c.h.b16 %v172
  %v285 = vunpack.c.l.b16 %v173
  %v286 = vunpack.c.h.b16 %v173
  %v287 = vunpack.c.l.b16 %v174
  %v288 = vunpack.c.h.b16 %v174
  %v289 = vunpack.c.l.b16 %v175
  %v290 = vunpack.c.h.b16 %v175
  %v291 = vunpack.c.l.b16 %v176
  %v292 = vunpack.c.h.b16 %v176
  %v293 = vunpack.c.l.b16 %v177
  %v294 = vunpack.c.h.b16 %v177
  %v295 = vunpack.c.l.b16 %v178
  %v296 = vunpack.c.h.b16 %v178
  %v297 = vunpack.c.l.b16 %v179
  %v298 = vunpack.c.h.b16 %v179
  %v299 = vunpack.c.l.b16 %v180
  %v300 = vunpack.c.h.b16 %v180
  %v301 = vunpack.c.l.b16 %v181
  %v302 = vunpack.c.h.b16 %v181
  %v303 = vunpack.c.l.b16 %v182
  %v304 = vunpack.c.h.b16 %v182
  %v305 = vunpack.c.l.b16 %v183
  %v306 = vunpack.c.h.b16 %v183
  %v307 = vunpack.c.l.b16 %v184
  %v308 = vunpack.c.h.b16 %v184
  %v309 = vunpack.c.l.b16 %v185
  %v310 = vunpack.c.h.b16 %v185
  %v311 = vunpack.c.l.b16 %v186
  %v312 = vunpack.c.h.b16 %v186
  %v313 = vunpack.c.l.b16 %v187
  %v314 = vunpack.c.h.b16 %v187
  %v315 = vunpack.c.l.b16 %v188
  %v316 = vunpack.c.h.b16 %v188
  %v317 = vunpack.c.l.b16 %v189
  %v318 = vunpack.c.h.b16 %v189
  %v319 = vunpack.c.l.b16 %v190
  %v320 = vunpack.c.h.b16 %v190
  %v321 = vunpack.c.l.b16 %v191
  %v322 = vunpack.c.h.b16 %v191
  %v323 = vunpack.c.l.b16 %v192
  %v324 = vunpack.c.h.b16 %v192
  %v325 = vunpack.c.l.b16 %v193
  %v326 = vunpack.c.h.b16 %v193
  %v327 = vunpack.c.l.b16 %v194
  %v328 = vunpack.c.h.b16 %v194
  %v329 = vunpack.c.l.b16 %v195
  %v330 = vunpack.c.h.b16 %v195
  %v331 = vpack.c.b16 %v271, %v267
  %v332 = vpack.c.b16 %v272, %v268
  %v333 = vpack.c.b16 %v273, %v269
  %v334 = vpack.c.b16 %v274, %v270
  %v335 = vpack.c.b16 %v279, %v275
  %v336 = vpack.c.b16 %v280, %v276
  %v337 = vpack.c.b16 %v281, %v277
  %v338 = vpack.c.b16 %v282, %v278
  %v339 = vpack.c.b16 %v287, %v283
  %v340 = vpack.c.b16 %v288, %v284
  %v341 = vpack.c.b16 %v289, %v285
  %v342 = vpack.c.b16 %v290, %v286
  %v343 = vpack.c.b16 %v295, %v291
  %v344 = vpack.c.b16 %v296, %v292
  %v345 = vpack.c.b16 %v297, %v293
  %v346 = vpack.c.b16 %v298, %v294
  %v347 = vpack.c.b16 %v303, %v299
  %v348 = vpack.c.b16 %v304, %v300
  %v349 = vpack.c.b16 %v305, %v301
  %v350 = vpack.c.b16 %v306, %v302
  %v351 = vpack.c.b16 %v311, %v307
  %v352 = vpack.c.b16 %v312, %v308
  %v353 = vpack.c.b16 %v313, %v309
  %v354 = vpack.c.b16 %v314, %v310
  %v355 = vpack.c.b16 %v319, %v315
  %v356 = vpack.c.b16 %v320, %v316
  %v357 = vpack.c.b16 %v321, %v317
  %v358 = vpack.c.b16 %v322, %v318
  %v359 = vpack.c.b16 %v327, %v323
  %v360 = vpack.c.b16 %v328, %v324
  %v361 = vpack.c.b16 %v329, %v325
  %v362 = vpack.c.b16 %v330, %v326
  %395 = vmatprep.subr.bf16.mxu0 %v360
  %396 = vmatpush1.bf16.msra.mxu0 %v359
  %397 = vmatprep.subr.bf16.mxu0 %v356
  %398 = vmatpush1.bf16.msra.mxu0 %v355
  %399 = vmatprep.subr.bf16.mxu0 %v352
  %400 = vmatpush1.bf16.msra.mxu0 %v351
  %401 = vmatprep.subr.bf16.mxu0 %v348
  %402 = vmatpush1.bf16.msra.mxu0 %v347
  %403 = vmatprep.subr.bf16.mxu0 %v344
  %404 = vmatpush1.bf16.msra.mxu0 %v343
  %405 = vmatprep.subr.bf16.mxu0 %v340
  %406 = vmatpush1.bf16.msra.mxu0 %v339
  %407 = vmatprep.subr.bf16.mxu0 %v336
  %408 = vmatpush1.bf16.msra.mxu0 %v335
  %409 = vmatprep.subr.bf16.mxu0 %v332
  %410 = vmatpush1.bf16.msra.mxu0 %v331
  %411 = vmatprep.subr.bf16.mxu0 0
  %412 = vmatpush2.bf16.msra.mxu0 0
  %413 = vmatprep.subr.bf16.mxu0 0
  %414 = vmatpush2.bf16.msra.mxu0 0
  %415 = vmatprep.subr.bf16.mxu0 0
  %416 = vmatpush2.bf16.msra.mxu0 0
  %417 = vmatprep.subr.bf16.mxu0 0
  %418 = vmatpush2.bf16.msra.mxu0 0
  %419 = vmatprep.subr.bf16.mxu0 0
  %420 = vmatpush2.bf16.msra.mxu0 0
  %421 = vmatprep.subr.bf16.mxu0 0
  %422 = vmatpush2.bf16.msra.mxu0 0
  %423 = vmatprep.subr.bf16.mxu0 0
  %424 = vmatpush2.bf16.msra.mxu0 0
  %425 = vmatprep.subr.bf16.mxu0 0
  %426 = vmatpush2.bf16.msra.mxu0 0
  %427 = vmatprep.mubr.bf16.mxu0 0
  %428 = vmatmul.mubr.bf16.gmra.mxu0 %v160
  %v429 = vpop.f32.mrf.mxu0
  %v430 = vadd.f32 %v222, %v429
  %v431 = vpop.f32.mrf.mxu0
  %v432 = vadd.f32 %v226, %v431
  %v433 = vpop.f32.mrf.mxu0
  %v434 = vadd.f32 %v222, %v433
  %v435 = vpop.f32.mrf.mxu0
  %v436 = vadd.f32 %v226, %v435
  %437 = vmatprep.mubr.bf16.mxu0 0
  %438 = vmatmul.mubr.bf16.gmra.mxu0 %v161
  %v439 = vpop.f32.mrf.mxu0
  %v440 = vadd.f32 %v222, %v439
  %v441 = vpop.f32.mrf.mxu0
  %v442 = vadd.f32 %v226, %v441
  %v443 = vpop.f32.mrf.mxu0
  %v444 = vadd.f32 %v222, %v443
  %v445 = vpop.f32.mrf.mxu0
  %v446 = vadd.f32 %v226, %v445
  %447 = vmatprep.mubr.bf16.mxu0 0
  %448 = vmatmul.mubr.bf16.gmra.mxu0 %v162
  %v449 = vpop.f32.mrf.mxu0
  %v450 = vadd.f32 %v222, %v449
  %v451 = vpop.f32.mrf.mxu0
  %v452 = vadd.f32 %v226, %v451
  %v453 = vpop.f32.mrf.mxu0
  %v454 = vadd.f32 %v222, %v453
  %v455 = vpop.f32.mrf.mxu0
  %v456 = vadd.f32 %v226, %v455
  %457 = vmatprep.mubr.bf16.mxu0 0
  %458 = vmatmul.mubr.bf16.gmra.mxu0 %v163
  %v459 = vpop.f32.mrf.mxu0
  %v460 = vadd.f32 %v222, %v459
  %v461 = vpop.f32.mrf.mxu0
  %v462 = vadd.f32 %v226, %v461
  %v463 = vpop.f32.mrf.mxu0
  %v464 = vadd.f32 %v222, %v463
  %v465 = vpop.f32.mrf.mxu0
  %v466 = vadd.f32 %v226, %v465
  %467 = vdwg.mxu0
  %468 = vmatprep.subr.bf16.mxu0 %v362
  %469 = vmatpush1.bf16.msra.mxu0 %v361
  %470 = vmatprep.subr.bf16.mxu0 %v358
  %471 = vmatpush1.bf16.msra.mxu0 %v357
  %472 = vmatprep.subr.bf16.mxu0 %v354
  %473 = vmatpush1.bf16.msra.mxu0 %v353
  %474 = vmatprep.subr.bf16.mxu0 %v350
  %475 = vmatpush1.bf16.msra.mxu0 %v349
  %476 = vmatprep.subr.bf16.mxu0 %v346
  %477 = vmatpush1.bf16.msra.mxu0 %v345
  %478 = vmatprep.subr.bf16.mxu0 %v342
  %479 = vmatpush1.bf16.msra.mxu0 %v341
  %480 = vmatprep.subr.bf16.mxu0 %v338
  %481 = vmatpush1.bf16.msra.mxu0 %v337
  %482 = vmatprep.subr.bf16.mxu0 %v334
  %483 = vmatpush1.bf16.msra.mxu0 %v333
  %484 = vmatprep.subr.bf16.mxu0 0
  %485 = vmatpush2.bf16.msra.mxu0 0
  %486 = vmatprep.subr.bf16.mxu0 0
  %487 = vmatpush2.bf16.msra.mxu0 0
  %488 = vmatprep.subr.bf16.mxu0 0
  %489 = vmatpush2.bf16.msra.mxu0 0
  %490 = vmatprep.subr.bf16.mxu0 0
  %491 = vmatpush2.bf16.msra.mxu0 0
  %492 = vmatprep.subr.bf16.mxu0 0
  %493 = vmatpush2.bf16.msra.mxu0 0
  %494 = vmatprep.subr.bf16.mxu0 0
  %495 = vmatpush2.bf16.msra.mxu0 0
  %496 = vmatprep.subr.bf16.mxu0 0
  %497 = vmatpush2.bf16.msra.mxu0 0
  %498 = vmatprep.subr.bf16.mxu0 0
  %499 = vmatpush2.bf16.msra.mxu0 0
  %500 = vmatprep.mubr.bf16.mxu0 0
  %501 = vmatmul.mubr.bf16.gmra.mxu0 %v160
  %v502 = vpop.f32.mrf.mxu0
  %v503 = vadd.f32 %v230, %v502
  %v504 = vpop.f32.mrf.mxu0
  %v505 = vadd.f32 %v234, %v504
  %v506 = vpop.f32.mrf.mxu0
  %v507 = vadd.f32 %v230, %v506
  %v508 = vpop.f32.mrf.mxu0
  %v509 = vadd.f32 %v234, %v508
  %510 = vmatprep.mubr.bf16.mxu0 0
  %511 = vmatmul.mubr.bf16.gmra.mxu0 %v161
  %v512 = vpop.f32.mrf.mxu0
  %v513 = vadd.f32 %v230, %v512
  %v514 = vpop.f32.mrf.mxu0
  %v515 = vadd.f32 %v234, %v514
  %v516 = vpop.f32.mrf.mxu0
  %v517 = vadd.f32 %v230, %v516
  %v518 = vpop.f32.mrf.mxu0
  %v519 = vadd.f32 %v234, %v518
  %520 = vmatprep.mubr.bf16.mxu0 0
  %521 = vmatmul.mubr.bf16.gmra.mxu0 %v162
  %v522 = vpop.f32.mrf.mxu0
  %v523 = vadd.f32 %v230, %v522
  %v524 = vpop.f32.mrf.mxu0
  %v525 = vadd.f32 %v234, %v524
  %v526 = vpop.f32.mrf.mxu0
  %v527 = vadd.f32 %v230, %v526
  %v528 = vpop.f32.mrf.mxu0
  %v529 = vadd.f32 %v234, %v528
  %530 = vmatprep.mubr.bf16.mxu0 0
  %531 = vmatmul.mubr.bf16.gmra.mxu0 %v163
  %v532 = vpop.f32.mrf.mxu0
  %v533 = vadd.f32 %v230, %v532
  %v534 = vpop.f32.mrf.mxu0
  %v535 = vadd.f32 %v234, %v534
  %v536 = vpop.f32.mrf.mxu0
  %v537 = vadd.f32 %v230, %v536
  %v538 = vpop.f32.mrf.mxu0
  %v539 = vadd.f32 %v234, %v538
  %540 = vdwg.mxu0
  %v541 = vmul.f32 %v430, 1.702
  %v542 = vmul.f32 %v432, 1.702
  %v543 = vmul.f32 %v503, 1.702
  %v544 = vmul.f32 %v505, 1.702
  %v545 = vmul.f32 %v434, 1.702
  %v546 = vmul.f32 %v436, 1.702
  %v547 = vmul.f32 %v507, 1.702
  %v548 = vmul.f32 %v509, 1.702
  %v549 = vmul.f32 %v440, 1.702
  %v550 = vmul.f32 %v442, 1.702
  %v551 = vmul.f32 %v513, 1.702
  %v552 = vmul.f32 %v515, 1.702
  %v553 = vmul.f32 %v444, 1.702
  %v554 = vmul.f32 %v446, 1.702
  %v555 = vmul.f32 %v517, 1.702
  %v556 = vmul.f32 %v519, 1.702
  %v557 = vmul.f32 %v450, 1.702
  %v558 = vmul.f32 %v452, 1.702
  %v559 = vmul.f32 %v523, 1.702
  %v560 = vmul.f32 %v525, 1.702
  %v561 = vmul.f32 %v454, 1.702
  %v562 = vmul.f32 %v456, 1.702
  %v563 = vmul.f32 %v527, 1.702
  %v564 = vmul.f32 %v529, 1.702
  %v565 = vmul.f32 %v460, 1.702
  %v566 = vmul.f32 %v462, 1.702
  %v567 = vmul.f32 %v533, 1.702
  %v568 = vmul.f32 %v535, 1.702
  %v569 = vmul.f32 %v464, 1.702
  %v570 = vmul.f32 %v466, 1.702
  %v571 = vmul.f32 %v537, 1.702
  %v572 = vmul.f32 %v539, 1.702
  %v573 = vxor.u32 %v541, 2147483648
  %v574 = vxor.u32 %v542, 2147483648
  %v575 = vxor.u32 %v543, 2147483648
  %v576 = vxor.u32 %v544, 2147483648
  %v577 = vxor.u32 %v545, 2147483648
  %v578 = vxor.u32 %v546, 2147483648
  %v579 = vxor.u32 %v547, 2147483648
  %v580 = vxor.u32 %v548, 2147483648
  %v581 = vxor.u32 %v549, 2147483648
  %v582 = vxor.u32 %v550, 2147483648
  %v583 = vxor.u32 %v551, 2147483648
  %v584 = vxor.u32 %v552, 2147483648
  %v585 = vxor.u32 %v553, 2147483648
  %v586 = vxor.u32 %v554, 2147483648
  %v587 = vxor.u32 %v555, 2147483648
  %v588 = vxor.u32 %v556, 2147483648
  %v589 = vxor.u32 %v557, 2147483648
  %v590 = vxor.u32 %v558, 2147483648
  %v591 = vxor.u32 %v559, 2147483648
  %v592 = vxor.u32 %v560, 2147483648
  %v593 = vxor.u32 %v561, 2147483648
  %v594 = vxor.u32 %v562, 2147483648
  %v595 = vxor.u32 %v563, 2147483648
  %v596 = vxor.u32 %v564, 2147483648
  %v597 = vxor.u32 %v565, 2147483648
  %v598 = vxor.u32 %v566, 2147483648
  %v599 = vxor.u32 %v567, 2147483648
  %v600 = vxor.u32 %v568, 2147483648
  %v601 = vxor.u32 %v569, 2147483648
  %v602 = vxor.u32 %v570, 2147483648
  %v603 = vxor.u32 %v571, 2147483648
  %v604 = vxor.u32 %v572, 2147483648
  %v605 = vmul.f32 %v573, 1.442695
  %v606 = vpow.pop %v605
  %v607 = vmul.f32 %v574, 1.442695
  %v608 = vpow.pop %v607
  %v609 = vmul.f32 %v575, 1.442695
  %v610 = vpow.pop %v609
  %v611 = vmul.f32 %v576, 1.442695
  %v612 = vpow.pop %v611
  %v613 = vmul.f32 %v577, 1.442695
  %v614 = vpow.pop %v613
  %v615 = vmul.f32 %v578, 1.442695
  %v616 = vpow.pop %v615
  %v617 = vmul.f32 %v579, 1.442695
  %v618 = vpow.pop %v617
  %v619 = vmul.f32 %v580, 1.442695
  %v620 = vpow.pop %v619
  %v621 = vmul.f32 %v581, 1.442695
  %v622 = vpow.pop %v621
  %v623 = vmul.f32 %v582, 1.442695
  %v624 = vpow.pop %v623
  %v625 = vmul.f32 %v583, 1.442695
  %v626 = vpow.pop %v625
  %v627 = vmul.f32 %v584, 1.442695
  %v628 = vpow.pop %v627
  %v629 = vmul.f32 %v585, 1.442695
  %v630 = vpow.pop %v629
  %v631 = vmul.f32 %v586, 1.442695
  %v632 = vpow.pop %v631
  %v633 = vmul.f32 %v587, 1.442695
  %v634 = vpow.pop %v633
  %v635 = vmul.f32 %v588, 1.442695
  %v636 = vpow.pop %v635
  %v637 = vmul.f32 %v589, 1.442695
  %v638 = vpow.pop %v637
  %v639 = vmul.f32 %v590, 1.442695
  %v640 = vpow.pop %v639
  %v641 = vmul.f32 %v591, 1.442695
  %v642 = vpow.pop %v641
  %v643 = vmul.f32 %v592, 1.442695
  %v644 = vpow.pop %v643
  %v645 = vmul.f32 %v593, 1.442695
  %v646 = vpow.pop %v645
  %v647 = vmul.f32 %v594, 1.442695
  %v648 = vpow.pop %v647
  %v649 = vmul.f32 %v595, 1.442695
  %v650 = vpow.pop %v649
  %v651 = vmul.f32 %v596, 1.442695
  %v652 = vpow.pop %v651
  %v653 = vmul.f32 %v597, 1.442695
  %v654 = vpow.pop %v653
  %v655 = vmul.f32 %v598, 1.442695
  %v656 = vpow.pop %v655
  %v657 = vmul.f32 %v599, 1.442695
  %v658 = vpow.pop %v657
  %v659 = vmul.f32 %v600, 1.442695
  %v660 = vpow.pop %v659
  %v661 = vmul.f32 %v601, 1.442695
  %v662 = vpow.pop %v661
  %v663 = vmul.f32 %v602, 1.442695
  %v664 = vpow.pop %v663
  %v665 = vmul.f32 %v603, 1.442695
  %v666 = vpow.pop %v665
  %v667 = vmul.f32 %v604, 1.442695
  %v668 = vpow.pop %v667
  %v669 = vadd.f32 %v606, 1.0
  %v670 = vadd.f32 %v608, 1.0
  %v671 = vadd.f32 %v610, 1.0
  %v672 = vadd.f32 %v612, 1.0
  %v673 = vadd.f32 %v614, 1.0
  %v674 = vadd.f32 %v616, 1.0
  %v675 = vadd.f32 %v618, 1.0
  %v676 = vadd.f32 %v620, 1.0
  %v677 = vadd.f32 %v622, 1.0
  %v678 = vadd.f32 %v624, 1.0
  %v679 = vadd.f32 %v626, 1.0
  %v680 = vadd.f32 %v628, 1.0
  %v681 = vadd.f32 %v630, 1.0
  %v682 = vadd.f32 %v632, 1.0
  %v683 = vadd.f32 %v634, 1.0
  %v684 = vadd.f32 %v636, 1.0
  %v685 = vadd.f32 %v638, 1.0
  %v686 = vadd.f32 %v640, 1.0
  %v687 = vadd.f32 %v642, 1.0
  %v688 = vadd.f32 %v644, 1.0
  %v689 = vadd.f32 %v646, 1.0
  %v690 = vadd.f32 %v648, 1.0
  %v691 = vadd.f32 %v650, 1.0
  %v692 = vadd.f32 %v652, 1.0
  %v693 = vadd.f32 %v654, 1.0
  %v694 = vadd.f32 %v656, 1.0
  %v695 = vadd.f32 %v658, 1.0
  %v696 = vadd.f32 %v660, 1.0
  %v697 = vadd.f32 %v662, 1.0
  %v698 = vadd.f32 %v664, 1.0
  %v699 = vadd.f32 %v666, 1.0
  %v700 = vadd.f32 %v668, 1.0
  %v701 = vrcp.pop %v669
  %v702 = vmul.f32 1.0, %v701
  %v703 = vrcp.pop %v670
  %v704 = vmul.f32 1.0, %v703
  %v705 = vrcp.pop %v671
  %v706 = vmul.f32 1.0, %v705
  %v707 = vrcp.pop %v672
  %v708 = vmul.f32 1.0, %v707
  %v709 = vrcp.pop %v673
  %v710 = vmul.f32 1.0, %v709
  %v711 = vrcp.pop %v674
  %v712 = vmul.f32 1.0, %v711
  %v713 = vrcp.pop %v675
  %v714 = vmul.f32 1.0, %v713
  %v715 = vrcp.pop %v676
  %v716 = vmul.f32 1.0, %v715
  %v717 = vrcp.pop %v677
  %v718 = vmul.f32 1.0, %v717
  %v719 = vrcp.pop %v678
  %v720 = vmul.f32 1.0, %v719
  %v721 = vrcp.pop %v679
  %v722 = vmul.f32 1.0, %v721
  %v723 = vrcp.pop %v680
  %v724 = vmul.f32 1.0, %v723
  %v725 = vrcp.pop %v681
  %v726 = vmul.f32 1.0, %v725
  %v727 = vrcp.pop %v682
  %v728 = vmul.f32 1.0, %v727
  %v729 = vrcp.pop %v683
  %v730 = vmul.f32 1.0, %v729
  %v731 = vrcp.pop %v684
  %v732 = vmul.f32 1.0, %v731
  %v733 = vrcp.pop %v685
  %v734 = vmul.f32 1.0, %v733
  %v735 = vrcp.pop %v686
  %v736 = vmul.f32 1.0, %v735
  %v737 = vrcp.pop %v687
  %v738 = vmul.f32 1.0, %v737
  %v739 = vrcp.pop %v688
  %v740 = vmul.f32 1.0, %v739
  %v741 = vrcp.pop %v689
  %v742 = vmul.f32 1.0, %v741
  %v743 = vrcp.pop %v690
  %v744 = vmul.f32 1.0, %v743
  %v745 = vrcp.pop %v691
  %v746 = vmul.f32 1.0, %v745
  %v747 = vrcp.pop %v692
  %v748 = vmul.f32 1.0, %v747
  %v749 = vrcp.pop %v693
  %v750 = vmul.f32 1.0, %v749
  %v751 = vrcp.pop %v694
  %v752 = vmul.f32 1.0, %v751
  %v753 = vrcp.pop %v695
  %v754 = vmul.f32 1.0, %v753
  %v755 = vrcp.pop %v696
  %v756 = vmul.f32 1.0, %v755
  %v757 = vrcp.pop %v697
  %v758 = vmul.f32 1.0, %v757
  %v759 = vrcp.pop %v698
  %v760 = vmul.f32 1.0, %v759
  %v761 = vrcp.pop %v699
  %v762 = vmul.f32 1.0, %v761
  %v763 = vrcp.pop %v700
  %v764 = vmul.f32 1.0, %v763
  %v765 = vmul.f32 %v430, %v702
  %v766 = vmul.f32 %v432, %v704
  %v767 = vmul.f32 %v503, %v706
  %v768 = vmul.f32 %v505, %v708
  %v769 = vmul.f32 %v434, %v710
  %v770 = vmul.f32 %v436, %v712
  %v771 = vmul.f32 %v507, %v714
  %v772 = vmul.f32 %v509, %v716
  %v773 = vmul.f32 %v440, %v718
  %v774 = vmul.f32 %v442, %v720
  %v775 = vmul.f32 %v513, %v722
  %v776 = vmul.f32 %v515, %v724
  %v777 = vmul.f32 %v444, %v726
  %v778 = vmul.f32 %v446, %v728
  %v779 = vmul.f32 %v517, %v730
  %v780 = vmul.f32 %v519, %v732
  %v781 = vmul.f32 %v450, %v734
  %v782 = vmul.f32 %v452, %v736
  %v783 = vmul.f32 %v523, %v738
  %v784 = vmul.f32 %v525, %v740
  %v785 = vmul.f32 %v454, %v742
  %v786 = vmul.f32 %v456, %v744
  %v787 = vmul.f32 %v527, %v746
  %v788 = vmul.f32 %v529, %v748
  %v789 = vmul.f32 %v460, %v750
  %v790 = vmul.f32 %v462, %v752
  %v791 = vmul.f32 %v533, %v754
  %v792 = vmul.f32 %v535, %v756
  %v793 = vmul.f32 %v464, %v758
  %v794 = vmul.f32 %v466, %v760
  %v795 = vmul.f32 %v537, %v762
  %v796 = vmul.f32 %v539, %v764
  %v797 = vpack.c.bf16 %v769, %v765
  %v798 = vpack.c.bf16 %v770, %v766
  %v799 = vpack.c.bf16 %v771, %v767
  %v800 = vpack.c.bf16 %v772, %v768
  %v801 = vpack.c.bf16 %v777, %v773
  %v802 = vpack.c.bf16 %v778, %v774
  %v803 = vpack.c.bf16 %v779, %v775
  %v804 = vpack.c.bf16 %v780, %v776
  %v805 = vpack.c.bf16 %v785, %v781
  %v806 = vpack.c.bf16 %v786, %v782
  %v807 = vpack.c.bf16 %v787, %v783
  %v808 = vpack.c.bf16 %v788, %v784
  %v809 = vpack.c.bf16 %v793, %v789
  %v810 = vpack.c.bf16 %v794, %v790
  %v811 = vpack.c.bf16 %v795, %v791
  %v812 = vpack.c.bf16 %v796, %v792
  %v813 = vld [vmem:[%s5] sm:$0xf]
  %v814 = vld [vmem:[%s5 + $0x4] sm:$0xf]
  %v815 = vld [vmem:[%s5 + $0x8] sm:$0xf]
  %v816 = vld [vmem:[%s5 + $0xc] sm:$0xf]
  %v817 = vld [vmem:[%s5 + $0x10] sm:$0xf]
  %v818 = vld [vmem:[%s5 + $0x14] sm:$0xf]
  %v819 = vld [vmem:[%s5 + $0x18] sm:$0xf]
  %v820 = vld [vmem:[%s5 + $0x1c] sm:$0xf]
  %v821 = vld [vmem:[%s5 + $0x20] sm:$0xf]
  %v822 = vld [vmem:[%s5 + $0x24] sm:$0xf]
  %v823 = vld [vmem:[%s5 + $0x28] sm:$0xf]
  %v824 = vld [vmem:[%s5 + $0x2c] sm:$0xf]
  %v825 = vld [vmem:[%s5 + $0x30] sm:$0xf]
  %v826 = vld [vmem:[%s5 + $0x34] sm:$0xf]
  %v827 = vld [vmem:[%s5 + $0x38] sm:$0xf]
  %v828 = vld [vmem:[%s5 + $0x3c] sm:$0xf]
  %v829 = vld [vmem:[%s5 + $0x40] sm:$0xf]
  %v830 = vld [vmem:[%s5 + $0x44] sm:$0xf]
  %v831 = vld [vmem:[%s5 + $0x48] sm:$0xf]
  %v832 = vld [vmem:[%s5 + $0x4c] sm:$0xf]
  %v833 = vld [vmem:[%s5 + $0x50] sm:$0xf]
  %v834 = vld [vmem:[%s5 + $0x54] sm:$0xf]
  %v835 = vld [vmem:[%s5 + $0x58] sm:$0xf]
  %v836 = vld [vmem:[%s5 + $0x5c] sm:$0xf]
  %v837 = vld [vmem:[%s5 + $0x60] sm:$0xf]
  %v838 = vld [vmem:[%s5 + $0x64] sm:$0xf]
  %v839 = vld [vmem:[%s5 + $0x68] sm:$0xf]
  %v840 = vld [vmem:[%s5 + $0x6c] sm:$0xf]
  %v841 = vld [vmem:[%s5 + $0x70] sm:$0xf]
  %v842 = vld [vmem:[%s5 + $0x74] sm:$0xf]
  %v843 = vld [vmem:[%s5 + $0x78] sm:$0xf]
  %v844 = vld [vmem:[%s5 + $0x7c] sm:$0xf]
  %v845 = vld [vmem:[%s5 + $0x80] sm:$0xf]
  %v846 = vld [vmem:[%s5 + $0x84] sm:$0xf]
  %v847 = vld [vmem:[%s5 + $0x88] sm:$0xf]
  %v848 = vld [vmem:[%s5 + $0x8c] sm:$0xf]
  %v849 = vld [vmem:[%s5 + $0x90] sm:$0xf]
  %v850 = vld [vmem:[%s5 + $0x94] sm:$0xf]
  %v851 = vld [vmem:[%s5 + $0x98] sm:$0xf]
  %v852 = vld [vmem:[%s5 + $0x9c] sm:$0xf]
  %v853 = vld [vmem:[%s5 + $0xa0] sm:$0xf]
  %v854 = vld [vmem:[%s5 + $0xa4] sm:$0xf]
  %v855 = vld [vmem:[%s5 + $0xa8] sm:$0xf]
  %v856 = vld [vmem:[%s5 + $0xac] sm:$0xf]
  %v857 = vld [vmem:[%s5 + $0xb0] sm:$0xf]
  %v858 = vld [vmem:[%s5 + $0xb4] sm:$0xf]
  %v859 = vld [vmem:[%s5 + $0xb8] sm:$0xf]
  %v860 = vld [vmem:[%s5 + $0xbc] sm:$0xf]
  %v861 = vld [vmem:[%s5 + $0xc0] sm:$0xf]
  %v862 = vld [vmem:[%s5 + $0xc4] sm:$0xf]
  %v863 = vld [vmem:[%s5 + $0xc8] sm:$0xf]
  %v864 = vld [vmem:[%s5 + $0xcc] sm:$0xf]
  %v865 = vld [vmem:[%s5 + $0xd0] sm:$0xf]
  %v866 = vld [vmem:[%s5 + $0xd4] sm:$0xf]
  %v867 = vld [vmem:[%s5 + $0xd8] sm:$0xf]
  %v868 = vld [vmem:[%s5 + $0xdc] sm:$0xf]
  %v869 = vld [vmem:[%s5 + $0xe0] sm:$0xf]
  %v870 = vld [vmem:[%s5 + $0xe4] sm:$0xf]
  %v871 = vld [vmem:[%s5 + $0xe8] sm:$0xf]
  %v872 = vld [vmem:[%s5 + $0xec] sm:$0xf]
  %v873 = vld [vmem:[%s5 + $0xf0] sm:$0xf]
  %v874 = vld [vmem:[%s5 + $0xf4] sm:$0xf]
  %v875 = vld [vmem:[%s5 + $0xf8] sm:$0xf]
  %v876 = vld [vmem:[%s5 + $0xfc] sm:$0xf]
  %v877 = vld [vmem:[%s6] sm:$0x1]
  %v878 = vunpack.c.l.bf16 %v877
  %v879 = vlaneseq
  %v880 = vshrl.u32 %v879, 7
  %v881 = vsub.s32 0, %v880
  %v882 = vrot.slane %v878, %v881
  %v947 = vunpack.c.l.b16 %v813
  %v948 = vunpack.c.l.b16 %v814
  %v949 = vunpack.c.l.b16 %v815
  %v950 = vunpack.c.l.b16 %v816
  %v951 = vunpack.c.l.b16 %v817
  %v952 = vunpack.c.l.b16 %v818
  %v953 = vunpack.c.l.b16 %v819
  %v954 = vunpack.c.l.b16 %v820
  %v955 = vunpack.c.l.b16 %v821
  %v956 = vunpack.c.l.b16 %v822
  %v957 = vunpack.c.l.b16 %v823
  %v958 = vunpack.c.l.b16 %v824
  %v959 = vunpack.c.l.b16 %v825
  %v960 = vunpack.c.l.b16 %v826
  %v961 = vunpack.c.l.b16 %v827
  %v962 = vunpack.c.l.b16 %v828
  %v963 = vunpack.c.l.b16 %v829
  %v964 = vunpack.c.l.b16 %v830
  %v965 = vunpack.c.l.b16 %v831
  %v966 = vunpack.c.l.b16 %v832
  %v967 = vunpack.c.l.b16 %v833
  %v968 = vunpack.c.l.b16 %v834
  %v969 = vunpack.c.l.b16 %v835
  %v970 = vunpack.c.l.b16 %v836
  %v971 = vunpack.c.l.b16 %v837
  %v972 = vunpack.c.l.b16 %v838
  %v973 = vunpack.c.l.b16 %v839
  %v974 = vunpack.c.l.b16 %v840
  %v975 = vunpack.c.l.b16 %v841
  %v976 = vunpack.c.l.b16 %v842
  %v977 = vunpack.c.l.b16 %v843
  %v978 = vunpack.c.l.b16 %v844
  %v979 = vunpack.c.l.b16 %v845
  %v980 = vunpack.c.l.b16 %v846
  %v981 = vunpack.c.l.b16 %v847
  %v982 = vunpack.c.l.b16 %v848
  %v983 = vunpack.c.l.b16 %v849
  %v984 = vunpack.c.l.b16 %v850
  %v985 = vunpack.c.l.b16 %v851
  %v986 = vunpack.c.l.b16 %v852
  %v987 = vunpack.c.l.b16 %v853
  %v988 = vunpack.c.l.b16 %v854
  %v989 = vunpack.c.l.b16 %v855
  %v990 = vunpack.c.l.b16 %v856
  %v991 = vunpack.c.l.b16 %v857
  %v992 = vunpack.c.l.b16 %v858
  %v993 = vunpack.c.l.b16 %v859
  %v994 = vunpack.c.l.b16 %v860
  %v995 = vunpack.c.l.b16 %v861
  %v996 = vunpack.c.l.b16 %v862
  %v997 = vunpack.c.l.b16 %v863
  %v998 = vunpack.c.l.b16 %v864
  %v999 = vunpack.c.l.b16 %v865
  %v1000 = vunpack.c.l.b16 %v866
  %v1001 = vunpack.c.l.b16 %v867
  %v1002 = vunpack.c.l.b16 %v868
  %v1003 = vunpack.c.l.b16 %v869
  %v1004 = vunpack.c.l.b16 %v870
  %v1005 = vunpack.c.l.b16 %v871
  %v1006 = vunpack.c.l.b16 %v872
  %v1007 = vunpack.c.l.b16 %v873
  %v1008 = vunpack.c.l.b16 %v874
  %v1009 = vunpack.c.l.b16 %v875
  %v1010 = vunpack.c.l.b16 %v876
  %v1011 = vpack.c.b16 %v948, %v947
  %v1012 = vpack.c.b16 %v950, %v949
  %v1013 = vpack.c.b16 %v952, %v951
  %v1014 = vpack.c.b16 %v954, %v953
  %v1015 = vpack.c.b16 %v956, %v955
  %v1016 = vpack.c.b16 %v958, %v957
  %v1017 = vpack.c.b16 %v960, %v959
  %v1018 = vpack.c.b16 %v962, %v961
  %v1019 = vpack.c.b16 %v964, %v963
  %v1020 = vpack.c.b16 %v966, %v965
  %v1021 = vpack.c.b16 %v968, %v967
  %v1022 = vpack.c.b16 %v970, %v969
  %v1023 = vpack.c.b16 %v972, %v971
  %v1024 = vpack.c.b16 %v974, %v973
  %v1025 = vpack.c.b16 %v976, %v975
  %v1026 = vpack.c.b16 %v978, %v977
  %v1027 = vpack.c.b16 %v980, %v979
  %v1028 = vpack.c.b16 %v982, %v981
  %v1029 = vpack.c.b16 %v984, %v983
  %v1030 = vpack.c.b16 %v986, %v985
  %v1031 = vpack.c.b16 %v988, %v987
  %v1032 = vpack.c.b16 %v990, %v989
  %v1033 = vpack.c.b16 %v992, %v991
  %v1034 = vpack.c.b16 %v994, %v993
  %v1035 = vpack.c.b16 %v996, %v995
  %v1036 = vpack.c.b16 %v998, %v997
  %v1037 = vpack.c.b16 %v1000, %v999
  %v1038 = vpack.c.b16 %v1002, %v1001
  %v1039 = vpack.c.b16 %v1004, %v1003
  %v1040 = vpack.c.b16 %v1006, %v1005
  %v1041 = vpack.c.b16 %v1008, %v1007
  %v1042 = vpack.c.b16 %v1010, %v1009
  %1075 = vmatprep.subr.bf16.mxu0 0
  %1076 = vmatpush1.bf16.msra.mxu0 %v1018
  %1077 = vmatprep.subr.bf16.mxu0 0
  %1078 = vmatpush1.bf16.msra.mxu0 %v1017
  %1079 = vmatprep.subr.bf16.mxu0 0
  %1080 = vmatpush1.bf16.msra.mxu0 %v1016
  %1081 = vmatprep.subr.bf16.mxu0 0
  %1082 = vmatpush1.bf16.msra.mxu0 %v1015
  %1083 = vmatprep.subr.bf16.mxu0 0
  %1084 = vmatpush1.bf16.msra.mxu0 %v1014
  %1085 = vmatprep.subr.bf16.mxu0 0
  %1086 = vmatpush1.bf16.msra.mxu0 %v1013
  %1087 = vmatprep.subr.bf16.mxu0 0
  %1088 = vmatpush1.bf16.msra.mxu0 %v1012
  %1089 = vmatprep.subr.bf16.mxu0 0
  %1090 = vmatpush1.bf16.msra.mxu0 %v1011
  %1091 = vmatprep.subr.bf16.mxu0 0
  %1092 = vmatpush2.bf16.msra.mxu0 %v1026
  %1093 = vmatprep.subr.bf16.mxu0 0
  %1094 = vmatpush2.bf16.msra.mxu0 %v1025
  %1095 = vmatprep.subr.bf16.mxu0 0
  %1096 = vmatpush2.bf16.msra.mxu0 %v1024
  %1097 = vmatprep.subr.bf16.mxu0 0
  %1098 = vmatpush2.bf16.msra.mxu0 %v1023
  %1099 = vmatprep.subr.bf16.mxu0 0
  %1100 = vmatpush2.bf16.msra.mxu0 %v1022
  %1101 = vmatprep.subr.bf16.mxu0 0
  %1102 = vmatpush2.bf16.msra.mxu0 %v1021
  %1103 = vmatprep.subr.bf16.mxu0 0
  %1104 = vmatpush2.bf16.msra.mxu0 %v1020
  %1105 = vmatprep.subr.bf16.mxu0 0
  %1106 = vmatpush2.bf16.msra.mxu0 %v1019
  %1107 = vmatprep.mubr.bf16.mxu0 %v798
  %1108 = vmatmul.mubr.bf16.gmra.mxu0 %v797
  %v1109 = vpop.f32.mrf.mxu0
  %v1110 = vadd.f32 %v882, %v1109
  %v1111 = vpop.f32.mrf.mxu0
  %v1112 = vpop.f32.mrf.mxu0
  %v1113 = vadd.f32 %v882, %v1112
  %v1114 = vpop.f32.mrf.mxu0
  %1115 = vmatprep.mubr.bf16.mxu0 %v802
  %1116 = vmatmul.mubr.bf16.gmra.mxu0 %v801
  %v1117 = vpop.f32.mrf.mxu0
  %v1118 = vadd.f32 %v882, %v1117
  %v1119 = vpop.f32.mrf.mxu0
  %v1120 = vpop.f32.mrf.mxu0
  %v1121 = vadd.f32 %v882, %v1120
  %v1122 = vpop.f32.mrf.mxu0
  %1123 = vmatprep.mubr.bf16.mxu0 %v806
  %1124 = vmatmul.mubr.bf16.gmra.mxu0 %v805
  %v1125 = vpop.f32.mrf.mxu0
  %v1126 = vadd.f32 %v882, %v1125
  %v1127 = vpop.f32.mrf.mxu0
  %v1128 = vpop.f32.mrf.mxu0
  %v1129 = vadd.f32 %v882, %v1128
  %v1130 = vpop.f32.mrf.mxu0
  %1131 = vmatprep.mubr.bf16.mxu0 %v810
  %1132 = vmatmul.mubr.bf16.gmra.mxu0 %v809
  %v1133 = vpop.f32.mrf.mxu0
  %v1134 = vadd.f32 %v882, %v1133
  %v1135 = vpop.f32.mrf.mxu0
  %v1136 = vpop.f32.mrf.mxu0
  %v1137 = vadd.f32 %v882, %v1136
  %v1138 = vpop.f32.mrf.mxu0
  %1139 = vdwg.mxu0
  %1140 = vmatprep.subr.bf16.mxu0 0
  %1141 = vmatpush1.bf16.msra.mxu0 %v1034
  %1142 = vmatprep.subr.bf16.mxu0 0
  %1143 = vmatpush1.bf16.msra.mxu0 %v1033
  %1144 = vmatprep.subr.bf16.mxu0 0
  %1145 = vmatpush1.bf16.msra.mxu0 %v1032
  %1146 = vmatprep.subr.bf16.mxu0 0
  %1147 = vmatpush1.bf16.msra.mxu0 %v1031
  %1148 = vmatprep.subr.bf16.mxu0 0
  %1149 = vmatpush1.bf16.msra.mxu0 %v1030
  %1150 = vmatprep.subr.bf16.mxu0 0
  %1151 = vmatpush1.bf16.msra.mxu0 %v1029
  %1152 = vmatprep.subr.bf16.mxu0 0
  %1153 = vmatpush1.bf16.msra.mxu0 %v1028
  %1154 = vmatprep.subr.bf16.mxu0 0
  %1155 = vmatpush1.bf16.msra.mxu0 %v1027
  %1156 = vmatprep.subr.bf16.mxu0 0
  %1157 = vmatpush2.bf16.msra.mxu0 %v1042
  %1158 = vmatprep.subr.bf16.mxu0 0
  %1159 = vmatpush2.bf16.msra.mxu0 %v1041
  %1160 = vmatprep.subr.bf16.mxu0 0
  %1161 = vmatpush2.bf16.msra.mxu0 %v1040
  %1162 = vmatprep.subr.bf16.mxu0 0
  %1163 = vmatpush2.bf16.msra.mxu0 %v1039
  %1164 = vmatprep.subr.bf16.mxu0 0
  %1165 = vmatpush2.bf16.msra.mxu0 %v1038
  %1166 = vmatprep.subr.bf16.mxu0 0
  %1167 = vmatpush2.bf16.msra.mxu0 %v1037
  %1168 = vmatprep.subr.bf16.mxu0 0
  %1169 = vmatpush2.bf16.msra.mxu0 %v1036
  %1170 = vmatprep.subr.bf16.mxu0 0
  %1171 = vmatpush2.bf16.msra.mxu0 %v1035
  %1172 = vmatprep.mubr.bf16.mxu0 %v800
  %1173 = vmatmul.mubr.bf16.gmra.mxu0 %v799
  %v1174 = vpop.f32.mrf.mxu0
  %v1175 = vadd.f32 %v1110, %v1174
  %v1176 = vpop.f32.mrf.mxu0
  %v1177 = vpop.f32.mrf.mxu0
  %v1178 = vadd.f32 %v1113, %v1177
  %v1179 = vpop.f32.mrf.mxu0
  %1180 = vmatprep.mubr.bf16.mxu0 %v804
  %1181 = vmatmul.mubr.bf16.gmra.mxu0 %v803
  %v1182 = vpop.f32.mrf.mxu0
  %v1183 = vadd.f32 %v1118, %v1182
  %v1184 = vpop.f32.mrf.mxu0
  %v1185 = vpop.f32.mrf.mxu0
  %v1186 = vadd.f32 %v1121, %v1185
  %v1187 = vpop.f32.mrf.mxu0
  %1188 = vmatprep.mubr.bf16.mxu0 %v808
  %1189 = vmatmul.mubr.bf16.gmra.mxu0 %v807
  %v1190 = vpop.f32.mrf.mxu0
  %v1191 = vadd.f32 %v1126, %v1190
  %v1192 = vpop.f32.mrf.mxu0
  %v1193 = vpop.f32.mrf.mxu0
  %v1194 = vadd.f32 %v1129, %v1193
  %v1195 = vpop.f32.mrf.mxu0
  %1196 = vmatprep.mubr.bf16.mxu0 %v812
  %1197 = vmatmul.mubr.bf16.gmra.mxu0 %v811
  %v1198 = vpop.f32.mrf.mxu0
  %v1199 = vadd.f32 %v1134, %v1198
  %v1200 = vpop.f32.mrf.mxu0
  %v1201 = vpop.f32.mrf.mxu0
  %v1202 = vadd.f32 %v1137, %v1201
  %v1203 = vpop.f32.mrf.mxu0
  %1204 = vdwg.mxu0
  %v1205 = vadd.f32 %v1175, %v35
  %v1206 = vadd.f32 %v1178, %v36
  %v1207 = vadd.f32 %v1183, %v37
  %v1208 = vadd.f32 %v1186, %v38
  %v1209 = vadd.f32 %v1191, %v39
  %v1210 = vadd.f32 %v1194, %v40
  %v1211 = vadd.f32 %v1199, %v41
  %v1212 = vadd.f32 %v1202, %v42
  %v1213 = vpack.c.bf16 %v1206, %v1205
  %v1214 = vpack.c.bf16 %v1208, %v1207
  %v1215 = vpack.c.bf16 %v1210, %v1209
  %v1216 = vpack.c.bf16 %v1212, %v1211
  %v1221 = vunpack.c.l.b16 %v1213
  %v1222 = vunpack.c.h.b16 %v1213
  %v1223 = vunpack.c.l.b16 %v1214
  %v1224 = vunpack.c.h.b16 %v1214
  %v1225 = vunpack.c.l.b16 %v1215
  %v1226 = vunpack.c.h.b16 %v1215
  %v1227 = vunpack.c.l.b16 %v1216
  %v1228 = vunpack.c.h.b16 %v1216
  %v1229 = vpack.c.b16 %v1221, %v1221
  %v1230 = vpack.c.b16 %v1222, %v1222
  %v1231 = vpack.c.b16 %v1223, %v1223
  %v1232 = vpack.c.b16 %v1224, %v1224
  %v1233 = vpack.c.b16 %v1225, %v1225
  %v1234 = vpack.c.b16 %v1226, %v1226
  %v1235 = vpack.c.b16 %v1227, %v1227
  %v1236 = vpack.c.b16 %v1228, %v1228
  %1245 = vst [vmem:[%s7] sm:$0xf] %v1229
  %1246 = vst [vmem:[%s7 + $0x4] sm:$0xf] %v1230
  %1247 = vst [vmem:[%s7 + $0x8] sm:$0xf] %v1231
  %1248 = vst [vmem:[%s7 + $0xc] sm:$0xf] %v1232
  %1249 = vst [vmem:[%s7 + $0x10] sm:$0xf] %v1233
  %1250 = vst [vmem:[%s7 + $0x14] sm:$0xf] %v1234
  %1251 = vst [vmem:[%s7 + $0x18] sm:$0xf] %v1235
  %1252 = vst [vmem:[%s7 + $0x1c] sm:$0xf] %v1236
  // Predicated region
  $region30: #{full_forward.11} parent=0 // pred_check
    _
  $region31: #{full_forward.11} parent=0 // pred_check_branch
    %1254 = sbr.rel (0) target = $region33
  $region32: #{full_forward.11} parent=0 // pred_region
    _
  $region33: #{full_forward.11} parent=0 // pred_fallthru
    _
  // Predicated region
  $region34: #{full_forward.11} parent=0 // pred_check
    _
  $region35: #{full_forward.11} parent=0 // pred_check_branch
    %1256 = sbr.rel (0) target = $region37
  $region36: #{full_forward.11} parent=0 // pred_region
    _
  $region37: #{full_forward.11} parent=0 // pred_fallthru
    _

// kernel: full_forward.10
$region0: #{full_forward.10}
  #allocation0 [shape = 'u32[]', space=smem, size = 0x4, offset = 0x4, fixed_abs, tag = 'smem constant byte address 0x4 - core index']
  #allocation1 [shape = 'u32[144,128]{1,0:T(1,128)}', space=vmem, size = 0x12000, scoped, tag = 'internal scratch']
  %s0 = inlined_call_operand.vmem [shape: bf16[4,16,384], index: 0, kind: input, shape index: {}]
  %s1 = inlined_call_operand.vmem [shape: bf16[4,16,128], index: 1, kind: input, shape index: {}]
  %s2 = inlined_call_operand.vmem [shape: f32[16,16], index: 2, kind: input, shape index: {}]
  %s3 = inlined_call_operand.vmem [shape: bf16[128,128], index: 3, kind: input, shape index: {}]
  %s4 = inlined_call_operand.vmem [shape: bf16[1,128], index: 4, kind: input, shape index: {}]
  %s5 = inlined_call_operand.vmem [shape: bf16[4,16,128], index: 5, kind: output, shape index: {}]
  %s6 = sld [smem:[#allocation0]]
  $region30: #{full_forward.10} parent=0
    _
  %s8 = ssub.s32 1, %s6
  %s9 = scalar_select 0, %s8, %s6
  // Predicated region
  $region2: #{full_forward.10} parent=0 // pred_check
    _
  $region3: #{full_forward.10} parent=0 // pred_check_branch
    %11 = sbr.rel (0) target = $region5
  $region4: #{full_forward.10} parent=0 // pred_region
    _
  $region5: #{full_forward.10} parent=0 // pred_fallthru
    _
  // Predicated region
  $region6: #{full_forward.10} parent=0 // pred_check
    _
  $region7: #{full_forward.10} parent=0 // pred_check_branch
    %13 = sbr.rel (0) target = $region9
  $region8: #{full_forward.10} parent=0 // pred_region
    _
  $region9: #{full_forward.10} parent=0 // pred_fallthru
    _
  // Predicated region
  $region10: #{full_forward.10} parent=0 // pred_check
    _
  $region11: #{full_forward.10} parent=0 // pred_check_branch
    %15 = sbr.rel (0) target = $region13
  $region12: #{full_forward.10} parent=0 // pred_region
    _
  $region13: #{full_forward.10} parent=0 // pred_fallthru
    _
  // Predicated region
  $region14: #{full_forward.10} parent=0 // pred_check
    _
  $region15: #{full_forward.10} parent=0 // pred_check_branch
    %17 = sbr.rel (0) target = $region17
  $region16: #{full_forward.10} parent=0 // pred_region
    _
  $region17: #{full_forward.10} parent=0 // pred_fallthru
    _
  // Predicated region
  $region18: #{full_forward.10} parent=0 // pred_check
    _
  $region19: #{full_forward.10} parent=0 // pred_check_branch
    %19 = sbr.rel (0) target = $region21
  $region20: #{full_forward.10} parent=0 // pred_region
    _
  $region21: #{full_forward.10} parent=0 // pred_fallthru
    _
  %v21 = vld [vmem:[%s0] sm:$0xff]
  %v22 = vld [vmem:[%s0 + $0x8] sm:$0xf]
  %v23 = vld [vmem:[%s0 + $0xc] sm:$0xff]
  %v24 = vld [vmem:[%s0 + $0x14] sm:$0xf]
  %v25 = vld [vmem:[%s0 + $0x18] sm:$0xff]
  %v26 = vld [vmem:[%s0 + $0x20] sm:$0xf]
  %v27 = vld [vmem:[%s0 + $0x24] sm:$0xff]
  %v28 = vld [vmem:[%s0 + $0x2c] sm:$0xf]
  %v29 = vld [vmem:[%s0 + $0x30] sm:$0xff]
  %v30 = vld [vmem:[%s0 + $0x38] sm:$0xf]
  %v31 = vld [vmem:[%s0 + $0x3c] sm:$0xff]
  %v32 = vld [vmem:[%s0 + $0x44] sm:$0xf]
  %v33 = vld [vmem:[%s0 + $0x48] sm:$0xff]
  %v34 = vld [vmem:[%s0 + $0x50] sm:$0xf]
  %v35 = vld [vmem:[%s0 + $0x54] sm:$0xff]
  %v36 = vld [vmem:[%s0 + $0x5c] sm:$0xf]
  %v37 = vld [vmem:[%s2] sm:$0xff]
  %v38 = vld [vmem:[%s2 + $0x8] sm:$0xff]
  %v39 = vld [vmem:[%s3] sm:$0xf]
  %v40 = vld [vmem:[%s3 + $0x4] sm:$0xf]
  %v41 = vld [vmem:[%s3 + $0x8] sm:$0xf]
  %v42 = vld [vmem:[%s3 + $0xc] sm:$0xf]
  %v43 = vld [vmem:[%s3 + $0x10] sm:$0xf]
  %v44 = vld [vmem:[%s3 + $0x14] sm:$0xf]
  %v45 = vld [vmem:[%s3 + $0x18] sm:$0xf]
  %v46 = vld [vmem:[%s3 + $0x1c] sm:$0xf]
  %v47 = vld [vmem:[%s3 + $0x20] sm:$0xf]
  %v48 = vld [vmem:[%s3 + $0x24] sm:$0xf]
  %v49 = vld [vmem:[%s3 + $0x28] sm:$0xf]
  %v50 = vld [vmem:[%s3 + $0x2c] sm:$0xf]
  %v51 = vld [vmem:[%s3 + $0x30] sm:$0xf]
  %v52 = vld [vmem:[%s3 + $0x34] sm:$0xf]
  %v53 = vld [vmem:[%s3 + $0x38] sm:$0xf]
  %v54 = vld [vmem:[%s3 + $0x3c] sm:$0xf]
  %v57 = vrot.slane %v21, 4
  %v58 = vrot.slane %v23, 4
  %v59 = vunpack.c.l.b16 %v21
  %v60 = vunpack.c.l.b16 %v23
  %v61 = vpack.c.b16 %v60, %v59
  %v62 = vunpack.c.l.b16 %v57
  %v63 = vunpack.c.l.b16 %v58
  %v64 = vpack.c.b16 %v63, %v62
  %vm65 = vcmask 261120
  %v67 = vsel %vm65, %v61, 0
  %v70 = vsel %vm65, %v64, 0
  %72 = vmatprep.subr.bf16.mxu0 0
  %73 = vmatpush1.bf16.xpose.msra.mxu0 0
  %74 = vmatprep.subr.bf16.mxu0 0
  %75 = vmatpush1.bf16.xpose.msra.mxu0 0
  %76 = vmatprep.subr.bf16.mxu0 0
  %77 = vmatpush1.bf16.xpose.msra.mxu0 0
  %78 = vmatprep.subr.bf16.mxu0 0
  %79 = vmatpush1.bf16.xpose.msra.mxu0 0
  %80 = vmatprep.subr.bf16.mxu0 0
  %81 = vmatpush1.bf16.xpose.msra.mxu0 0
  %82 = vmatprep.subr.bf16.mxu0 0
  %83 = vmatpush1.bf16.xpose.msra.mxu0 0
  %84 = vmatprep.subr.bf16.mxu0 0
  %85 = vmatpush1.bf16.xpose.msra.mxu0 0
  %86 = vmatprep.subr.bf16.mxu0 0
  %87 = vmatpush1.bf16.xpose.msra.mxu0 %v70
  %88 = vmatprep.subr.bf16.mxu0 0
  %89 = vmatpush2.bf16.xpose.msra.mxu0 0
  %90 = vmatprep.subr.bf16.mxu0 0
  %91 = vmatpush2.bf16.xpose.msra.mxu0 0
  %92 = vmatprep.subr.bf16.mxu0 0
  %93 = vmatpush2.bf16.xpose.msra.mxu0 0
  %94 = vmatprep.subr.bf16.mxu0 0
  %95 = vmatpush2.bf16.xpose.msra.mxu0 0
  %96 = vmatprep.subr.bf16.mxu0 0
  %97 = vmatpush2.bf16.xpose.msra.mxu0 0
  %98 = vmatprep.subr.bf16.mxu0 0
  %99 = vmatpush2.bf16.xpose.msra.mxu0 0
  %100 = vmatprep.subr.bf16.mxu0 0
  %101 = vmatpush2.bf16.xpose.msra.mxu0 0
  %102 = vmatprep.subr.bf16.mxu0 0
  %103 = vmatpush2.bf16.xpose.msra.mxu0 0
  %104 = vmatprep.mubr.bf16.mxu0 0
  %105 = vmatmul.mubr.bf16.gmra.mxu0 %v67
  %v106 = vpop.f32.mrf.mxu0
  %v107 = vadd.f32 %v37, %v106
  %v108 = vpop.f32.mrf.mxu0
  %v109 = vpop.f32.mrf.mxu0
  %v110 = vadd.f32 %v38, %v109
  %v111 = vpop.f32.mrf.mxu0
  %112 = vdwg.mxu0
  %v115 = vrot.slane %v25, 4
  %v116 = vrot.slane %v27, 4
  %v117 = vunpack.c.l.b16 %v25
  %v118 = vunpack.c.l.b16 %v27
  %v119 = vpack.c.b16 %v118, %v117
  %v120 = vunpack.c.l.b16 %v115
  %v121 = vunpack.c.l.b16 %v116
  %v122 = vpack.c.b16 %v121, %v120
  %v124 = vsel %vm65, %v119, 0
  %v127 = vsel %vm65, %v122, 0
  %129 = vmatprep.subr.bf16.mxu0 0
  %130 = vmatpush1.bf16.xpose.msra.mxu0 0
  %131 = vmatprep.subr.bf16.mxu0 0
  %132 = vmatpush1.bf16.xpose.msra.mxu0 0
  %133 = vmatprep.subr.bf16.mxu0 0
  %134 = vmatpush1.bf16.xpose.msra.mxu0 0
  %135 = vmatprep.subr.bf16.mxu0 0
  %136 = vmatpush1.bf16.xpose.msra.mxu0 0
  %137 = vmatprep.subr.bf16.mxu0 0
  %138 = vmatpush1.bf16.xpose.msra.mxu0 0
  %139 = vmatprep.subr.bf16.mxu0 0
  %140 = vmatpush1.bf16.xpose.msra.mxu0 0
  %141 = vmatprep.subr.bf16.mxu0 0
  %142 = vmatpush1.bf16.xpose.msra.mxu0 0
  %143 = vmatprep.subr.bf16.mxu0 0
  %144 = vmatpush1.bf16.xpose.msra.mxu0 %v127
  %145 = vmatprep.subr.bf16.mxu0 0
  %146 = vmatpush2.bf16.xpose.msra.mxu0 0
  %147 = vmatprep.subr.bf16.mxu0 0
  %148 = vmatpush2.bf16.xpose.msra.mxu0 0
  %149 = vmatprep.subr.bf16.mxu0 0
  %150 = vmatpush2.bf16.xpose.msra.mxu0 0
  %151 = vmatprep.subr.bf16.mxu0 0
  %152 = vmatpush2.bf16.xpose.msra.mxu0 0
  %153 = vmatprep.subr.bf16.mxu0 0
  %154 = vmatpush2.bf16.xpose.msra.mxu0 0
  %155 = vmatprep.subr.bf16.mxu0 0
  %156 = vmatpush2.bf16.xpose.msra.mxu0 0
  %157 = vmatprep.subr.bf16.mxu0 0
  %158 = vmatpush2.bf16.xpose.msra.mxu0 0
  %159 = vmatprep.subr.bf16.mxu0 0
  %160 = vmatpush2.bf16.xpose.msra.mxu0 0
  %161 = vmatprep.mubr.bf16.mxu0 0
  %162 = vmatmul.mubr.bf16.gmra.mxu0 %v124
  %v163 = vpop.f32.mrf.mxu0
  %v164 = vadd.f32 %v37, %v163
  %v165 = vpop.f32.mrf.mxu0
  %v166 = vpop.f32.mrf.mxu0
  %v167 = vadd.f32 %v38, %v166
  %v168 = vpop.f32.mrf.mxu0
  %169 = vdwg.mxu0
  %v172 = vrot.slane %v29, 4
  %v173 = vrot.slane %v31, 4
  %v174 = vunpack.c.l.b16 %v29
  %v175 = vunpack.c.l.b16 %v31
  %v176 = vpack.c.b16 %v175, %v174
  %v177 = vunpack.c.l.b16 %v172
  %v178 = vunpack.c.l.b16 %v173
  %v179 = vpack.c.b16 %v178, %v177
  %v181 = vsel %vm65, %v176, 0
  %v184 = vsel %vm65, %v179, 0
  %186 = vmatprep.subr.bf16.mxu0 0
  %187 = vmatpush1.bf16.xpose.msra.mxu0 0
  %188 = vmatprep.subr.bf16.mxu0 0
  %189 = vmatpush1.bf16.xpose.msra.mxu0 0
  %190 = vmatprep.subr.bf16.mxu0 0
  %191 = vmatpush1.bf16.xpose.msra.mxu0 0
  %192 = vmatprep.subr.bf16.mxu0 0
  %193 = vmatpush1.bf16.xpose.msra.mxu0 0
  %194 = vmatprep.subr.bf16.mxu0 0
  %195 = vmatpush1.bf16.xpose.msra.mxu0 0
  %196 = vmatprep.subr.bf16.mxu0 0
  %197 = vmatpush1.bf16.xpose.msra.mxu0 0
  %198 = vmatprep.subr.bf16.mxu0 0
  %199 = vmatpush1.bf16.xpose.msra.mxu0 0
  %200 = vmatprep.subr.bf16.mxu0 0
  %201 = vmatpush1.bf16.xpose.msra.mxu0 %v184
  %202 = vmatprep.subr.bf16.mxu0 0
  %203 = vmatpush2.bf16.xpose.msra.mxu0 0
  %204 = vmatprep.subr.bf16.mxu0 0
  %205 = vmatpush2.bf16.xpose.msra.mxu0 0
  %206 = vmatprep.subr.bf16.mxu0 0
  %207 = vmatpush2.bf16.xpose.msra.mxu0 0
  %208 = vmatprep.subr.bf16.mxu0 0
  %209 = vmatpush2.bf16.xpose.msra.mxu0 0
  %210 = vmatprep.subr.bf16.mxu0 0
  %211 = vmatpush2.bf16.xpose.msra.mxu0 0
  %212 = vmatprep.subr.bf16.mxu0 0
  %213 = vmatpush2.bf16.xpose.msra.mxu0 0
  %214 = vmatprep.subr.bf16.mxu0 0
  %215 = vmatpush2.bf16.xpose.msra.mxu0 0
  %216 = vmatprep.subr.bf16.mxu0 0
  %217 = vmatpush2.bf16.xpose.msra.mxu0 0
  %218 = vmatprep.mubr.bf16.mxu0 0
  %219 = vmatmul.mubr.bf16.gmra.mxu0 %v181
  %v220 = vpop.f32.mrf.mxu0
  %v221 = vadd.f32 %v37, %v220
  %v222 = vpop.f32.mrf.mxu0
  %v223 = vpop.f32.mrf.mxu0
  %v224 = vadd.f32 %v38, %v223
  %v225 = vpop.f32.mrf.mxu0
  %226 = vdwg.mxu0
  %v229 = vrot.slane %v33, 4
  %v230 = vrot.slane %v35, 4
  %v231 = vunpack.c.l.b16 %v33
  %v232 = vunpack.c.l.b16 %v35
  %v233 = vpack.c.b16 %v232, %v231
  %v234 = vunpack.c.l.b16 %v229
  %v235 = vunpack.c.l.b16 %v230
  %v236 = vpack.c.b16 %v235, %v234
  %v238 = vsel %vm65, %v233, 0
  %v241 = vsel %vm65, %v236, 0
  %243 = vmatprep.subr.bf16.mxu0 0
  %244 = vmatpush1.bf16.xpose.msra.mxu0 0
  %245 = vmatprep.subr.bf16.mxu0 0
  %246 = vmatpush1.bf16.xpose.msra.mxu0 0
  %247 = vmatprep.subr.bf16.mxu0 0
  %248 = vmatpush1.bf16.xpose.msra.mxu0 0
  %249 = vmatprep.subr.bf16.mxu0 0
  %250 = vmatpush1.bf16.xpose.msra.mxu0 0
  %251 = vmatprep.subr.bf16.mxu0 0
  %252 = vmatpush1.bf16.xpose.msra.mxu0 0
  %253 = vmatprep.subr.bf16.mxu0 0
  %254 = vmatpush1.bf16.xpose.msra.mxu0 0
  %255 = vmatprep.subr.bf16.mxu0 0
  %256 = vmatpush1.bf16.xpose.msra.mxu0 0
  %257 = vmatprep.subr.bf16.mxu0 0
  %258 = vmatpush1.bf16.xpose.msra.mxu0 %v241
  %259 = vmatprep.subr.bf16.mxu0 0
  %260 = vmatpush2.bf16.xpose.msra.mxu0 0
  %261 = vmatprep.subr.bf16.mxu0 0
  %262 = vmatpush2.bf16.xpose.msra.mxu0 0
  %263 = vmatprep.subr.bf16.mxu0 0
  %264 = vmatpush2.bf16.xpose.msra.mxu0 0
  %265 = vmatprep.subr.bf16.mxu0 0
  %266 = vmatpush2.bf16.xpose.msra.mxu0 0
  %267 = vmatprep.subr.bf16.mxu0 0
  %268 = vmatpush2.bf16.xpose.msra.mxu0 0
  %269 = vmatprep.subr.bf16.mxu0 0
  %270 = vmatpush2.bf16.xpose.msra.mxu0 0
  %271 = vmatprep.subr.bf16.mxu0 0
  %272 = vmatpush2.bf16.xpose.msra.mxu0 0
  %273 = vmatprep.subr.bf16.mxu0 0
  %274 = vmatpush2.bf16.xpose.msra.mxu0 0
  %275 = vmatprep.mubr.bf16.mxu0 0
  %276 = vmatmul.mubr.bf16.gmra.mxu0 %v238
  %v277 = vpop.f32.mrf.mxu0
  %v278 = vadd.f32 %v37, %v277
  %v279 = vpop.f32.mrf.mxu0
  %v280 = vpop.f32.mrf.mxu0
  %v281 = vadd.f32 %v38, %v280
  %v282 = vpop.f32.mrf.mxu0
  %283 = vdwg.mxu0
  %vm284 = vcmask 130048
  %v285 = vsel %vm284, %v107, -inf
  %286 = vmax.xlane.f32.xlu0 %v285
  %v287 = vpop.xlane.xlu0 %286
  %v288 = vsel %vm284, %v110, -inf
  %289 = vmax.xlane.f32.xlu0 %v288
  %v290 = vpop.xlane.xlu0 %289
  %v291 = vsel %vm284, %v164, -inf
  %292 = vmax.xlane.f32.xlu0 %v291
  %v293 = vpop.xlane.xlu0 %292
  %v294 = vsel %vm284, %v167, -inf
  %295 = vmax.xlane.f32.xlu0 %v294
  %v296 = vpop.xlane.xlu0 %295
  %v297 = vsel %vm284, %v221, -inf
  %298 = vmax.xlane.f32.xlu0 %v297
  %v299 = vpop.xlane.xlu0 %298
  %v300 = vsel %vm284, %v224, -inf
  %301 = vmax.xlane.f32.xlu0 %v300
  %v302 = vpop.xlane.xlu0 %301
  %v303 = vsel %vm284, %v278, -inf
  %304 = vmax.xlane.f32.xlu0 %v303
  %v305 = vpop.xlane.xlu0 %304
  %v306 = vsel %vm284, %v281, -inf
  %307 = vmax.xlane.f32.xlu0 %v306
  %v308 = vpop.xlane.xlu0 %307
  %v309 = vsub.f32 %v107, %v287
  %v310 = vsub.f32 %v110, %v290
  %v311 = vsub.f32 %v164, %v293
  %v312 = vsub.f32 %v167, %v296
  %v313 = vsub.f32 %v221, %v299
  %v314 = vsub.f32 %v224, %v302
  %v315 = vsub.f32 %v278, %v305
  %v316 = vsub.f32 %v281, %v308
  %v317 = vmul.f32 %v309, 1.442695
  %v318 = vpow.pop %v317
  %v319 = vmul.f32 %v310, 1.442695
  %v320 = vpow.pop %v319
  %v321 = vmul.f32 %v311, 1.442695
  %v322 = vpow.pop %v321
  %v323 = vmul.f32 %v312, 1.442695
  %v324 = vpow.pop %v323
  %v325 = vmul.f32 %v313, 1.442695
  %v326 = vpow.pop %v325
  %v327 = vmul.f32 %v314, 1.442695
  %v328 = vpow.pop %v327
  %v329 = vmul.f32 %v315, 1.442695
  %v330 = vpow.pop %v329
  %v331 = vmul.f32 %v316, 1.442695
  %v332 = vpow.pop %v331
  %v333 = vsel %vm284, %v318, 0.0
  %334 = vadd.xlane.f32.xlu0 %v333
  %v335 = vpop.xlane.xlu0 %334
  %v336 = vsel %vm284, %v320, 0.0
  %337 = vadd.xlane.f32.xlu0 %v336
  %v338 = vpop.xlane.xlu0 %337
  %v339 = vsel %vm284, %v322, 0.0
  %340 = vadd.xlane.f32.xlu0 %v339
  %v341 = vpop.xlane.xlu0 %340
  %v342 = vsel %vm284, %v324, 0.0
  %343 = vadd.xlane.f32.xlu0 %v342
  %v344 = vpop.xlane.xlu0 %343
  %v345 = vsel %vm284, %v326, 0.0
  %346 = vadd.xlane.f32.xlu0 %v345
  %v347 = vpop.xlane.xlu0 %346
  %v348 = vsel %vm284, %v328, 0.0
  %349 = vadd.xlane.f32.xlu0 %v348
  %v350 = vpop.xlane.xlu0 %349
  %v351 = vsel %vm284, %v330, 0.0
  %352 = vadd.xlane.f32.xlu0 %v351
  %v353 = vpop.xlane.xlu0 %352
  %v354 = vsel %vm284, %v332, 0.0
  %355 = vadd.xlane.f32.xlu0 %v354
  %v356 = vpop.xlane.xlu0 %355
  %v357 = vrcp.pop %v335
  %v358 = vrcp.pop %v338
  %v359 = vrcp.pop %v341
  %v360 = vrcp.pop %v344
  %v361 = vrcp.pop %v347
  %v362 = vrcp.pop %v350
  %v363 = vrcp.pop %v353
  %v364 = vrcp.pop %v356
  %v365 = vmul.f32 %v318, %v357
  %v366 = vmul.f32 %v320, %v358
  %v367 = vmul.f32 %v322, %v359
  %v368 = vmul.f32 %v324, %v360
  %v369 = vmul.f32 %v326, %v361
  %v370 = vmul.f32 %v328, %v362
  %v371 = vmul.f32 %v330, %v363
  %v372 = vmul.f32 %v332, %v364
  %v373 = vpack.c.bf16 %v366, %v365
  %v374 = vpack.c.bf16 %v368, %v367
  %v375 = vpack.c.bf16 %v370, %v369
  %v376 = vpack.c.bf16 %v372, %v371
  %v379 = vunpack.c.l.b16 %v22
  %v380 = vunpack.c.l.b16 %v24
  %v381 = vpack.c.b16 %v380, %v379
  %v384 = vsel %vm284, %v373, 0
  %386 = vmatprep.subr.bf16.mxu0 0
  %387 = vmatpush1.bf16.msra.mxu0 0
  %388 = vmatprep.subr.bf16.mxu0 0
  %389 = vmatpush1.bf16.msra.mxu0 0
  %390 = vmatprep.subr.bf16.mxu0 0
  %391 = vmatpush1.bf16.msra.mxu0 0
  %392 = vmatprep.subr.bf16.mxu0 0
  %393 = vmatpush1.bf16.msra.mxu0 0
  %394 = vmatprep.subr.bf16.mxu0 0
  %395 = vmatpush1.bf16.msra.mxu0 0
  %396 = vmatprep.subr.bf16.mxu0 0
  %397 = vmatpush1.bf16.msra.mxu0 0
  %398 = vmatprep.subr.bf16.mxu0 0
  %399 = vmatpush1.bf16.msra.mxu0 0
  %400 = vmatprep.subr.bf16.mxu0 0
  %401 = vmatpush1.bf16.msra.mxu0 %v381
  %402 = vmatprep.subr.bf16.mxu0 0
  %403 = vmatpush2.bf16.msra.mxu0 0
  %404 = vmatprep.subr.bf16.mxu0 0
  %405 = vmatpush2.bf16.msra.mxu0 0
  %406 = vmatprep.subr.bf16.mxu0 0
  %407 = vmatpush2.bf16.msra.mxu0 0
  %408 = vmatprep.subr.bf16.mxu0 0
  %409 = vmatpush2.bf16.msra.mxu0 0
  %410 = vmatprep.subr.bf16.mxu0 0
  %411 = vmatpush2.bf16.msra.mxu0 0
  %412 = vmatprep.subr.bf16.mxu0 0
  %413 = vmatpush2.bf16.msra.mxu0 0
  %414 = vmatprep.subr.bf16.mxu0 0
  %415 = vmatpush2.bf16.msra.mxu0 0
  %416 = vmatprep.subr.bf16.mxu0 0
  %417 = vmatpush2.bf16.msra.mxu0 0
  %418 = vmatprep.mubr.bf16.mxu0 0
  %419 = vmatmul.mubr.bf16.gmra.mxu0 %v384
  %v420 = vpop.f32.mrf.mxu0
  %v421 = vadd.f32 0.0, %v420
  %v422 = vpop.f32.mrf.mxu0
  %v423 = vpop.f32.mrf.mxu0
  %v424 = vadd.f32 0.0, %v423
  %v425 = vpop.f32.mrf.mxu0
  %426 = vdwg.mxu0
  %v429 = vunpack.c.l.b16 %v26
  %v430 = vunpack.c.l.b16 %v28
  %v431 = vpack.c.b16 %v430, %v429
  %v434 = vsel %vm284, %v374, 0
  %436 = vmatprep.subr.bf16.mxu0 0
  %437 = vmatpush1.bf16.msra.mxu0 0
  %438 = vmatprep.subr.bf16.mxu0 0
  %439 = vmatpush1.bf16.msra.mxu0 0
  %440 = vmatprep.subr.bf16.mxu0 0
  %441 = vmatpush1.bf16.msra.mxu0 0
  %442 = vmatprep.subr.bf16.mxu0 0
  %443 = vmatpush1.bf16.msra.mxu0 0
  %444 = vmatprep.subr.bf16.mxu0 0
  %445 = vmatpush1.bf16.msra.mxu0 0
  %446 = vmatprep.subr.bf16.mxu0 0
  %447 = vmatpush1.bf16.msra.mxu0 0
  %448 = vmatprep.subr.bf16.mxu0 0
  %449 = vmatpush1.bf16.msra.mxu0 0
  %450 = vmatprep.subr.bf16.mxu0 0
  %451 = vmatpush1.bf16.msra.mxu0 %v431
  %452 = vmatprep.subr.bf16.mxu0 0
  %453 = vmatpush2.bf16.msra.mxu0 0
  %454 = vmatprep.subr.bf16.mxu0 0
  %455 = vmatpush2.bf16.msra.mxu0 0
  %456 = vmatprep.subr.bf16.mxu0 0
  %457 = vmatpush2.bf16.msra.mxu0 0
  %458 = vmatprep.subr.bf16.mxu0 0
  %459 = vmatpush2.bf16.msra.mxu0 0
  %460 = vmatprep.subr.bf16.mxu0 0
  %461 = vmatpush2.bf16.msra.mxu0 0
  %462 = vmatprep.subr.bf16.mxu0 0
  %463 = vmatpush2.bf16.msra.mxu0 0
  %464 = vmatprep.subr.bf16.mxu0 0
  %465 = vmatpush2.bf16.msra.mxu0 0
  %466 = vmatprep.subr.bf16.mxu0 0
  %467 = vmatpush2.bf16.msra.mxu0 0
  %468 = vmatprep.mubr.bf16.mxu0 0
  %469 = vmatmul.mubr.bf16.gmra.mxu0 %v434
  %v470 = vpop.f32.mrf.mxu0
  %v471 = vadd.f32 0.0, %v470
  %v472 = vpop.f32.mrf.mxu0
  %v473 = vpop.f32.mrf.mxu0
  %v474 = vadd.f32 0.0, %v473
  %v475 = vpop.f32.mrf.mxu0
  %476 = vdwg.mxu0
  %v479 = vunpack.c.l.b16 %v30
  %v480 = vunpack.c.l.b16 %v32
  %v481 = vpack.c.b16 %v480, %v479
  %v484 = vsel %vm284, %v375, 0
  %486 = vmatprep.subr.bf16.mxu0 0
  %487 = vmatpush1.bf16.msra.mxu0 0
  %488 = vmatprep.subr.bf16.mxu0 0
  %489 = vmatpush1.bf16.msra.mxu0 0
  %490 = vmatprep.subr.bf16.mxu0 0
  %491 = vmatpush1.bf16.msra.mxu0 0
  %492 = vmatprep.subr.bf16.mxu0 0
  %493 = vmatpush1.bf16.msra.mxu0 0
  %494 = vmatprep.subr.bf16.mxu0 0
  %495 = vmatpush1.bf16.msra.mxu0 0
  %496 = vmatprep.subr.bf16.mxu0 0
  %497 = vmatpush1.bf16.msra.mxu0 0
  %498 = vmatprep.subr.bf16.mxu0 0
  %499 = vmatpush1.bf16.msra.mxu0 0
  %500 = vmatprep.subr.bf16.mxu0 0
  %501 = vmatpush1.bf16.msra.mxu0 %v481
  %502 = vmatprep.subr.bf16.mxu0 0
  %503 = vmatpush2.bf16.msra.mxu0 0
  %504 = vmatprep.subr.bf16.mxu0 0
  %505 = vmatpush2.bf16.msra.mxu0 0
  %506 = vmatprep.subr.bf16.mxu0 0
  %507 = vmatpush2.bf16.msra.mxu0 0
  %508 = vmatprep.subr.bf16.mxu0 0
  %509 = vmatpush2.bf16.msra.mxu0 0
  %510 = vmatprep.subr.bf16.mxu0 0
  %511 = vmatpush2.bf16.msra.mxu0 0
  %512 = vmatprep.subr.bf16.mxu0 0
  %513 = vmatpush2.bf16.msra.mxu0 0
  %514 = vmatprep.subr.bf16.mxu0 0
  %515 = vmatpush2.bf16.msra.mxu0 0
  %516 = vmatprep.subr.bf16.mxu0 0
  %517 = vmatpush2.bf16.msra.mxu0 0
  %518 = vmatprep.mubr.bf16.mxu0 0
  %519 = vmatmul.mubr.bf16.gmra.mxu0 %v484
  %v520 = vpop.f32.mrf.mxu0
  %v521 = vadd.f32 0.0, %v520
  %v522 = vpop.f32.mrf.mxu0
  %v523 = vpop.f32.mrf.mxu0
  %v524 = vadd.f32 0.0, %v523
  %v525 = vpop.f32.mrf.mxu0
  %526 = vdwg.mxu0
  %v529 = vunpack.c.l.b16 %v34
  %v530 = vunpack.c.l.b16 %v36
  %v531 = vpack.c.b16 %v530, %v529
  %v534 = vsel %vm284, %v376, 0
  %536 = vmatprep.subr.bf16.mxu0 0
  %537 = vmatpush1.bf16.msra.mxu0 0
  %538 = vmatprep.subr.bf16.mxu0 0
  %539 = vmatpush1.bf16.msra.mxu0 0
  %540 = vmatprep.subr.bf16.mxu0 0
  %541 = vmatpush1.bf16.msra.mxu0 0
  %542 = vmatprep.subr.bf16.mxu0 0
  %543 = vmatpush1.bf16.msra.mxu0 0
  %544 = vmatprep.subr.bf16.mxu0 0
  %545 = vmatpush1.bf16.msra.mxu0 0
  %546 = vmatprep.subr.bf16.mxu0 0
  %547 = vmatpush1.bf16.msra.mxu0 0
  %548 = vmatprep.subr.bf16.mxu0 0
  %549 = vmatpush1.bf16.msra.mxu0 0
  %550 = vmatprep.subr.bf16.mxu0 0
  %551 = vmatpush1.bf16.msra.mxu0 %v531
  %552 = vmatprep.subr.bf16.mxu0 0
  %553 = vmatpush2.bf16.msra.mxu0 0
  %554 = vmatprep.subr.bf16.mxu0 0
  %555 = vmatpush2.bf16.msra.mxu0 0
  %556 = vmatprep.subr.bf16.mxu0 0
  %557 = vmatpush2.bf16.msra.mxu0 0
  %558 = vmatprep.subr.bf16.mxu0 0
  %559 = vmatpush2.bf16.msra.mxu0 0
  %560 = vmatprep.subr.bf16.mxu0 0
  %561 = vmatpush2.bf16.msra.mxu0 0
  %562 = vmatprep.subr.bf16.mxu0 0
  %563 = vmatpush2.bf16.msra.mxu0 0
  %564 = vmatprep.subr.bf16.mxu0 0
  %565 = vmatpush2.bf16.msra.mxu0 0
  %566 = vmatprep.subr.bf16.mxu0 0
  %567 = vmatpush2.bf16.msra.mxu0 0
  %568 = vmatprep.mubr.bf16.mxu0 0
  %569 = vmatmul.mubr.bf16.gmra.mxu0 %v534
  %v570 = vpop.f32.mrf.mxu0
  %v571 = vadd.f32 0.0, %v570
  %v572 = vpop.f32.mrf.mxu0
  %v573 = vpop.f32.mrf.mxu0
  %v574 = vadd.f32 0.0, %v573
  %v575 = vpop.f32.mrf.mxu0
  %576 = vdwg.mxu0
  %v577 = vpack.c.bf16 %v424, %v421
  %v578 = vpack.c.bf16 %v474, %v471
  %v579 = vpack.c.bf16 %v524, %v521
  %v580 = vpack.c.bf16 %v574, %v571
  %581 = vrot.lane.b32.xlu0 %v21, 96
  %v582 = vpop.permute.xlu0 %581
  %583 = vrot.lane.b32.xlu0 %v23, 96
  %v584 = vpop.permute.xlu0 %583
  %v585 = vrot.slane %v582, 4
  %v586 = vrot.slane %v584, 4
  %587 = vrot.lane.b32.xlu0 %v61, 96
  %v588 = vpop.permute.xlu0 %587
  %v589 = vunpack.c.l.b16 %v585
  %v590 = vunpack.c.l.b16 %v586
  %v591 = vpack.c.b16 %v590, %v589
  %v593 = vsel %vm65, %v588, 0
  %v596 = vsel %vm65, %v591, 0
  %598 = vmatprep.subr.bf16.mxu0 0
  %599 = vmatpush1.bf16.xpose.msra.mxu0 0
  %600 = vmatprep.subr.bf16.mxu0 0
  %601 = vmatpush1.bf16.xpose.msra.mxu0 0
  %602 = vmatprep.subr.bf16.mxu0 0
  %603 = vmatpush1.bf16.xpose.msra.mxu0 0
  %604 = vmatprep.subr.bf16.mxu0 0
  %605 = vmatpush1.bf16.xpose.msra.mxu0 0
  %606 = vmatprep.subr.bf16.mxu0 0
  %607 = vmatpush1.bf16.xpose.msra.mxu0 0
  %608 = vmatprep.subr.bf16.mxu0 0
  %609 = vmatpush1.bf16.xpose.msra.mxu0 0
  %610 = vmatprep.subr.bf16.mxu0 0
  %611 = vmatpush1.bf16.xpose.msra.mxu0 0
  %612 = vmatprep.subr.bf16.mxu0 0
  %613 = vmatpush1.bf16.xpose.msra.mxu0 %v596
  %614 = vmatprep.subr.bf16.mxu0 0
  %615 = vmatpush2.bf16.xpose.msra.mxu0 0
  %616 = vmatprep.subr.bf16.mxu0 0
  %617 = vmatpush2.bf16.xpose.msra.mxu0 0
  %618 = vmatprep.subr.bf16.mxu0 0
  %619 = vmatpush2.bf16.xpose.msra.mxu0 0
  %620 = vmatprep.subr.bf16.mxu0 0
  %621 = vmatpush2.bf16.xpose.msra.mxu0 0
  %622 = vmatprep.subr.bf16.mxu0 0
  %623 = vmatpush2.bf16.xpose.msra.mxu0 0
  %624 = vmatprep.subr.bf16.mxu0 0
  %625 = vmatpush2.bf16.xpose.msra.mxu0 0
  %626 = vmatprep.subr.bf16.mxu0 0
  %627 = vmatpush2.bf16.xpose.msra.mxu0 0
  %628 = vmatprep.subr.bf16.mxu0 0
  %629 = vmatpush2.bf16.xpose.msra.mxu0 0
  %630 = vmatprep.mubr.bf16.mxu0 0
  %631 = vmatmul.mubr.bf16.gmra.mxu0 %v593
  %v632 = vpop.f32.mrf.mxu0
  %v633 = vadd.f32 %v37, %v632
  %v634 = vpop.f32.mrf.mxu0
  %v635 = vpop.f32.mrf.mxu0
  %v636 = vadd.f32 %v38, %v635
  %v637 = vpop.f32.mrf.mxu0
  %638 = vdwg.mxu0
  %639 = vrot.lane.b32.xlu0 %v25, 96
  %v640 = vpop.permute.xlu0 %639
  %641 = vrot.lane.b32.xlu0 %v27, 96
  %v642 = vpop.permute.xlu0 %641
  %v643 = vrot.slane %v640, 4
  %v644 = vrot.slane %v642, 4
  %645 = vrot.lane.b32.xlu0 %v119, 96
  %v646 = vpop.permute.xlu0 %645
  %v647 = vunpack.c.l.b16 %v643
  %v648 = vunpack.c.l.b16 %v644
  %v649 = vpack.c.b16 %v648, %v647
  %v651 = vsel %vm65, %v646, 0
  %v654 = vsel %vm65, %v649, 0
  %656 = vmatprep.subr.bf16.mxu0 0
  %657 = vmatpush1.bf16.xpose.msra.mxu0 0
  %658 = vmatprep.subr.bf16.mxu0 0
  %659 = vmatpush1.bf16.xpose.msra.mxu0 0
  %660 = vmatprep.subr.bf16.mxu0 0
  %661 = vmatpush1.bf16.xpose.msra.mxu0 0
  %662 = vmatprep.subr.bf16.mxu0 0
  %663 = vmatpush1.bf16.xpose.msra.mxu0 0
  %664 = vmatprep.subr.bf16.mxu0 0
  %665 = vmatpush1.bf16.xpose.msra.mxu0 0
  %666 = vmatprep.subr.bf16.mxu0 0
  %667 = vmatpush1.bf16.xpose.msra.mxu0 0
  %668 = vmatprep.subr.bf16.mxu0 0
  %669 = vmatpush1.bf16.xpose.msra.mxu0 0
  %670 = vmatprep.subr.bf16.mxu0 0
  %671 = vmatpush1.bf16.xpose.msra.mxu0 %v654
  %672 = vmatprep.subr.bf16.mxu0 0
  %673 = vmatpush2.bf16.xpose.msra.mxu0 0
  %674 = vmatprep.subr.bf16.mxu0 0
  %675 = vmatpush2.bf16.xpose.msra.mxu0 0
  %676 = vmatprep.subr.bf16.mxu0 0
  %677 = vmatpush2.bf16.xpose.msra.mxu0 0
  %678 = vmatprep.subr.bf16.mxu0 0
  %679 = vmatpush2.bf16.xpose.msra.mxu0 0
  %680 = vmatprep.subr.bf16.mxu0 0
  %681 = vmatpush2.bf16.xpose.msra.mxu0 0
  %682 = vmatprep.subr.bf16.mxu0 0
  %683 = vmatpush2.bf16.xpose.msra.mxu0 0
  %684 = vmatprep.subr.bf16.mxu0 0
  %685 = vmatpush2.bf16.xpose.msra.mxu0 0
  %686 = vmatprep.subr.bf16.mxu0 0
  %687 = vmatpush2.bf16.xpose.msra.mxu0 0
  %688 = vmatprep.mubr.bf16.mxu0 0
  %689 = vmatmul.mubr.bf16.gmra.mxu0 %v651
  %v690 = vpop.f32.mrf.mxu0
  %v691 = vadd.f32 %v37, %v690
  %v692 = vpop.f32.mrf.mxu0
  %v693 = vpop.f32.mrf.mxu0
  %v694 = vadd.f32 %v38, %v693
  %v695 = vpop.f32.mrf.mxu0
  %696 = vdwg.mxu0
  %697 = vrot.lane.b32.xlu0 %v29, 96
  %v698 = vpop.permute.xlu0 %697
  %699 = vrot.lane.b32.xlu0 %v31, 96
  %v700 = vpop.permute.xlu0 %699
  %v701 = vrot.slane %v698, 4
  %v702 = vrot.slane %v700, 4
  %703 = vrot.lane.b32.xlu0 %v176, 96
  %v704 = vpop.permute.xlu0 %703
  %v705 = vunpack.c.l.b16 %v701
  %v706 = vunpack.c.l.b16 %v702
  %v707 = vpack.c.b16 %v706, %v705
  %v709 = vsel %vm65, %v704, 0
  %v712 = vsel %vm65, %v707, 0
  %714 = vmatprep.subr.bf16.mxu0 0
  %715 = vmatpush1.bf16.xpose.msra.mxu0 0
  %716 = vmatprep.subr.bf16.mxu0 0
  %717 = vmatpush1.bf16.xpose.msra.mxu0 0
  %718 = vmatprep.subr.bf16.mxu0 0
  %719 = vmatpush1.bf16.xpose.msra.mxu0 0
  %720 = vmatprep.subr.bf16.mxu0 0
  %721 = vmatpush1.bf16.xpose.msra.mxu0 0
  %722 = vmatprep.subr.bf16.mxu0 0
  %723 = vmatpush1.bf16.xpose.msra.mxu0 0
  %724 = vmatprep.subr.bf16.mxu0 0
  %725 = vmatpush1.bf16.xpose.msra.mxu0 0
  %726 = vmatprep.subr.bf16.mxu0 0
  %727 = vmatpush1.bf16.xpose.msra.mxu0 0
  %728 = vmatprep.subr.bf16.mxu0 0
  %729 = vmatpush1.bf16.xpose.msra.mxu0 %v712
  %730 = vmatprep.subr.bf16.mxu0 0
  %731 = vmatpush2.bf16.xpose.msra.mxu0 0
  %732 = vmatprep.subr.bf16.mxu0 0
  %733 = vmatpush2.bf16.xpose.msra.mxu0 0
  %734 = vmatprep.subr.bf16.mxu0 0
  %735 = vmatpush2.bf16.xpose.msra.mxu0 0
  %736 = vmatprep.subr.bf16.mxu0 0
  %737 = vmatpush2.bf16.xpose.msra.mxu0 0
  %738 = vmatprep.subr.bf16.mxu0 0
  %739 = vmatpush2.bf16.xpose.msra.mxu0 0
  %740 = vmatprep.subr.bf16.mxu0 0
  %741 = vmatpush2.bf16.xpose.msra.mxu0 0
  %742 = vmatprep.subr.bf16.mxu0 0
  %743 = vmatpush2.bf16.xpose.msra.mxu0 0
  %744 = vmatprep.subr.bf16.mxu0 0
  %745 = vmatpush2.bf16.xpose.msra.mxu0 0
  %746 = vmatprep.mubr.bf16.mxu0 0
  %747 = vmatmul.mubr.bf16.gmra.mxu0 %v709
  %v748 = vpop.f32.mrf.mxu0
  %v749 = vadd.f32 %v37, %v748
  %v750 = vpop.f32.mrf.mxu0
  %v751 = vpop.f32.mrf.mxu0
  %v752 = vadd.f32 %v38, %v751
  %v753 = vpop.f32.mrf.mxu0
  %754 = vdwg.mxu0
  %755 = vrot.lane.b32.xlu0 %v33, 96
  %v756 = vpop.permute.xlu0 %755
  %757 = vrot.lane.b32.xlu0 %v35, 96
  %v758 = vpop.permute.xlu0 %757
  %v759 = vrot.slane %v756, 4
  %v760 = vrot.slane %v758, 4
  %761 = vrot.lane.b32.xlu0 %v233, 96
  %v762 = vpop.permute.xlu0 %761
  %v763 = vunpack.c.l.b16 %v759
  %v764 = vunpack.c.l.b16 %v760
  %v765 = vpack.c.b16 %v764, %v763
  %v767 = vsel %vm65, %v762, 0
  %v770 = vsel %vm65, %v765, 0
  %772 = vmatprep.subr.bf16.mxu0 0
  %773 = vmatpush1.bf16.xpose.msra.mxu0 0
  %774 = vmatprep.subr.bf16.mxu0 0
  %775 = vmatpush1.bf16.xpose.msra.mxu0 0
  %776 = vmatprep.subr.bf16.mxu0 0
  %777 = vmatpush1.bf16.xpose.msra.mxu0 0
  %778 = vmatprep.subr.bf16.mxu0 0
  %779 = vmatpush1.bf16.xpose.msra.mxu0 0
  %780 = vmatprep.subr.bf16.mxu0 0
  %781 = vmatpush1.bf16.xpose.msra.mxu0 0
  %782 = vmatprep.subr.bf16.mxu0 0
  %783 = vmatpush1.bf16.xpose.msra.mxu0 0
  %784 = vmatprep.subr.bf16.mxu0 0
  %785 = vmatpush1.bf16.xpose.msra.mxu0 0
  %786 = vmatprep.subr.bf16.mxu0 0
  %787 = vmatpush1.bf16.xpose.msra.mxu0 %v770
  %788 = vmatprep.subr.bf16.mxu0 0
  %789 = vmatpush2.bf16.xpose.msra.mxu0 0
  %790 = vmatprep.subr.bf16.mxu0 0
  %791 = vmatpush2.bf16.xpose.msra.mxu0 0
  %792 = vmatprep.subr.bf16.mxu0 0
  %793 = vmatpush2.bf16.xpose.msra.mxu0 0
  %794 = vmatprep.subr.bf16.mxu0 0
  %795 = vmatpush2.bf16.xpose.msra.mxu0 0
  %796 = vmatprep.subr.bf16.mxu0 0
  %797 = vmatpush2.bf16.xpose.msra.mxu0 0
  %798 = vmatprep.subr.bf16.mxu0 0
  %799 = vmatpush2.bf16.xpose.msra.mxu0 0
  %800 = vmatprep.subr.bf16.mxu0 0
  %801 = vmatpush2.bf16.xpose.msra.mxu0 0
  %802 = vmatprep.subr.bf16.mxu0 0
  %803 = vmatpush2.bf16.xpose.msra.mxu0 0
  %804 = vmatprep.mubr.bf16.mxu0 0
  %805 = vmatmul.mubr.bf16.gmra.mxu0 %v767
  %v806 = vpop.f32.mrf.mxu0
  %v807 = vadd.f32 %v37, %v806
  %v808 = vpop.f32.mrf.mxu0
  %v809 = vpop.f32.mrf.mxu0
  %v810 = vadd.f32 %v38, %v809
  %v811 = vpop.f32.mrf.mxu0
  %812 = vdwg.mxu0
  %v813 = vsel %vm284, %v633, -inf
  %814 = vmax.xlane.f32.xlu0 %v813
  %v815 = vpop.xlane.xlu0 %814
  %v816 = vsel %vm284, %v636, -inf
  %817 = vmax.xlane.f32.xlu0 %v816
  %v818 = vpop.xlane.xlu0 %817
  %v819 = vsel %vm284, %v691, -inf
  %820 = vmax.xlane.f32.xlu0 %v819
  %v821 = vpop.xlane.xlu0 %820
  %v822 = vsel %vm284, %v694, -inf
  %823 = vmax.xlane.f32.xlu0 %v822
  %v824 = vpop.xlane.xlu0 %823
  %v825 = vsel %vm284, %v749, -inf
  %826 = vmax.xlane.f32.xlu0 %v825
  %v827 = vpop.xlane.xlu0 %826
  %v828 = vsel %vm284, %v752, -inf
  %829 = vmax.xlane.f32.xlu0 %v828
  %v830 = vpop.xlane.xlu0 %829
  %v831 = vsel %vm284, %v807, -inf
  %832 = vmax.xlane.f32.xlu0 %v831
  %v833 = vpop.xlane.xlu0 %832
  %v834 = vsel %vm284, %v810, -inf
  %835 = vmax.xlane.f32.xlu0 %v834
  %v836 = vpop.xlane.xlu0 %835
  %v837 = vsub.f32 %v633, %v815
  %v838 = vsub.f32 %v636, %v818
  %v839 = vsub.f32 %v691, %v821
  %v840 = vsub.f32 %v694, %v824
  %v841 = vsub.f32 %v749, %v827
  %v842 = vsub.f32 %v752, %v830
  %v843 = vsub.f32 %v807, %v833
  %v844 = vsub.f32 %v810, %v836
  %v845 = vmul.f32 %v837, 1.442695
  %v846 = vpow.pop %v845
  %v847 = vmul.f32 %v838, 1.442695
  %v848 = vpow.pop %v847
  %v849 = vmul.f32 %v839, 1.442695
  %v850 = vpow.pop %v849
  %v851 = vmul.f32 %v840, 1.442695
  %v852 = vpow.pop %v851
  %v853 = vmul.f32 %v841, 1.442695
  %v854 = vpow.pop %v853
  %v855 = vmul.f32 %v842, 1.442695
  %v856 = vpow.pop %v855
  %v857 = vmul.f32 %v843, 1.442695
  %v858 = vpow.pop %v857
  %v859 = vmul.f32 %v844, 1.442695
  %v860 = vpow.pop %v859
  %v861 = vsel %vm284, %v846, 0.0
  %862 = vadd.xlane.f32.xlu0 %v861
  %v863 = vpop.xlane.xlu0 %862
  %v864 = vsel %vm284, %v848, 0.0
  %865 = vadd.xlane.f32.xlu0 %v864
  %v866 = vpop.xlane.xlu0 %865
  %v867 = vsel %vm284, %v850, 0.0
  %868 = vadd.xlane.f32.xlu0 %v867
  %v869 = vpop.xlane.xlu0 %868
  %v870 = vsel %vm284, %v852, 0.0
  %871 = vadd.xlane.f32.xlu0 %v870
  %v872 = vpop.xlane.xlu0 %871
  %v873 = vsel %vm284, %v854, 0.0
  %874 = vadd.xlane.f32.xlu0 %v873
  %v875 = vpop.xlane.xlu0 %874
  %v876 = vsel %vm284, %v856, 0.0
  %877 = vadd.xlane.f32.xlu0 %v876
  %v878 = vpop.xlane.xlu0 %877
  %v879 = vsel %vm284, %v858, 0.0
  %880 = vadd.xlane.f32.xlu0 %v879
  %v881 = vpop.xlane.xlu0 %880
  %v882 = vsel %vm284, %v860, 0.0
  %883 = vadd.xlane.f32.xlu0 %v882
  %v884 = vpop.xlane.xlu0 %883
  %v885 = vrcp.pop %v863
  %v886 = vrcp.pop %v866
  %v887 = vrcp.pop %v869
  %v888 = vrcp.pop %v872
  %v889 = vrcp.pop %v875
  %v890 = vrcp.pop %v878
  %v891 = vrcp.pop %v881
  %v892 = vrcp.pop %v884
  %v893 = vmul.f32 %v846, %v885
  %v894 = vmul.f32 %v848, %v886
  %v895 = vmul.f32 %v850, %v887
  %v896 = vmul.f32 %v852, %v888
  %v897 = vmul.f32 %v854, %v889
  %v898 = vmul.f32 %v856, %v890
  %v899 = vmul.f32 %v858, %v891
  %v900 = vmul.f32 %v860, %v892
  %v901 = vpack.c.bf16 %v894, %v893
  %v902 = vpack.c.bf16 %v896, %v895
  %v903 = vpack.c.bf16 %v898, %v897
  %v904 = vpack.c.bf16 %v900, %v899
  %905 = vrot.lane.b32.xlu0 %v381, 96
  %v906 = vpop.permute.xlu0 %905
  %v909 = vsel %vm284, %v901, 0
  %911 = vmatprep.subr.bf16.mxu0 0
  %912 = vmatpush1.bf16.msra.mxu0 0
  %913 = vmatprep.subr.bf16.mxu0 0
  %914 = vmatpush1.bf16.msra.mxu0 0
  %915 = vmatprep.subr.bf16.mxu0 0
  %916 = vmatpush1.bf16.msra.mxu0 0
  %917 = vmatprep.subr.bf16.mxu0 0
  %918 = vmatpush1.bf16.msra.mxu0 0
  %919 = vmatprep.subr.bf16.mxu0 0
  %920 = vmatpush1.bf16.msra.mxu0 0
  %921 = vmatprep.subr.bf16.mxu0 0
  %922 = vmatpush1.bf16.msra.mxu0 0
  %923 = vmatprep.subr.bf16.mxu0 0
  %924 = vmatpush1.bf16.msra.mxu0 0
  %925 = vmatprep.subr.bf16.mxu0 0
  %926 = vmatpush1.bf16.msra.mxu0 %v906
  %927 = vmatprep.subr.bf16.mxu0 0
  %928 = vmatpush2.bf16.msra.mxu0 0
  %929 = vmatprep.subr.bf16.mxu0 0
  %930 = vmatpush2.bf16.msra.mxu0 0
  %931 = vmatprep.subr.bf16.mxu0 0
  %932 = vmatpush2.bf16.msra.mxu0 0
  %933 = vmatprep.subr.bf16.mxu0 0
  %934 = vmatpush2.bf16.msra.mxu0 0
  %935 = vmatprep.subr.bf16.mxu0 0
  %936 = vmatpush2.bf16.msra.mxu0 0
  %937 = vmatprep.subr.bf16.mxu0 0
  %938 = vmatpush2.bf16.msra.mxu0 0
  %939 = vmatprep.subr.bf16.mxu0 0
  %940 = vmatpush2.bf16.msra.mxu0 0
  %941 = vmatprep.subr.bf16.mxu0 0
  %942 = vmatpush2.bf16.msra.mxu0 0
  %943 = vmatprep.mubr.bf16.mxu0 0
  %944 = vmatmul.mubr.bf16.gmra.mxu0 %v909
  %v945 = vpop.f32.mrf.mxu0
  %v946 = vadd.f32 0.0, %v945
  %v947 = vpop.f32.mrf.mxu0
  %v948 = vpop.f32.mrf.mxu0
  %v949 = vadd.f32 0.0, %v948
  %v950 = vpop.f32.mrf.mxu0
  %951 = vdwg.mxu0
  %952 = vrot.lane.b32.xlu0 %v431, 96
  %v953 = vpop.permute.xlu0 %952
  %v956 = vsel %vm284, %v902, 0
  %958 = vmatprep.subr.bf16.mxu0 0
  %959 = vmatpush1.bf16.msra.mxu0 0
  %960 = vmatprep.subr.bf16.mxu0 0
  %961 = vmatpush1.bf16.msra.mxu0 0
  %962 = vmatprep.subr.bf16.mxu0 0
  %963 = vmatpush1.bf16.msra.mxu0 0
  %964 = vmatprep.subr.bf16.mxu0 0
  %965 = vmatpush1.bf16.msra.mxu0 0
  %966 = vmatprep.subr.bf16.mxu0 0
  %967 = vmatpush1.bf16.msra.mxu0 0
  %968 = vmatprep.subr.bf16.mxu0 0
  %969 = vmatpush1.bf16.msra.mxu0 0
  %970 = vmatprep.subr.bf16.mxu0 0
  %971 = vmatpush1.bf16.msra.mxu0 0
  %972 = vmatprep.subr.bf16.mxu0 0
  %973 = vmatpush1.bf16.msra.mxu0 %v953
  %974 = vmatprep.subr.bf16.mxu0 0
  %975 = vmatpush2.bf16.msra.mxu0 0
  %976 = vmatprep.subr.bf16.mxu0 0
  %977 = vmatpush2.bf16.msra.mxu0 0
  %978 = vmatprep.subr.bf16.mxu0 0
  %979 = vmatpush2.bf16.msra.mxu0 0
  %980 = vmatprep.subr.bf16.mxu0 0
  %981 = vmatpush2.bf16.msra.mxu0 0
  %982 = vmatprep.subr.bf16.mxu0 0
  %983 = vmatpush2.bf16.msra.mxu0 0
  %984 = vmatprep.subr.bf16.mxu0 0
  %985 = vmatpush2.bf16.msra.mxu0 0
  %986 = vmatprep.subr.bf16.mxu0 0
  %987 = vmatpush2.bf16.msra.mxu0 0
  %988 = vmatprep.subr.bf16.mxu0 0
  %989 = vmatpush2.bf16.msra.mxu0 0
  %990 = vmatprep.mubr.bf16.mxu0 0
  %991 = vmatmul.mubr.bf16.gmra.mxu0 %v956
  %v992 = vpop.f32.mrf.mxu0
  %v993 = vadd.f32 0.0, %v992
  %v994 = vpop.f32.mrf.mxu0
  %v995 = vpop.f32.mrf.mxu0
  %v996 = vadd.f32 0.0, %v995
  %v997 = vpop.f32.mrf.mxu0
  %998 = vdwg.mxu0
  %999 = vrot.lane.b32.xlu0 %v481, 96
  %v1000 = vpop.permute.xlu0 %999
  %v1003 = vsel %vm284, %v903, 0
  %1005 = vmatprep.subr.bf16.mxu0 0
  %1006 = vmatpush1.bf16.msra.mxu0 0
  %1007 = vmatprep.subr.bf16.mxu0 0
  %1008 = vmatpush1.bf16.msra.mxu0 0
  %1009 = vmatprep.subr.bf16.mxu0 0
  %1010 = vmatpush1.bf16.msra.mxu0 0
  %1011 = vmatprep.subr.bf16.mxu0 0
  %1012 = vmatpush1.bf16.msra.mxu0 0
  %1013 = vmatprep.subr.bf16.mxu0 0
  %1014 = vmatpush1.bf16.msra.mxu0 0
  %1015 = vmatprep.subr.bf16.mxu0 0
  %1016 = vmatpush1.bf16.msra.mxu0 0
  %1017 = vmatprep.subr.bf16.mxu0 0
  %1018 = vmatpush1.bf16.msra.mxu0 0
  %1019 = vmatprep.subr.bf16.mxu0 0
  %1020 = vmatpush1.bf16.msra.mxu0 %v1000
  %1021 = vmatprep.subr.bf16.mxu0 0
  %1022 = vmatpush2.bf16.msra.mxu0 0
  %1023 = vmatprep.subr.bf16.mxu0 0
  %1024 = vmatpush2.bf16.msra.mxu0 0
  %1025 = vmatprep.subr.bf16.mxu0 0
  %1026 = vmatpush2.bf16.msra.mxu0 0
  %1027 = vmatprep.subr.bf16.mxu0 0
  %1028 = vmatpush2.bf16.msra.mxu0 0
  %1029 = vmatprep.subr.bf16.mxu0 0
  %1030 = vmatpush2.bf16.msra.mxu0 0
  %1031 = vmatprep.subr.bf16.mxu0 0
  %1032 = vmatpush2.bf16.msra.mxu0 0
  %1033 = vmatprep.subr.bf16.mxu0 0
  %1034 = vmatpush2.bf16.msra.mxu0 0
  %1035 = vmatprep.subr.bf16.mxu0 0
  %1036 = vmatpush2.bf16.msra.mxu0 0
  %1037 = vmatprep.mubr.bf16.mxu0 0
  %1038 = vmatmul.mubr.bf16.gmra.mxu0 %v1003
  %v1039 = vpop.f32.mrf.mxu0
  %v1040 = vadd.f32 0.0, %v1039
  %v1041 = vpop.f32.mrf.mxu0
  %v1042 = vpop.f32.mrf.mxu0
  %v1043 = vadd.f32 0.0, %v1042
  %v1044 = vpop.f32.mrf.mxu0
  %1045 = vdwg.mxu0
  %1046 = vrot.lane.b32.xlu0 %v531, 96
  %v1047 = vpop.permute.xlu0 %1046
  %v1050 = vsel %vm284, %v904, 0
  %1052 = vmatprep.subr.bf16.mxu0 0
  %1053 = vmatpush1.bf16.msra.mxu0 0
  %1054 = vmatprep.subr.bf16.mxu0 0
  %1055 = vmatpush1.bf16.msra.mxu0 0
  %1056 = vmatprep.subr.bf16.mxu0 0
  %1057 = vmatpush1.bf16.msra.mxu0 0
  %1058 = vmatprep.subr.bf16.mxu0 0
  %1059 = vmatpush1.bf16.msra.mxu0 0
  %1060 = vmatprep.subr.bf16.mxu0 0
  %1061 = vmatpush1.bf16.msra.mxu0 0
  %1062 = vmatprep.subr.bf16.mxu0 0
  %1063 = vmatpush1.bf16.msra.mxu0 0
  %1064 = vmatprep.subr.bf16.mxu0 0
  %1065 = vmatpush1.bf16.msra.mxu0 0
  %1066 = vmatprep.subr.bf16.mxu0 0
  %1067 = vmatpush1.bf16.msra.mxu0 %v1047
  %1068 = vmatprep.subr.bf16.mxu0 0
  %1069 = vmatpush2.bf16.msra.mxu0 0
  %1070 = vmatprep.subr.bf16.mxu0 0
  %1071 = vmatpush2.bf16.msra.mxu0 0
  %1072 = vmatprep.subr.bf16.mxu0 0
  %1073 = vmatpush2.bf16.msra.mxu0 0
  %1074 = vmatprep.subr.bf16.mxu0 0
  %1075 = vmatpush2.bf16.msra.mxu0 0
  %1076 = vmatprep.subr.bf16.mxu0 0
  %1077 = vmatpush2.bf16.msra.mxu0 0
  %1078 = vmatprep.subr.bf16.mxu0 0
  %1079 = vmatpush2.bf16.msra.mxu0 0
  %1080 = vmatprep.subr.bf16.mxu0 0
  %1081 = vmatpush2.bf16.msra.mxu0 0
  %1082 = vmatprep.subr.bf16.mxu0 0
  %1083 = vmatpush2.bf16.msra.mxu0 0
  %1084 = vmatprep.mubr.bf16.mxu0 0
  %1085 = vmatmul.mubr.bf16.gmra.mxu0 %v1050
  %v1086 = vpop.f32.mrf.mxu0
  %v1087 = vadd.f32 0.0, %v1086
  %v1088 = vpop.f32.mrf.mxu0
  %v1089 = vpop.f32.mrf.mxu0
  %v1090 = vadd.f32 0.0, %v1089
  %v1091 = vpop.f32.mrf.mxu0
  %1092 = vdwg.mxu0
  %v1093 = vpack.c.bf16 %v949, %v946
  %v1094 = vpack.c.bf16 %v996, %v993
  %v1095 = vpack.c.bf16 %v1043, %v1040
  %v1096 = vpack.c.bf16 %v1090, %v1087
  %v1101 = vunpack.c.l.b16 %v43
  %v1102 = vunpack.c.l.b16 %v44
  %v1103 = vunpack.c.l.b16 %v45
  %v1104 = vunpack.c.l.b16 %v46
  %v1105 = vpack.c.b16 %v1102, %v1101
  %v1106 = vpack.c.b16 %v1104, %v1103
  %v1110 = vsel %vm65, %v1093, 0
  %v1113 = vsel %vm65, %v1094, 0
  %v1116 = vsel %vm65, %v1095, 0
  %v1119 = vsel %vm65, %v1096, 0
  %1121 = vmatprep.subr.bf16.mxu0 0
  %1122 = vmatpush1.bf16.msra.mxu0 0
  %1123 = vmatprep.subr.bf16.mxu0 0
  %1124 = vmatpush1.bf16.msra.mxu0 0
  %1125 = vmatprep.subr.bf16.mxu0 0
  %1126 = vmatpush1.bf16.msra.mxu0 0
  %1127 = vmatprep.subr.bf16.mxu0 0
  %1128 = vmatpush1.bf16.msra.mxu0 0
  %1129 = vmatprep.subr.bf16.mxu0 0
  %1130 = vmatpush1.bf16.msra.mxu0 0
  %1131 = vmatprep.subr.bf16.mxu0 0
  %1132 = vmatpush1.bf16.msra.mxu0 0
  %1133 = vmatprep.subr.bf16.mxu0 0
  %1134 = vmatpush1.bf16.msra.mxu0 %v1106
  %1135 = vmatprep.subr.bf16.mxu0 0
  %1136 = vmatpush1.bf16.msra.mxu0 %v1105
  %1137 = vmatprep.subr.bf16.mxu0 0
  %1138 = vmatpush2.bf16.msra.mxu0 0
  %1139 = vmatprep.subr.bf16.mxu0 0
  %1140 = vmatpush2.bf16.msra.mxu0 0
  %1141 = vmatprep.subr.bf16.mxu0 0
  %1142 = vmatpush2.bf16.msra.mxu0 0
  %1143 = vmatprep.subr.bf16.mxu0 0
  %1144 = vmatpush2.bf16.msra.mxu0 0
  %1145 = vmatprep.subr.bf16.mxu0 0
  %1146 = vmatpush2.bf16.msra.mxu0 0
  %1147 = vmatprep.subr.bf16.mxu0 0
  %1148 = vmatpush2.bf16.msra.mxu0 0
  %1149 = vmatprep.subr.bf16.mxu0 0
  %1150 = vmatpush2.bf16.msra.mxu0 0
  %1151 = vmatprep.subr.bf16.mxu0 0
  %1152 = vmatpush2.bf16.msra.mxu0 0
  %1153 = vmatprep.mubr.bf16.mxu0 0
  %1154 = vmatmul.mubr.bf16.gmra.mxu0 %v1110
  %v1155 = vpop.f32.mrf.mxu0
  %v1156 = vadd.f32 0.0, %v1155
  %v1157 = vpop.f32.mrf.mxu0
  %v1158 = vpop.f32.mrf.mxu0
  %v1159 = vadd.f32 0.0, %v1158
  %v1160 = vpop.f32.mrf.mxu0
  %1161 = vmatprep.mubr.bf16.mxu0 0
  %1162 = vmatmul.mubr.bf16.gmra.mxu0 %v1113
  %v1163 = vpop.f32.mrf.mxu0
  %v1164 = vadd.f32 0.0, %v1163
  %v1165 = vpop.f32.mrf.mxu0
  %v1166 = vpop.f32.mrf.mxu0
  %v1167 = vadd.f32 0.0, %v1166
  %v1168 = vpop.f32.mrf.mxu0
  %1169 = vmatprep.mubr.bf16.mxu0 0
  %1170 = vmatmul.mubr.bf16.gmra.mxu0 %v1116
  %v1171 = vpop.f32.mrf.mxu0
  %v1172 = vadd.f32 0.0, %v1171
  %v1173 = vpop.f32.mrf.mxu0
  %v1174 = vpop.f32.mrf.mxu0
  %v1175 = vadd.f32 0.0, %v1174
  %v1176 = vpop.f32.mrf.mxu0
  %1177 = vmatprep.mubr.bf16.mxu0 0
  %1178 = vmatmul.mubr.bf16.gmra.mxu0 %v1119
  %v1179 = vpop.f32.mrf.mxu0
  %v1180 = vadd.f32 0.0, %v1179
  %v1181 = vpop.f32.mrf.mxu0
  %v1182 = vpop.f32.mrf.mxu0
  %v1183 = vadd.f32 0.0, %v1182
  %v1184 = vpop.f32.mrf.mxu0
  %1185 = vdwg.mxu0
  %v1190 = vunpack.c.l.b16 %v39
  %v1191 = vunpack.c.l.b16 %v40
  %v1192 = vunpack.c.l.b16 %v41
  %v1193 = vunpack.c.l.b16 %v42
  %v1194 = vpack.c.b16 %v1191, %v1190
  %v1195 = vpack.c.b16 %v1193, %v1192
  %v1199 = vsel %vm65, %v577, 0
  %v1202 = vsel %vm65, %v578, 0
  %v1205 = vsel %vm65, %v579, 0
  %v1208 = vsel %vm65, %v580, 0
  %1210 = vmatprep.subr.bf16.mxu0 0
  %1211 = vmatpush1.bf16.msra.mxu0 0
  %1212 = vmatprep.subr.bf16.mxu0 0
  %1213 = vmatpush1.bf16.msra.mxu0 0
  %1214 = vmatprep.subr.bf16.mxu0 0
  %1215 = vmatpush1.bf16.msra.mxu0 0
  %1216 = vmatprep.subr.bf16.mxu0 0
  %1217 = vmatpush1.bf16.msra.mxu0 0
  %1218 = vmatprep.subr.bf16.mxu0 0
  %1219 = vmatpush1.bf16.msra.mxu0 0
  %1220 = vmatprep.subr.bf16.mxu0 0
  %1221 = vmatpush1.bf16.msra.mxu0 0
  %1222 = vmatprep.subr.bf16.mxu0 0
  %1223 = vmatpush1.bf16.msra.mxu0 %v1195
  %1224 = vmatprep.subr.bf16.mxu0 0
  %1225 = vmatpush1.bf16.msra.mxu0 %v1194
  %1226 = vmatprep.subr.bf16.mxu0 0
  %1227 = vmatpush2.bf16.msra.mxu0 0
  %1228 = vmatprep.subr.bf16.mxu0 0
  %1229 = vmatpush2.bf16.msra.mxu0 0
  %1230 = vmatprep.subr.bf16.mxu0 0
  %1231 = vmatpush2.bf16.msra.mxu0 0
  %1232 = vmatprep.subr.bf16.mxu0 0
  %1233 = vmatpush2.bf16.msra.mxu0 0
  %1234 = vmatprep.subr.bf16.mxu0 0
  %1235 = vmatpush2.bf16.msra.mxu0 0
  %1236 = vmatprep.subr.bf16.mxu0 0
  %1237 = vmatpush2.bf16.msra.mxu0 0
  %1238 = vmatprep.subr.bf16.mxu0 0
  %1239 = vmatpush2.bf16.msra.mxu0 0
  %1240 = vmatprep.subr.bf16.mxu0 0
  %1241 = vmatpush2.bf16.msra.mxu0 0
  %1242 = vmatprep.mubr.bf16.mxu0 0
  %1243 = vmatmul.mubr.bf16.gmra.mxu0 %v1199
  %v1244 = vpop.f32.mrf.mxu0
  %v1245 = vadd.f32 %v1156, %v1244
  %v1246 = vpop.f32.mrf.mxu0
  %v1247 = vpop.f32.mrf.mxu0
  %v1248 = vadd.f32 %v1159, %v1247
  %v1249 = vpop.f32.mrf.mxu0
  %1250 = vmatprep.mubr.bf16.mxu0 0
  %1251 = vmatmul.mubr.bf16.gmra.mxu0 %v1202
  %v1252 = vpop.f32.mrf.mxu0
  %v1253 = vadd.f32 %v1164, %v1252
  %v1254 = vpop.f32.mrf.mxu0
  %v1255 = vpop.f32.mrf.mxu0
  %v1256 = vadd.f32 %v1167, %v1255
  %v1257 = vpop.f32.mrf.mxu0
  %1258 = vmatprep.mubr.bf16.mxu0 0
  %1259 = vmatmul.mubr.bf16.gmra.mxu0 %v1205
  %v1260 = vpop.f32.mrf.mxu0
  %v1261 = vadd.f32 %v1172, %v1260
  %v1262 = vpop.f32.mrf.mxu0
  %v1263 = vpop.f32.mrf.mxu0
  %v1264 = vadd.f32 %v1175, %v1263
  %v1265 = vpop.f32.mrf.mxu0
  %1266 = vmatprep.mubr.bf16.mxu0 0
  %1267 = vmatmul.mubr.bf16.gmra.mxu0 %v1208
  %v1268 = vpop.f32.mrf.mxu0
  %v1269 = vadd.f32 %v1180, %v1268
  %v1270 = vpop.f32.mrf.mxu0
  %v1271 = vpop.f32.mrf.mxu0
  %v1272 = vadd.f32 %v1183, %v1271
  %v1273 = vpop.f32.mrf.mxu0
  %1274 = vdwg.mxu0
  %1275 = vrot.lane.b32.xlu0 %v21, 64
  %v1276 = vpop.permute.xlu0 %1275
  %1277 = vrot.lane.b32.xlu0 %v23, 64
  %v1278 = vpop.permute.xlu0 %1277
  %v1279 = vrot.slane %v1276, 4
  %v1280 = vrot.slane %v1278, 4
  %1281 = vrot.lane.b32.xlu0 %v61, 64
  %v1282 = vpop.permute.xlu0 %1281
  %v1283 = vunpack.c.l.b16 %v1279
  %v1284 = vunpack.c.l.b16 %v1280
  %v1285 = vpack.c.b16 %v1284, %v1283
  %v1287 = vsel %vm65, %v1282, 0
  %v1290 = vsel %vm65, %v1285, 0
  %1292 = vmatprep.subr.bf16.mxu0 0
  %1293 = vmatpush1.bf16.xpose.msra.mxu0 0
  %1294 = vmatprep.subr.bf16.mxu0 0
  %1295 = vmatpush1.bf16.xpose.msra.mxu0 0
  %1296 = vmatprep.subr.bf16.mxu0 0
  %1297 = vmatpush1.bf16.xpose.msra.mxu0 0
  %1298 = vmatprep.subr.bf16.mxu0 0
  %1299 = vmatpush1.bf16.xpose.msra.mxu0 0
  %1300 = vmatprep.subr.bf16.mxu0 0
  %1301 = vmatpush1.bf16.xpose.msra.mxu0 0
  %1302 = vmatprep.subr.bf16.mxu0 0
  %1303 = vmatpush1.bf16.xpose.msra.mxu0 0
  %1304 = vmatprep.subr.bf16.mxu0 0
  %1305 = vmatpush1.bf16.xpose.msra.mxu0 0
  %1306 = vmatprep.subr.bf16.mxu0 0
  %1307 = vmatpush1.bf16.xpose.msra.mxu0 %v1290
  %1308 = vmatprep.subr.bf16.mxu0 0
  %1309 = vmatpush2.bf16.xpose.msra.mxu0 0
  %1310 = vmatprep.subr.bf16.mxu0 0
  %1311 = vmatpush2.bf16.xpose.msra.mxu0 0
  %1312 = vmatprep.subr.bf16.mxu0 0
  %1313 = vmatpush2.bf16.xpose.msra.mxu0 0
  %1314 = vmatprep.subr.bf16.mxu0 0
  %1315 = vmatpush2.bf16.xpose.msra.mxu0 0
  %1316 = vmatprep.subr.bf16.mxu0 0
  %1317 = vmatpush2.bf16.xpose.msra.mxu0 0
  %1318 = vmatprep.subr.bf16.mxu0 0
  %1319 = vmatpush2.bf16.xpose.msra.mxu0 0
  %1320 = vmatprep.subr.bf16.mxu0 0
  %1321 = vmatpush2.bf16.xpose.msra.mxu0 0
  %1322 = vmatprep.subr.bf16.mxu0 0
  %1323 = vmatpush2.bf16.xpose.msra.mxu0 0
  %1324 = vmatprep.mubr.bf16.mxu0 0
  %1325 = vmatmul.mubr.bf16.gmra.mxu0 %v1287
  %v1326 = vpop.f32.mrf.mxu0
  %v1327 = vadd.f32 %v37, %v1326
  %v1328 = vpop.f32.mrf.mxu0
  %v1329 = vpop.f32.mrf.mxu0
  %v1330 = vadd.f32 %v38, %v1329
  %v1331 = vpop.f32.mrf.mxu0
  %1332 = vdwg.mxu0
  %1333 = vrot.lane.b32.xlu0 %v25, 64
  %v1334 = vpop.permute.xlu0 %1333
  %1335 = vrot.lane.b32.xlu0 %v27, 64
  %v1336 = vpop.permute.xlu0 %1335
  %v1337 = vrot.slane %v1334, 4
  %v1338 = vrot.slane %v1336, 4
  %1339 = vrot.lane.b32.xlu0 %v119, 64
  %v1340 = vpop.permute.xlu0 %1339
  %v1341 = vunpack.c.l.b16 %v1337
  %v1342 = vunpack.c.l.b16 %v1338
  %v1343 = vpack.c.b16 %v1342, %v1341
  %v1345 = vsel %vm65, %v1340, 0
  %v1348 = vsel %vm65, %v1343, 0
  %1350 = vmatprep.subr.bf16.mxu0 0
  %1351 = vmatpush1.bf16.xpose.msra.mxu0 0
  %1352 = vmatprep.subr.bf16.mxu0 0
  %1353 = vmatpush1.bf16.xpose.msra.mxu0 0
  %1354 = vmatprep.subr.bf16.mxu0 0
  %1355 = vmatpush1.bf16.xpose.msra.mxu0 0
  %1356 = vmatprep.subr.bf16.mxu0 0
  %1357 = vmatpush1.bf16.xpose.msra.mxu0 0
  %1358 = vmatprep.subr.bf16.mxu0 0
  %1359 = vmatpush1.bf16.xpose.msra.mxu0 0
  %1360 = vmatprep.subr.bf16.mxu0 0
  %1361 = vmatpush1.bf16.xpose.msra.mxu0 0
  %1362 = vmatprep.subr.bf16.mxu0 0
  %1363 = vmatpush1.bf16.xpose.msra.mxu0 0
  %1364 = vmatprep.subr.bf16.mxu0 0
  %1365 = vmatpush1.bf16.xpose.msra.mxu0 %v1348
  %1366 = vmatprep.subr.bf16.mxu0 0
  %1367 = vmatpush2.bf16.xpose.msra.mxu0 0
  %1368 = vmatprep.subr.bf16.mxu0 0
  %1369 = vmatpush2.bf16.xpose.msra.mxu0 0
  %1370 = vmatprep.subr.bf16.mxu0 0
  %1371 = vmatpush2.bf16.xpose.msra.mxu0 0
  %1372 = vmatprep.subr.bf16.mxu0 0
  %1373 = vmatpush2.bf16.xpose.msra.mxu0 0
  %1374 = vmatprep.subr.bf16.mxu0 0
  %1375 = vmatpush2.bf16.xpose.msra.mxu0 0
  %1376 = vmatprep.subr.bf16.mxu0 0
  %1377 = vmatpush2.bf16.xpose.msra.mxu0 0
  %1378 = vmatprep.subr.bf16.mxu0 0
  %1379 = vmatpush2.bf16.xpose.msra.mxu0 0
  %1380 = vmatprep.subr.bf16.mxu0 0
  %1381 = vmatpush2.bf16.xpose.msra.mxu0 0
  %1382 = vmatprep.mubr.bf16.mxu0 0
  %1383 = vmatmul.mubr.bf16.gmra.mxu0 %v1345
  %v1384 = vpop.f32.mrf.mxu0
  %v1385 = vadd.f32 %v37, %v1384
  %v1386 = vpop.f32.mrf.mxu0
  %v1387 = vpop.f32.mrf.mxu0
  %v1388 = vadd.f32 %v38, %v1387
  %v1389 = vpop.f32.mrf.mxu0
  %1390 = vdwg.mxu0
  %1391 = vrot.lane.b32.xlu0 %v29, 64
  %v1392 = vpop.permute.xlu0 %1391
  %1393 = vrot.lane.b32.xlu0 %v31, 64
  %v1394 = vpop.permute.xlu0 %1393
  %v1395 = vrot.slane %v1392, 4
  %v1396 = vrot.slane %v1394, 4
  %1397 = vrot.lane.b32.xlu0 %v176, 64
  %v1398 = vpop.permute.xlu0 %1397
  %v1399 = vunpack.c.l.b16 %v1395
  %v1400 = vunpack.c.l.b16 %v1396
  %v1401 = vpack.c.b16 %v1400, %v1399
  %v1403 = vsel %vm65, %v1398, 0
  %v1406 = vsel %vm65, %v1401, 0
  %1408 = vmatprep.subr.bf16.mxu0 0
  %1409 = vmatpush1.bf16.xpose.msra.mxu0 0
  %1410 = vmatprep.subr.bf16.mxu0 0
  %1411 = vmatpush1.bf16.xpose.msra.mxu0 0
  %1412 = vmatprep.subr.bf16.mxu0 0
  %1413 = vmatpush1.bf16.xpose.msra.mxu0 0
  %1414 = vmatprep.subr.bf16.mxu0 0
  %1415 = vmatpush1.bf16.xpose.msra.mxu0 0
  %1416 = vmatprep.subr.bf16.mxu0 0
  %1417 = vmatpush1.bf16.xpose.msra.mxu0 0
  %1418 = vmatprep.subr.bf16.mxu0 0
  %1419 = vmatpush1.bf16.xpose.msra.mxu0 0
  %1420 = vmatprep.subr.bf16.mxu0 0
  %1421 = vmatpush1.bf16.xpose.msra.mxu0 0
  %1422 = vmatprep.subr.bf16.mxu0 0
  %1423 = vmatpush1.bf16.xpose.msra.mxu0 %v1406
  %1424 = vmatprep.subr.bf16.mxu0 0
  %1425 = vmatpush2.bf16.xpose.msra.mxu0 0
  %1426 = vmatprep.subr.bf16.mxu0 0
  %1427 = vmatpush2.bf16.xpose.msra.mxu0 0
  %1428 = vmatprep.subr.bf16.mxu0 0
  %1429 = vmatpush2.bf16.xpose.msra.mxu0 0
  %1430 = vmatprep.subr.bf16.mxu0 0
  %1431 = vmatpush2.bf16.xpose.msra.mxu0 0
  %1432 = vmatprep.subr.bf16.mxu0 0
  %1433 = vmatpush2.bf16.xpose.msra.mxu0 0
  %1434 = vmatprep.subr.bf16.mxu0 0
  %1435 = vmatpush2.bf16.xpose.msra.mxu0 0
  %1436 = vmatprep.subr.bf16.mxu0 0
  %1437 = vmatpush2.bf16.xpose.msra.mxu0 0
  %1438 = vmatprep.subr.bf16.mxu0 0
  %1439 = vmatpush2.bf16.xpose.msra.mxu0 0
  %1440 = vmatprep.mubr.bf16.mxu0 0
  %1441 = vmatmul.mubr.bf16.gmra.mxu0 %v1403
  %v1442 = vpop.f32.mrf.mxu0
  %v1443 = vadd.f32 %v37, %v1442
  %v1444 = vpop.f32.mrf.mxu0
  %v1445 = vpop.f32.mrf.mxu0
  %v1446 = vadd.f32 %v38, %v1445
  %v1447 = vpop.f32.mrf.mxu0
  %1448 = vdwg.mxu0
  %1449 = vrot.lane.b32.xlu0 %v33, 64
  %v1450 = vpop.permute.xlu0 %1449
  %1451 = vrot.lane.b32.xlu0 %v35, 64
  %v1452 = vpop.permute.xlu0 %1451
  %v1453 = vrot.slane %v1450, 4
  %v1454 = vrot.slane %v1452, 4
  %1455 = vrot.lane.b32.xlu0 %v233, 64
  %v1456 = vpop.permute.xlu0 %1455
  %v1457 = vunpack.c.l.b16 %v1453
  %v1458 = vunpack.c.l.b16 %v1454
  %v1459 = vpack.c.b16 %v1458, %v1457
  %v1461 = vsel %vm65, %v1456, 0
  %v1464 = vsel %vm65, %v1459, 0
  %1466 = vmatprep.subr.bf16.mxu0 0
  %1467 = vmatpush1.bf16.xpose.msra.mxu0 0
  %1468 = vmatprep.subr.bf16.mxu0 0
  %1469 = vmatpush1.bf16.xpose.msra.mxu0 0
  %1470 = vmatprep.subr.bf16.mxu0 0
  %1471 = vmatpush1.bf16.xpose.msra.mxu0 0
  %1472 = vmatprep.subr.bf16.mxu0 0
  %1473 = vmatpush1.bf16.xpose.msra.mxu0 0
  %1474 = vmatprep.subr.bf16.mxu0 0
  %1475 = vmatpush1.bf16.xpose.msra.mxu0 0
  %1476 = vmatprep.subr.bf16.mxu0 0
  %1477 = vmatpush1.bf16.xpose.msra.mxu0 0
  %1478 = vmatprep.subr.bf16.mxu0 0
  %1479 = vmatpush1.bf16.xpose.msra.mxu0 0
  %1480 = vmatprep.subr.bf16.mxu0 0
  %1481 = vmatpush1.bf16.xpose.msra.mxu0 %v1464
  %1482 = vmatprep.subr.bf16.mxu0 0
  %1483 = vmatpush2.bf16.xpose.msra.mxu0 0
  %1484 = vmatprep.subr.bf16.mxu0 0
  %1485 = vmatpush2.bf16.xpose.msra.mxu0 0
  %1486 = vmatprep.subr.bf16.mxu0 0
  %1487 = vmatpush2.bf16.xpose.msra.mxu0 0
  %1488 = vmatprep.subr.bf16.mxu0 0
  %1489 = vmatpush2.bf16.xpose.msra.mxu0 0
  %1490 = vmatprep.subr.bf16.mxu0 0
  %1491 = vmatpush2.bf16.xpose.msra.mxu0 0
  %1492 = vmatprep.subr.bf16.mxu0 0
  %1493 = vmatpush2.bf16.xpose.msra.mxu0 0
  %1494 = vmatprep.subr.bf16.mxu0 0
  %1495 = vmatpush2.bf16.xpose.msra.mxu0 0
  %1496 = vmatprep.subr.bf16.mxu0 0
  %1497 = vmatpush2.bf16.xpose.msra.mxu0 0
  %1498 = vmatprep.mubr.bf16.mxu0 0
  %1499 = vmatmul.mubr.bf16.gmra.mxu0 %v1461
  %v1500 = vpop.f32.mrf.mxu0
  %v1501 = vadd.f32 %v37, %v1500
  %v1502 = vpop.f32.mrf.mxu0
  %v1503 = vpop.f32.mrf.mxu0
  %v1504 = vadd.f32 %v38, %v1503
  %v1505 = vpop.f32.mrf.mxu0
  %1506 = vdwg.mxu0
  %v1507 = vsel %vm284, %v1327, -inf
  %1508 = vmax.xlane.f32.xlu0 %v1507
  %v1509 = vpop.xlane.xlu0 %1508
  %v1510 = vsel %vm284, %v1330, -inf
  %1511 = vmax.xlane.f32.xlu0 %v1510
  %v1512 = vpop.xlane.xlu0 %1511
  %v1513 = vsel %vm284, %v1385, -inf
  %1514 = vmax.xlane.f32.xlu0 %v1513
  %v1515 = vpop.xlane.xlu0 %1514
  %v1516 = vsel %vm284, %v1388, -inf
  %1517 = vmax.xlane.f32.xlu0 %v1516
  %v1518 = vpop.xlane.xlu0 %1517
  %v1519 = vsel %vm284, %v1443, -inf
  %1520 = vmax.xlane.f32.xlu0 %v1519
  %v1521 = vpop.xlane.xlu0 %1520
  %v1522 = vsel %vm284, %v1446, -inf
  %1523 = vmax.xlane.f32.xlu0 %v1522
  %v1524 = vpop.xlane.xlu0 %1523
  %v1525 = vsel %vm284, %v1501, -inf
  %1526 = vmax.xlane.f32.xlu0 %v1525
  %v1527 = vpop.xlane.xlu0 %1526
  %v1528 = vsel %vm284, %v1504, -inf
  %1529 = vmax.xlane.f32.xlu0 %v1528
  %v1530 = vpop.xlane.xlu0 %1529
  %v1531 = vsub.f32 %v1327, %v1509
  %v1532 = vsub.f32 %v1330, %v1512
  %v1533 = vsub.f32 %v1385, %v1515
  %v1534 = vsub.f32 %v1388, %v1518
  %v1535 = vsub.f32 %v1443, %v1521
  %v1536 = vsub.f32 %v1446, %v1524
  %v1537 = vsub.f32 %v1501, %v1527
  %v1538 = vsub.f32 %v1504, %v1530
  %v1539 = vmul.f32 %v1531, 1.442695
  %v1540 = vpow.pop %v1539
  %v1541 = vmul.f32 %v1532, 1.442695
  %v1542 = vpow.pop %v1541
  %v1543 = vmul.f32 %v1533, 1.442695
  %v1544 = vpow.pop %v1543
  %v1545 = vmul.f32 %v1534, 1.442695
  %v1546 = vpow.pop %v1545
  %v1547 = vmul.f32 %v1535, 1.442695
  %v1548 = vpow.pop %v1547
  %v1549 = vmul.f32 %v1536, 1.442695
  %v1550 = vpow.pop %v1549
  %v1551 = vmul.f32 %v1537, 1.442695
  %v1552 = vpow.pop %v1551
  %v1553 = vmul.f32 %v1538, 1.442695
  %v1554 = vpow.pop %v1553
  %v1555 = vsel %vm284, %v1540, 0.0
  %1556 = vadd.xlane.f32.xlu0 %v1555
  %v1557 = vpop.xlane.xlu0 %1556
  %v1558 = vsel %vm284, %v1542, 0.0
  %1559 = vadd.xlane.f32.xlu0 %v1558
  %v1560 = vpop.xlane.xlu0 %1559
  %v1561 = vsel %vm284, %v1544, 0.0
  %1562 = vadd.xlane.f32.xlu0 %v1561
  %v1563 = vpop.xlane.xlu0 %1562
  %v1564 = vsel %vm284, %v1546, 0.0
  %1565 = vadd.xlane.f32.xlu0 %v1564
  %v1566 = vpop.xlane.xlu0 %1565
  %v1567 = vsel %vm284, %v1548, 0.0
  %1568 = vadd.xlane.f32.xlu0 %v1567
  %v1569 = vpop.xlane.xlu0 %1568
  %v1570 = vsel %vm284, %v1550, 0.0
  %1571 = vadd.xlane.f32.xlu0 %v1570
  %v1572 = vpop.xlane.xlu0 %1571
  %v1573 = vsel %vm284, %v1552, 0.0
  %1574 = vadd.xlane.f32.xlu0 %v1573
  %v1575 = vpop.xlane.xlu0 %1574
  %v1576 = vsel %vm284, %v1554, 0.0
  %1577 = vadd.xlane.f32.xlu0 %v1576
  %v1578 = vpop.xlane.xlu0 %1577
  %v1579 = vrcp.pop %v1557
  %v1580 = vrcp.pop %v1560
  %v1581 = vrcp.pop %v1563
  %v1582 = vrcp.pop %v1566
  %v1583 = vrcp.pop %v1569
  %v1584 = vrcp.pop %v1572
  %v1585 = vrcp.pop %v1575
  %v1586 = vrcp.pop %v1578
  %v1587 = vmul.f32 %v1540, %v1579
  %v1588 = vmul.f32 %v1542, %v1580
  %v1589 = vmul.f32 %v1544, %v1581
  %v1590 = vmul.f32 %v1546, %v1582
  %v1591 = vmul.f32 %v1548, %v1583
  %v1592 = vmul.f32 %v1550, %v1584
  %v1593 = vmul.f32 %v1552, %v1585
  %v1594 = vmul.f32 %v1554, %v1586
  %v1595 = vpack.c.bf16 %v1588, %v1587
  %v1596 = vpack.c.bf16 %v1590, %v1589
  %v1597 = vpack.c.bf16 %v1592, %v1591
  %v1598 = vpack.c.bf16 %v1594, %v1593
  %1599 = vrot.lane.b32.xlu0 %v381, 64
  %v1600 = vpop.permute.xlu0 %1599
  %v1603 = vsel %vm284, %v1595, 0
  %1605 = vmatprep.subr.bf16.mxu0 0
  %1606 = vmatpush1.bf16.msra.mxu0 0
  %1607 = vmatprep.subr.bf16.mxu0 0
  %1608 = vmatpush1.bf16.msra.mxu0 0
  %1609 = vmatprep.subr.bf16.mxu0 0
  %1610 = vmatpush1.bf16.msra.mxu0 0
  %1611 = vmatprep.subr.bf16.mxu0 0
  %1612 = vmatpush1.bf16.msra.mxu0 0
  %1613 = vmatprep.subr.bf16.mxu0 0
  %1614 = vmatpush1.bf16.msra.mxu0 0
  %1615 = vmatprep.subr.bf16.mxu0 0
  %1616 = vmatpush1.bf16.msra.mxu0 0
  %1617 = vmatprep.subr.bf16.mxu0 0
  %1618 = vmatpush1.bf16.msra.mxu0 0
  %1619 = vmatprep.subr.bf16.mxu0 0
  %1620 = vmatpush1.bf16.msra.mxu0 %v1600
  %1621 = vmatprep.subr.bf16.mxu0 0
  %1622 = vmatpush2.bf16.msra.mxu0 0
  %1623 = vmatprep.subr.bf16.mxu0 0
  %1624 = vmatpush2.bf16.msra.mxu0 0
  %1625 = vmatprep.subr.bf16.mxu0 0
  %1626 = vmatpush2.bf16.msra.mxu0 0
  %1627 = vmatprep.subr.bf16.mxu0 0
  %1628 = vmatpush2.bf16.msra.mxu0 0
  %1629 = vmatprep.subr.bf16.mxu0 0
  %1630 = vmatpush2.bf16.msra.mxu0 0
  %1631 = vmatprep.subr.bf16.mxu0 0
  %1632 = vmatpush2.bf16.msra.mxu0 0
  %1633 = vmatprep.subr.bf16.mxu0 0
  %1634 = vmatpush2.bf16.msra.mxu0 0
  %1635 = vmatprep.subr.bf16.mxu0 0
  %1636 = vmatpush2.bf16.msra.mxu0 0
  %1637 = vmatprep.mubr.bf16.mxu0 0
  %1638 = vmatmul.mubr.bf16.gmra.mxu0 %v1603
  %v1639 = vpop.f32.mrf.mxu0
  %v1640 = vadd.f32 0.0, %v1639
  %v1641 = vpop.f32.mrf.mxu0
  %v1642 = vpop.f32.mrf.mxu0
  %v1643 = vadd.f32 0.0, %v1642
  %v1644 = vpop.f32.mrf.mxu0
  %1645 = vdwg.mxu0
  %1646 = vrot.lane.b32.xlu0 %v431, 64
  %v1647 = vpop.permute.xlu0 %1646
  %v1650 = vsel %vm284, %v1596, 0
  %1652 = vmatprep.subr.bf16.mxu0 0
  %1653 = vmatpush1.bf16.msra.mxu0 0
  %1654 = vmatprep.subr.bf16.mxu0 0
  %1655 = vmatpush1.bf16.msra.mxu0 0
  %1656 = vmatprep.subr.bf16.mxu0 0
  %1657 = vmatpush1.bf16.msra.mxu0 0
  %1658 = vmatprep.subr.bf16.mxu0 0
  %1659 = vmatpush1.bf16.msra.mxu0 0
  %1660 = vmatprep.subr.bf16.mxu0 0
  %1661 = vmatpush1.bf16.msra.mxu0 0
  %1662 = vmatprep.subr.bf16.mxu0 0
  %1663 = vmatpush1.bf16.msra.mxu0 0
  %1664 = vmatprep.subr.bf16.mxu0 0
  %1665 = vmatpush1.bf16.msra.mxu0 0
  %1666 = vmatprep.subr.bf16.mxu0 0
  %1667 = vmatpush1.bf16.msra.mxu0 %v1647
  %1668 = vmatprep.subr.bf16.mxu0 0
  %1669 = vmatpush2.bf16.msra.mxu0 0
  %1670 = vmatprep.subr.bf16.mxu0 0
  %1671 = vmatpush2.bf16.msra.mxu0 0
  %1672 = vmatprep.subr.bf16.mxu0 0
  %1673 = vmatpush2.bf16.msra.mxu0 0
  %1674 = vmatprep.subr.bf16.mxu0 0
  %1675 = vmatpush2.bf16.msra.mxu0 0
  %1676 = vmatprep.subr.bf16.mxu0 0
  %1677 = vmatpush2.bf16.msra.mxu0 0
  %1678 = vmatprep.subr.bf16.mxu0 0
  %1679 = vmatpush2.bf16.msra.mxu0 0
  %1680 = vmatprep.subr.bf16.mxu0 0
  %1681 = vmatpush2.bf16.msra.mxu0 0
  %1682 = vmatprep.subr.bf16.mxu0 0
  %1683 = vmatpush2.bf16.msra.mxu0 0
  %1684 = vmatprep.mubr.bf16.mxu0 0
  %1685 = vmatmul.mubr.bf16.gmra.mxu0 %v1650
  %v1686 = vpop.f32.mrf.mxu0
  %v1687 = vadd.f32 0.0, %v1686
  %v1688 = vpop.f32.mrf.mxu0
  %v1689 = vpop.f32.mrf.mxu0
  %v1690 = vadd.f32 0.0, %v1689
  %v1691 = vpop.f32.mrf.mxu0
  %1692 = vdwg.mxu0
  %1693 = vrot.lane.b32.xlu0 %v481, 64
  %v1694 = vpop.permute.xlu0 %1693
  %v1697 = vsel %vm284, %v1597, 0
  %1699 = vmatprep.subr.bf16.mxu0 0
  %1700 = vmatpush1.bf16.msra.mxu0 0
  %1701 = vmatprep.subr.bf16.mxu0 0
  %1702 = vmatpush1.bf16.msra.mxu0 0
  %1703 = vmatprep.subr.bf16.mxu0 0
  %1704 = vmatpush1.bf16.msra.mxu0 0
  %1705 = vmatprep.subr.bf16.mxu0 0
  %1706 = vmatpush1.bf16.msra.mxu0 0
  %1707 = vmatprep.subr.bf16.mxu0 0
  %1708 = vmatpush1.bf16.msra.mxu0 0
  %1709 = vmatprep.subr.bf16.mxu0 0
  %1710 = vmatpush1.bf16.msra.mxu0 0
  %1711 = vmatprep.subr.bf16.mxu0 0
  %1712 = vmatpush1.bf16.msra.mxu0 0
  %1713 = vmatprep.subr.bf16.mxu0 0
  %1714 = vmatpush1.bf16.msra.mxu0 %v1694
  %1715 = vmatprep.subr.bf16.mxu0 0
  %1716 = vmatpush2.bf16.msra.mxu0 0
  %1717 = vmatprep.subr.bf16.mxu0 0
  %1718 = vmatpush2.bf16.msra.mxu0 0
  %1719 = vmatprep.subr.bf16.mxu0 0
  %1720 = vmatpush2.bf16.msra.mxu0 0
  %1721 = vmatprep.subr.bf16.mxu0 0
  %1722 = vmatpush2.bf16.msra.mxu0 0
  %1723 = vmatprep.subr.bf16.mxu0 0
  %1724 = vmatpush2.bf16.msra.mxu0 0
  %1725 = vmatprep.subr.bf16.mxu0 0
  %1726 = vmatpush2.bf16.msra.mxu0 0
  %1727 = vmatprep.subr.bf16.mxu0 0
  %1728 = vmatpush2.bf16.msra.mxu0 0
  %1729 = vmatprep.subr.bf16.mxu0 0
  %1730 = vmatpush2.bf16.msra.mxu0 0
  %1731 = vmatprep.mubr.bf16.mxu0 0
  %1732 = vmatmul.mubr.bf16.gmra.mxu0 %v1697
  %v1733 = vpop.f32.mrf.mxu0
  %v1734 = vadd.f32 0.0, %v1733
  %v1735 = vpop.f32.mrf.mxu0
  %v1736 = vpop.f32.mrf.mxu0
  %v1737 = vadd.f32 0.0, %v1736
  %v1738 = vpop.f32.mrf.mxu0
  %1739 = vdwg.mxu0
  %1740 = vrot.lane.b32.xlu0 %v531, 64
  %v1741 = vpop.permute.xlu0 %1740
  %v1744 = vsel %vm284, %v1598, 0
  %1746 = vmatprep.subr.bf16.mxu0 0
  %1747 = vmatpush1.bf16.msra.mxu0 0
  %1748 = vmatprep.subr.bf16.mxu0 0
  %1749 = vmatpush1.bf16.msra.mxu0 0
  %1750 = vmatprep.subr.bf16.mxu0 0
  %1751 = vmatpush1.bf16.msra.mxu0 0
  %1752 = vmatprep.subr.bf16.mxu0 0
  %1753 = vmatpush1.bf16.msra.mxu0 0
  %1754 = vmatprep.subr.bf16.mxu0 0
  %1755 = vmatpush1.bf16.msra.mxu0 0
  %1756 = vmatprep.subr.bf16.mxu0 0
  %1757 = vmatpush1.bf16.msra.mxu0 0
  %1758 = vmatprep.subr.bf16.mxu0 0
  %1759 = vmatpush1.bf16.msra.mxu0 0
  %1760 = vmatprep.subr.bf16.mxu0 0
  %1761 = vmatpush1.bf16.msra.mxu0 %v1741
  %1762 = vmatprep.subr.bf16.mxu0 0
  %1763 = vmatpush2.bf16.msra.mxu0 0
  %1764 = vmatprep.subr.bf16.mxu0 0
  %1765 = vmatpush2.bf16.msra.mxu0 0
  %1766 = vmatprep.subr.bf16.mxu0 0
  %1767 = vmatpush2.bf16.msra.mxu0 0
  %1768 = vmatprep.subr.bf16.mxu0 0
  %1769 = vmatpush2.bf16.msra.mxu0 0
  %1770 = vmatprep.subr.bf16.mxu0 0
  %1771 = vmatpush2.bf16.msra.mxu0 0
  %1772 = vmatprep.subr.bf16.mxu0 0
  %1773 = vmatpush2.bf16.msra.mxu0 0
  %1774 = vmatprep.subr.bf16.mxu0 0
  %1775 = vmatpush2.bf16.msra.mxu0 0
  %1776 = vmatprep.subr.bf16.mxu0 0
  %1777 = vmatpush2.bf16.msra.mxu0 0
  %1778 = vmatprep.mubr.bf16.mxu0 0
  %1779 = vmatmul.mubr.bf16.gmra.mxu0 %v1744
  %v1780 = vpop.f32.mrf.mxu0
  %v1781 = vadd.f32 0.0, %v1780
  %v1782 = vpop.f32.mrf.mxu0
  %v1783 = vpop.f32.mrf.mxu0
  %v1784 = vadd.f32 0.0, %v1783
  %v1785 = vpop.f32.mrf.mxu0
  %1786 = vdwg.mxu0
  %v1787 = vpack.c.bf16 %v1643, %v1640
  %v1788 = vpack.c.bf16 %v1690, %v1687
  %v1789 = vpack.c.bf16 %v1737, %v1734
  %v1790 = vpack.c.bf16 %v1784, %v1781
  %v1795 = vunpack.c.l.b16 %v47
  %v1796 = vunpack.c.l.b16 %v48
  %v1797 = vunpack.c.l.b16 %v49
  %v1798 = vunpack.c.l.b16 %v50
  %v1799 = vpack.c.b16 %v1796, %v1795
  %v1800 = vpack.c.b16 %v1798, %v1797
  %v1804 = vsel %vm65, %v1787, 0
  %v1807 = vsel %vm65, %v1788, 0
  %v1810 = vsel %vm65, %v1789, 0
  %v1813 = vsel %vm65, %v1790, 0
  %1815 = vmatprep.subr.bf16.mxu0 0
  %1816 = vmatpush1.bf16.msra.mxu0 0
  %1817 = vmatprep.subr.bf16.mxu0 0
  %1818 = vmatpush1.bf16.msra.mxu0 0
  %1819 = vmatprep.subr.bf16.mxu0 0
  %1820 = vmatpush1.bf16.msra.mxu0 0
  %1821 = vmatprep.subr.bf16.mxu0 0
  %1822 = vmatpush1.bf16.msra.mxu0 0
  %1823 = vmatprep.subr.bf16.mxu0 0
  %1824 = vmatpush1.bf16.msra.mxu0 0
  %1825 = vmatprep.subr.bf16.mxu0 0
  %1826 = vmatpush1.bf16.msra.mxu0 0
  %1827 = vmatprep.subr.bf16.mxu0 0
  %1828 = vmatpush1.bf16.msra.mxu0 %v1800
  %1829 = vmatprep.subr.bf16.mxu0 0
  %1830 = vmatpush1.bf16.msra.mxu0 %v1799
  %1831 = vmatprep.subr.bf16.mxu0 0
  %1832 = vmatpush2.bf16.msra.mxu0 0
  %1833 = vmatprep.subr.bf16.mxu0 0
  %1834 = vmatpush2.bf16.msra.mxu0 0
  %1835 = vmatprep.subr.bf16.mxu0 0
  %1836 = vmatpush2.bf16.msra.mxu0 0
  %1837 = vmatprep.subr.bf16.mxu0 0
  %1838 = vmatpush2.bf16.msra.mxu0 0
  %1839 = vmatprep.subr.bf16.mxu0 0
  %1840 = vmatpush2.bf16.msra.mxu0 0
  %1841 = vmatprep.subr.bf16.mxu0 0
  %1842 = vmatpush2.bf16.msra.mxu0 0
  %1843 = vmatprep.subr.bf16.mxu0 0
  %1844 = vmatpush2.bf16.msra.mxu0 0
  %1845 = vmatprep.subr.bf16.mxu0 0
  %1846 = vmatpush2.bf16.msra.mxu0 0
  %1847 = vmatprep.mubr.bf16.mxu0 0
  %1848 = vmatmul.mubr.bf16.gmra.mxu0 %v1804
  %v1849 = vpop.f32.mrf.mxu0
  %v1850 = vadd.f32 0.0, %v1849
  %v1851 = vpop.f32.mrf.mxu0
  %v1852 = vpop.f32.mrf.mxu0
  %v1853 = vadd.f32 0.0, %v1852
  %v1854 = vpop.f32.mrf.mxu0
  %1855 = vmatprep.mubr.bf16.mxu0 0
  %1856 = vmatmul.mubr.bf16.gmra.mxu0 %v1807
  %v1857 = vpop.f32.mrf.mxu0
  %v1858 = vadd.f32 0.0, %v1857
  %v1859 = vpop.f32.mrf.mxu0
  %v1860 = vpop.f32.mrf.mxu0
  %v1861 = vadd.f32 0.0, %v1860
  %v1862 = vpop.f32.mrf.mxu0
  %1863 = vmatprep.mubr.bf16.mxu0 0
  %1864 = vmatmul.mubr.bf16.gmra.mxu0 %v1810
  %v1865 = vpop.f32.mrf.mxu0
  %v1866 = vadd.f32 0.0, %v1865
  %v1867 = vpop.f32.mrf.mxu0
  %v1868 = vpop.f32.mrf.mxu0
  %v1869 = vadd.f32 0.0, %v1868
  %v1870 = vpop.f32.mrf.mxu0
  %1871 = vmatprep.mubr.bf16.mxu0 0
  %1872 = vmatmul.mubr.bf16.gmra.mxu0 %v1813
  %v1873 = vpop.f32.mrf.mxu0
  %v1874 = vadd.f32 0.0, %v1873
  %v1875 = vpop.f32.mrf.mxu0
  %v1876 = vpop.f32.mrf.mxu0
  %v1877 = vadd.f32 0.0, %v1876
  %v1878 = vpop.f32.mrf.mxu0
  %1879 = vdwg.mxu0
  %v1880 = vadd.f32 %v1245, %v1850
  %v1881 = vadd.f32 %v1248, %v1853
  %v1882 = vadd.f32 %v1253, %v1858
  %v1883 = vadd.f32 %v1256, %v1861
  %v1884 = vadd.f32 %v1261, %v1866
  %v1885 = vadd.f32 %v1264, %v1869
  %v1886 = vadd.f32 %v1269, %v1874
  %v1887 = vadd.f32 %v1272, %v1877
  %1888 = vrot.lane.b32.xlu0 %v21, 32
  %v1889 = vpop.permute.xlu0 %1888
  %1890 = vrot.lane.b32.xlu0 %v23, 32
  %v1891 = vpop.permute.xlu0 %1890
  %v1892 = vrot.slane %v1889, 4
  %v1893 = vrot.slane %v1891, 4
  %1894 = vrot.lane.b32.xlu0 %v61, 32
  %v1895 = vpop.permute.xlu0 %1894
  %v1896 = vunpack.c.l.b16 %v1892
  %v1897 = vunpack.c.l.b16 %v1893
  %v1898 = vpack.c.b16 %v1897, %v1896
  %v1900 = vsel %vm65, %v1895, 0
  %v1903 = vsel %vm65, %v1898, 0
  %1905 = vmatprep.subr.bf16.mxu0 0
  %1906 = vmatpush1.bf16.xpose.msra.mxu0 0
  %1907 = vmatprep.subr.bf16.mxu0 0
  %1908 = vmatpush1.bf16.xpose.msra.mxu0 0
  %1909 = vmatprep.subr.bf16.mxu0 0
  %1910 = vmatpush1.bf16.xpose.msra.mxu0 0
  %1911 = vmatprep.subr.bf16.mxu0 0
  %1912 = vmatpush1.bf16.xpose.msra.mxu0 0
  %1913 = vmatprep.subr.bf16.mxu0 0
  %1914 = vmatpush1.bf16.xpose.msra.mxu0 0
  %1915 = vmatprep.subr.bf16.mxu0 0
  %1916 = vmatpush1.bf16.xpose.msra.mxu0 0
  %1917 = vmatprep.subr.bf16.mxu0 0
  %1918 = vmatpush1.bf16.xpose.msra.mxu0 0
  %1919 = vmatprep.subr.bf16.mxu0 0
  %1920 = vmatpush1.bf16.xpose.msra.mxu0 %v1903
  %1921 = vmatprep.subr.bf16.mxu0 0
  %1922 = vmatpush2.bf16.xpose.msra.mxu0 0
  %1923 = vmatprep.subr.bf16.mxu0 0
  %1924 = vmatpush2.bf16.xpose.msra.mxu0 0
  %1925 = vmatprep.subr.bf16.mxu0 0
  %1926 = vmatpush2.bf16.xpose.msra.mxu0 0
  %1927 = vmatprep.subr.bf16.mxu0 0
  %1928 = vmatpush2.bf16.xpose.msra.mxu0 0
  %1929 = vmatprep.subr.bf16.mxu0 0
  %1930 = vmatpush2.bf16.xpose.msra.mxu0 0
  %1931 = vmatprep.subr.bf16.mxu0 0
  %1932 = vmatpush2.bf16.xpose.msra.mxu0 0
  %1933 = vmatprep.subr.bf16.mxu0 0
  %1934 = vmatpush2.bf16.xpose.msra.mxu0 0
  %1935 = vmatprep.subr.bf16.mxu0 0
  %1936 = vmatpush2.bf16.xpose.msra.mxu0 0
  %1937 = vmatprep.mubr.bf16.mxu0 0
  %1938 = vmatmul.mubr.bf16.gmra.mxu0 %v1900
  %v1939 = vpop.f32.mrf.mxu0
  %v1940 = vadd.f32 %v37, %v1939
  %v1941 = vpop.f32.mrf.mxu0
  %v1942 = vpop.f32.mrf.mxu0
  %v1943 = vadd.f32 %v38, %v1942
  %v1944 = vpop.f32.mrf.mxu0
  %1945 = vdwg.mxu0
  %1946 = vrot.lane.b32.xlu0 %v25, 32
  %v1947 = vpop.permute.xlu0 %1946
  %1948 = vrot.lane.b32.xlu0 %v27, 32
  %v1949 = vpop.permute.xlu0 %1948
  %v1950 = vrot.slane %v1947, 4
  %v1951 = vrot.slane %v1949, 4
  %1952 = vrot.lane.b32.xlu0 %v119, 32
  %v1953 = vpop.permute.xlu0 %1952
  %v1954 = vunpack.c.l.b16 %v1950
  %v1955 = vunpack.c.l.b16 %v1951
  %v1956 = vpack.c.b16 %v1955, %v1954
  %v1958 = vsel %vm65, %v1953, 0
  %v1961 = vsel %vm65, %v1956, 0
  %1963 = vmatprep.subr.bf16.mxu0 0
  %1964 = vmatpush1.bf16.xpose.msra.mxu0 0
  %1965 = vmatprep.subr.bf16.mxu0 0
  %1966 = vmatpush1.bf16.xpose.msra.mxu0 0
  %1967 = vmatprep.subr.bf16.mxu0 0
  %1968 = vmatpush1.bf16.xpose.msra.mxu0 0
  %1969 = vmatprep.subr.bf16.mxu0 0
  %1970 = vmatpush1.bf16.xpose.msra.mxu0 0
  %1971 = vmatprep.subr.bf16.mxu0 0
  %1972 = vmatpush1.bf16.xpose.msra.mxu0 0
  %1973 = vmatprep.subr.bf16.mxu0 0
  %1974 = vmatpush1.bf16.xpose.msra.mxu0 0
  %1975 = vmatprep.subr.bf16.mxu0 0
  %1976 = vmatpush1.bf16.xpose.msra.mxu0 0
  %1977 = vmatprep.subr.bf16.mxu0 0
  %1978 = vmatpush1.bf16.xpose.msra.mxu0 %v1961
  %1979 = vmatprep.subr.bf16.mxu0 0
  %1980 = vmatpush2.bf16.xpose.msra.mxu0 0
  %1981 = vmatprep.subr.bf16.mxu0 0
  %1982 = vmatpush2.bf16.xpose.msra.mxu0 0
  %1983 = vmatprep.subr.bf16.mxu0 0
  %1984 = vmatpush2.bf16.xpose.msra.mxu0 0
  %1985 = vmatprep.subr.bf16.mxu0 0
  %1986 = vmatpush2.bf16.xpose.msra.mxu0 0
  %1987 = vmatprep.subr.bf16.mxu0 0
  %1988 = vmatpush2.bf16.xpose.msra.mxu0 0
  %1989 = vmatprep.subr.bf16.mxu0 0
  %1990 = vmatpush2.bf16.xpose.msra.mxu0 0
  %1991 = vmatprep.subr.bf16.mxu0 0
  %1992 = vmatpush2.bf16.xpose.msra.mxu0 0
  %1993 = vmatprep.subr.bf16.mxu0 0
  %1994 = vmatpush2.bf16.xpose.msra.mxu0 0
  %1995 = vmatprep.mubr.bf16.mxu0 0
  %1996 = vmatmul.mubr.bf16.gmra.mxu0 %v1958
  %v1997 = vpop.f32.mrf.mxu0
  %v1998 = vadd.f32 %v37, %v1997
  %v1999 = vpop.f32.mrf.mxu0
  %v2000 = vpop.f32.mrf.mxu0
  %v2001 = vadd.f32 %v38, %v2000
  %v2002 = vpop.f32.mrf.mxu0
  %2003 = vdwg.mxu0
  %2004 = vrot.lane.b32.xlu0 %v29, 32
  %v2005 = vpop.permute.xlu0 %2004
  %2006 = vrot.lane.b32.xlu0 %v31, 32
  %v2007 = vpop.permute.xlu0 %2006
  %v2008 = vrot.slane %v2005, 4
  %v2009 = vrot.slane %v2007, 4
  %2010 = vrot.lane.b32.xlu0 %v176, 32
  %v2011 = vpop.permute.xlu0 %2010
  %v2012 = vunpack.c.l.b16 %v2008
  %v2013 = vunpack.c.l.b16 %v2009
  %v2014 = vpack.c.b16 %v2013, %v2012
  %v2016 = vsel %vm65, %v2011, 0
  %v2019 = vsel %vm65, %v2014, 0
  %2021 = vmatprep.subr.bf16.mxu0 0
  %2022 = vmatpush1.bf16.xpose.msra.mxu0 0
  %2023 = vmatprep.subr.bf16.mxu0 0
  %2024 = vmatpush1.bf16.xpose.msra.mxu0 0
  %2025 = vmatprep.subr.bf16.mxu0 0
  %2026 = vmatpush1.bf16.xpose.msra.mxu0 0
  %2027 = vmatprep.subr.bf16.mxu0 0
  %2028 = vmatpush1.bf16.xpose.msra.mxu0 0
  %2029 = vmatprep.subr.bf16.mxu0 0
  %2030 = vmatpush1.bf16.xpose.msra.mxu0 0
  %2031 = vmatprep.subr.bf16.mxu0 0
  %2032 = vmatpush1.bf16.xpose.msra.mxu0 0
  %2033 = vmatprep.subr.bf16.mxu0 0
  %2034 = vmatpush1.bf16.xpose.msra.mxu0 0
  %2035 = vmatprep.subr.bf16.mxu0 0
  %2036 = vmatpush1.bf16.xpose.msra.mxu0 %v2019
  %2037 = vmatprep.subr.bf16.mxu0 0
  %2038 = vmatpush2.bf16.xpose.msra.mxu0 0
  %2039 = vmatprep.subr.bf16.mxu0 0
  %2040 = vmatpush2.bf16.xpose.msra.mxu0 0
  %2041 = vmatprep.subr.bf16.mxu0 0
  %2042 = vmatpush2.bf16.xpose.msra.mxu0 0
  %2043 = vmatprep.subr.bf16.mxu0 0
  %2044 = vmatpush2.bf16.xpose.msra.mxu0 0
  %2045 = vmatprep.subr.bf16.mxu0 0
  %2046 = vmatpush2.bf16.xpose.msra.mxu0 0
  %2047 = vmatprep.subr.bf16.mxu0 0
  %2048 = vmatpush2.bf16.xpose.msra.mxu0 0
  %2049 = vmatprep.subr.bf16.mxu0 0
  %2050 = vmatpush2.bf16.xpose.msra.mxu0 0
  %2051 = vmatprep.subr.bf16.mxu0 0
  %2052 = vmatpush2.bf16.xpose.msra.mxu0 0
  %2053 = vmatprep.mubr.bf16.mxu0 0
  %2054 = vmatmul.mubr.bf16.gmra.mxu0 %v2016
  %v2055 = vpop.f32.mrf.mxu0
  %v2056 = vadd.f32 %v37, %v2055
  %v2057 = vpop.f32.mrf.mxu0
  %v2058 = vpop.f32.mrf.mxu0
  %v2059 = vadd.f32 %v38, %v2058
  %v2060 = vpop.f32.mrf.mxu0
  %2061 = vdwg.mxu0
  %2062 = vrot.lane.b32.xlu0 %v33, 32
  %v2063 = vpop.permute.xlu0 %2062
  %2064 = vrot.lane.b32.xlu0 %v35, 32
  %v2065 = vpop.permute.xlu0 %2064
  %v2066 = vrot.slane %v2063, 4
  %v2067 = vrot.slane %v2065, 4
  %2068 = vrot.lane.b32.xlu0 %v233, 32
  %v2069 = vpop.permute.xlu0 %2068
  %v2070 = vunpack.c.l.b16 %v2066
  %v2071 = vunpack.c.l.b16 %v2067
  %v2072 = vpack.c.b16 %v2071, %v2070
  %v2074 = vsel %vm65, %v2069, 0
  %v2077 = vsel %vm65, %v2072, 0
  %2079 = vmatprep.subr.bf16.mxu0 0
  %2080 = vmatpush1.bf16.xpose.msra.mxu0 0
  %2081 = vmatprep.subr.bf16.mxu0 0
  %2082 = vmatpush1.bf16.xpose.msra.mxu0 0
  %2083 = vmatprep.subr.bf16.mxu0 0
  %2084 = vmatpush1.bf16.xpose.msra.mxu0 0
  %2085 = vmatprep.subr.bf16.mxu0 0
  %2086 = vmatpush1.bf16.xpose.msra.mxu0 0
  %2087 = vmatprep.subr.bf16.mxu0 0
  %2088 = vmatpush1.bf16.xpose.msra.mxu0 0
  %2089 = vmatprep.subr.bf16.mxu0 0
  %2090 = vmatpush1.bf16.xpose.msra.mxu0 0
  %2091 = vmatprep.subr.bf16.mxu0 0
  %2092 = vmatpush1.bf16.xpose.msra.mxu0 0
  %2093 = vmatprep.subr.bf16.mxu0 0
  %2094 = vmatpush1.bf16.xpose.msra.mxu0 %v2077
  %2095 = vmatprep.subr.bf16.mxu0 0
  %2096 = vmatpush2.bf16.xpose.msra.mxu0 0
  %2097 = vmatprep.subr.bf16.mxu0 0
  %2098 = vmatpush2.bf16.xpose.msra.mxu0 0
  %2099 = vmatprep.subr.bf16.mxu0 0
  %2100 = vmatpush2.bf16.xpose.msra.mxu0 0
  %2101 = vmatprep.subr.bf16.mxu0 0
  %2102 = vmatpush2.bf16.xpose.msra.mxu0 0
  %2103 = vmatprep.subr.bf16.mxu0 0
  %2104 = vmatpush2.bf16.xpose.msra.mxu0 0
  %2105 = vmatprep.subr.bf16.mxu0 0
  %2106 = vmatpush2.bf16.xpose.msra.mxu0 0
  %2107 = vmatprep.subr.bf16.mxu0 0
  %2108 = vmatpush2.bf16.xpose.msra.mxu0 0
  %2109 = vmatprep.subr.bf16.mxu0 0
  %2110 = vmatpush2.bf16.xpose.msra.mxu0 0
  %2111 = vmatprep.mubr.bf16.mxu0 0
  %2112 = vmatmul.mubr.bf16.gmra.mxu0 %v2074
  %v2113 = vpop.f32.mrf.mxu0
  %v2114 = vadd.f32 %v37, %v2113
  %v2115 = vpop.f32.mrf.mxu0
  %v2116 = vpop.f32.mrf.mxu0
  %v2117 = vadd.f32 %v38, %v2116
  %v2118 = vpop.f32.mrf.mxu0
  %2119 = vdwg.mxu0
  %v2120 = vsel %vm284, %v1940, -inf
  %2121 = vmax.xlane.f32.xlu0 %v2120
  %v2122 = vpop.xlane.xlu0 %2121
  %v2123 = vsel %vm284, %v1943, -inf
  %2124 = vmax.xlane.f32.xlu0 %v2123
  %v2125 = vpop.xlane.xlu0 %2124
  %v2126 = vsel %vm284, %v1998, -inf
  %2127 = vmax.xlane.f32.xlu0 %v2126
  %v2128 = vpop.xlane.xlu0 %2127
  %v2129 = vsel %vm284, %v2001, -inf
  %2130 = vmax.xlane.f32.xlu0 %v2129
  %v2131 = vpop.xlane.xlu0 %2130
  %v2132 = vsel %vm284, %v2056, -inf
  %2133 = vmax.xlane.f32.xlu0 %v2132
  %v2134 = vpop.xlane.xlu0 %2133
  %v2135 = vsel %vm284, %v2059, -inf
  %2136 = vmax.xlane.f32.xlu0 %v2135
  %v2137 = vpop.xlane.xlu0 %2136
  %v2138 = vsel %vm284, %v2114, -inf
  %2139 = vmax.xlane.f32.xlu0 %v2138
  %v2140 = vpop.xlane.xlu0 %2139
  %v2141 = vsel %vm284, %v2117, -inf
  %2142 = vmax.xlane.f32.xlu0 %v2141
  %v2143 = vpop.xlane.xlu0 %2142
  %v2144 = vsub.f32 %v1940, %v2122
  %v2145 = vsub.f32 %v1943, %v2125
  %v2146 = vsub.f32 %v1998, %v2128
  %v2147 = vsub.f32 %v2001, %v2131
  %v2148 = vsub.f32 %v2056, %v2134
  %v2149 = vsub.f32 %v2059, %v2137
  %v2150 = vsub.f32 %v2114, %v2140
  %v2151 = vsub.f32 %v2117, %v2143
  %v2152 = vmul.f32 %v2144, 1.442695
  %v2153 = vpow.pop %v2152
  %v2154 = vmul.f32 %v2145, 1.442695
  %v2155 = vpow.pop %v2154
  %v2156 = vmul.f32 %v2146, 1.442695
  %v2157 = vpow.pop %v2156
  %v2158 = vmul.f32 %v2147, 1.442695
  %v2159 = vpow.pop %v2158
  %v2160 = vmul.f32 %v2148, 1.442695
  %v2161 = vpow.pop %v2160
  %v2162 = vmul.f32 %v2149, 1.442695
  %v2163 = vpow.pop %v2162
  %v2164 = vmul.f32 %v2150, 1.442695
  %v2165 = vpow.pop %v2164
  %v2166 = vmul.f32 %v2151, 1.442695
  %v2167 = vpow.pop %v2166
  %v2168 = vsel %vm284, %v2153, 0.0
  %2169 = vadd.xlane.f32.xlu0 %v2168
  %v2170 = vpop.xlane.xlu0 %2169
  %v2171 = vsel %vm284, %v2155, 0.0
  %2172 = vadd.xlane.f32.xlu0 %v2171
  %v2173 = vpop.xlane.xlu0 %2172
  %v2174 = vsel %vm284, %v2157, 0.0
  %2175 = vadd.xlane.f32.xlu0 %v2174
  %v2176 = vpop.xlane.xlu0 %2175
  %v2177 = vsel %vm284, %v2159, 0.0
  %2178 = vadd.xlane.f32.xlu0 %v2177
  %v2179 = vpop.xlane.xlu0 %2178
  %v2180 = vsel %vm284, %v2161, 0.0
  %2181 = vadd.xlane.f32.xlu0 %v2180
  %v2182 = vpop.xlane.xlu0 %2181
  %v2183 = vsel %vm284, %v2163, 0.0
  %2184 = vadd.xlane.f32.xlu0 %v2183
  %v2185 = vpop.xlane.xlu0 %2184
  %v2186 = vsel %vm284, %v2165, 0.0
  %2187 = vadd.xlane.f32.xlu0 %v2186
  %v2188 = vpop.xlane.xlu0 %2187
  %v2189 = vsel %vm284, %v2167, 0.0
  %2190 = vadd.xlane.f32.xlu0 %v2189
  %v2191 = vpop.xlane.xlu0 %2190
  %v2192 = vrcp.pop %v2170
  %v2193 = vrcp.pop %v2173
  %v2194 = vrcp.pop %v2176
  %v2195 = vrcp.pop %v2179
  %v2196 = vrcp.pop %v2182
  %v2197 = vrcp.pop %v2185
  %v2198 = vrcp.pop %v2188
  %v2199 = vrcp.pop %v2191
  %v2200 = vmul.f32 %v2153, %v2192
  %v2201 = vmul.f32 %v2155, %v2193
  %v2202 = vmul.f32 %v2157, %v2194
  %v2203 = vmul.f32 %v2159, %v2195
  %v2204 = vmul.f32 %v2161, %v2196
  %v2205 = vmul.f32 %v2163, %v2197
  %v2206 = vmul.f32 %v2165, %v2198
  %v2207 = vmul.f32 %v2167, %v2199
  %v2208 = vpack.c.bf16 %v2201, %v2200
  %v2209 = vpack.c.bf16 %v2203, %v2202
  %v2210 = vpack.c.bf16 %v2205, %v2204
  %v2211 = vpack.c.bf16 %v2207, %v2206
  %2212 = vrot.lane.b32.xlu0 %v381, 32
  %v2213 = vpop.permute.xlu0 %2212
  %v2216 = vsel %vm284, %v2208, 0
  %2218 = vmatprep.subr.bf16.mxu0 0
  %2219 = vmatpush1.bf16.msra.mxu0 0
  %2220 = vmatprep.subr.bf16.mxu0 0
  %2221 = vmatpush1.bf16.msra.mxu0 0
  %2222 = vmatprep.subr.bf16.mxu0 0
  %2223 = vmatpush1.bf16.msra.mxu0 0
  %2224 = vmatprep.subr.bf16.mxu0 0
  %2225 = vmatpush1.bf16.msra.mxu0 0
  %2226 = vmatprep.subr.bf16.mxu0 0
  %2227 = vmatpush1.bf16.msra.mxu0 0
  %2228 = vmatprep.subr.bf16.mxu0 0
  %2229 = vmatpush1.bf16.msra.mxu0 0
  %2230 = vmatprep.subr.bf16.mxu0 0
  %2231 = vmatpush1.bf16.msra.mxu0 0
  %2232 = vmatprep.subr.bf16.mxu0 0
  %2233 = vmatpush1.bf16.msra.mxu0 %v2213
  %2234 = vmatprep.subr.bf16.mxu0 0
  %2235 = vmatpush2.bf16.msra.mxu0 0
  %2236 = vmatprep.subr.bf16.mxu0 0
  %2237 = vmatpush2.bf16.msra.mxu0 0
  %2238 = vmatprep.subr.bf16.mxu0 0
  %2239 = vmatpush2.bf16.msra.mxu0 0
  %2240 = vmatprep.subr.bf16.mxu0 0
  %2241 = vmatpush2.bf16.msra.mxu0 0
  %2242 = vmatprep.subr.bf16.mxu0 0
  %2243 = vmatpush2.bf16.msra.mxu0 0
  %2244 = vmatprep.subr.bf16.mxu0 0
  %2245 = vmatpush2.bf16.msra.mxu0 0
  %2246 = vmatprep.subr.bf16.mxu0 0
  %2247 = vmatpush2.bf16.msra.mxu0 0
  %2248 = vmatprep.subr.bf16.mxu0 0
  %2249 = vmatpush2.bf16.msra.mxu0 0
  %2250 = vmatprep.mubr.bf16.mxu0 0
  %2251 = vmatmul.mubr.bf16.gmra.mxu0 %v2216
  %v2252 = vpop.f32.mrf.mxu0
  %v2253 = vadd.f32 0.0, %v2252
  %v2254 = vpop.f32.mrf.mxu0
  %v2255 = vpop.f32.mrf.mxu0
  %v2256 = vadd.f32 0.0, %v2255
  %v2257 = vpop.f32.mrf.mxu0
  %2258 = vdwg.mxu0
  %2259 = vrot.lane.b32.xlu0 %v431, 32
  %v2260 = vpop.permute.xlu0 %2259
  %v2263 = vsel %vm284, %v2209, 0
  %2265 = vmatprep.subr.bf16.mxu0 0
  %2266 = vmatpush1.bf16.msra.mxu0 0
  %2267 = vmatprep.subr.bf16.mxu0 0
  %2268 = vmatpush1.bf16.msra.mxu0 0
  %2269 = vmatprep.subr.bf16.mxu0 0
  %2270 = vmatpush1.bf16.msra.mxu0 0
  %2271 = vmatprep.subr.bf16.mxu0 0
  %2272 = vmatpush1.bf16.msra.mxu0 0
  %2273 = vmatprep.subr.bf16.mxu0 0
  %2274 = vmatpush1.bf16.msra.mxu0 0
  %2275 = vmatprep.subr.bf16.mxu0 0
  %2276 = vmatpush1.bf16.msra.mxu0 0
  %2277 = vmatprep.subr.bf16.mxu0 0
  %2278 = vmatpush1.bf16.msra.mxu0 0
  %2279 = vmatprep.subr.bf16.mxu0 0
  %2280 = vmatpush1.bf16.msra.mxu0 %v2260
  %2281 = vmatprep.subr.bf16.mxu0 0
  %2282 = vmatpush2.bf16.msra.mxu0 0
  %2283 = vmatprep.subr.bf16.mxu0 0
  %2284 = vmatpush2.bf16.msra.mxu0 0
  %2285 = vmatprep.subr.bf16.mxu0 0
  %2286 = vmatpush2.bf16.msra.mxu0 0
  %2287 = vmatprep.subr.bf16.mxu0 0
  %2288 = vmatpush2.bf16.msra.mxu0 0
  %2289 = vmatprep.subr.bf16.mxu0 0
  %2290 = vmatpush2.bf16.msra.mxu0 0
  %2291 = vmatprep.subr.bf16.mxu0 0
  %2292 = vmatpush2.bf16.msra.mxu0 0
  %2293 = vmatprep.subr.bf16.mxu0 0
  %2294 = vmatpush2.bf16.msra.mxu0 0
  %2295 = vmatprep.subr.bf16.mxu0 0
  %2296 = vmatpush2.bf16.msra.mxu0 0
  %2297 = vmatprep.mubr.bf16.mxu0 0
  %2298 = vmatmul.mubr.bf16.gmra.mxu0 %v2263
  %v2299 = vpop.f32.mrf.mxu0
  %v2300 = vadd.f32 0.0, %v2299
  %v2301 = vpop.f32.mrf.mxu0
  %v2302 = vpop.f32.mrf.mxu0
  %v2303 = vadd.f32 0.0, %v2302
  %v2304 = vpop.f32.mrf.mxu0
  %2305 = vdwg.mxu0
  %2306 = vrot.lane.b32.xlu0 %v481, 32
  %v2307 = vpop.permute.xlu0 %2306
  %v2310 = vsel %vm284, %v2210, 0
  %2312 = vmatprep.subr.bf16.mxu0 0
  %2313 = vmatpush1.bf16.msra.mxu0 0
  %2314 = vmatprep.subr.bf16.mxu0 0
  %2315 = vmatpush1.bf16.msra.mxu0 0
  %2316 = vmatprep.subr.bf16.mxu0 0
  %2317 = vmatpush1.bf16.msra.mxu0 0
  %2318 = vmatprep.subr.bf16.mxu0 0
  %2319 = vmatpush1.bf16.msra.mxu0 0
  %2320 = vmatprep.subr.bf16.mxu0 0
  %2321 = vmatpush1.bf16.msra.mxu0 0
  %2322 = vmatprep.subr.bf16.mxu0 0
  %2323 = vmatpush1.bf16.msra.mxu0 0
  %2324 = vmatprep.subr.bf16.mxu0 0
  %2325 = vmatpush1.bf16.msra.mxu0 0
  %2326 = vmatprep.subr.bf16.mxu0 0
  %2327 = vmatpush1.bf16.msra.mxu0 %v2307
  %2328 = vmatprep.subr.bf16.mxu0 0
  %2329 = vmatpush2.bf16.msra.mxu0 0
  %2330 = vmatprep.subr.bf16.mxu0 0
  %2331 = vmatpush2.bf16.msra.mxu0 0
  %2332 = vmatprep.subr.bf16.mxu0 0
  %2333 = vmatpush2.bf16.msra.mxu0 0
  %2334 = vmatprep.subr.bf16.mxu0 0
  %2335 = vmatpush2.bf16.msra.mxu0 0
  %2336 = vmatprep.subr.bf16.mxu0 0
  %2337 = vmatpush2.bf16.msra.mxu0 0
  %2338 = vmatprep.subr.bf16.mxu0 0
  %2339 = vmatpush2.bf16.msra.mxu0 0
  %2340 = vmatprep.subr.bf16.mxu0 0
  %2341 = vmatpush2.bf16.msra.mxu0 0
  %2342 = vmatprep.subr.bf16.mxu0 0
  %2343 = vmatpush2.bf16.msra.mxu0 0
  %2344 = vmatprep.mubr.bf16.mxu0 0
  %2345 = vmatmul.mubr.bf16.gmra.mxu0 %v2310
  %v2346 = vpop.f32.mrf.mxu0
  %v2347 = vadd.f32 0.0, %v2346
  %v2348 = vpop.f32.mrf.mxu0
  %v2349 = vpop.f32.mrf.mxu0
  %v2350 = vadd.f32 0.0, %v2349
  %v2351 = vpop.f32.mrf.mxu0
  %2352 = vdwg.mxu0
  %2353 = vrot.lane.b32.xlu0 %v531, 32
  %v2354 = vpop.permute.xlu0 %2353
  %v2357 = vsel %vm284, %v2211, 0
  %2359 = vmatprep.subr.bf16.mxu0 0
  %2360 = vmatpush1.bf16.msra.mxu0 0
  %2361 = vmatprep.subr.bf16.mxu0 0
  %2362 = vmatpush1.bf16.msra.mxu0 0
  %2363 = vmatprep.subr.bf16.mxu0 0
  %2364 = vmatpush1.bf16.msra.mxu0 0
  %2365 = vmatprep.subr.bf16.mxu0 0
  %2366 = vmatpush1.bf16.msra.mxu0 0
  %2367 = vmatprep.subr.bf16.mxu0 0
  %2368 = vmatpush1.bf16.msra.mxu0 0
  %2369 = vmatprep.subr.bf16.mxu0 0
  %2370 = vmatpush1.bf16.msra.mxu0 0
  %2371 = vmatprep.subr.bf16.mxu0 0
  %2372 = vmatpush1.bf16.msra.mxu0 0
  %2373 = vmatprep.subr.bf16.mxu0 0
  %2374 = vmatpush1.bf16.msra.mxu0 %v2354
  %2375 = vmatprep.subr.bf16.mxu0 0
  %2376 = vmatpush2.bf16.msra.mxu0 0
  %2377 = vmatprep.subr.bf16.mxu0 0
  %2378 = vmatpush2.bf16.msra.mxu0 0
  %2379 = vmatprep.subr.bf16.mxu0 0
  %2380 = vmatpush2.bf16.msra.mxu0 0
  %2381 = vmatprep.subr.bf16.mxu0 0
  %2382 = vmatpush2.bf16.msra.mxu0 0
  %2383 = vmatprep.subr.bf16.mxu0 0
  %2384 = vmatpush2.bf16.msra.mxu0 0
  %2385 = vmatprep.subr.bf16.mxu0 0
  %2386 = vmatpush2.bf16.msra.mxu0 0
  %2387 = vmatprep.subr.bf16.mxu0 0
  %2388 = vmatpush2.bf16.msra.mxu0 0
  %2389 = vmatprep.subr.bf16.mxu0 0
  %2390 = vmatpush2.bf16.msra.mxu0 0
  %2391 = vmatprep.mubr.bf16.mxu0 0
  %2392 = vmatmul.mubr.bf16.gmra.mxu0 %v2357
  %v2393 = vpop.f32.mrf.mxu0
  %v2394 = vadd.f32 0.0, %v2393
  %v2395 = vpop.f32.mrf.mxu0
  %v2396 = vpop.f32.mrf.mxu0
  %v2397 = vadd.f32 0.0, %v2396
  %v2398 = vpop.f32.mrf.mxu0
  %2399 = vdwg.mxu0
  %v2400 = vpack.c.bf16 %v2256, %v2253
  %v2401 = vpack.c.bf16 %v2303, %v2300
  %v2402 = vpack.c.bf16 %v2350, %v2347
  %v2403 = vpack.c.bf16 %v2397, %v2394
  %v2408 = vunpack.c.l.b16 %v51
  %v2409 = vunpack.c.l.b16 %v52
  %v2410 = vunpack.c.l.b16 %v53
  %v2411 = vunpack.c.l.b16 %v54
  %v2412 = vpack.c.b16 %v2409, %v2408
  %v2413 = vpack.c.b16 %v2411, %v2410
  %v2417 = vsel %vm65, %v2400, 0
  %v2420 = vsel %vm65, %v2401, 0
  %v2423 = vsel %vm65, %v2402, 0
  %v2426 = vsel %vm65, %v2403, 0
  %2428 = vmatprep.subr.bf16.mxu0 0
  %2429 = vmatpush1.bf16.msra.mxu0 0
  %2430 = vmatprep.subr.bf16.mxu0 0
  %2431 = vmatpush1.bf16.msra.mxu0 0
  %2432 = vmatprep.subr.bf16.mxu0 0
  %2433 = vmatpush1.bf16.msra.mxu0 0
  %2434 = vmatprep.subr.bf16.mxu0 0
  %2435 = vmatpush1.bf16.msra.mxu0 0
  %2436 = vmatprep.subr.bf16.mxu0 0
  %2437 = vmatpush1.bf16.msra.mxu0 0
  %2438 = vmatprep.subr.bf16.mxu0 0
  %2439 = vmatpush1.bf16.msra.mxu0 0
  %2440 = vmatprep.subr.bf16.mxu0 0
  %2441 = vmatpush1.bf16.msra.mxu0 %v2413
  %2442 = vmatprep.subr.bf16.mxu0 0
  %2443 = vmatpush1.bf16.msra.mxu0 %v2412
  %2444 = vmatprep.subr.bf16.mxu0 0
  %2445 = vmatpush2.bf16.msra.mxu0 0
  %2446 = vmatprep.subr.bf16.mxu0 0
  %2447 = vmatpush2.bf16.msra.mxu0 0
  %2448 = vmatprep.subr.bf16.mxu0 0
  %2449 = vmatpush2.bf16.msra.mxu0 0
  %2450 = vmatprep.subr.bf16.mxu0 0
  %2451 = vmatpush2.bf16.msra.mxu0 0
  %2452 = vmatprep.subr.bf16.mxu0 0
  %2453 = vmatpush2.bf16.msra.mxu0 0
  %2454 = vmatprep.subr.bf16.mxu0 0
  %2455 = vmatpush2.bf16.msra.mxu0 0
  %2456 = vmatprep.subr.bf16.mxu0 0
  %2457 = vmatpush2.bf16.msra.mxu0 0
  %2458 = vmatprep.subr.bf16.mxu0 0
  %2459 = vmatpush2.bf16.msra.mxu0 0
  %2460 = vmatprep.mubr.bf16.mxu0 0
  %2461 = vmatmul.mubr.bf16.gmra.mxu0 %v2417
  %v2462 = vpop.f32.mrf.mxu0
  %v2463 = vadd.f32 0.0, %v2462
  %v2464 = vpop.f32.mrf.mxu0
  %v2465 = vpop.f32.mrf.mxu0
  %v2466 = vadd.f32 0.0, %v2465
  %v2467 = vpop.f32.mrf.mxu0
  %2468 = vmatprep.mubr.bf16.mxu0 0
  %2469 = vmatmul.mubr.bf16.gmra.mxu0 %v2420
  %v2470 = vpop.f32.mrf.mxu0
  %v2471 = vadd.f32 0.0, %v2470
  %v2472 = vpop.f32.mrf.mxu0
  %v2473 = vpop.f32.mrf.mxu0
  %v2474 = vadd.f32 0.0, %v2473
  %v2475 = vpop.f32.mrf.mxu0
  %2476 = vmatprep.mubr.bf16.mxu0 0
  %2477 = vmatmul.mubr.bf16.gmra.mxu0 %v2423
  %v2478 = vpop.f32.mrf.mxu0
  %v2479 = vadd.f32 0.0, %v2478
  %v2480 = vpop.f32.mrf.mxu0
  %v2481 = vpop.f32.mrf.mxu0
  %v2482 = vadd.f32 0.0, %v2481
  %v2483 = vpop.f32.mrf.mxu0
  %2484 = vmatprep.mubr.bf16.mxu0 0
  %2485 = vmatmul.mubr.bf16.gmra.mxu0 %v2426
  %v2486 = vpop.f32.mrf.mxu0
  %v2487 = vadd.f32 0.0, %v2486
  %v2488 = vpop.f32.mrf.mxu0
  %v2489 = vpop.f32.mrf.mxu0
  %v2490 = vadd.f32 0.0, %v2489
  %v2491 = vpop.f32.mrf.mxu0
  %2492 = vdwg.mxu0
  %v2493 = vadd.f32 %v1880, %v2463
  %v2494 = vadd.f32 %v1881, %v2466
  %v2495 = vadd.f32 %v1882, %v2471
  %v2496 = vadd.f32 %v1883, %v2474
  %v2497 = vadd.f32 %v1884, %v2479
  %v2498 = vadd.f32 %v1885, %v2482
  %v2499 = vadd.f32 %v1886, %v2487
  %v2500 = vadd.f32 %v1887, %v2490
  %v2501 = vld [vmem:[%s4] sm:$0x1]
  %v2502 = vunpack.c.l.bf16 %v2501
  %v2503 = vlaneseq
  %v2504 = vshrl.u32 %v2503, 7
  %v2505 = vsub.s32 0, %v2504
  %v2506 = vrot.slane %v2502, %v2505
  %v2507 = vadd.f32 %v2493, %v2506
  %v2508 = vadd.f32 %v2494, %v2506
  %v2509 = vadd.f32 %v2495, %v2506
  %v2510 = vadd.f32 %v2496, %v2506
  %v2511 = vadd.f32 %v2497, %v2506
  %v2512 = vadd.f32 %v2498, %v2506
  %v2513 = vadd.f32 %v2499, %v2506
  %v2514 = vadd.f32 %v2500, %v2506
  %v2515 = vld [vmem:[%s1] sm:$0xf]
  %v2516 = vld [vmem:[%s1 + $0x4] sm:$0xf]
  %v2517 = vld [vmem:[%s1 + $0x8] sm:$0xf]
  %v2518 = vld [vmem:[%s1 + $0xc] sm:$0xf]
  %v2519 = vld [vmem:[%s1 + $0x10] sm:$0xf]
  %v2520 = vld [vmem:[%s1 + $0x14] sm:$0xf]
  %v2521 = vld [vmem:[%s1 + $0x18] sm:$0xf]
  %v2522 = vld [vmem:[%s1 + $0x1c] sm:$0xf]
  %v2523 = vunpack.c.l.bf16 %v2515
  %v2524 = vunpack.c.l.bf16 %v2516
  %v2525 = vunpack.c.l.bf16 %v2517
  %v2526 = vunpack.c.l.bf16 %v2518
  %v2527 = vunpack.c.l.bf16 %v2519
  %v2528 = vunpack.c.l.bf16 %v2520
  %v2529 = vunpack.c.l.bf16 %v2521
  %v2530 = vunpack.c.l.bf16 %v2522
  %v2531 = vadd.f32 %v2507, %v2523
  %v2532 = vadd.f32 %v2508, %v2524
  %v2533 = vadd.f32 %v2509, %v2525
  %v2534 = vadd.f32 %v2510, %v2526
  %v2535 = vadd.f32 %v2511, %v2527
  %v2536 = vadd.f32 %v2512, %v2528
  %v2537 = vadd.f32 %v2513, %v2529
  %v2538 = vadd.f32 %v2514, %v2530
  %v2539 = vpack.c.bf16 %v2532, %v2531
  %v2540 = vpack.c.bf16 %v2534, %v2533
  %v2541 = vpack.c.bf16 %v2536, %v2535
  %v2542 = vpack.c.bf16 %v2538, %v2537
  %v2547 = vunpack.c.l.b16 %v2539
  %v2548 = vunpack.c.h.b16 %v2539
  %v2549 = vunpack.c.l.b16 %v2540
  %v2550 = vunpack.c.h.b16 %v2540
  %v2551 = vunpack.c.l.b16 %v2541
  %v2552 = vunpack.c.h.b16 %v2541
  %v2553 = vunpack.c.l.b16 %v2542
  %v2554 = vunpack.c.h.b16 %v2542
  %v2555 = vpack.c.b16 %v2547, %v2547
  %v2556 = vpack.c.b16 %v2548, %v2548
  %v2557 = vpack.c.b16 %v2549, %v2549
  %v2558 = vpack.c.b16 %v2550, %v2550
  %v2559 = vpack.c.b16 %v2551, %v2551
  %v2560 = vpack.c.b16 %v2552, %v2552
  %v2561 = vpack.c.b16 %v2553, %v2553
  %v2562 = vpack.c.b16 %v2554, %v2554
  %2571 = vst [vmem:[%s5] sm:$0xf] %v2555
  %2572 = vst [vmem:[%s5 + $0x4] sm:$0xf] %v2556
  %2573 = vst [vmem:[%s5 + $0x8] sm:$0xf] %v2557
  %2574 = vst [vmem:[%s5 + $0xc] sm:$0xf] %v2558
  %2575 = vst [vmem:[%s5 + $0x10] sm:$0xf] %v2559
  %2576 = vst [vmem:[%s5 + $0x14] sm:$0xf] %v2560
  %2577 = vst [vmem:[%s5 + $0x18] sm:$0xf] %v2561
  %2578 = vst [vmem:[%s5 + $0x1c] sm:$0xf] %v2562
  // Predicated region
  $region22: #{full_forward.10} parent=0 // pred_check
    _
  $region23: #{full_forward.10} parent=0 // pred_check_branch
    %2580 = sbr.rel (0) target = $region25
  $region24: #{full_forward.10} parent=0 // pred_region
    _
  $region25: #{full_forward.10} parent=0 // pred_fallthru
    _
  // Predicated region
  $region26: #{full_forward.10} parent=0 // pred_check
    _
  $region27: #{full_forward.10} parent=0 // pred_check_branch
    %2582 = sbr.rel (0) target = $region29
  $region28: #{full_forward.10} parent=0 // pred_region
    _
  $region29: #{full_forward.10} parent=0 // pred_fallthru
    _

// kernel: full_forward.12
$region0: #{full_forward.12}
  #allocation0 [shape = 'u32[]', space=smem, size = 0x4, offset = 0x4, fixed_abs, tag = 'smem constant byte address 0x4 - core index']
  #allocation1 [shape = 'u32[144,128]{1,0:T(1,128)}', space=vmem, size = 0x12000, scoped, tag = 'internal scratch']
  %s0 = inlined_call_operand.vmem [shape: bf16[64,128], index: 0, kind: input, shape index: {}]
  %s1 = inlined_call_operand.vmem [shape: bf16[1,128], index: 1, kind: input, shape index: {}]
  %s2 = inlined_call_operand.vmem [shape: bf16[1,128], index: 2, kind: input, shape index: {}]
  %s3 = inlined_call_operand.vmem [shape: bf16[128,384], index: 3, kind: input, shape index: {}]
  %s4 = inlined_call_operand.vmem [shape: bf16[1,384], index: 4, kind: input, shape index: {}]
  %s5 = inlined_call_operand.vmem [shape: bf16[64,384], index: 5, kind: output, shape index: {}]
  %s6 = sld [smem:[#allocation0]]
  $region30: #{full_forward.12} parent=0
    _
  %s8 = ssub.s32 1, %s6
  %s9 = scalar_select 0, %s8, %s6
  // Predicated region
  $region2: #{full_forward.12} parent=0 // pred_check
    _
  $region3: #{full_forward.12} parent=0 // pred_check_branch
    %11 = sbr.rel (0) target = $region5
  $region4: #{full_forward.12} parent=0 // pred_region
    _
  $region5: #{full_forward.12} parent=0 // pred_fallthru
    _
  // Predicated region
  $region6: #{full_forward.12} parent=0 // pred_check
    _
  $region7: #{full_forward.12} parent=0 // pred_check_branch
    %13 = sbr.rel (0) target = $region9
  $region8: #{full_forward.12} parent=0 // pred_region
    _
  $region9: #{full_forward.12} parent=0 // pred_fallthru
    _
  // Predicated region
  $region10: #{full_forward.12} parent=0 // pred_check
    _
  $region11: #{full_forward.12} parent=0 // pred_check_branch
    %15 = sbr.rel (0) target = $region13
  $region12: #{full_forward.12} parent=0 // pred_region
    _
  $region13: #{full_forward.12} parent=0 // pred_fallthru
    _
  // Predicated region
  $region14: #{full_forward.12} parent=0 // pred_check
    _
  $region15: #{full_forward.12} parent=0 // pred_check_branch
    %17 = sbr.rel (0) target = $region17
  $region16: #{full_forward.12} parent=0 // pred_region
    _
  $region17: #{full_forward.12} parent=0 // pred_fallthru
    _
  // Predicated region
  $region18: #{full_forward.12} parent=0 // pred_check
    _
  $region19: #{full_forward.12} parent=0 // pred_check_branch
    %19 = sbr.rel (0) target = $region21
  $region20: #{full_forward.12} parent=0 // pred_region
    _
  $region21: #{full_forward.12} parent=0 // pred_fallthru
    _
  %v21 = vld [vmem:[%s0] sm:$0xf]
  %v22 = vld [vmem:[%s0 + $0x4] sm:$0xf]
  %v23 = vld [vmem:[%s0 + $0x8] sm:$0xf]
  %v24 = vld [vmem:[%s0 + $0xc] sm:$0xf]
  %v25 = vld [vmem:[%s0 + $0x10] sm:$0xf]
  %v26 = vld [vmem:[%s0 + $0x14] sm:$0xf]
  %v27 = vld [vmem:[%s0 + $0x18] sm:$0xf]
  %v28 = vld [vmem:[%s0 + $0x1c] sm:$0xf]
  %v29 = vunpack.c.l.bf16 %v21
  %v30 = vunpack.c.l.bf16 %v22
  %v31 = vunpack.c.l.bf16 %v23
  %v32 = vunpack.c.l.bf16 %v24
  %v33 = vunpack.c.l.bf16 %v25
  %v34 = vunpack.c.l.bf16 %v26
  %v35 = vunpack.c.l.bf16 %v27
  %v36 = vunpack.c.l.bf16 %v28
  %37 = vadd.xlane.f32.xlu0 %v29
  %v38 = vpop.xlane.xlu0 %37
  %39 = vadd.xlane.f32.xlu0 %v30
  %v40 = vpop.xlane.xlu0 %39
  %41 = vadd.xlane.f32.xlu0 %v31
  %v42 = vpop.xlane.xlu0 %41
  %43 = vadd.xlane.f32.xlu0 %v32
  %v44 = vpop.xlane.xlu0 %43
  %45 = vadd.xlane.f32.xlu0 %v33
  %v46 = vpop.xlane.xlu0 %45
  %47 = vadd.xlane.f32.xlu0 %v34
  %v48 = vpop.xlane.xlu0 %47
  %49 = vadd.xlane.f32.xlu0 %v35
  %v50 = vpop.xlane.xlu0 %49
  %51 = vadd.xlane.f32.xlu0 %v36
  %v52 = vpop.xlane.xlu0 %51
  %v53 = vrcp.pop 128.0
  %v54 = vmul.f32 %v38, %v53
  %v55 = vmul.f32 %v40, %v53
  %v56 = vmul.f32 %v42, %v53
  %v57 = vmul.f32 %v44, %v53
  %v58 = vmul.f32 %v46, %v53
  %v59 = vmul.f32 %v48, %v53
  %v60 = vmul.f32 %v50, %v53
  %v61 = vmul.f32 %v52, %v53
  %v62 = vsub.f32 %v29, %v54
  %v63 = vsub.f32 %v30, %v55
  %v64 = vsub.f32 %v31, %v56
  %v65 = vsub.f32 %v32, %v57
  %v66 = vsub.f32 %v33, %v58
  %v67 = vsub.f32 %v34, %v59
  %v68 = vsub.f32 %v35, %v60
  %v69 = vsub.f32 %v36, %v61
  %v70 = vmul.f32 %v62, %v62
  %v71 = vmul.f32 %v63, %v63
  %v72 = vmul.f32 %v64, %v64
  %v73 = vmul.f32 %v65, %v65
  %v74 = vmul.f32 %v66, %v66
  %v75 = vmul.f32 %v67, %v67
  %v76 = vmul.f32 %v68, %v68
  %v77 = vmul.f32 %v69, %v69
  %78 = vadd.xlane.f32.xlu0 %v70
  %v79 = vpop.xlane.xlu0 %78
  %80 = vadd.xlane.f32.xlu0 %v71
  %v81 = vpop.xlane.xlu0 %80
  %82 = vadd.xlane.f32.xlu0 %v72
  %v83 = vpop.xlane.xlu0 %82
  %84 = vadd.xlane.f32.xlu0 %v73
  %v85 = vpop.xlane.xlu0 %84
  %86 = vadd.xlane.f32.xlu0 %v74
  %v87 = vpop.xlane.xlu0 %86
  %88 = vadd.xlane.f32.xlu0 %v75
  %v89 = vpop.xlane.xlu0 %88
  %90 = vadd.xlane.f32.xlu0 %v76
  %v91 = vpop.xlane.xlu0 %90
  %92 = vadd.xlane.f32.xlu0 %v77
  %v93 = vpop.xlane.xlu0 %92
  %v94 = vmul.f32 %v79, %v53
  %v95 = vmul.f32 %v81, %v53
  %v96 = vmul.f32 %v83, %v53
  %v97 = vmul.f32 %v85, %v53
  %v98 = vmul.f32 %v87, %v53
  %v99 = vmul.f32 %v89, %v53
  %v100 = vmul.f32 %v91, %v53
  %v101 = vmul.f32 %v93, %v53
  %v102 = vadd.f32 %v94, 1e-05
  %v103 = vadd.f32 %v95, 1e-05
  %v104 = vadd.f32 %v96, 1e-05
  %v105 = vadd.f32 %v97, 1e-05
  %v106 = vadd.f32 %v98, 1e-05
  %v107 = vadd.f32 %v99, 1e-05
  %v108 = vadd.f32 %v100, 1e-05
  %v109 = vadd.f32 %v101, 1e-05
  %v110 = vrsqrt.pop %v102
  %v111 = vrsqrt.pop %v103
  %v112 = vrsqrt.pop %v104
  %v113 = vrsqrt.pop %v105
  %v114 = vrsqrt.pop %v106
  %v115 = vrsqrt.pop %v107
  %v116 = vrsqrt.pop %v108
  %v117 = vrsqrt.pop %v109
  %v118 = vmul.f32 %v62, %v110
  %v119 = vmul.f32 %v63, %v111
  %v120 = vmul.f32 %v64, %v112
  %v121 = vmul.f32 %v65, %v113
  %v122 = vmul.f32 %v66, %v114
  %v123 = vmul.f32 %v67, %v115
  %v124 = vmul.f32 %v68, %v116
  %v125 = vmul.f32 %v69, %v117
  %v126 = vld [vmem:[%s1] sm:$0x1]
  %v127 = vunpack.c.l.bf16 %v126
  %v128 = vlaneseq
  %v129 = vshrl.u32 %v128, 7
  %v130 = vsub.s32 0, %v129
  %v131 = vrot.slane %v127, %v130
  %v132 = vmul.f32 %v118, %v131
  %v133 = vmul.f32 %v119, %v131
  %v134 = vmul.f32 %v120, %v131
  %v135 = vmul.f32 %v121, %v131
  %v136 = vmul.f32 %v122, %v131
  %v137 = vmul.f32 %v123, %v131
  %v138 = vmul.f32 %v124, %v131
  %v139 = vmul.f32 %v125, %v131
  %v140 = vld [vmem:[%s2] sm:$0x1]
  %v141 = vunpack.c.l.bf16 %v140
  %v142 = vlaneseq
  %v143 = vshrl.u32 %v142, 7
  %v144 = vsub.s32 0, %v143
  %v145 = vrot.slane %v141, %v144
  %v146 = vadd.f32 %v132, %v145
  %v147 = vadd.f32 %v133, %v145
  %v148 = vadd.f32 %v134, %v145
  %v149 = vadd.f32 %v135, %v145
  %v150 = vadd.f32 %v136, %v145
  %v151 = vadd.f32 %v137, %v145
  %v152 = vadd.f32 %v138, %v145
  %v153 = vadd.f32 %v139, %v145
  %v154 = vpack.c.bf16 %v147, %v146
  %v155 = vpack.c.bf16 %v149, %v148
  %v156 = vpack.c.bf16 %v151, %v150
  %v157 = vpack.c.bf16 %v153, %v152
  %v158 = vld [vmem:[%s3] sm:$0xff]
  %v159 = vld [vmem:[%s3 + $0x8] sm:$0xf]
  %v160 = vld [vmem:[%s3 + $0xc] sm:$0xff]
  %v161 = vld [vmem:[%s3 + $0x14] sm:$0xf]
  %v162 = vld [vmem:[%s3 + $0x18] sm:$0xff]
  %v163 = vld [vmem:[%s3 + $0x20] sm:$0xf]
  %v164 = vld [vmem:[%s3 + $0x24] sm:$0xff]
  %v165 = vld [vmem:[%s3 + $0x2c] sm:$0xf]
  %v166 = vld [vmem:[%s3 + $0x30] sm:$0xff]
  %v167 = vld [vmem:[%s3 + $0x38] sm:$0xf]
  %v168 = vld [vmem:[%s3 + $0x3c] sm:$0xff]
  %v169 = vld [vmem:[%s3 + $0x44] sm:$0xf]
  %v170 = vld [vmem:[%s3 + $0x48] sm:$0xff]
  %v171 = vld [vmem:[%s3 + $0x50] sm:$0xf]
  %v172 = vld [vmem:[%s3 + $0x54] sm:$0xff]
  %v173 = vld [vmem:[%s3 + $0x5c] sm:$0xf]
  %v174 = vld [vmem:[%s3 + $0x60] sm:$0xff]
  %v175 = vld [vmem:[%s3 + $0x68] sm:$0xf]
  %v176 = vld [vmem:[%s3 + $0x6c] sm:$0xff]
  %v177 = vld [vmem:[%s3 + $0x74] sm:$0xf]
  %v178 = vld [vmem:[%s3 + $0x78] sm:$0xff]
  %v179 = vld [vmem:[%s3 + $0x80] sm:$0xf]
  %v180 = vld [vmem:[%s3 + $0x84] sm:$0xff]
  %v181 = vld [vmem:[%s3 + $0x8c] sm:$0xf]
  %v182 = vld [vmem:[%s3 + $0x90] sm:$0xff]
  %v183 = vld [vmem:[%s3 + $0x98] sm:$0xf]
  %v184 = vld [vmem:[%s3 + $0x9c] sm:$0xff]
  %v185 = vld [vmem:[%s3 + $0xa4] sm:$0xf]
  %v186 = vld [vmem:[%s3 + $0xa8] sm:$0xff]
  %v187 = vld [vmem:[%s3 + $0xb0] sm:$0xf]
  %v188 = vld [vmem:[%s3 + $0xb4] sm:$0xff]
  %v189 = vld [vmem:[%s3 + $0xbc] sm:$0xf]
  %v190 = vld [vmem:[%s4] sm:$0x7]
  %v191 = vunpack.c.l.bf16 %v190
  %v193 = vlaneseq
  %v194 = vshrl.u32 %v193, 7
  %v195 = vsub.s32 0, %v194
  %v196 = vrot.slane %v191, %v195
  %v197 = vlaneseq
  %v198 = vshrl.u32 %v197, 7
  %v199 = vsub.s32 2, %v198
  %v200 = vrot.slane %v191, %v199
  %v201 = vlaneseq
  %v202 = vshrl.u32 %v201, 7
  %v203 = vsub.s32 4, %v202
  %v204 = vrot.slane %v191, %v203
  %v208 = vlaneseq
  %v209 = vshrl.u32 %v208, 7
  %v210 = vsub.s32 0, %v209
  %v211 = vrot.slane %v196, %v210
  %v212 = vlaneseq
  %v213 = vshrl.u32 %v212, 7
  %v214 = vsub.s32 0, %v213
  %v215 = vrot.slane %v200, %v214
  %v216 = vlaneseq
  %v217 = vshrl.u32 %v216, 7
  %v218 = vsub.s32 0, %v217
  %v219 = vrot.slane %v204, %v218
  %v252 = vunpack.c.l.b16 %v158
  %v253 = vunpack.c.h.b16 %v158
  %v254 = vunpack.c.l.b16 %v159
  %v255 = vunpack.c.l.b16 %v160
  %v256 = vunpack.c.h.b16 %v160
  %v257 = vunpack.c.l.b16 %v161
  %v258 = vunpack.c.l.b16 %v162
  %v259 = vunpack.c.h.b16 %v162
  %v260 = vunpack.c.l.b16 %v163
  %v261 = vunpack.c.l.b16 %v164
  %v262 = vunpack.c.h.b16 %v164
  %v263 = vunpack.c.l.b16 %v165
  %v264 = vunpack.c.l.b16 %v166
  %v265 = vunpack.c.h.b16 %v166
  %v266 = vunpack.c.l.b16 %v167
  %v267 = vunpack.c.l.b16 %v168
  %v268 = vunpack.c.h.b16 %v168
  %v269 = vunpack.c.l.b16 %v169
  %v270 = vunpack.c.l.b16 %v170
  %v271 = vunpack.c.h.b16 %v170
  %v272 = vunpack.c.l.b16 %v171
  %v273 = vunpack.c.l.b16 %v172
  %v274 = vunpack.c.h.b16 %v172
  %v275 = vunpack.c.l.b16 %v173
  %v276 = vunpack.c.l.b16 %v174
  %v277 = vunpack.c.h.b16 %v174
  %v278 = vunpack.c.l.b16 %v175
  %v279 = vunpack.c.l.b16 %v176
  %v280 = vunpack.c.h.b16 %v176
  %v281 = vunpack.c.l.b16 %v177
  %v282 = vunpack.c.l.b16 %v178
  %v283 = vunpack.c.h.b16 %v178
  %v284 = vunpack.c.l.b16 %v179
  %v285 = vunpack.c.l.b16 %v180
  %v286 = vunpack.c.h.b16 %v180
  %v287 = vunpack.c.l.b16 %v181
  %v288 = vunpack.c.l.b16 %v182
  %v289 = vunpack.c.h.b16 %v182
  %v290 = vunpack.c.l.b16 %v183
  %v291 = vunpack.c.l.b16 %v184
  %v292 = vunpack.c.h.b16 %v184
  %v293 = vunpack.c.l.b16 %v185
  %v294 = vunpack.c.l.b16 %v186
  %v295 = vunpack.c.h.b16 %v186
  %v296 = vunpack.c.l.b16 %v187
  %v297 = vunpack.c.l.b16 %v188
  %v298 = vunpack.c.h.b16 %v188
  %v299 = vunpack.c.l.b16 %v189
  %v300 = vpack.c.b16 %v255, %v252
  %v301 = vpack.c.b16 %v256, %v253
  %v302 = vpack.c.b16 %v257, %v254
  %v303 = vpack.c.b16 %v261, %v258
  %v304 = vpack.c.b16 %v262, %v259
  %v305 = vpack.c.b16 %v263, %v260
  %v306 = vpack.c.b16 %v267, %v264
  %v307 = vpack.c.b16 %v268, %v265
  %v308 = vpack.c.b16 %v269, %v266
  %v309 = vpack.c.b16 %v273, %v270
  %v310 = vpack.c.b16 %v274, %v271
  %v311 = vpack.c.b16 %v275, %v272
  %v312 = vpack.c.b16 %v279, %v276
  %v313 = vpack.c.b16 %v280, %v277
  %v314 = vpack.c.b16 %v281, %v278
  %v315 = vpack.c.b16 %v285, %v282
  %v316 = vpack.c.b16 %v286, %v283
  %v317 = vpack.c.b16 %v287, %v284
  %v318 = vpack.c.b16 %v291, %v288
  %v319 = vpack.c.b16 %v292, %v289
  %v320 = vpack.c.b16 %v293, %v290
  %v321 = vpack.c.b16 %v297, %v294
  %v322 = vpack.c.b16 %v298, %v295
  %v323 = vpack.c.b16 %v299, %v296
  %348 = vmatprep.subr.bf16.mxu0 %v322
  %349 = vmatpush1.bf16.msra.mxu0 %v321
  %350 = vmatprep.subr.bf16.mxu0 %v319
  %351 = vmatpush1.bf16.msra.mxu0 %v318
  %352 = vmatprep.subr.bf16.mxu0 %v316
  %353 = vmatpush1.bf16.msra.mxu0 %v315
  %354 = vmatprep.subr.bf16.mxu0 %v313
  %355 = vmatpush1.bf16.msra.mxu0 %v312
  %356 = vmatprep.subr.bf16.mxu0 %v310
  %357 = vmatpush1.bf16.msra.mxu0 %v309
  %358 = vmatprep.subr.bf16.mxu0 %v307
  %359 = vmatpush1.bf16.msra.mxu0 %v306
  %360 = vmatprep.subr.bf16.mxu0 %v304
  %361 = vmatpush1.bf16.msra.mxu0 %v303
  %362 = vmatprep.subr.bf16.mxu0 %v301
  %363 = vmatpush1.bf16.msra.mxu0 %v300
  %364 = vmatprep.subr.bf16.mxu0 0
  %365 = vmatpush2.bf16.msra.mxu0 0
  %366 = vmatprep.subr.bf16.mxu0 0
  %367 = vmatpush2.bf16.msra.mxu0 0
  %368 = vmatprep.subr.bf16.mxu0 0
  %369 = vmatpush2.bf16.msra.mxu0 0
  %370 = vmatprep.subr.bf16.mxu0 0
  %371 = vmatpush2.bf16.msra.mxu0 0
  %372 = vmatprep.subr.bf16.mxu0 0
  %373 = vmatpush2.bf16.msra.mxu0 0
  %374 = vmatprep.subr.bf16.mxu0 0
  %375 = vmatpush2.bf16.msra.mxu0 0
  %376 = vmatprep.subr.bf16.mxu0 0
  %377 = vmatpush2.bf16.msra.mxu0 0
  %378 = vmatprep.subr.bf16.mxu0 0
  %379 = vmatpush2.bf16.msra.mxu0 0
  %380 = vmatprep.mubr.bf16.mxu0 0
  %381 = vmatmul.mubr.bf16.gmra.mxu0 %v154
  %v382 = vpop.f32.mrf.mxu0
  %v383 = vadd.f32 %v211, %v382
  %v384 = vpop.f32.mrf.mxu0
  %v385 = vadd.f32 %v215, %v384
  %v386 = vpop.f32.mrf.mxu0
  %v387 = vadd.f32 %v211, %v386
  %v388 = vpop.f32.mrf.mxu0
  %v389 = vadd.f32 %v215, %v388
  %390 = vmatprep.mubr.bf16.mxu0 0
  %391 = vmatmul.mubr.bf16.gmra.mxu0 %v155
  %v392 = vpop.f32.mrf.mxu0
  %v393 = vadd.f32 %v211, %v392
  %v394 = vpop.f32.mrf.mxu0
  %v395 = vadd.f32 %v215, %v394
  %v396 = vpop.f32.mrf.mxu0
  %v397 = vadd.f32 %v211, %v396
  %v398 = vpop.f32.mrf.mxu0
  %v399 = vadd.f32 %v215, %v398
  %400 = vmatprep.mubr.bf16.mxu0 0
  %401 = vmatmul.mubr.bf16.gmra.mxu0 %v156
  %v402 = vpop.f32.mrf.mxu0
  %v403 = vadd.f32 %v211, %v402
  %v404 = vpop.f32.mrf.mxu0
  %v405 = vadd.f32 %v215, %v404
  %v406 = vpop.f32.mrf.mxu0
  %v407 = vadd.f32 %v211, %v406
  %v408 = vpop.f32.mrf.mxu0
  %v409 = vadd.f32 %v215, %v408
  %410 = vmatprep.mubr.bf16.mxu0 0
  %411 = vmatmul.mubr.bf16.gmra.mxu0 %v157
  %v412 = vpop.f32.mrf.mxu0
  %v413 = vadd.f32 %v211, %v412
  %v414 = vpop.f32.mrf.mxu0
  %v415 = vadd.f32 %v215, %v414
  %v416 = vpop.f32.mrf.mxu0
  %v417 = vadd.f32 %v211, %v416
  %v418 = vpop.f32.mrf.mxu0
  %v419 = vadd.f32 %v215, %v418
  %420 = vdwg.mxu0
  %421 = vmatprep.subr.bf16.mxu0 0
  %422 = vmatpush1.bf16.msra.mxu0 %v323
  %423 = vmatprep.subr.bf16.mxu0 0
  %424 = vmatpush1.bf16.msra.mxu0 %v320
  %425 = vmatprep.subr.bf16.mxu0 0
  %426 = vmatpush1.bf16.msra.mxu0 %v317
  %427 = vmatprep.subr.bf16.mxu0 0
  %428 = vmatpush1.bf16.msra.mxu0 %v314
  %429 = vmatprep.subr.bf16.mxu0 0
  %430 = vmatpush1.bf16.msra.mxu0 %v311
  %431 = vmatprep.subr.bf16.mxu0 0
  %432 = vmatpush1.bf16.msra.mxu0 %v308
  %433 = vmatprep.subr.bf16.mxu0 0
  %434 = vmatpush1.bf16.msra.mxu0 %v305
  %435 = vmatprep.subr.bf16.mxu0 0
  %436 = vmatpush1.bf16.msra.mxu0 %v302
  %437 = vmatprep.subr.bf16.mxu0 0
  %438 = vmatpush2.bf16.msra.mxu0 0
  %439 = vmatprep.subr.bf16.mxu0 0
  %440 = vmatpush2.bf16.msra.mxu0 0
  %441 = vmatprep.subr.bf16.mxu0 0
  %442 = vmatpush2.bf16.msra.mxu0 0
  %443 = vmatprep.subr.bf16.mxu0 0
  %444 = vmatpush2.bf16.msra.mxu0 0
  %445 = vmatprep.subr.bf16.mxu0 0
  %446 = vmatpush2.bf16.msra.mxu0 0
  %447 = vmatprep.subr.bf16.mxu0 0
  %448 = vmatpush2.bf16.msra.mxu0 0
  %449 = vmatprep.subr.bf16.mxu0 0
  %450 = vmatpush2.bf16.msra.mxu0 0
  %451 = vmatprep.subr.bf16.mxu0 0
  %452 = vmatpush2.bf16.msra.mxu0 0
  %453 = vmatprep.mubr.bf16.mxu0 0
  %454 = vmatmul.mubr.bf16.gmra.mxu0 %v154
  %v455 = vpop.f32.mrf.mxu0
  %v456 = vadd.f32 %v219, %v455
  %v457 = vpop.f32.mrf.mxu0
  %v458 = vpop.f32.mrf.mxu0
  %v459 = vadd.f32 %v219, %v458
  %v460 = vpop.f32.mrf.mxu0
  %461 = vmatprep.mubr.bf16.mxu0 0
  %462 = vmatmul.mubr.bf16.gmra.mxu0 %v155
  %v463 = vpop.f32.mrf.mxu0
  %v464 = vadd.f32 %v219, %v463
  %v465 = vpop.f32.mrf.mxu0
  %v466 = vpop.f32.mrf.mxu0
  %v467 = vadd.f32 %v219, %v466
  %v468 = vpop.f32.mrf.mxu0
  %469 = vmatprep.mubr.bf16.mxu0 0
  %470 = vmatmul.mubr.bf16.gmra.mxu0 %v156
  %v471 = vpop.f32.mrf.mxu0
  %v472 = vadd.f32 %v219, %v471
  %v473 = vpop.f32.mrf.mxu0
  %v474 = vpop.f32.mrf.mxu0
  %v475 = vadd.f32 %v219, %v474
  %v476 = vpop.f32.mrf.mxu0
  %477 = vmatprep.mubr.bf16.mxu0 0
  %478 = vmatmul.mubr.bf16.gmra.mxu0 %v157
  %v479 = vpop.f32.mrf.mxu0
  %v480 = vadd.f32 %v219, %v479
  %v481 = vpop.f32.mrf.mxu0
  %v482 = vpop.f32.mrf.mxu0
  %v483 = vadd.f32 %v219, %v482
  %v484 = vpop.f32.mrf.mxu0
  %485 = vdwg.mxu0
  %v486 = vpack.c.bf16 %v387, %v383
  %v487 = vpack.c.bf16 %v389, %v385
  %v488 = vpack.c.bf16 %v459, %v456
  %v489 = vpack.c.bf16 %v397, %v393
  %v490 = vpack.c.bf16 %v399, %v395
  %v491 = vpack.c.bf16 %v467, %v464
  %v492 = vpack.c.bf16 %v407, %v403
  %v493 = vpack.c.bf16 %v409, %v405
  %v494 = vpack.c.bf16 %v475, %v472
  %v495 = vpack.c.bf16 %v417, %v413
  %v496 = vpack.c.bf16 %v419, %v415
  %v497 = vpack.c.bf16 %v483, %v480
  %v510 = vunpack.c.l.b16 %v486
  %v511 = vunpack.c.l.b16 %v487
  %v512 = vunpack.c.l.b16 %v488
  %v513 = vunpack.c.h.b16 %v486
  %v514 = vunpack.c.h.b16 %v487
  %v515 = vunpack.c.h.b16 %v488
  %v516 = vunpack.c.l.b16 %v489
  %v517 = vunpack.c.l.b16 %v490
  %v518 = vunpack.c.l.b16 %v491
  %v519 = vunpack.c.h.b16 %v489
  %v520 = vunpack.c.h.b16 %v490
  %v521 = vunpack.c.h.b16 %v491
  %v522 = vunpack.c.l.b16 %v492
  %v523 = vunpack.c.l.b16 %v493
  %v524 = vunpack.c.l.b16 %v494
  %v525 = vunpack.c.h.b16 %v492
  %v526 = vunpack.c.h.b16 %v493
  %v527 = vunpack.c.h.b16 %v494
  %v528 = vunpack.c.l.b16 %v495
  %v529 = vunpack.c.l.b16 %v496
  %v530 = vunpack.c.l.b16 %v497
  %v531 = vunpack.c.h.b16 %v495
  %v532 = vunpack.c.h.b16 %v496
  %v533 = vunpack.c.h.b16 %v497
  %v534 = vpack.c.b16 %v511, %v510
  %v535 = vpack.c.b16 %v512, %v512
  %v536 = vpack.c.b16 %v514, %v513
  %v537 = vpack.c.b16 %v515, %v515
  %v538 = vpack.c.b16 %v517, %v516
  %v539 = vpack.c.b16 %v518, %v518
  %v540 = vpack.c.b16 %v520, %v519
  %v541 = vpack.c.b16 %v521, %v521
  %v542 = vpack.c.b16 %v523, %v522
  %v543 = vpack.c.b16 %v524, %v524
  %v544 = vpack.c.b16 %v526, %v525
  %v545 = vpack.c.b16 %v527, %v527
  %v546 = vpack.c.b16 %v529, %v528
  %v547 = vpack.c.b16 %v530, %v530
  %v548 = vpack.c.b16 %v532, %v531
  %v549 = vpack.c.b16 %v533, %v533
  %566 = vst [vmem:[%s5] sm:$0xff] %v534
  %567 = vst [vmem:[%s5 + $0x8] sm:$0xf] %v535
  %568 = vst [vmem:[%s5 + $0xc] sm:$0xff] %v536
  %569 = vst [vmem:[%s5 + $0x14] sm:$0xf] %v537
  %570 = vst [vmem:[%s5 + $0x18] sm:$0xff] %v538
  %571 = vst [vmem:[%s5 + $0x20] sm:$0xf] %v539
  %572 = vst [vmem:[%s5 + $0x24] sm:$0xff] %v540
  %573 = vst [vmem:[%s5 + $0x2c] sm:$0xf] %v541
  %574 = vst [vmem:[%s5 + $0x30] sm:$0xff] %v542
  %575 = vst [vmem:[%s5 + $0x38] sm:$0xf] %v543
  %576 = vst [vmem:[%s5 + $0x3c] sm:$0xff] %v544
  %577 = vst [vmem:[%s5 + $0x44] sm:$0xf] %v545
  %578 = vst [vmem:[%s5 + $0x48] sm:$0xff] %v546
  %579 = vst [vmem:[%s5 + $0x50] sm:$0xf] %v547
  %580 = vst [vmem:[%s5 + $0x54] sm:$0xff] %v548
  %581 = vst [vmem:[%s5 + $0x5c] sm:$0xf] %v549
  // Predicated region
  $region22: #{full_forward.12} parent=0 // pred_check
    _
  $region23: #{full_forward.12} parent=0 // pred_check_branch
    %583 = sbr.rel (0) target = $region25
  $region24: #{full_forward.12} parent=0 // pred_region
    _
  $region25: #{full_forward.12} parent=0 // pred_fallthru
    _
  // Predicated region
  $region26: #{full_forward.12} parent=0 // pred_check
    _
  $region27: #{full_forward.12} parent=0 // pred_check_branch
    %585 = sbr.rel (0) target = $region29
  $region28: #{full_forward.12} parent=0 // pred_region
    _
  $region29: #{full_forward.12} parent=0 // pred_fallthru
    _

// kernel: full_forward.15
$region0: #{full_forward.15}
  #allocation0 [shape = 'u32[]', space=smem, size = 0x4, offset = 0x4, fixed_abs, tag = 'smem constant byte address 0x4 - core index']
  #allocation1 [shape = 'u32[144,128]{1,0:T(1,128)}', space=vmem, size = 0x12000, scoped, tag = 'internal scratch']
  %s0 = inlined_call_operand.vmem [shape: bf16[4,128], index: 0, kind: input, shape index: {}]
  %s1 = inlined_call_operand.vmem [shape: bf16[1,128], index: 1, kind: input, shape index: {}]
  %s2 = inlined_call_operand.vmem [shape: bf16[1,128], index: 2, kind: input, shape index: {}]
  %s3 = inlined_call_operand.vmem [shape: bf16[128,128], index: 3, kind: input, shape index: {}]
  %s4 = inlined_call_operand.hbm [shape: bf16[4,128], index: 4, kind: output, shape index: {}]
  %s5 = sld [smem:[#allocation0]]
  $region26: #{full_forward.15} parent=0
    _
  %s7 = ssub.s32 1, %s5
  %s8 = scalar_select 0, %s7, %s5
  $region1: #{full_forward.15} parent=0
    #allocation2 [shape = 'u8[1024]{0}', space=vmem, size = 0x400, scoped, tag = 'output window, operand 0, single buffered']
    #allocation3 [shape = 's32[1]{0}', space=sflag, size = 0x4, scoped, tag = 'scoped memory for full_forward.15']
    %9 = vsyncpa [#allocation3], 0
    // Predicated region
    $region2: #{full_forward.15} parent=1 // pred_check
      _
    $region3: #{full_forward.15} parent=1 // pred_check_branch
      %11 = sbr.rel (0) target = $region5
    $region4: #{full_forward.15} parent=1 // pred_region
      _
    $region5: #{full_forward.15} parent=1 // pred_fallthru
      _
    // Predicated region
    $region6: #{full_forward.15} parent=1 // pred_check
      _
    $region7: #{full_forward.15} parent=1 // pred_check_branch
      %13 = sbr.rel (0) target = $region9
    $region8: #{full_forward.15} parent=1 // pred_region
      _
    $region9: #{full_forward.15} parent=1 // pred_fallthru
      _
    // Predicated region
    $region10: #{full_forward.15} parent=1 // pred_check
      _
    $region11: #{full_forward.15} parent=1 // pred_check_branch
      %15 = sbr.rel (0) target = $region13
    $region12: #{full_forward.15} parent=1 // pred_region
      _
    $region13: #{full_forward.15} parent=1 // pred_fallthru
      _
    // Predicated region
    $region14: #{full_forward.15} parent=1 // pred_check
      _
    $region15: #{full_forward.15} parent=1 // pred_check_branch
      %17 = sbr.rel (0) target = $region17
    $region16: #{full_forward.15} parent=1 // pred_region
      _
    $region17: #{full_forward.15} parent=1 // pred_fallthru
      _
    %v19 = vld [vmem:[%s0] sm:$0x3]
    %v20 = vunpack.c.l.bf16 %v19
    %vm21 = vcmask 1043456
    %v22 = vsel %vm21, %v20, 0.0
    %23 = vadd.xlane.f32.xlu0 %v22
    %v24 = vpop.xlane.xlu0 %23
    %v25 = vrcp.pop 128.0
    %v26 = vmul.f32 %v24, %v25
    %v27 = vsub.f32 %v20, %v26
    %v28 = vmul.f32 %v27, %v27
    %v29 = vsel %vm21, %v28, 0.0
    %30 = vadd.xlane.f32.xlu0 %v29
    %v31 = vpop.xlane.xlu0 %30
    %v32 = vmul.f32 %v31, %v25
    %v33 = vadd.f32 %v32, 1e-05
    %v34 = vrsqrt.pop %v33
    %v35 = vmul.f32 %v27, %v34
    %v36 = vld [vmem:[%s1] sm:$0x1]
    %v37 = vunpack.c.l.bf16 %v36
    %v38 = vlaneseq
    %v39 = vshrl.u32 %v38, 7
    %v40 = vsub.s32 0, %v39
    %v41 = vrot.slane %v37, %v40
    %v42 = vmul.f32 %v35, %v41
    %v43 = vld [vmem:[%s2] sm:$0x1]
    %v44 = vunpack.c.l.bf16 %v43
    %v45 = vlaneseq
    %v46 = vshrl.u32 %v45, 7
    %v47 = vsub.s32 0, %v46
    %v48 = vrot.slane %v44, %v47
    %v49 = vadd.f32 %v42, %v48
    %v50 = vpack.c.bf16 %v49, %v49
    %v51 = vld [vmem:[%s3] sm:$0xf]
    %v52 = vld [vmem:[%s3 + $0x4] sm:$0xf]
    %v53 = vld [vmem:[%s3 + $0x8] sm:$0xf]
    %v54 = vld [vmem:[%s3 + $0xc] sm:$0xf]
    %v55 = vld [vmem:[%s3 + $0x10] sm:$0xf]
    %v56 = vld [vmem:[%s3 + $0x14] sm:$0xf]
    %v57 = vld [vmem:[%s3 + $0x18] sm:$0xf]
    %v58 = vld [vmem:[%s3 + $0x1c] sm:$0xf]
    %v59 = vld [vmem:[%s3 + $0x20] sm:$0xf]
    %v60 = vld [vmem:[%s3 + $0x24] sm:$0xf]
    %v61 = vld [vmem:[%s3 + $0x28] sm:$0xf]
    %v62 = vld [vmem:[%s3 + $0x2c] sm:$0xf]
    %v63 = vld [vmem:[%s3 + $0x30] sm:$0xf]
    %v64 = vld [vmem:[%s3 + $0x34] sm:$0xf]
    %v65 = vld [vmem:[%s3 + $0x38] sm:$0xf]
    %v66 = vld [vmem:[%s3 + $0x3c] sm:$0xf]
    %v83 = vunpack.c.l.b16 %v51
    %v84 = vunpack.c.l.b16 %v52
    %v85 = vunpack.c.l.b16 %v53
    %v86 = vunpack.c.l.b16 %v54
    %v87 = vunpack.c.l.b16 %v55
    %v88 = vunpack.c.l.b16 %v56
    %v89 = vunpack.c.l.b16 %v57
    %v90 = vunpack.c.l.b16 %v58
    %v91 = vunpack.c.l.b16 %v59
    %v92 = vunpack.c.l.b16 %v60
    %v93 = vunpack.c.l.b16 %v61
    %v94 = vunpack.c.l.b16 %v62
    %v95 = vunpack.c.l.b16 %v63
    %v96 = vunpack.c.l.b16 %v64
    %v97 = vunpack.c.l.b16 %v65
    %v98 = vunpack.c.l.b16 %v66
    %v99 = vpack.c.b16 %v84, %v83
    %v100 = vpack.c.b16 %v86, %v85
    %v101 = vpack.c.b16 %v88, %v87
    %v102 = vpack.c.b16 %v90, %v89
    %v103 = vpack.c.b16 %v92, %v91
    %v104 = vpack.c.b16 %v94, %v93
    %v105 = vpack.c.b16 %v96, %v95
    %v106 = vpack.c.b16 %v98, %v97
    %115 = vmatprep.subr.bf16.mxu0 0
    %116 = vmatpush1.bf16.msra.mxu0 %v106
    %117 = vmatprep.subr.bf16.mxu0 0
    %118 = vmatpush1.bf16.msra.mxu0 %v105
    %119 = vmatprep.subr.bf16.mxu0 0
    %120 = vmatpush1.bf16.msra.mxu0 %v104
    %121 = vmatprep.subr.bf16.mxu0 0
    %122 = vmatpush1.bf16.msra.mxu0 %v103
    %123 = vmatprep.subr.bf16.mxu0 0
    %124 = vmatpush1.bf16.msra.mxu0 %v102
    %125 = vmatprep.subr.bf16.mxu0 0
    %126 = vmatpush1.bf16.msra.mxu0 %v101
    %127 = vmatprep.subr.bf16.mxu0 0
    %128 = vmatpush1.bf16.msra.mxu0 %v100
    %129 = vmatprep.subr.bf16.mxu0 0
    %130 = vmatpush1.bf16.msra.mxu0 %v99
    %131 = vmatprep.subr.bf16.mxu0 0
    %132 = vmatpush2.bf16.msra.mxu0 0
    %133 = vmatprep.subr.bf16.mxu0 0
    %134 = vmatpush2.bf16.msra.mxu0 0
    %135 = vmatprep.subr.bf16.mxu0 0
    %136 = vmatpush2.bf16.msra.mxu0 0
    %137 = vmatprep.subr.bf16.mxu0 0
    %138 = vmatpush2.bf16.msra.mxu0 0
    %139 = vmatprep.subr.bf16.mxu0 0
    %140 = vmatpush2.bf16.msra.mxu0 0
    %141 = vmatprep.subr.bf16.mxu0 0
    %142 = vmatpush2.bf16.msra.mxu0 0
    %143 = vmatprep.subr.bf16.mxu0 0
    %144 = vmatpush2.bf16.msra.mxu0 0
    %145 = vmatprep.subr.bf16.mxu0 0
    %146 = vmatpush2.bf16.msra.mxu0 0
    %147 = vmatprep.mubr.bf16.mxu0 0
    %148 = vmatmul.mubr.bf16.gmra.mxu0 %v50
    %v149 = vpop.f32.mrf.mxu0
    %v150 = vadd.f32 0.0, %v149
    %v151 = vpop.f32.mrf.mxu0
    %v152 = vpop.f32.mrf.mxu0
    %v153 = vpop.f32.mrf.mxu0
    %154 = vdwg.mxu0
    %v155 = vpack.c.bf16 %v150, %v150
    %156 = vst [vmem:[#allocation2] sm:$0x3] %v155
    // Predicated region
    $region18: #{full_forward.15} parent=1 // pred_check
      _
    $region19: #{full_forward.15} parent=1 // pred_check_branch
      %158 = sbr.rel (0) target = $region21
    $region20: #{full_forward.15} parent=1 // pred_region
      %s160 = ssub.s32 32, 32
      %161 = vsyncadd [#allocation3], %s160
      %s163 = sshll.u32 [#allocation2], 4
      %s164 = int_to_ptr.vmem [resolvable:$true] %s163
      %166 = dma.vmem_to_hbm [thread:$0]  %s164, 32, %s4, [#allocation3]
    $region21: #{full_forward.15} parent=1 // pred_fallthru
      _
    // Predicated region
    $region22: #{full_forward.15} parent=1 // pred_check
      _
    $region23: #{full_forward.15} parent=1 // pred_check_branch
      %168 = sbr.rel (0) target = $region25
    $region24: #{full_forward.15} parent=1 // pred_region
      %169 = dma.done [#allocation3], 32
    $region25: #{full_forward.15} parent=1 // pred_fallthru
      _
    %170 = vsyncpa [#allocation3], 1

</llo_original>
